<compile_context>
chip_gen: v7x
topology: tpu7x:2x2x1
jax: 0.10.0
libtpu: 0.0.40
codegen_flags: <defaults>
</compile_context>

<pallas_src>
import jax
import jax.numpy as jnp
import numpy as np
from jax.experimental import pallas as pl
from jax.experimental.pallas import tpu as pltpu

D_MODEL = 256
N_HEADS = 8
D_K = D_MODEL // N_HEADS
DEPTH = 6
VOCAB = 11
VPAD = 128            # lane-dense padded vocab width for the fused projection
D_FF = 4 * D_MODEL
LN_EPS = 1e-5
NEG = -1e9            # matches torch masked_fill(mask == 0, -1e9)
HI = jax.lax.Precision.HIGHEST


def _decoder_stack_kernel(x_ref, enc_ref, smask_ref, cmask_ref,
                          aw_ref, w1_ref, b1_ref, w2_ref, sp_ref,
                          ow_ref, ob_ref, o_ref, logits_ref):
    layer = pl.program_id(0)
    last = pl.num_programs(0) - 1

    # Seed the resident activation block with the embedded input at layer 0.
    @pl.when(layer == 0)
    def _():
        o_ref[...] = x_ref[...]

    sp = sp_ref[0]                 # (15, D): rows 0-7 attn biases, 8-13 LN, 14 ffn_b2
    attn_b = sp[0:8, :]            # [sq, sk, sv, so, cq, ck, cv, co]
    ln = sp[8:14, :]               # [g1, b1, g2, b2, g3, b3]
    b2 = sp[14:15, :]              # (1, D)
    b1 = b1_ref[0]                 # (1, D_FF)

    smask = smask_ref[...] != 0.0  # (BN, BN)  block-diag causal mask
    cmask = cmask_ref[...] != 0.0  # (BN, BM)  block-diag batch mask
    enc = enc_ref[...]             # (BM, D)

    def layer_norm(v, idx):
        g = ln[2 * idx:2 * idx + 1, :]
        b = ln[2 * idx + 1:2 * idx + 2, :]
        mu = jnp.mean(v, axis=-1, keepdims=True)
        c = v - mu
        var = jnp.mean(c * c, axis=-1, keepdims=True)
        return c * jax.lax.rsqrt(var + LN_EPS) * g + b

    def attention(Q, K, V, wo_col, bo, mask):
        # Q: (rows, D); K, V: (rows_k, D); mask: (rows, rows_k)
        scale = 1.0 / (D_K ** 0.5)
        nq = Q.shape[0]
        acc = jnp.zeros((nq, D_MODEL), jnp.float32)
        for h in range(N_HEADS):                       # static unroll over heads
            lo = h * D_K
            Qh = Q[:, lo:lo + D_K]
            Kh = K[:, lo:lo + D_K]
            Vh = V[:, lo:lo + D_K]
            s = jax.lax.dot_general(Qh, Kh, (((1,), (1,)), ((), ())),
                                    preferred_element_type=jnp.float32) * scale
            s = jnp.where(mask, s, NEG)
            m = jnp.max(s, axis=-1, keepdims=True)
            p = jnp.exp(s - m)
            p = p / jnp.sum(p, axis=-1, keepdims=True)      # exact softmax
            head = jnp.dot(p, Vh, preferred_element_type=jnp.float32)  # (rows, D_K)
            acc = acc + jnp.dot(head,
                                aw_ref[0, lo:lo + D_K, wo_col:wo_col + D_MODEL],
                                preferred_element_type=jnp.float32)
        return acc + bo

    # TODO(synk): nn.Dropout is stochastic at train time; treated as identity (eval mode).
    x = o_ref[...]                                     # (BN, D) running activation

    # ---- self-attention (fused QKV projection over all batch rows) ----
    qkv = jnp.dot(x, aw_ref[0, :, 0:3 * D_MODEL],
                  preferred_element_type=jnp.float32)
    Q = qkv[:, 0:D_MODEL] + attn_b[0:1, :]
    K = qkv[:, D_MODEL:2 * D_MODEL] + attn_b[1:2, :]
    V = qkv[:, 2 * D_MODEL:3 * D_MODEL] + attn_b[2:3, :]
    sa = attention(Q, K, V, 3 * D_MODEL, attn_b[3:4, :], smask)
    x = layer_norm(x + sa, 0)                          # norm1

    # ---- cross-attention (fused KV projection of the encoder output) ----
    Qc = jnp.dot(x, aw_ref[0, :, 4 * D_MODEL:5 * D_MODEL],
                 preferred_element_type=jnp.float32) + attn_b[4:5, :]
    kv = jnp.dot(enc, aw_ref[0, :, 5 * D_MODEL:7 * D_MODEL],
                 preferred_element_type=jnp.float32)
    Kc = kv[:, 0:D_MODEL] + attn_b[5:6, :]
    Vc = kv[:, D_MODEL:2 * D_MODEL] + attn_b[6:7, :]
    ca = attention(Qc, Kc, Vc, 7 * D_MODEL, attn_b[7:8, :], cmask)
    x = layer_norm(x + ca, 1)                          # norm2

    # ---- feed-forward ----
    h = jnp.maximum(jnp.dot(x, w1_ref[0],
                            preferred_element_type=jnp.float32) + b1, 0.0)
    f = jnp.dot(h, w2_ref[0], preferred_element_type=jnp.float32) + b2
    x = layer_norm(x + f, 2)                           # norm3

    o_ref[...] = x

    # Fused vocab projection (lane-dense, padded to 128) on the last layer.
    @pl.when(layer == last)
    def _():
        logits_ref[...] = (jnp.dot(x, ow_ref[...],
                                   preferred_element_type=jnp.float32)
                           + ob_ref[...])


def four_digit_decoder_forward(tgt_tokens, encoder_output, params):
    B, N = tgt_tokens.shape
    M = encoder_output.shape[1]
    BN, BM = B * N, B * M

    # Glue: embedding gather + learnable positional embedding add, then flatten
    # batch into the matmul row dimension.
    x = (jnp.take(params["embed"], tgt_tokens, axis=0)
         + params["pos"][:, :N, :]).astype(jnp.float32).reshape(BN, D_MODEL)
    enc = encoder_output.astype(jnp.float32).reshape(BM, D_MODEL)

    # Block-diagonal masks for the flattened-batch attention (static shapes).
    smask = np.zeros((BN, BN), np.float32)
    cmask = np.zeros((BN, BM), np.float32)
    tri = np.tril(np.ones((N, N), np.float32))
    for b in range(B):
        smask[b * N:(b + 1) * N, b * N:(b + 1) * N] = tri      # causal, same batch
        cmask[b * N:(b + 1) * N, b * M:(b + 1) * M] = 1.0      # same batch only
    smask = jnp.asarray(smask)
    cmask = jnp.asarray(cmask)

    # Re-pack per-layer weights: one (D, 8D) attention slab per layer
    # (columns: [Wq_s | Wk_s | Wv_s | Wo_s | Wq_c | Wk_c | Wv_c | Wo_c]).
    aw = params["attn_w"].astype(jnp.float32).transpose(0, 2, 1, 3).reshape(
        DEPTH, D_MODEL, 8 * D_MODEL)
    # Small per-layer params packed into one block: attn biases (8), LN (6), ffn_b2 (1).
    sp = jnp.concatenate([params["attn_b"].astype(jnp.float32),
                          params["ln"].astype(jnp.float32),
                          params["ffn_b2"].astype(jnp.float32)], axis=1)   # (DEPTH, 15, D)
    w1 = params["ffn_w1"].astype(jnp.float32)
    b1 = params["ffn_b1"].astype(jnp.float32)
    w2 = params["ffn_w2"].astype(jnp.float32)
    ow = jnp.zeros((D_MODEL, VPAD), jnp.float32).at[:, :VOCAB].set(
        params["out_w"].astype(jnp.float32))
    ob = jnp.zeros((1, VPAD), jnp.float32).at[:, :VOCAB].set(
        params["out_b"].astype(jnp.float32))

    grid_spec = pltpu.PrefetchScalarGridSpec(
        num_scalar_prefetch=0,
        grid=(DEPTH,),   # depth only: each layer's weights are fetched exactly once
        in_specs=[
            pl.BlockSpec((BN, D_MODEL), lambda l: (0, 0)),                # embedded x
            pl.BlockSpec((BM, D_MODEL), lambda l: (0, 0)),                # encoder out
            pl.BlockSpec((BN, BN), lambda l: (0, 0)),                     # self mask
            pl.BlockSpec((BN, BM), lambda l: (0, 0)),                     # cross mask
            pl.BlockSpec((1, D_MODEL, 8 * D_MODEL), lambda l: (l, 0, 0)),  # packed attn W
            pl.BlockSpec((1, D_MODEL, D_FF), lambda l: (l, 0, 0)),        # ffn w1
            pl.BlockSpec((1, 1, D_FF), lambda l: (l, 0, 0)),              # ffn b1
            pl.BlockSpec((1, D_FF, D_MODEL), lambda l: (l, 0, 0)),        # ffn w2
            pl.BlockSpec((1, 15, D_MODEL), lambda l: (l, 0, 0)),          # packed smalls
            pl.BlockSpec((D_MODEL, VPAD), lambda l: (0, 0)),              # out W (padded)
            pl.BlockSpec((1, VPAD), lambda l: (0, 0)),                    # out b (padded)
        ],
        out_specs=(
            pl.BlockSpec((BN, D_MODEL), lambda l: (0, 0)),                # hidden carry
            pl.BlockSpec((BN, VPAD), lambda l: (0, 0)),                   # padded logits
        ),
    )

    _, logits_padded = pl.pallas_call(
        _decoder_stack_kernel,
        out_shape=(jax.ShapeDtypeStruct((BN, D_MODEL), jnp.float32),
                   jax.ShapeDtypeStruct((BN, VPAD), jnp.float32)),
        grid_spec=grid_spec,
        compiler_params=pltpu.CompilerParams(
            dimension_semantics=("arbitrary",),   # activation carried across depth
        ),
    )(x, enc, smask, cmask, aw, w1, b1, w2, sp, ow, ob)

    return logits_padded.reshape(B, N, VPAD)[:, :, :VOCAB]


# ----------------------- pure-JAX reference (for validation) -----------------------
def _ref_forward(tgt_tokens, encoder_output, params):
    B, N = tgt_tokens.shape
    x = params["embed"][tgt_tokens] + params["pos"][:, :N, :]
    causal = jnp.tril(jnp.ones((N, N), jnp.float32))[None, None]  # tgt_mask

    def mha(q, kv, aw, ab, base, mask):
        Bq, Nq, _ = q.shape
        Nk = kv.shape[1]
        Q = jnp.dot(q, aw[base + 0], precision=HI) + ab[base + 0]
        K = jnp.dot(kv, aw[base + 1], precision=HI) + ab[base + 1]
        V = jnp.dot(kv, aw[base + 2], precision=HI) + ab[base + 2]
        Qh = Q.reshape(Bq, Nq, N_HEADS, D_K).transpose(0, 2, 1, 3)
        Kh = K.reshape(Bq, Nk, N_HEADS, D_K).transpose(0, 2, 1, 3)
        Vh = V.reshape(Bq, Nk, N_HEADS, D_K).transpose(0, 2, 1, 3)
        s = jnp.einsum("bhqd,bhkd->bhqk", Qh, Kh, precision=HI) / (D_K ** 0.5)
        if mask is not None:
            s = jnp.where(mask == 0, NEG, s)
        p = jax.nn.softmax(s, axis=-1)
        o = jnp.einsum("bhqk,bhkd->bhqd", p, Vh,
                       precision=HI).transpose(0, 2, 1, 3).reshape(Bq, Nq, D_MODEL)
        return jnp.dot(o, aw[base + 3], precision=HI) + ab[base + 3]

    def layer_norm(v, g, b):
        mu = v.mean(-1, keepdims=True)
        var = ((v - mu) ** 2).mean(-1, keepdims=True)
        return (v - mu) / jnp.sqrt(var + LN_EPS) * g + b

    for l in range(DEPTH):
        aw, ab, ln = params["attn_w"][l], params["attn_b"][l], params["ln"][l]
        x = layer_norm(x + mha(x, x, aw, ab, 0, causal), ln[0], ln[1])
        x = layer_norm(x + mha(x, encoder_output, aw, ab, 4, None), ln[2], ln[3])
        h = jax.nn.relu(jnp.dot(x, params["ffn_w1"][l], precision=HI) + params["ffn_b1"][l])
        f = jnp.dot(h, params["ffn_w2"][l], precision=HI) + params["ffn_b2"][l]
        x = layer_norm(x + f, ln[4], ln[5])
    return jnp.dot(x, params["out_w"], precision=HI) + params["out_b"]


if __name__ == "__main__":
    key = jax.random.PRNGKey(0)
    keys = jax.random.split(key, 16)
    B, N, M = 2, 5, 8   # batch=2, tgt seq=5 (pos table has 5 slots), encoder seq=8

    def nrm(k, shape, scale=0.02):
        return scale * jax.random.normal(k, shape, dtype=jnp.float32)

    # Deterministic synthetic parameters (module __init__ shapes; torch inits the
    # positional embedding to zeros — we use small randoms to exercise the path).
    gammas = 1.0 + 0.05 * jax.random.normal(keys[8], (DEPTH, 3, D_MODEL), jnp.float32)
    betas = 0.05 * jax.random.normal(keys[9], (DEPTH, 3, D_MODEL), jnp.float32)
    ln = jnp.stack([gammas, betas], axis=2).reshape(DEPTH, 6, D_MODEL)

    params = {
        "embed": nrm(keys[0], (VOCAB, D_MODEL)),
        "pos": nrm(keys[1], (1, 5, D_MODEL)),
        "attn_w": nrm(keys[2], (DEPTH, 8, D_MODEL, D_MODEL)),   # [sq,sk,sv,so,cq,ck,cv,co]
        "attn_b": nrm(keys[3], (DEPTH, 8, D_MODEL)),
        "ffn_w1": nrm(keys[4], (DEPTH, D_MODEL, D_FF)),
        "ffn_b1": nrm(keys[5], (DEPTH, 1, D_FF)),
        "ffn_w2": nrm(keys[6], (DEPTH, D_FF, D_MODEL)),
        "ffn_b2": nrm(keys[7], (DEPTH, 1, D_MODEL)),
        "ln": ln,
        "out_w": nrm(keys[10], (D_MODEL, VOCAB)),
        "out_b": nrm(keys[11], (1, VOCAB)),
    }

    tgt_tokens = jax.random.randint(keys[12], (B, N), 0, VOCAB, dtype=jnp.int32)
    encoder_output = jax.random.normal(keys[13], (B, M, D_MODEL), dtype=jnp.float32)

    out = jax.block_until_ready(
        four_digit_decoder_forward(tgt_tokens, encoder_output, params))
    ref = jax.block_until_ready(_ref_forward(tgt_tokens, encoder_output, params))

    assert out.shape == (B, N, VOCAB)
    # Tolerance covers residual MXU pass-rounding differences over 6 layers.
    np.testing.assert_allclose(np.asarray(out), np.asarray(ref), rtol=5e-3, atol=5e-3)
    print("KERNEL_OK")
</pallas_src>

<mosaic_0001>
module attributes {stable_mosaic.version = 11 : i64} {
  func.func @_decoder_stack_kernel(%arg0: i32, %arg1: memref<10x256xf32, #tpu.memory_space<vmem>>, %arg2: memref<16x256xf32, #tpu.memory_space<vmem>>, %arg3: memref<10x10xf32, #tpu.memory_space<vmem>>, %arg4: memref<10x16xf32, #tpu.memory_space<vmem>>, %arg5: memref<1x256x2048xf32, #tpu.memory_space<vmem>>, %arg6: memref<1x256x1024xf32, #tpu.memory_space<vmem>>, %arg7: memref<1x1x1024xf32, #tpu.memory_space<vmem>>, %arg8: memref<1x1024x256xf32, #tpu.memory_space<vmem>>, %arg9: memref<1x15x256xf32, #tpu.memory_space<vmem>>, %arg10: memref<256x128xf32, #tpu.memory_space<vmem>>, %arg11: memref<1x128xf32, #tpu.memory_space<vmem>>, %arg12: memref<10x256xf32, #tpu.memory_space<vmem>>, %arg13: memref<10x128xf32, #tpu.memory_space<vmem>>) attributes {dimension_semantics = [#tpu.dimension_semantics<arbitrary>], iteration_bounds = array<i64: 6>, scalar_prefetch = 0 : i64, scratch_operands = 0 : i64, tpu.core_type = #tpu.core_type<tc>, window_params = [{pipeline_mode = #tpu.pipeline_mode<synchronous>, transform_indices = @transform_0, window_bounds = array<i64: 10, 256>}, {pipeline_mode = #tpu.pipeline_mode<synchronous>, transform_indices = @transform_1, window_bounds = array<i64: 16, 256>}, {pipeline_mode = #tpu.pipeline_mode<synchronous>, transform_indices = @transform_2, window_bounds = array<i64: 10, 10>}, {pipeline_mode = #tpu.pipeline_mode<synchronous>, transform_indices = @transform_3, window_bounds = array<i64: 10, 16>}, {transform_indices = @transform_4, window_bounds = array<i64: 1, 256, 2048>}, {transform_indices = @transform_5, window_bounds = array<i64: 1, 256, 1024>}, {transform_indices = @transform_6, window_bounds = array<i64: 1, 1, 1024>}, {transform_indices = @transform_7, window_bounds = array<i64: 1, 1024, 256>}, {transform_indices = @transform_8, window_bounds = array<i64: 1, 15, 256>}, {pipeline_mode = #tpu.pipeline_mode<synchronous>, transform_indices = @transform_9, window_bounds = array<i64: 256, 128>}, {pipeline_mode = #tpu.pipeline_mode<synchronous>, transform_indices = @transform_10, window_bounds = array<i64: 1, 128>}, {pipeline_mode = #tpu.pipeline_mode<synchronous>, transform_indices = @transform_11, window_bounds = array<i64: 10, 256>}, {pipeline_mode = #tpu.pipeline_mode<synchronous>, transform_indices = @transform_12, window_bounds = array<i64: 10, 128>}]} {
    %c0_i32 = arith.constant 0 : i32
    %0 = arith.cmpi eq, %arg0, %c0_i32 : i32
    %1 = arith.extui %0 : i1 to i32
    %c0_i32_0 = arith.constant 0 : i32
    %2 = arith.cmpi ne, %1, %c0_i32_0 : i32
    scf.if %2 {
      %c0_205 = arith.constant 0 : index
      %c0_206 = arith.constant 0 : index
      %495 = vector.load %arg1[%c0_205, %c0_206] : memref<10x256xf32, #tpu.memory_space<vmem>>, vector<10x256xf32>
      %c0_207 = arith.constant 0 : index
      %c0_208 = arith.constant 0 : index
      %496 = vector.load %arg12[%c0_207, %c0_208] : memref<10x256xf32, #tpu.memory_space<vmem>>, vector<10x256xf32>
      tpu.vector_store %arg12[%c0_207, %c0_208], %495 {strides = array<i32>} : memref<10x256xf32, #tpu.memory_space<vmem>>, vector<10x256xf32>,
    } else {
    }
    %c0 = arith.constant 0 : index
    %c0_1 = arith.constant 0 : index
    %c0_2 = arith.constant 0 : index
    %3 = vector.load %arg9[%c0, %c0_1, %c0_2] : memref<1x15x256xf32, #tpu.memory_space<vmem>>, vector<1x15x256xf32>
    %4 = vector.shape_cast %3 : vector<1x15x256xf32> to vector<15x256xf32>
    %5 = vector.extract_strided_slice %4 {offsets = [0, 0], sizes = [8, 256], strides = [1, 1]} : vector<15x256xf32> to vector<8x256xf32>
    %6 = vector.extract_strided_slice %4 {offsets = [8, 0], sizes = [6, 256], strides = [1, 1]} : vector<15x256xf32> to vector<6x256xf32>
    %7 = vector.extract_strided_slice %4 {offsets = [14, 0], sizes = [1, 256], strides = [1, 1]} : vector<15x256xf32> to vector<1x256xf32>
    %c0_3 = arith.constant 0 : index
    %c0_4 = arith.constant 0 : index
    %c0_5 = arith.constant 0 : index
    %8 = vector.load %arg7[%c0_3, %c0_4, %c0_5] : memref<1x1x1024xf32, #tpu.memory_space<vmem>>, vector<1x1x1024xf32>
    %9 = vector.shape_cast %8 : vector<1x1x1024xf32> to vector<1x1024xf32>
    %c0_6 = arith.constant 0 : index
    %c0_7 = arith.constant 0 : index
    %10 = vector.load %arg3[%c0_6, %c0_7] : memref<10x10xf32, #tpu.memory_space<vmem>>, vector<10x10xf32>
    %cst = arith.constant 0.000000e+00 : f32
    %11 = vector.broadcast %cst : f32 to vector<10x10xf32>
    %12 = arith.cmpf one, %10, %11 : vector<10x10xf32>
    %c0_8 = arith.constant 0 : index
    %c0_9 = arith.constant 0 : index
    %13 = vector.load %arg4[%c0_8, %c0_9] : memref<10x16xf32, #tpu.memory_space<vmem>>, vector<10x16xf32>
    %cst_10 = arith.constant 0.000000e+00 : f32
    %14 = vector.broadcast %cst_10 : f32 to vector<10x16xf32>
    %15 = arith.cmpf one, %13, %14 : vector<10x16xf32>
    %c0_11 = arith.constant 0 : index
    %c0_12 = arith.constant 0 : index
    %16 = vector.load %arg2[%c0_11, %c0_12] : memref<16x256xf32, #tpu.memory_space<vmem>>, vector<16x256xf32>
    %c0_13 = arith.constant 0 : index
    %c0_14 = arith.constant 0 : index
    %17 = vector.load %arg12[%c0_13, %c0_14] : memref<10x256xf32, #tpu.memory_space<vmem>>, vector<10x256xf32>
    %c0_15 = arith.constant 0 : index
    %c0_16 = arith.constant 0 : index
    %c0_17 = arith.constant 0 : index
    %18 = vector.load %arg5[%c0_15, %c0_16, %c0_17] : memref<1x256x2048xf32, #tpu.memory_space<vmem>>, vector<1x256x768xf32>
    %19 = vector.shape_cast %18 : vector<1x256x768xf32> to vector<256x768xf32>
    %cst_18 = arith.constant dense<0.000000e+00> : vector<10x768xf32>
    %20 = tpu.matmul %17, %19, %cst_18 {dimension_numbers = #tpu.dot_dimension_numbers<[1], [0], [0], [1], [0, 0, 1, 1], [], []>} : vector<10x256xf32>, vector<256x768xf32>, vector<10x768xf32> -> vector<10x768xf32>
    %21 = vector.extract_strided_slice %20 {offsets = [0, 0], sizes = [10, 256], strides = [1, 1]} : vector<10x768xf32> to vector<10x256xf32>
    %22 = vector.extract_strided_slice %5 {offsets = [0, 0], sizes = [1, 256], strides = [1, 1]} : vector<8x256xf32> to vector<1x256xf32>
    %23 = vector.broadcast %22 : vector<1x256xf32> to vector<10x256xf32>
    %24 = arith.addf %21, %23 : vector<10x256xf32>
    %25 = vector.extract_strided_slice %20 {offsets = [0, 256], sizes = [10, 256], strides = [1, 1]} : vector<10x768xf32> to vector<10x256xf32>
    %26 = vector.extract_strided_slice %5 {offsets = [1, 0], sizes = [1, 256], strides = [1, 1]} : vector<8x256xf32> to vector<1x256xf32>
    %27 = vector.broadcast %26 : vector<1x256xf32> to vector<10x256xf32>
    %28 = arith.addf %25, %27 : vector<10x256xf32>
    %29 = vector.extract_strided_slice %20 {offsets = [0, 512], sizes = [10, 256], strides = [1, 1]} : vector<10x768xf32> to vector<10x256xf32>
    %30 = vector.extract_strided_slice %5 {offsets = [2, 0], sizes = [1, 256], strides = [1, 1]} : vector<8x256xf32> to vector<1x256xf32>
    %31 = vector.broadcast %30 : vector<1x256xf32> to vector<10x256xf32>
    %32 = arith.addf %29, %31 : vector<10x256xf32>
    %33 = vector.extract_strided_slice %5 {offsets = [3, 0], sizes = [1, 256], strides = [1, 1]} : vector<8x256xf32> to vector<1x256xf32>
    %cst_19 = arith.constant 0.000000e+00 : f32
    %34 = vector.broadcast %cst_19 : f32 to vector<10x256xf32>
    %35 = vector.extract_strided_slice %24 {offsets = [0, 0], sizes = [10, 32], strides = [1, 1]} : vector<10x256xf32> to vector<10x32xf32>
    %36 = vector.extract_strided_slice %28 {offsets = [0, 0], sizes = [10, 32], strides = [1, 1]} : vector<10x256xf32> to vector<10x32xf32>
    %37 = vector.extract_strided_slice %32 {offsets = [0, 0], sizes = [10, 32], strides = [1, 1]} : vector<10x256xf32> to vector<10x32xf32>
    %cst_20 = arith.constant dense<0.000000e+00> : vector<10x10xf32>
    %38 = tpu.matmul %35, %36, %cst_20 {dimension_numbers = #tpu.dot_dimension_numbers<[1], [1], [0], [0], [0, 0, 1, 0], [], []>} : vector<10x32xf32>, vector<10x32xf32>, vector<10x10xf32> -> vector<10x10xf32>
    %cst_21 = arith.constant 0.176776692 : f32
    %39 = vector.broadcast %cst_21 : f32 to vector<10x10xf32>
    %40 = arith.mulf %38, %39 : vector<10x10xf32>
    %cst_22 = arith.constant -1.000000e+09 : f32
    %41 = vector.broadcast %cst_22 : f32 to vector<10x10xf32>
    %42 = arith.select %12, %40, %41 : vector<10x10xi1>, vector<10x10xf32>
    %cst_23 = arith.constant dense<0xFF800000> : vector<10xf32>
    %43 = vector.multi_reduction <maximumf>, %42, %cst_23 [1] : vector<10x10xf32> to vector<10xf32>
    %44 = vector.shape_cast %43 : vector<10xf32> to vector<10x1xf32>
    %45 = vector.broadcast %44 : vector<10x1xf32> to vector<10x10xf32>
    %46 = arith.subf %42, %45 : vector<10x10xf32>
    %47 = math.exp %46 : vector<10x10xf32>
    %cst_24 = arith.constant dense<0.000000e+00> : vector<10xf32>
    %48 = vector.multi_reduction <add>, %47, %cst_24 [1] : vector<10x10xf32> to vector<10xf32>
    %49 = vector.shape_cast %48 : vector<10xf32> to vector<10x1xf32>
    %50 = vector.broadcast %49 : vector<10x1xf32> to vector<10x10xf32>
    %51 = arith.divf %47, %50 : vector<10x10xf32>
    %cst_25 = arith.constant dense<0.000000e+00> : vector<10x32xf32>
    %52 = tpu.matmul %51, %37, %cst_25 {dimension_numbers = #tpu.dot_dimension_numbers<[1], [0], [0], [1], [0, 0, 1, 1], [], []>} : vector<10x10xf32>, vector<10x32xf32>, vector<10x32xf32> -> vector<10x32xf32>
    %c0_26 = arith.constant 0 : index
    %c0_27 = arith.constant 0 : index
    %c768 = arith.constant 768 : index
    %53 = vector.load %arg5[%c0_26, %c0_27, %c768] : memref<1x256x2048xf32, #tpu.memory_space<vmem>>, vector<1x32x256xf32>
    %54 = vector.shape_cast %53 : vector<1x32x256xf32> to vector<32x256xf32>
    %cst_28 = arith.constant dense<0.000000e+00> : vector<10x256xf32>
    %55 = tpu.matmul %52, %54, %cst_28 {dimension_numbers = #tpu.dot_dimension_numbers<[1], [0], [0], [1], [0, 0, 1, 1], [], []>} : vector<10x32xf32>, vector<32x256xf32>, vector<10x256xf32> -> vector<10x256xf32>
    %56 = arith.addf %34, %55 : vector<10x256xf32>
    %57 = vector.extract_strided_slice %24 {offsets = [0, 32], sizes = [10, 32], strides = [1, 1]} : vector<10x256xf32> to vector<10x32xf32>
    %58 = vector.extract_strided_slice %28 {offsets = [0, 32], sizes = [10, 32], strides = [1, 1]} : vector<10x256xf32> to vector<10x32xf32>
    %59 = vector.extract_strided_slice %32 {offsets = [0, 32], sizes = [10, 32], strides = [1, 1]} : vector<10x256xf32> to vector<10x32xf32>
    %cst_29 = arith.constant dense<0.000000e+00> : vector<10x10xf32>
    %60 = tpu.matmul %57, %58, %cst_29 {dimension_numbers = #tpu.dot_dimension_numbers<[1], [1], [0], [0], [0, 0, 1, 0], [], []>} : vector<10x32xf32>, vector<10x32xf32>, vector<10x10xf32> -> vector<10x10xf32>
    %cst_30 = arith.constant 0.176776692 : f32
    %61 = vector.broadcast %cst_30 : f32 to vector<10x10xf32>
    %62 = arith.mulf %60, %61 : vector<10x10xf32>
    %cst_31 = arith.constant -1.000000e+09 : f32
    %63 = vector.broadcast %cst_31 : f32 to vector<10x10xf32>
    %64 = arith.select %12, %62, %63 : vector<10x10xi1>, vector<10x10xf32>
    %cst_32 = arith.constant dense<0xFF800000> : vector<10xf32>
    %65 = vector.multi_reduction <maximumf>, %64, %cst_32 [1] : vector<10x10xf32> to vector<10xf32>
    %66 = vector.shape_cast %65 : vector<10xf32> to vector<10x1xf32>
    %67 = vector.broadcast %66 : vector<10x1xf32> to vector<10x10xf32>
    %68 = arith.subf %64, %67 : vector<10x10xf32>
    %69 = math.exp %68 : vector<10x10xf32>
    %cst_33 = arith.constant dense<0.000000e+00> : vector<10xf32>
    %70 = vector.multi_reduction <add>, %69, %cst_33 [1] : vector<10x10xf32> to vector<10xf32>
    %71 = vector.shape_cast %70 : vector<10xf32> to vector<10x1xf32>
    %72 = vector.broadcast %71 : vector<10x1xf32> to vector<10x10xf32>
    %73 = arith.divf %69, %72 : vector<10x10xf32>
    %cst_34 = arith.constant dense<0.000000e+00> : vector<10x32xf32>
    %74 = tpu.matmul %73, %59, %cst_34 {dimension_numbers = #tpu.dot_dimension_numbers<[1], [0], [0], [1], [0, 0, 1, 1], [], []>} : vector<10x10xf32>, vector<10x32xf32>, vector<10x32xf32> -> vector<10x32xf32>
    %c0_35 = arith.constant 0 : index
    %c32 = arith.constant 32 : index
    %c768_36 = arith.constant 768 : index
    %75 = vector.load %arg5[%c0_35, %c32, %c768_36] : memref<1x256x2048xf32, #tpu.memory_space<vmem>>, vector<1x32x256xf32>
    %76 = vector.shape_cast %75 : vector<1x32x256xf32> to vector<32x256xf32>
    %cst_37 = arith.constant dense<0.000000e+00> : vector<10x256xf32>
    %77 = tpu.matmul %74, %76, %cst_37 {dimension_numbers = #tpu.dot_dimension_numbers<[1], [0], [0], [1], [0, 0, 1, 1], [], []>} : vector<10x32xf32>, vector<32x256xf32>, vector<10x256xf32> -> vector<10x256xf32>
    %78 = arith.addf %56, %77 : vector<10x256xf32>
    %79 = vector.extract_strided_slice %24 {offsets = [0, 64], sizes = [10, 32], strides = [1, 1]} : vector<10x256xf32> to vector<10x32xf32>
    %80 = vector.extract_strided_slice %28 {offsets = [0, 64], sizes = [10, 32], strides = [1, 1]} : vector<10x256xf32> to vector<10x32xf32>
    %81 = vector.extract_strided_slice %32 {offsets = [0, 64], sizes = [10, 32], strides = [1, 1]} : vector<10x256xf32> to vector<10x32xf32>
    %cst_38 = arith.constant dense<0.000000e+00> : vector<10x10xf32>
    %82 = tpu.matmul %79, %80, %cst_38 {dimension_numbers = #tpu.dot_dimension_numbers<[1], [1], [0], [0], [0, 0, 1, 0], [], []>} : vector<10x32xf32>, vector<10x32xf32>, vector<10x10xf32> -> vector<10x10xf32>
    %cst_39 = arith.constant 0.176776692 : f32
    %83 = vector.broadcast %cst_39 : f32 to vector<10x10xf32>
    %84 = arith.mulf %82, %83 : vector<10x10xf32>
    %cst_40 = arith.constant -1.000000e+09 : f32
    %85 = vector.broadcast %cst_40 : f32 to vector<10x10xf32>
    %86 = arith.select %12, %84, %85 : vector<10x10xi1>, vector<10x10xf32>
    %cst_41 = arith.constant dense<0xFF800000> : vector<10xf32>
    %87 = vector.multi_reduction <maximumf>, %86, %cst_41 [1] : vector<10x10xf32> to vector<10xf32>
    %88 = vector.shape_cast %87 : vector<10xf32> to vector<10x1xf32>
    %89 = vector.broadcast %88 : vector<10x1xf32> to vector<10x10xf32>
    %90 = arith.subf %86, %89 : vector<10x10xf32>
    %91 = math.exp %90 : vector<10x10xf32>
    %cst_42 = arith.constant dense<0.000000e+00> : vector<10xf32>
    %92 = vector.multi_reduction <add>, %91, %cst_42 [1] : vector<10x10xf32> to vector<10xf32>
    %93 = vector.shape_cast %92 : vector<10xf32> to vector<10x1xf32>
    %94 = vector.broadcast %93 : vector<10x1xf32> to vector<10x10xf32>
    %95 = arith.divf %91, %94 : vector<10x10xf32>
    %cst_43 = arith.constant dense<0.000000e+00> : vector<10x32xf32>
    %96 = tpu.matmul %95, %81, %cst_43 {dimension_numbers = #tpu.dot_dimension_numbers<[1], [0], [0], [1], [0, 0, 1, 1], [], []>} : vector<10x10xf32>, vector<10x32xf32>, vector<10x32xf32> -> vector<10x32xf32>
    %c0_44 = arith.constant 0 : index
    %c64 = arith.constant 64 : index
    %c768_45 = arith.constant 768 : index
    %97 = vector.load %arg5[%c0_44, %c64, %c768_45] : memref<1x256x2048xf32, #tpu.memory_space<vmem>>, vector<1x32x256xf32>
    %98 = vector.shape_cast %97 : vector<1x32x256xf32> to vector<32x256xf32>
    %cst_46 = arith.constant dense<0.000000e+00> : vector<10x256xf32>
    %99 = tpu.matmul %96, %98, %cst_46 {dimension_numbers = #tpu.dot_dimension_numbers<[1], [0], [0], [1], [0, 0, 1, 1], [], []>} : vector<10x32xf32>, vector<32x256xf32>, vector<10x256xf32> -> vector<10x256xf32>
    %100 = arith.addf %78, %99 : vector<10x256xf32>
    %101 = vector.extract_strided_slice %24 {offsets = [0, 96], sizes = [10, 32], strides = [1, 1]} : vector<10x256xf32> to vector<10x32xf32>
    %102 = vector.extract_strided_slice %28 {offsets = [0, 96], sizes = [10, 32], strides = [1, 1]} : vector<10x256xf32> to vector<10x32xf32>
    %103 = vector.extract_strided_slice %32 {offsets = [0, 96], sizes = [10, 32], strides = [1, 1]} : vector<10x256xf32> to vector<10x32xf32>
    %cst_47 = arith.constant dense<0.000000e+00> : vector<10x10xf32>
    %104 = tpu.matmul %101, %102, %cst_47 {dimension_numbers = #tpu.dot_dimension_numbers<[1], [1], [0], [0], [0, 0, 1, 0], [], []>} : vector<10x32xf32>, vector<10x32xf32>, vector<10x10xf32> -> vector<10x10xf32>
    %cst_48 = arith.constant 0.176776692 : f32
    %105 = vector.broadcast %cst_48 : f32 to vector<10x10xf32>
    %106 = arith.mulf %104, %105 : vector<10x10xf32>
    %cst_49 = arith.constant -1.000000e+09 : f32
    %107 = vector.broadcast %cst_49 : f32 to vector<10x10xf32>
    %108 = arith.select %12, %106, %107 : vector<10x10xi1>, vector<10x10xf32>
    %cst_50 = arith.constant dense<0xFF800000> : vector<10xf32>
    %109 = vector.multi_reduction <maximumf>, %108, %cst_50 [1] : vector<10x10xf32> to vector<10xf32>
    %110 = vector.shape_cast %109 : vector<10xf32> to vector<10x1xf32>
    %111 = vector.broadcast %110 : vector<10x1xf32> to vector<10x10xf32>
    %112 = arith.subf %108, %111 : vector<10x10xf32>
    %113 = math.exp %112 : vector<10x10xf32>
    %cst_51 = arith.constant dense<0.000000e+00> : vector<10xf32>
    %114 = vector.multi_reduction <add>, %113, %cst_51 [1] : vector<10x10xf32> to vector<10xf32>
    %115 = vector.shape_cast %114 : vector<10xf32> to vector<10x1xf32>
    %116 = vector.broadcast %115 : vector<10x1xf32> to vector<10x10xf32>
    %117 = arith.divf %113, %116 : vector<10x10xf32>
    %cst_52 = arith.constant dense<0.000000e+00> : vector<10x32xf32>
    %118 = tpu.matmul %117, %103, %cst_52 {dimension_numbers = #tpu.dot_dimension_numbers<[1], [0], [0], [1], [0, 0, 1, 1], [], []>} : vector<10x10xf32>, vector<10x32xf32>, vector<10x32xf32> -> vector<10x32xf32>
    %c0_53 = arith.constant 0 : index
    %c96 = arith.constant 96 : index
    %c768_54 = arith.constant 768 : index
    %119 = vector.load %arg5[%c0_53, %c96, %c768_54] : memref<1x256x2048xf32, #tpu.memory_space<vmem>>, vector<1x32x256xf32>
    %120 = vector.shape_cast %119 : vector<1x32x256xf32> to vector<32x256xf32>
    %cst_55 = arith.constant dense<0.000000e+00> : vector<10x256xf32>
    %121 = tpu.matmul %118, %120, %cst_55 {dimension_numbers = #tpu.dot_dimension_numbers<[1], [0], [0], [1], [0, 0, 1, 1], [], []>} : vector<10x32xf32>, vector<32x256xf32>, vector<10x256xf32> -> vector<10x256xf32>
    %122 = arith.addf %100, %121 : vector<10x256xf32>
    %123 = vector.extract_strided_slice %24 {offsets = [0, 128], sizes = [10, 32], strides = [1, 1]} : vector<10x256xf32> to vector<10x32xf32>
    %124 = vector.extract_strided_slice %28 {offsets = [0, 128], sizes = [10, 32], strides = [1, 1]} : vector<10x256xf32> to vector<10x32xf32>
    %125 = vector.extract_strided_slice %32 {offsets = [0, 128], sizes = [10, 32], strides = [1, 1]} : vector<10x256xf32> to vector<10x32xf32>
    %cst_56 = arith.constant dense<0.000000e+00> : vector<10x10xf32>
    %126 = tpu.matmul %123, %124, %cst_56 {dimension_numbers = #tpu.dot_dimension_numbers<[1], [1], [0], [0], [0, 0, 1, 0], [], []>} : vector<10x32xf32>, vector<10x32xf32>, vector<10x10xf32> -> vector<10x10xf32>
    %cst_57 = arith.constant 0.176776692 : f32
    %127 = vector.broadcast %cst_57 : f32 to vector<10x10xf32>
    %128 = arith.mulf %126, %127 : vector<10x10xf32>
    %cst_58 = arith.constant -1.000000e+09 : f32
    %129 = vector.broadcast %cst_58 : f32 to vector<10x10xf32>
    %130 = arith.select %12, %128, %129 : vector<10x10xi1>, vector<10x10xf32>
    %cst_59 = arith.constant dense<0xFF800000> : vector<10xf32>
    %131 = vector.multi_reduction <maximumf>, %130, %cst_59 [1] : vector<10x10xf32> to vector<10xf32>
    %132 = vector.shape_cast %131 : vector<10xf32> to vector<10x1xf32>
    %133 = vector.broadcast %132 : vector<10x1xf32> to vector<10x10xf32>
    %134 = arith.subf %130, %133 : vector<10x10xf32>
    %135 = math.exp %134 : vector<10x10xf32>
    %cst_60 = arith.constant dense<0.000000e+00> : vector<10xf32>
    %136 = vector.multi_reduction <add>, %135, %cst_60 [1] : vector<10x10xf32> to vector<10xf32>
    %137 = vector.shape_cast %136 : vector<10xf32> to vector<10x1xf32>
    %138 = vector.broadcast %137 : vector<10x1xf32> to vector<10x10xf32>
    %139 = arith.divf %135, %138 : vector<10x10xf32>
    %cst_61 = arith.constant dense<0.000000e+00> : vector<10x32xf32>
    %140 = tpu.matmul %139, %125, %cst_61 {dimension_numbers = #tpu.dot_dimension_numbers<[1], [0], [0], [1], [0, 0, 1, 1], [], []>} : vector<10x10xf32>, vector<10x32xf32>, vector<10x32xf32> -> vector<10x32xf32>
    %c0_62 = arith.constant 0 : index
    %c128 = arith.constant 128 : index
    %c768_63 = arith.constant 768 : index
    %141 = vector.load %arg5[%c0_62, %c128, %c768_63] : memref<1x256x2048xf32, #tpu.memory_space<vmem>>, vector<1x32x256xf32>
    %142 = vector.shape_cast %141 : vector<1x32x256xf32> to vector<32x256xf32>
    %cst_64 = arith.constant dense<0.000000e+00> : vector<10x256xf32>
    %143 = tpu.matmul %140, %142, %cst_64 {dimension_numbers = #tpu.dot_dimension_numbers<[1], [0], [0], [1], [0, 0, 1, 1], [], []>} : vector<10x32xf32>, vector<32x256xf32>, vector<10x256xf32> -> vector<10x256xf32>
    %144 = arith.addf %122, %143 : vector<10x256xf32>
    %145 = vector.extract_strided_slice %24 {offsets = [0, 160], sizes = [10, 32], strides = [1, 1]} : vector<10x256xf32> to vector<10x32xf32>
    %146 = vector.extract_strided_slice %28 {offsets = [0, 160], sizes = [10, 32], strides = [1, 1]} : vector<10x256xf32> to vector<10x32xf32>
    %147 = vector.extract_strided_slice %32 {offsets = [0, 160], sizes = [10, 32], strides = [1, 1]} : vector<10x256xf32> to vector<10x32xf32>
    %cst_65 = arith.constant dense<0.000000e+00> : vector<10x10xf32>
    %148 = tpu.matmul %145, %146, %cst_65 {dimension_numbers = #tpu.dot_dimension_numbers<[1], [1], [0], [0], [0, 0, 1, 0], [], []>} : vector<10x32xf32>, vector<10x32xf32>, vector<10x10xf32> -> vector<10x10xf32>
    %cst_66 = arith.constant 0.176776692 : f32
    %149 = vector.broadcast %cst_66 : f32 to vector<10x10xf32>
    %150 = arith.mulf %148, %149 : vector<10x10xf32>
    %cst_67 = arith.constant -1.000000e+09 : f32
    %151 = vector.broadcast %cst_67 : f32 to vector<10x10xf32>
    %152 = arith.select %12, %150, %151 : vector<10x10xi1>, vector<10x10xf32>
    %cst_68 = arith.constant dense<0xFF800000> : vector<10xf32>
    %153 = vector.multi_reduction <maximumf>, %152, %cst_68 [1] : vector<10x10xf32> to vector<10xf32>
    %154 = vector.shape_cast %153 : vector<10xf32> to vector<10x1xf32>
    %155 = vector.broadcast %154 : vector<10x1xf32> to vector<10x10xf32>
    %156 = arith.subf %152, %155 : vector<10x10xf32>
    %157 = math.exp %156 : vector<10x10xf32>
    %cst_69 = arith.constant dense<0.000000e+00> : vector<10xf32>
    %158 = vector.multi_reduction <add>, %157, %cst_69 [1] : vector<10x10xf32> to vector<10xf32>
    %159 = vector.shape_cast %158 : vector<10xf32> to vector<10x1xf32>
    %160 = vector.broadcast %159 : vector<10x1xf32> to vector<10x10xf32>
    %161 = arith.divf %157, %160 : vector<10x10xf32>
    %cst_70 = arith.constant dense<0.000000e+00> : vector<10x32xf32>
    %162 = tpu.matmul %161, %147, %cst_70 {dimension_numbers = #tpu.dot_dimension_numbers<[1], [0], [0], [1], [0, 0, 1, 1], [], []>} : vector<10x10xf32>, vector<10x32xf32>, vector<10x32xf32> -> vector<10x32xf32>
    %c0_71 = arith.constant 0 : index
    %c160 = arith.constant 160 : index
    %c768_72 = arith.constant 768 : index
    %163 = vector.load %arg5[%c0_71, %c160, %c768_72] : memref<1x256x2048xf32, #tpu.memory_space<vmem>>, vector<1x32x256xf32>
    %164 = vector.shape_cast %163 : vector<1x32x256xf32> to vector<32x256xf32>
    %cst_73 = arith.constant dense<0.000000e+00> : vector<10x256xf32>
    %165 = tpu.matmul %162, %164, %cst_73 {dimension_numbers = #tpu.dot_dimension_numbers<[1], [0], [0], [1], [0, 0, 1, 1], [], []>} : vector<10x32xf32>, vector<32x256xf32>, vector<10x256xf32> -> vector<10x256xf32>
    %166 = arith.addf %144, %165 : vector<10x256xf32>
    %167 = vector.extract_strided_slice %24 {offsets = [0, 192], sizes = [10, 32], strides = [1, 1]} : vector<10x256xf32> to vector<10x32xf32>
    %168 = vector.extract_strided_slice %28 {offsets = [0, 192], sizes = [10, 32], strides = [1, 1]} : vector<10x256xf32> to vector<10x32xf32>
    %169 = vector.extract_strided_slice %32 {offsets = [0, 192], sizes = [10, 32], strides = [1, 1]} : vector<10x256xf32> to vector<10x32xf32>
    %cst_74 = arith.constant dense<0.000000e+00> : vector<10x10xf32>
    %170 = tpu.matmul %167, %168, %cst_74 {dimension_numbers = #tpu.dot_dimension_numbers<[1], [1], [0], [0], [0, 0, 1, 0], [], []>} : vector<10x32xf32>, vector<10x32xf32>, vector<10x10xf32> -> vector<10x10xf32>
    %cst_75 = arith.constant 0.176776692 : f32
    %171 = vector.broadcast %cst_75 : f32 to vector<10x10xf32>
    %172 = arith.mulf %170, %171 : vector<10x10xf32>
    %cst_76 = arith.constant -1.000000e+09 : f32
    %173 = vector.broadcast %cst_76 : f32 to vector<10x10xf32>
    %174 = arith.select %12, %172, %173 : vector<10x10xi1>, vector<10x10xf32>
    %cst_77 = arith.constant dense<0xFF800000> : vector<10xf32>
    %175 = vector.multi_reduction <maximumf>, %174, %cst_77 [1] : vector<10x10xf32> to vector<10xf32>
    %176 = vector.shape_cast %175 : vector<10xf32> to vector<10x1xf32>
    %177 = vector.broadcast %176 : vector<10x1xf32> to vector<10x10xf32>
    %178 = arith.subf %174, %177 : vector<10x10xf32>
    %179 = math.exp %178 : vector<10x10xf32>
    %cst_78 = arith.constant dense<0.000000e+00> : vector<10xf32>
    %180 = vector.multi_reduction <add>, %179, %cst_78 [1] : vector<10x10xf32> to vector<10xf32>
    %181 = vector.shape_cast %180 : vector<10xf32> to vector<10x1xf32>
    %182 = vector.broadcast %181 : vector<10x1xf32> to vector<10x10xf32>
    %183 = arith.divf %179, %182 : vector<10x10xf32>
    %cst_79 = arith.constant dense<0.000000e+00> : vector<10x32xf32>
    %184 = tpu.matmul %183, %169, %cst_79 {dimension_numbers = #tpu.dot_dimension_numbers<[1], [0], [0], [1], [0, 0, 1, 1], [], []>} : vector<10x10xf32>, vector<10x32xf32>, vector<10x32xf32> -> vector<10x32xf32>
    %c0_80 = arith.constant 0 : index
    %c192 = arith.constant 192 : index
    %c768_81 = arith.constant 768 : index
    %185 = vector.load %arg5[%c0_80, %c192, %c768_81] : memref<1x256x2048xf32, #tpu.memory_space<vmem>>, vector<1x32x256xf32>
    %186 = vector.shape_cast %185 : vector<1x32x256xf32> to vector<32x256xf32>
    %cst_82 = arith.constant dense<0.000000e+00> : vector<10x256xf32>
    %187 = tpu.matmul %184, %186, %cst_82 {dimension_numbers = #tpu.dot_dimension_numbers<[1], [0], [0], [1], [0, 0, 1, 1], [], []>} : vector<10x32xf32>, vector<32x256xf32>, vector<10x256xf32> -> vector<10x256xf32>
    %188 = arith.addf %166, %187 : vector<10x256xf32>
    %189 = vector.extract_strided_slice %24 {offsets = [0, 224], sizes = [10, 32], strides = [1, 1]} : vector<10x256xf32> to vector<10x32xf32>
    %190 = vector.extract_strided_slice %28 {offsets = [0, 224], sizes = [10, 32], strides = [1, 1]} : vector<10x256xf32> to vector<10x32xf32>
    %191 = vector.extract_strided_slice %32 {offsets = [0, 224], sizes = [10, 32], strides = [1, 1]} : vector<10x256xf32> to vector<10x32xf32>
    %cst_83 = arith.constant dense<0.000000e+00> : vector<10x10xf32>
    %192 = tpu.matmul %189, %190, %cst_83 {dimension_numbers = #tpu.dot_dimension_numbers<[1], [1], [0], [0], [0, 0, 1, 0], [], []>} : vector<10x32xf32>, vector<10x32xf32>, vector<10x10xf32> -> vector<10x10xf32>
    %cst_84 = arith.constant 0.176776692 : f32
    %193 = vector.broadcast %cst_84 : f32 to vector<10x10xf32>
    %194 = arith.mulf %192, %193 : vector<10x10xf32>
    %cst_85 = arith.constant -1.000000e+09 : f32
    %195 = vector.broadcast %cst_85 : f32 to vector<10x10xf32>
    %196 = arith.select %12, %194, %195 : vector<10x10xi1>, vector<10x10xf32>
    %cst_86 = arith.constant dense<0xFF800000> : vector<10xf32>
    %197 = vector.multi_reduction <maximumf>, %196, %cst_86 [1] : vector<10x10xf32> to vector<10xf32>
    %198 = vector.shape_cast %197 : vector<10xf32> to vector<10x1xf32>
    %199 = vector.broadcast %198 : vector<10x1xf32> to vector<10x10xf32>
    %200 = arith.subf %196, %199 : vector<10x10xf32>
    %201 = math.exp %200 : vector<10x10xf32>
    %cst_87 = arith.constant dense<0.000000e+00> : vector<10xf32>
    %202 = vector.multi_reduction <add>, %201, %cst_87 [1] : vector<10x10xf32> to vector<10xf32>
    %203 = vector.shape_cast %202 : vector<10xf32> to vector<10x1xf32>
    %204 = vector.broadcast %203 : vector<10x1xf32> to vector<10x10xf32>
    %205 = arith.divf %201, %204 : vector<10x10xf32>
    %cst_88 = arith.constant dense<0.000000e+00> : vector<10x32xf32>
    %206 = tpu.matmul %205, %191, %cst_88 {dimension_numbers = #tpu.dot_dimension_numbers<[1], [0], [0], [1], [0, 0, 1, 1], [], []>} : vector<10x10xf32>, vector<10x32xf32>, vector<10x32xf32> -> vector<10x32xf32>
    %c0_89 = arith.constant 0 : index
    %c224 = arith.constant 224 : index
    %c768_90 = arith.constant 768 : index
    %207 = vector.load %arg5[%c0_89, %c224, %c768_90] : memref<1x256x2048xf32, #tpu.memory_space<vmem>>, vector<1x32x256xf32>
    %208 = vector.shape_cast %207 : vector<1x32x256xf32> to vector<32x256xf32>
    %cst_91 = arith.constant dense<0.000000e+00> : vector<10x256xf32>
    %209 = tpu.matmul %206, %208, %cst_91 {dimension_numbers = #tpu.dot_dimension_numbers<[1], [0], [0], [1], [0, 0, 1, 1], [], []>} : vector<10x32xf32>, vector<32x256xf32>, vector<10x256xf32> -> vector<10x256xf32>
    %210 = arith.addf %188, %209 : vector<10x256xf32>
    %211 = vector.broadcast %33 : vector<1x256xf32> to vector<10x256xf32>
    %212 = arith.addf %210, %211 : vector<10x256xf32>
    %213 = arith.addf %17, %212 : vector<10x256xf32>
    %214 = vector.extract_strided_slice %6 {offsets = [0, 0], sizes = [1, 256], strides = [1, 1]} : vector<6x256xf32> to vector<1x256xf32>
    %215 = vector.extract_strided_slice %6 {offsets = [1, 0], sizes = [1, 256], strides = [1, 1]} : vector<6x256xf32> to vector<1x256xf32>
    %cst_92 = arith.constant dense<0.000000e+00> : vector<10xf32>
    %216 = vector.multi_reduction <add>, %213, %cst_92 [1] : vector<10x256xf32> to vector<10xf32>
    %217 = vector.shape_cast %216 : vector<10xf32> to vector<10x1xf32>
    %cst_93 = arith.constant 2.560000e+02 : f32
    %218 = vector.broadcast %cst_93 : f32 to vector<10x1xf32>
    %219 = arith.divf %217, %218 : vector<10x1xf32>
    %220 = vector.broadcast %219 : vector<10x1xf32> to vector<10x256xf32>
    %221 = arith.subf %213, %220 : vector<10x256xf32>
    %222 = arith.mulf %221, %221 : vector<10x256xf32>
    %cst_94 = arith.constant dense<0.000000e+00> : vector<10xf32>
    %223 = vector.multi_reduction <add>, %222, %cst_94 [1] : vector<10x256xf32> to vector<10xf32>
    %224 = vector.shape_cast %223 : vector<10xf32> to vector<10x1xf32>
    %cst_95 = arith.constant 2.560000e+02 : f32
    %225 = vector.broadcast %cst_95 : f32 to vector<10x1xf32>
    %226 = arith.divf %224, %225 : vector<10x1xf32>
    %cst_96 = arith.constant 9.99999974E-6 : f32
    %227 = vector.broadcast %cst_96 : f32 to vector<10x1xf32>
    %228 = arith.addf %226, %227 : vector<10x1xf32>
    %229 = math.rsqrt %228 : vector<10x1xf32>
    %230 = vector.broadcast %229 : vector<10x1xf32> to vector<10x256xf32>
    %231 = arith.mulf %221, %230 : vector<10x256xf32>
    %232 = vector.broadcast %214 : vector<1x256xf32> to vector<10x256xf32>
    %233 = arith.mulf %231, %232 : vector<10x256xf32>
    %234 = vector.broadcast %215 : vector<1x256xf32> to vector<10x256xf32>
    %235 = arith.addf %233, %234 : vector<10x256xf32>
    %c0_97 = arith.constant 0 : index
    %c0_98 = arith.constant 0 : index
    %c1024 = arith.constant 1024 : index
    %236 = vector.load %arg5[%c0_97, %c0_98, %c1024] : memref<1x256x2048xf32, #tpu.memory_space<vmem>>, vector<1x256x256xf32>
    %237 = vector.shape_cast %236 : vector<1x256x256xf32> to vector<256x256xf32>
    %cst_99 = arith.constant dense<0.000000e+00> : vector<10x256xf32>
    %238 = tpu.matmul %235, %237, %cst_99 {dimension_numbers = #tpu.dot_dimension_numbers<[1], [0], [0], [1], [0, 0, 1, 1], [], []>} : vector<10x256xf32>, vector<256x256xf32>, vector<10x256xf32> -> vector<10x256xf32>
    %239 = vector.extract_strided_slice %5 {offsets = [4, 0], sizes = [1, 256], strides = [1, 1]} : vector<8x256xf32> to vector<1x256xf32>
    %240 = vector.broadcast %239 : vector<1x256xf32> to vector<10x256xf32>
    %241 = arith.addf %238, %240 : vector<10x256xf32>
    %c0_100 = arith.constant 0 : index
    %c0_101 = arith.constant 0 : index
    %c1280 = arith.constant 1280 : index
    %242 = vector.load %arg5[%c0_100, %c0_101, %c1280] : memref<1x256x2048xf32, #tpu.memory_space<vmem>>, vector<1x256x512xf32>
    %243 = vector.shape_cast %242 : vector<1x256x512xf32> to vector<256x512xf32>
    %cst_102 = arith.constant dense<0.000000e+00> : vector<16x512xf32>
    %244 = tpu.matmul %16, %243, %cst_102 {dimension_numbers = #tpu.dot_dimension_numbers<[1], [0], [0], [1], [0, 0, 1, 1], [], []>} : vector<16x256xf32>, vector<256x512xf32>, vector<16x512xf32> -> vector<16x512xf32>
    %245 = vector.extract_strided_slice %244 {offsets = [0, 0], sizes = [16, 256], strides = [1, 1]} : vector<16x512xf32> to vector<16x256xf32>
    %246 = vector.extract_strided_slice %5 {offsets = [5, 0], sizes = [1, 256], strides = [1, 1]} : vector<8x256xf32> to vector<1x256xf32>
    %247 = vector.broadcast %246 : vector<1x256xf32> to vector<16x256xf32>
    %248 = arith.addf %245, %247 : vector<16x256xf32>
    %249 = vector.extract_strided_slice %244 {offsets = [0, 256], sizes = [16, 256], strides = [1, 1]} : vector<16x512xf32> to vector<16x256xf32>
    %250 = vector.extract_strided_slice %5 {offsets = [6, 0], sizes = [1, 256], strides = [1, 1]} : vector<8x256xf32> to vector<1x256xf32>
    %251 = vector.broadcast %250 : vector<1x256xf32> to vector<16x256xf32>
    %252 = arith.addf %249, %251 : vector<16x256xf32>
    %253 = vector.extract_strided_slice %5 {offsets = [7, 0], sizes = [1, 256], strides = [1, 1]} : vector<8x256xf32> to vector<1x256xf32>
    %cst_103 = arith.constant 0.000000e+00 : f32
    %254 = vector.broadcast %cst_103 : f32 to vector<10x256xf32>
    %255 = vector.extract_strided_slice %241 {offsets = [0, 0], sizes = [10, 32], strides = [1, 1]} : vector<10x256xf32> to vector<10x32xf32>
    %256 = vector.extract_strided_slice %248 {offsets = [0, 0], sizes = [16, 32], strides = [1, 1]} : vector<16x256xf32> to vector<16x32xf32>
    %257 = vector.extract_strided_slice %252 {offsets = [0, 0], sizes = [16, 32], strides = [1, 1]} : vector<16x256xf32> to vector<16x32xf32>
    %cst_104 = arith.constant dense<0.000000e+00> : vector<10x16xf32>
    %258 = tpu.matmul %255, %256, %cst_104 {dimension_numbers = #tpu.dot_dimension_numbers<[1], [1], [0], [0], [0, 0, 1, 0], [], []>} : vector<10x32xf32>, vector<16x32xf32>, vector<10x16xf32> -> vector<10x16xf32>
    %cst_105 = arith.constant 0.176776692 : f32
    %259 = vector.broadcast %cst_105 : f32 to vector<10x16xf32>
    %260 = arith.mulf %258, %259 : vector<10x16xf32>
    %cst_106 = arith.constant -1.000000e+09 : f32
    %261 = vector.broadcast %cst_106 : f32 to vector<10x16xf32>
    %262 = arith.select %15, %260, %261 : vector<10x16xi1>, vector<10x16xf32>
    %cst_107 = arith.constant dense<0xFF800000> : vector<10xf32>
    %263 = vector.multi_reduction <maximumf>, %262, %cst_107 [1] : vector<10x16xf32> to vector<10xf32>
    %264 = vector.shape_cast %263 : vector<10xf32> to vector<10x1xf32>
    %265 = vector.broadcast %264 : vector<10x1xf32> to vector<10x16xf32>
    %266 = arith.subf %262, %265 : vector<10x16xf32>
    %267 = math.exp %266 : vector<10x16xf32>
    %cst_108 = arith.constant dense<0.000000e+00> : vector<10xf32>
    %268 = vector.multi_reduction <add>, %267, %cst_108 [1] : vector<10x16xf32> to vector<10xf32>
    %269 = vector.shape_cast %268 : vector<10xf32> to vector<10x1xf32>
    %270 = vector.broadcast %269 : vector<10x1xf32> to vector<10x16xf32>
    %271 = arith.divf %267, %270 : vector<10x16xf32>
    %cst_109 = arith.constant dense<0.000000e+00> : vector<10x32xf32>
    %272 = tpu.matmul %271, %257, %cst_109 {dimension_numbers = #tpu.dot_dimension_numbers<[1], [0], [0], [1], [0, 0, 1, 1], [], []>} : vector<10x16xf32>, vector<16x32xf32>, vector<10x32xf32> -> vector<10x32xf32>
    %c0_110 = arith.constant 0 : index
    %c0_111 = arith.constant 0 : index
    %c1792 = arith.constant 1792 : index
    %273 = vector.load %arg5[%c0_110, %c0_111, %c1792] : memref<1x256x2048xf32, #tpu.memory_space<vmem>>, vector<1x32x256xf32>
    %274 = vector.shape_cast %273 : vector<1x32x256xf32> to vector<32x256xf32>
    %cst_112 = arith.constant dense<0.000000e+00> : vector<10x256xf32>
    %275 = tpu.matmul %272, %274, %cst_112 {dimension_numbers = #tpu.dot_dimension_numbers<[1], [0], [0], [1], [0, 0, 1, 1], [], []>} : vector<10x32xf32>, vector<32x256xf32>, vector<10x256xf32> -> vector<10x256xf32>
    %276 = arith.addf %254, %275 : vector<10x256xf32>
    %277 = vector.extract_strided_slice %241 {offsets = [0, 32], sizes = [10, 32], strides = [1, 1]} : vector<10x256xf32> to vector<10x32xf32>
    %278 = vector.extract_strided_slice %248 {offsets = [0, 32], sizes = [16, 32], strides = [1, 1]} : vector<16x256xf32> to vector<16x32xf32>
    %279 = vector.extract_strided_slice %252 {offsets = [0, 32], sizes = [16, 32], strides = [1, 1]} : vector<16x256xf32> to vector<16x32xf32>
    %cst_113 = arith.constant dense<0.000000e+00> : vector<10x16xf32>
    %280 = tpu.matmul %277, %278, %cst_113 {dimension_numbers = #tpu.dot_dimension_numbers<[1], [1], [0], [0], [0, 0, 1, 0], [], []>} : vector<10x32xf32>, vector<16x32xf32>, vector<10x16xf32> -> vector<10x16xf32>
    %cst_114 = arith.constant 0.176776692 : f32
    %281 = vector.broadcast %cst_114 : f32 to vector<10x16xf32>
    %282 = arith.mulf %280, %281 : vector<10x16xf32>
    %cst_115 = arith.constant -1.000000e+09 : f32
    %283 = vector.broadcast %cst_115 : f32 to vector<10x16xf32>
    %284 = arith.select %15, %282, %283 : vector<10x16xi1>, vector<10x16xf32>
    %cst_116 = arith.constant dense<0xFF800000> : vector<10xf32>
    %285 = vector.multi_reduction <maximumf>, %284, %cst_116 [1] : vector<10x16xf32> to vector<10xf32>
    %286 = vector.shape_cast %285 : vector<10xf32> to vector<10x1xf32>
    %287 = vector.broadcast %286 : vector<10x1xf32> to vector<10x16xf32>
    %288 = arith.subf %284, %287 : vector<10x16xf32>
    %289 = math.exp %288 : vector<10x16xf32>
    %cst_117 = arith.constant dense<0.000000e+00> : vector<10xf32>
    %290 = vector.multi_reduction <add>, %289, %cst_117 [1] : vector<10x16xf32> to vector<10xf32>
    %291 = vector.shape_cast %290 : vector<10xf32> to vector<10x1xf32>
    %292 = vector.broadcast %291 : vector<10x1xf32> to vector<10x16xf32>
    %293 = arith.divf %289, %292 : vector<10x16xf32>
    %cst_118 = arith.constant dense<0.000000e+00> : vector<10x32xf32>
    %294 = tpu.matmul %293, %279, %cst_118 {dimension_numbers = #tpu.dot_dimension_numbers<[1], [0], [0], [1], [0, 0, 1, 1], [], []>} : vector<10x16xf32>, vector<16x32xf32>, vector<10x32xf32> -> vector<10x32xf32>
    %c0_119 = arith.constant 0 : index
    %c32_120 = arith.constant 32 : index
    %c1792_121 = arith.constant 1792 : index
    %295 = vector.load %arg5[%c0_119, %c32_120, %c1792_121] : memref<1x256x2048xf32, #tpu.memory_space<vmem>>, vector<1x32x256xf32>
    %296 = vector.shape_cast %295 : vector<1x32x256xf32> to vector<32x256xf32>
    %cst_122 = arith.constant dense<0.000000e+00> : vector<10x256xf32>
    %297 = tpu.matmul %294, %296, %cst_122 {dimension_numbers = #tpu.dot_dimension_numbers<[1], [0], [0], [1], [0, 0, 1, 1], [], []>} : vector<10x32xf32>, vector<32x256xf32>, vector<10x256xf32> -> vector<10x256xf32>
    %298 = arith.addf %276, %297 : vector<10x256xf32>
    %299 = vector.extract_strided_slice %241 {offsets = [0, 64], sizes = [10, 32], strides = [1, 1]} : vector<10x256xf32> to vector<10x32xf32>
    %300 = vector.extract_strided_slice %248 {offsets = [0, 64], sizes = [16, 32], strides = [1, 1]} : vector<16x256xf32> to vector<16x32xf32>
    %301 = vector.extract_strided_slice %252 {offsets = [0, 64], sizes = [16, 32], strides = [1, 1]} : vector<16x256xf32> to vector<16x32xf32>
    %cst_123 = arith.constant dense<0.000000e+00> : vector<10x16xf32>
    %302 = tpu.matmul %299, %300, %cst_123 {dimension_numbers = #tpu.dot_dimension_numbers<[1], [1], [0], [0], [0, 0, 1, 0], [], []>} : vector<10x32xf32>, vector<16x32xf32>, vector<10x16xf32> -> vector<10x16xf32>
    %cst_124 = arith.constant 0.176776692 : f32
    %303 = vector.broadcast %cst_124 : f32 to vector<10x16xf32>
    %304 = arith.mulf %302, %303 : vector<10x16xf32>
    %cst_125 = arith.constant -1.000000e+09 : f32
    %305 = vector.broadcast %cst_125 : f32 to vector<10x16xf32>
    %306 = arith.select %15, %304, %305 : vector<10x16xi1>, vector<10x16xf32>
    %cst_126 = arith.constant dense<0xFF800000> : vector<10xf32>
    %307 = vector.multi_reduction <maximumf>, %306, %cst_126 [1] : vector<10x16xf32> to vector<10xf32>
    %308 = vector.shape_cast %307 : vector<10xf32> to vector<10x1xf32>
    %309 = vector.broadcast %308 : vector<10x1xf32> to vector<10x16xf32>
    %310 = arith.subf %306, %309 : vector<10x16xf32>
    %311 = math.exp %310 : vector<10x16xf32>
    %cst_127 = arith.constant dense<0.000000e+00> : vector<10xf32>
    %312 = vector.multi_reduction <add>, %311, %cst_127 [1] : vector<10x16xf32> to vector<10xf32>
    %313 = vector.shape_cast %312 : vector<10xf32> to vector<10x1xf32>
    %314 = vector.broadcast %313 : vector<10x1xf32> to vector<10x16xf32>
    %315 = arith.divf %311, %314 : vector<10x16xf32>
    %cst_128 = arith.constant dense<0.000000e+00> : vector<10x32xf32>
    %316 = tpu.matmul %315, %301, %cst_128 {dimension_numbers = #tpu.dot_dimension_numbers<[1], [0], [0], [1], [0, 0, 1, 1], [], []>} : vector<10x16xf32>, vector<16x32xf32>, vector<10x32xf32> -> vector<10x32xf32>
    %c0_129 = arith.constant 0 : index
    %c64_130 = arith.constant 64 : index
    %c1792_131 = arith.constant 1792 : index
    %317 = vector.load %arg5[%c0_129, %c64_130, %c1792_131] : memref<1x256x2048xf32, #tpu.memory_space<vmem>>, vector<1x32x256xf32>
    %318 = vector.shape_cast %317 : vector<1x32x256xf32> to vector<32x256xf32>
    %cst_132 = arith.constant dense<0.000000e+00> : vector<10x256xf32>
    %319 = tpu.matmul %316, %318, %cst_132 {dimension_numbers = #tpu.dot_dimension_numbers<[1], [0], [0], [1], [0, 0, 1, 1], [], []>} : vector<10x32xf32>, vector<32x256xf32>, vector<10x256xf32> -> vector<10x256xf32>
    %320 = arith.addf %298, %319 : vector<10x256xf32>
    %321 = vector.extract_strided_slice %241 {offsets = [0, 96], sizes = [10, 32], strides = [1, 1]} : vector<10x256xf32> to vector<10x32xf32>
    %322 = vector.extract_strided_slice %248 {offsets = [0, 96], sizes = [16, 32], strides = [1, 1]} : vector<16x256xf32> to vector<16x32xf32>
    %323 = vector.extract_strided_slice %252 {offsets = [0, 96], sizes = [16, 32], strides = [1, 1]} : vector<16x256xf32> to vector<16x32xf32>
    %cst_133 = arith.constant dense<0.000000e+00> : vector<10x16xf32>
    %324 = tpu.matmul %321, %322, %cst_133 {dimension_numbers = #tpu.dot_dimension_numbers<[1], [1], [0], [0], [0, 0, 1, 0], [], []>} : vector<10x32xf32>, vector<16x32xf32>, vector<10x16xf32> -> vector<10x16xf32>
    %cst_134 = arith.constant 0.176776692 : f32
    %325 = vector.broadcast %cst_134 : f32 to vector<10x16xf32>
    %326 = arith.mulf %324, %325 : vector<10x16xf32>
    %cst_135 = arith.constant -1.000000e+09 : f32
    %327 = vector.broadcast %cst_135 : f32 to vector<10x16xf32>
    %328 = arith.select %15, %326, %327 : vector<10x16xi1>, vector<10x16xf32>
    %cst_136 = arith.constant dense<0xFF800000> : vector<10xf32>
    %329 = vector.multi_reduction <maximumf>, %328, %cst_136 [1] : vector<10x16xf32> to vector<10xf32>
    %330 = vector.shape_cast %329 : vector<10xf32> to vector<10x1xf32>
    %331 = vector.broadcast %330 : vector<10x1xf32> to vector<10x16xf32>
    %332 = arith.subf %328, %331 : vector<10x16xf32>
    %333 = math.exp %332 : vector<10x16xf32>
    %cst_137 = arith.constant dense<0.000000e+00> : vector<10xf32>
    %334 = vector.multi_reduction <add>, %333, %cst_137 [1] : vector<10x16xf32> to vector<10xf32>
    %335 = vector.shape_cast %334 : vector<10xf32> to vector<10x1xf32>
    %336 = vector.broadcast %335 : vector<10x1xf32> to vector<10x16xf32>
    %337 = arith.divf %333, %336 : vector<10x16xf32>
    %cst_138 = arith.constant dense<0.000000e+00> : vector<10x32xf32>
    %338 = tpu.matmul %337, %323, %cst_138 {dimension_numbers = #tpu.dot_dimension_numbers<[1], [0], [0], [1], [0, 0, 1, 1], [], []>} : vector<10x16xf32>, vector<16x32xf32>, vector<10x32xf32> -> vector<10x32xf32>
    %c0_139 = arith.constant 0 : index
    %c96_140 = arith.constant 96 : index
    %c1792_141 = arith.constant 1792 : index
    %339 = vector.load %arg5[%c0_139, %c96_140, %c1792_141] : memref<1x256x2048xf32, #tpu.memory_space<vmem>>, vector<1x32x256xf32>
    %340 = vector.shape_cast %339 : vector<1x32x256xf32> to vector<32x256xf32>
    %cst_142 = arith.constant dense<0.000000e+00> : vector<10x256xf32>
    %341 = tpu.matmul %338, %340, %cst_142 {dimension_numbers = #tpu.dot_dimension_numbers<[1], [0], [0], [1], [0, 0, 1, 1], [], []>} : vector<10x32xf32>, vector<32x256xf32>, vector<10x256xf32> -> vector<10x256xf32>
    %342 = arith.addf %320, %341 : vector<10x256xf32>
    %343 = vector.extract_strided_slice %241 {offsets = [0, 128], sizes = [10, 32], strides = [1, 1]} : vector<10x256xf32> to vector<10x32xf32>
    %344 = vector.extract_strided_slice %248 {offsets = [0, 128], sizes = [16, 32], strides = [1, 1]} : vector<16x256xf32> to vector<16x32xf32>
    %345 = vector.extract_strided_slice %252 {offsets = [0, 128], sizes = [16, 32], strides = [1, 1]} : vector<16x256xf32> to vector<16x32xf32>
    %cst_143 = arith.constant dense<0.000000e+00> : vector<10x16xf32>
    %346 = tpu.matmul %343, %344, %cst_143 {dimension_numbers = #tpu.dot_dimension_numbers<[1], [1], [0], [0], [0, 0, 1, 0], [], []>} : vector<10x32xf32>, vector<16x32xf32>, vector<10x16xf32> -> vector<10x16xf32>
    %cst_144 = arith.constant 0.176776692 : f32
    %347 = vector.broadcast %cst_144 : f32 to vector<10x16xf32>
    %348 = arith.mulf %346, %347 : vector<10x16xf32>
    %cst_145 = arith.constant -1.000000e+09 : f32
    %349 = vector.broadcast %cst_145 : f32 to vector<10x16xf32>
    %350 = arith.select %15, %348, %349 : vector<10x16xi1>, vector<10x16xf32>
    %cst_146 = arith.constant dense<0xFF800000> : vector<10xf32>
    %351 = vector.multi_reduction <maximumf>, %350, %cst_146 [1] : vector<10x16xf32> to vector<10xf32>
    %352 = vector.shape_cast %351 : vector<10xf32> to vector<10x1xf32>
    %353 = vector.broadcast %352 : vector<10x1xf32> to vector<10x16xf32>
    %354 = arith.subf %350, %353 : vector<10x16xf32>
    %355 = math.exp %354 : vector<10x16xf32>
    %cst_147 = arith.constant dense<0.000000e+00> : vector<10xf32>
    %356 = vector.multi_reduction <add>, %355, %cst_147 [1] : vector<10x16xf32> to vector<10xf32>
    %357 = vector.shape_cast %356 : vector<10xf32> to vector<10x1xf32>
    %358 = vector.broadcast %357 : vector<10x1xf32> to vector<10x16xf32>
    %359 = arith.divf %355, %358 : vector<10x16xf32>
    %cst_148 = arith.constant dense<0.000000e+00> : vector<10x32xf32>
    %360 = tpu.matmul %359, %345, %cst_148 {dimension_numbers = #tpu.dot_dimension_numbers<[1], [0], [0], [1], [0, 0, 1, 1], [], []>} : vector<10x16xf32>, vector<16x32xf32>, vector<10x32xf32> -> vector<10x32xf32>
    %c0_149 = arith.constant 0 : index
    %c128_150 = arith.constant 128 : index
    %c1792_151 = arith.constant 1792 : index
    %361 = vector.load %arg5[%c0_149, %c128_150, %c1792_151] : memref<1x256x2048xf32, #tpu.memory_space<vmem>>, vector<1x32x256xf32>
    %362 = vector.shape_cast %361 : vector<1x32x256xf32> to vector<32x256xf32>
    %cst_152 = arith.constant dense<0.000000e+00> : vector<10x256xf32>
    %363 = tpu.matmul %360, %362, %cst_152 {dimension_numbers = #tpu.dot_dimension_numbers<[1], [0], [0], [1], [0, 0, 1, 1], [], []>} : vector<10x32xf32>, vector<32x256xf32>, vector<10x256xf32> -> vector<10x256xf32>
    %364 = arith.addf %342, %363 : vector<10x256xf32>
    %365 = vector.extract_strided_slice %241 {offsets = [0, 160], sizes = [10, 32], strides = [1, 1]} : vector<10x256xf32> to vector<10x32xf32>
    %366 = vector.extract_strided_slice %248 {offsets = [0, 160], sizes = [16, 32], strides = [1, 1]} : vector<16x256xf32> to vector<16x32xf32>
    %367 = vector.extract_strided_slice %252 {offsets = [0, 160], sizes = [16, 32], strides = [1, 1]} : vector<16x256xf32> to vector<16x32xf32>
    %cst_153 = arith.constant dense<0.000000e+00> : vector<10x16xf32>
    %368 = tpu.matmul %365, %366, %cst_153 {dimension_numbers = #tpu.dot_dimension_numbers<[1], [1], [0], [0], [0, 0, 1, 0], [], []>} : vector<10x32xf32>, vector<16x32xf32>, vector<10x16xf32> -> vector<10x16xf32>
    %cst_154 = arith.constant 0.176776692 : f32
    %369 = vector.broadcast %cst_154 : f32 to vector<10x16xf32>
    %370 = arith.mulf %368, %369 : vector<10x16xf32>
    %cst_155 = arith.constant -1.000000e+09 : f32
    %371 = vector.broadcast %cst_155 : f32 to vector<10x16xf32>
    %372 = arith.select %15, %370, %371 : vector<10x16xi1>, vector<10x16xf32>
    %cst_156 = arith.constant dense<0xFF800000> : vector<10xf32>
    %373 = vector.multi_reduction <maximumf>, %372, %cst_156 [1] : vector<10x16xf32> to vector<10xf32>
    %374 = vector.shape_cast %373 : vector<10xf32> to vector<10x1xf32>
    %375 = vector.broadcast %374 : vector<10x1xf32> to vector<10x16xf32>
    %376 = arith.subf %372, %375 : vector<10x16xf32>
    %377 = math.exp %376 : vector<10x16xf32>
    %cst_157 = arith.constant dense<0.000000e+00> : vector<10xf32>
    %378 = vector.multi_reduction <add>, %377, %cst_157 [1] : vector<10x16xf32> to vector<10xf32>
    %379 = vector.shape_cast %378 : vector<10xf32> to vector<10x1xf32>
    %380 = vector.broadcast %379 : vector<10x1xf32> to vector<10x16xf32>
    %381 = arith.divf %377, %380 : vector<10x16xf32>
    %cst_158 = arith.constant dense<0.000000e+00> : vector<10x32xf32>
    %382 = tpu.matmul %381, %367, %cst_158 {dimension_numbers = #tpu.dot_dimension_numbers<[1], [0], [0], [1], [0, 0, 1, 1], [], []>} : vector<10x16xf32>, vector<16x32xf32>, vector<10x32xf32> -> vector<10x32xf32>
    %c0_159 = arith.constant 0 : index
    %c160_160 = arith.constant 160 : index
    %c1792_161 = arith.constant 1792 : index
    %383 = vector.load %arg5[%c0_159, %c160_160, %c1792_161] : memref<1x256x2048xf32, #tpu.memory_space<vmem>>, vector<1x32x256xf32>
    %384 = vector.shape_cast %383 : vector<1x32x256xf32> to vector<32x256xf32>
    %cst_162 = arith.constant dense<0.000000e+00> : vector<10x256xf32>
    %385 = tpu.matmul %382, %384, %cst_162 {dimension_numbers = #tpu.dot_dimension_numbers<[1], [0], [0], [1], [0, 0, 1, 1], [], []>} : vector<10x32xf32>, vector<32x256xf32>, vector<10x256xf32> -> vector<10x256xf32>
    %386 = arith.addf %364, %385 : vector<10x256xf32>
    %387 = vector.extract_strided_slice %241 {offsets = [0, 192], sizes = [10, 32], strides = [1, 1]} : vector<10x256xf32> to vector<10x32xf32>
    %388 = vector.extract_strided_slice %248 {offsets = [0, 192], sizes = [16, 32], strides = [1, 1]} : vector<16x256xf32> to vector<16x32xf32>
    %389 = vector.extract_strided_slice %252 {offsets = [0, 192], sizes = [16, 32], strides = [1, 1]} : vector<16x256xf32> to vector<16x32xf32>
    %cst_163 = arith.constant dense<0.000000e+00> : vector<10x16xf32>
    %390 = tpu.matmul %387, %388, %cst_163 {dimension_numbers = #tpu.dot_dimension_numbers<[1], [1], [0], [0], [0, 0, 1, 0], [], []>} : vector<10x32xf32>, vector<16x32xf32>, vector<10x16xf32> -> vector<10x16xf32>
    %cst_164 = arith.constant 0.176776692 : f32
    %391 = vector.broadcast %cst_164 : f32 to vector<10x16xf32>
    %392 = arith.mulf %390, %391 : vector<10x16xf32>
    %cst_165 = arith.constant -1.000000e+09 : f32
    %393 = vector.broadcast %cst_165 : f32 to vector<10x16xf32>
    %394 = arith.select %15, %392, %393 : vector<10x16xi1>, vector<10x16xf32>
    %cst_166 = arith.constant dense<0xFF800000> : vector<10xf32>
    %395 = vector.multi_reduction <maximumf>, %394, %cst_166 [1] : vector<10x16xf32> to vector<10xf32>
    %396 = vector.shape_cast %395 : vector<10xf32> to vector<10x1xf32>
    %397 = vector.broadcast %396 : vector<10x1xf32> to vector<10x16xf32>
    %398 = arith.subf %394, %397 : vector<10x16xf32>
    %399 = math.exp %398 : vector<10x16xf32>
    %cst_167 = arith.constant dense<0.000000e+00> : vector<10xf32>
    %400 = vector.multi_reduction <add>, %399, %cst_167 [1] : vector<10x16xf32> to vector<10xf32>
    %401 = vector.shape_cast %400 : vector<10xf32> to vector<10x1xf32>
    %402 = vector.broadcast %401 : vector<10x1xf32> to vector<10x16xf32>
    %403 = arith.divf %399, %402 : vector<10x16xf32>
    %cst_168 = arith.constant dense<0.000000e+00> : vector<10x32xf32>
    %404 = tpu.matmul %403, %389, %cst_168 {dimension_numbers = #tpu.dot_dimension_numbers<[1], [0], [0], [1], [0, 0, 1, 1], [], []>} : vector<10x16xf32>, vector<16x32xf32>, vector<10x32xf32> -> vector<10x32xf32>
    %c0_169 = arith.constant 0 : index
    %c192_170 = arith.constant 192 : index
    %c1792_171 = arith.constant 1792 : index
    %405 = vector.load %arg5[%c0_169, %c192_170, %c1792_171] : memref<1x256x2048xf32, #tpu.memory_space<vmem>>, vector<1x32x256xf32>
    %406 = vector.shape_cast %405 : vector<1x32x256xf32> to vector<32x256xf32>
    %cst_172 = arith.constant dense<0.000000e+00> : vector<10x256xf32>
    %407 = tpu.matmul %404, %406, %cst_172 {dimension_numbers = #tpu.dot_dimension_numbers<[1], [0], [0], [1], [0, 0, 1, 1], [], []>} : vector<10x32xf32>, vector<32x256xf32>, vector<10x256xf32> -> vector<10x256xf32>
    %408 = arith.addf %386, %407 : vector<10x256xf32>
    %409 = vector.extract_strided_slice %241 {offsets = [0, 224], sizes = [10, 32], strides = [1, 1]} : vector<10x256xf32> to vector<10x32xf32>
    %410 = vector.extract_strided_slice %248 {offsets = [0, 224], sizes = [16, 32], strides = [1, 1]} : vector<16x256xf32> to vector<16x32xf32>
    %411 = vector.extract_strided_slice %252 {offsets = [0, 224], sizes = [16, 32], strides = [1, 1]} : vector<16x256xf32> to vector<16x32xf32>
    %cst_173 = arith.constant dense<0.000000e+00> : vector<10x16xf32>
    %412 = tpu.matmul %409, %410, %cst_173 {dimension_numbers = #tpu.dot_dimension_numbers<[1], [1], [0], [0], [0, 0, 1, 0], [], []>} : vector<10x32xf32>, vector<16x32xf32>, vector<10x16xf32> -> vector<10x16xf32>
    %cst_174 = arith.constant 0.176776692 : f32
    %413 = vector.broadcast %cst_174 : f32 to vector<10x16xf32>
    %414 = arith.mulf %412, %413 : vector<10x16xf32>
    %cst_175 = arith.constant -1.000000e+09 : f32
    %415 = vector.broadcast %cst_175 : f32 to vector<10x16xf32>
    %416 = arith.select %15, %414, %415 : vector<10x16xi1>, vector<10x16xf32>
    %cst_176 = arith.constant dense<0xFF800000> : vector<10xf32>
    %417 = vector.multi_reduction <maximumf>, %416, %cst_176 [1] : vector<10x16xf32> to vector<10xf32>
    %418 = vector.shape_cast %417 : vector<10xf32> to vector<10x1xf32>
    %419 = vector.broadcast %418 : vector<10x1xf32> to vector<10x16xf32>
    %420 = arith.subf %416, %419 : vector<10x16xf32>
    %421 = math.exp %420 : vector<10x16xf32>
    %cst_177 = arith.constant dense<0.000000e+00> : vector<10xf32>
    %422 = vector.multi_reduction <add>, %421, %cst_177 [1] : vector<10x16xf32> to vector<10xf32>
    %423 = vector.shape_cast %422 : vector<10xf32> to vector<10x1xf32>
    %424 = vector.broadcast %423 : vector<10x1xf32> to vector<10x16xf32>
    %425 = arith.divf %421, %424 : vector<10x16xf32>
    %cst_178 = arith.constant dense<0.000000e+00> : vector<10x32xf32>
    %426 = tpu.matmul %425, %411, %cst_178 {dimension_numbers = #tpu.dot_dimension_numbers<[1], [0], [0], [1], [0, 0, 1, 1], [], []>} : vector<10x16xf32>, vector<16x32xf32>, vector<10x32xf32> -> vector<10x32xf32>
    %c0_179 = arith.constant 0 : index
    %c224_180 = arith.constant 224 : index
    %c1792_181 = arith.constant 1792 : index
    %427 = vector.load %arg5[%c0_179, %c224_180, %c1792_181] : memref<1x256x2048xf32, #tpu.memory_space<vmem>>, vector<1x32x256xf32>
    %428 = vector.shape_cast %427 : vector<1x32x256xf32> to vector<32x256xf32>
    %cst_182 = arith.constant dense<0.000000e+00> : vector<10x256xf32>
    %429 = tpu.matmul %426, %428, %cst_182 {dimension_numbers = #tpu.dot_dimension_numbers<[1], [0], [0], [1], [0, 0, 1, 1], [], []>} : vector<10x32xf32>, vector<32x256xf32>, vector<10x256xf32> -> vector<10x256xf32>
    %430 = arith.addf %408, %429 : vector<10x256xf32>
    %431 = vector.broadcast %253 : vector<1x256xf32> to vector<10x256xf32>
    %432 = arith.addf %430, %431 : vector<10x256xf32>
    %433 = arith.addf %235, %432 : vector<10x256xf32>
    %434 = vector.extract_strided_slice %6 {offsets = [2, 0], sizes = [1, 256], strides = [1, 1]} : vector<6x256xf32> to vector<1x256xf32>
    %435 = vector.extract_strided_slice %6 {offsets = [3, 0], sizes = [1, 256], strides = [1, 1]} : vector<6x256xf32> to vector<1x256xf32>
    %cst_183 = arith.constant dense<0.000000e+00> : vector<10xf32>
    %436 = vector.multi_reduction <add>, %433, %cst_183 [1] : vector<10x256xf32> to vector<10xf32>
    %437 = vector.shape_cast %436 : vector<10xf32> to vector<10x1xf32>
    %cst_184 = arith.constant 2.560000e+02 : f32
    %438 = vector.broadcast %cst_184 : f32 to vector<10x1xf32>
    %439 = arith.divf %437, %438 : vector<10x1xf32>
    %440 = vector.broadcast %439 : vector<10x1xf32> to vector<10x256xf32>
    %441 = arith.subf %433, %440 : vector<10x256xf32>
    %442 = arith.mulf %441, %441 : vector<10x256xf32>
    %cst_185 = arith.constant dense<0.000000e+00> : vector<10xf32>
    %443 = vector.multi_reduction <add>, %442, %cst_185 [1] : vector<10x256xf32> to vector<10xf32>
    %444 = vector.shape_cast %443 : vector<10xf32> to vector<10x1xf32>
    %cst_186 = arith.constant 2.560000e+02 : f32
    %445 = vector.broadcast %cst_186 : f32 to vector<10x1xf32>
    %446 = arith.divf %444, %445 : vector<10x1xf32>
    %cst_187 = arith.constant 9.99999974E-6 : f32
    %447 = vector.broadcast %cst_187 : f32 to vector<10x1xf32>
    %448 = arith.addf %446, %447 : vector<10x1xf32>
    %449 = math.rsqrt %448 : vector<10x1xf32>
    %450 = vector.broadcast %449 : vector<10x1xf32> to vector<10x256xf32>
    %451 = arith.mulf %441, %450 : vector<10x256xf32>
    %452 = vector.broadcast %434 : vector<1x256xf32> to vector<10x256xf32>
    %453 = arith.mulf %451, %452 : vector<10x256xf32>
    %454 = vector.broadcast %435 : vector<1x256xf32> to vector<10x256xf32>
    %455 = arith.addf %453, %454 : vector<10x256xf32>
    %c0_188 = arith.constant 0 : index
    %c0_189 = arith.constant 0 : index
    %c0_190 = arith.constant 0 : index
    %456 = vector.load %arg6[%c0_188, %c0_189, %c0_190] : memref<1x256x1024xf32, #tpu.memory_space<vmem>>, vector<1x256x1024xf32>
    %457 = vector.shape_cast %456 : vector<1x256x1024xf32> to vector<256x1024xf32>
    %cst_191 = arith.constant dense<0.000000e+00> : vector<10x1024xf32>
    %458 = tpu.matmul %455, %457, %cst_191 {dimension_numbers = #tpu.dot_dimension_numbers<[1], [0], [0], [1], [0, 0, 1, 1], [], []>} : vector<10x256xf32>, vector<256x1024xf32>, vector<10x1024xf32> -> vector<10x1024xf32>
    %459 = vector.broadcast %9 : vector<1x1024xf32> to vector<10x1024xf32>
    %460 = arith.addf %458, %459 : vector<10x1024xf32>
    %cst_192 = arith.constant 0.000000e+00 : f32
    %461 = vector.broadcast %cst_192 : f32 to vector<10x1024xf32>
    %462 = arith.maximumf %460, %461 : vector<10x1024xf32>
    %c0_193 = arith.constant 0 : index
    %c0_194 = arith.constant 0 : index
    %c0_195 = arith.constant 0 : index
    %463 = vector.load %arg8[%c0_193, %c0_194, %c0_195] : memref<1x1024x256xf32, #tpu.memory_space<vmem>>, vector<1x1024x256xf32>
    %464 = vector.shape_cast %463 : vector<1x1024x256xf32> to vector<1024x256xf32>
    %cst_196 = arith.constant dense<0.000000e+00> : vector<10x256xf32>
    %465 = tpu.matmul %462, %464, %cst_196 {dimension_numbers = #tpu.dot_dimension_numbers<[1], [0], [0], [1], [0, 0, 1, 1], [], []>} : vector<10x1024xf32>, vector<1024x256xf32>, vector<10x256xf32> -> vector<10x256xf32>
    %466 = vector.broadcast %7 : vector<1x256xf32> to vector<10x256xf32>
    %467 = arith.addf %465, %466 : vector<10x256xf32>
    %468 = arith.addf %455, %467 : vector<10x256xf32>
    %469 = vector.extract_strided_slice %6 {offsets = [4, 0], sizes = [1, 256], strides = [1, 1]} : vector<6x256xf32> to vector<1x256xf32>
    %470 = vector.extract_strided_slice %6 {offsets = [5, 0], sizes = [1, 256], strides = [1, 1]} : vector<6x256xf32> to vector<1x256xf32>
    %cst_197 = arith.constant dense<0.000000e+00> : vector<10xf32>
    %471 = vector.multi_reduction <add>, %468, %cst_197 [1] : vector<10x256xf32> to vector<10xf32>
    %472 = vector.shape_cast %471 : vector<10xf32> to vector<10x1xf32>
    %cst_198 = arith.constant 2.560000e+02 : f32
    %473 = vector.broadcast %cst_198 : f32 to vector<10x1xf32>
    %474 = arith.divf %472, %473 : vector<10x1xf32>
    %475 = vector.broadcast %474 : vector<10x1xf32> to vector<10x256xf32>
    %476 = arith.subf %468, %475 : vector<10x256xf32>
    %477 = arith.mulf %476, %476 : vector<10x256xf32>
    %cst_199 = arith.constant dense<0.000000e+00> : vector<10xf32>
    %478 = vector.multi_reduction <add>, %477, %cst_199 [1] : vector<10x256xf32> to vector<10xf32>
    %479 = vector.shape_cast %478 : vector<10xf32> to vector<10x1xf32>
    %cst_200 = arith.constant 2.560000e+02 : f32
    %480 = vector.broadcast %cst_200 : f32 to vector<10x1xf32>
    %481 = arith.divf %479, %480 : vector<10x1xf32>
    %cst_201 = arith.constant 9.99999974E-6 : f32
    %482 = vector.broadcast %cst_201 : f32 to vector<10x1xf32>
    %483 = arith.addf %481, %482 : vector<10x1xf32>
    %484 = math.rsqrt %483 : vector<10x1xf32>
    %485 = vector.broadcast %484 : vector<10x1xf32> to vector<10x256xf32>
    %486 = arith.mulf %476, %485 : vector<10x256xf32>
    %487 = vector.broadcast %469 : vector<1x256xf32> to vector<10x256xf32>
    %488 = arith.mulf %486, %487 : vector<10x256xf32>
    %489 = vector.broadcast %470 : vector<1x256xf32> to vector<10x256xf32>
    %490 = arith.addf %488, %489 : vector<10x256xf32>
    %c0_202 = arith.constant 0 : index
    %c0_203 = arith.constant 0 : index
    %491 = vector.load %arg12[%c0_202, %c0_203] : memref<10x256xf32, #tpu.memory_space<vmem>>, vector<10x256xf32>
    tpu.vector_store %arg12[%c0_202, %c0_203], %490 {strides = array<i32>} : memref<10x256xf32, #tpu.memory_space<vmem>>, vector<10x256xf32>,
    %c5_i32 = arith.constant 5 : i32
    %492 = arith.cmpi eq, %arg0, %c5_i32 : i32
    %493 = arith.extui %492 : i1 to i32
    %c0_i32_204 = arith.constant 0 : i32
    %494 = arith.cmpi ne, %493, %c0_i32_204 : i32
    scf.if %494 {
      %c0_205 = arith.constant 0 : index
      %c0_206 = arith.constant 0 : index
      %495 = vector.load %arg10[%c0_205, %c0_206] : memref<256x128xf32, #tpu.memory_space<vmem>>, vector<256x128xf32>
      %cst_207 = arith.constant dense<0.000000e+00> : vector<10x128xf32>
      %496 = tpu.matmul %490, %495, %cst_207 {dimension_numbers = #tpu.dot_dimension_numbers<[1], [0], [0], [1], [0, 0, 1, 1], [], []>} : vector<10x256xf32>, vector<256x128xf32>, vector<10x128xf32> -> vector<10x128xf32>
      %c0_208 = arith.constant 0 : index
      %c0_209 = arith.constant 0 : index
      %497 = vector.load %arg11[%c0_208, %c0_209] : memref<1x128xf32, #tpu.memory_space<vmem>>, vector<1x128xf32>
      %498 = vector.broadcast %497 : vector<1x128xf32> to vector<10x128xf32>
      %499 = arith.addf %496, %498 : vector<10x128xf32>
      %c0_210 = arith.constant 0 : index
      %c0_211 = arith.constant 0 : index
      %500 = vector.load %arg13[%c0_210, %c0_211] : memref<10x128xf32, #tpu.memory_space<vmem>>, vector<10x128xf32>
      tpu.vector_store %arg13[%c0_210, %c0_211], %499 {strides = array<i32>} : memref<10x128xf32, #tpu.memory_space<vmem>>, vector<10x128xf32>,
    } else {
    }
    return
  }
  func.func @transform_0(%arg0: i32) -> (i32, i32) {
    %c0_i32 = arith.constant 0 : i32
    %c0_i32_0 = arith.constant 0 : i32
    %c0_i32_1 = arith.constant 0 : i32
    return %c0_i32, %c0_i32_0 : i32, i32
  }
  func.func @transform_1(%arg0: i32) -> (i32, i32) {
    %c0_i32 = arith.constant 0 : i32
    %c0_i32_0 = arith.constant 0 : i32
    %c0_i32_1 = arith.constant 0 : i32
    return %c0_i32, %c0_i32_0 : i32, i32
  }
  func.func @transform_2(%arg0: i32) -> (i32, i32) {
    %c0_i32 = arith.constant 0 : i32
    %c0_i32_0 = arith.constant 0 : i32
    %c0_i32_1 = arith.constant 0 : i32
    return %c0_i32, %c0_i32_0 : i32, i32
  }
  func.func @transform_3(%arg0: i32) -> (i32, i32) {
    %c0_i32 = arith.constant 0 : i32
    %c0_i32_0 = arith.constant 0 : i32
    %c0_i32_1 = arith.constant 0 : i32
    return %c0_i32, %c0_i32_0 : i32, i32
  }
  func.func @transform_4(%arg0: i32) -> (i32, i32, i32) {
    %c0_i32 = arith.constant 0 : i32
    %c0_i32_0 = arith.constant 0 : i32
    %c0_i32_1 = arith.constant 0 : i32
    return %arg0, %c0_i32, %c0_i32_0 : i32, i32, i32
  }
  func.func @transform_5(%arg0: i32) -> (i32, i32, i32) {
    %c0_i32 = arith.constant 0 : i32
    %c0_i32_0 = arith.constant 0 : i32
    %c0_i32_1 = arith.constant 0 : i32
    return %arg0, %c0_i32, %c0_i32_0 : i32, i32, i32
  }
  func.func @transform_6(%arg0: i32) -> (i32, i32, i32) {
    %c0_i32 = arith.constant 0 : i32
    %c0_i32_0 = arith.constant 0 : i32
    %c0_i32_1 = arith.constant 0 : i32
    return %arg0, %c0_i32, %c0_i32_0 : i32, i32, i32
  }
  func.func @transform_7(%arg0: i32) -> (i32, i32, i32) {
    %c0_i32 = arith.constant 0 : i32
    %c0_i32_0 = arith.constant 0 : i32
    %c0_i32_1 = arith.constant 0 : i32
    return %arg0, %c0_i32, %c0_i32_0 : i32, i32, i32
  }
  func.func @transform_8(%arg0: i32) -> (i32, i32, i32) {
    %c0_i32 = arith.constant 0 : i32
    %c0_i32_0 = arith.constant 0 : i32
    %c0_i32_1 = arith.constant 0 : i32
    return %arg0, %c0_i32, %c0_i32_0 : i32, i32, i32
  }
  func.func @transform_9(%arg0: i32) -> (i32, i32) {
    %c0_i32 = arith.constant 0 : i32
    %c0_i32_0 = arith.constant 0 : i32
    %c0_i32_1 = arith.constant 0 : i32
    return %c0_i32, %c0_i32_0 : i32, i32
  }
  func.func @transform_10(%arg0: i32) -> (i32, i32) {
    %c0_i32 = arith.constant 0 : i32
    %c0_i32_0 = arith.constant 0 : i32
    %c0_i32_1 = arith.constant 0 : i32
    return %c0_i32, %c0_i32_0 : i32, i32
  }
  func.func @transform_11(%arg0: i32) -> (i32, i32) {
    %c0_i32 = arith.constant 0 : i32
    %c0_i32_0 = arith.constant 0 : i32
    %c0_i32_1 = arith.constant 0 : i32
    return %c0_i32, %c0_i32_0 : i32, i32
  }
  func.func @transform_12(%arg0: i32) -> (i32, i32) {
    %c0_i32 = arith.constant 0 : i32
    %c0_i32_0 = arith.constant 0 : i32
    %c0_i32_1 = arith.constant 0 : i32
    return %c0_i32, %c0_i32_0 : i32, i32
  }
}

</mosaic_0001>

<llo_original>
// kernel: tpu_custom_call.1
$region0: #{tpu_custom_call.1}
  #allocation0 [shape = 'u32[]', space=smem, size = 0x4, offset = 0x4, fixed_abs, tag = 'smem constant byte address 0x4 - core index']
  #allocation1 [shape = 'u32[144,128]{1,0:T(1,128)}', space=vmem, size = 0x12000, scoped, tag = 'internal scratch']
  %s0 = inlined_call_operand.hbm [shape: f32[10,256], index: 0, kind: input, shape index: {}]
  %s1 = inlined_call_operand.hbm [shape: f32[16,256], index: 1, kind: input, shape index: {}]
  %s2 = inlined_call_operand.hbm [shape: f32[10,10], index: 2, kind: input, shape index: {}]
  %s3 = inlined_call_operand.hbm [shape: f32[10,16], index: 3, kind: input, shape index: {}]
  %s4 = inlined_call_operand.hbm [shape: f32[6,256,2048], index: 4, kind: input, shape index: {}]
  %s5 = inlined_call_operand.hbm [shape: f32[6,256,1024], index: 5, kind: input, shape index: {}]
  %s6 = inlined_call_operand.hbm [shape: f32[6,1,1024], index: 6, kind: input, shape index: {}]
  %s7 = inlined_call_operand.hbm [shape: f32[6,1024,256], index: 7, kind: input, shape index: {}]
  %s8 = inlined_call_operand.hbm [shape: f32[6,15,256], index: 8, kind: input, shape index: {}]
  %s9 = inlined_call_operand.hbm [shape: f32[256,128], index: 9, kind: input, shape index: {}]
  %s10 = inlined_call_operand.hbm [shape: f32[1,128], index: 10, kind: input, shape index: {}]
  %s11 = inlined_call_operand.hbm [shape: f32[10,256], index: 11, kind: output, shape index: {0}]
  %s12 = inlined_call_operand.hbm [shape: f32[10,128], index: 12, kind: output, shape index: {1}]
  %13 = xla_tuple %s11, %s12
  %s14 = sld [smem:[#allocation0]]
  $region137: #{tpu_custom_call.1} parent=0
    _
  %s16 = ssub.s32 1, %s14
  %s17 = scalar_select 0, %s16, %s14
  $region1: #{tpu_custom_call.1} parent=0
    #allocation2 [shape = 'u8[16384]{0}', space=vmem, size = 0x4000, scoped, tag = 'input window, operand 0, single buffered']
    #allocation3 [shape = 's32[2]{0}', space=sflag, size = 0x8, scoped, tag = 'scoped memory for tpu_custom_call.1']
    #allocation4 [shape = 's32[2]{0}', space=sflag, size = 0x8, scoped, tag = 'scoped memory for tpu_custom_call.1']
    #allocation5 [shape = 'u8[16384]{0}', space=vmem, size = 0x4000, scoped, tag = 'input window, operand 1, single buffered']
    #allocation6 [shape = 's32[1]{0}', space=sflag, size = 0x4, scoped, tag = 'scoped memory for tpu_custom_call.1']
    #allocation7 [shape = 'u8[8192]{0}', space=vmem, size = 0x2000, scoped, tag = 'input window, operand 2, single buffered']
    #allocation8 [shape = 'u8[8192]{0}', space=vmem, size = 0x2000, scoped, tag = 'input window, operand 3, single buffered']
    #allocation9 [shape = 's32[1]{0}', space=sflag, size = 0x4, scoped, tag = 'scoped memory for tpu_custom_call.1']
    #allocation10 [shape = 'u8[4194304]{0}', space=vmem, size = 0x400000, scoped, tag = 'input window, operand 4']
    #allocation11 [shape = 'u8[2097152]{0}', space=vmem, size = 0x200000, scoped, tag = 'input window, operand 5']
    #allocation12 [shape = 'u8[8192]{0}', space=vmem, size = 0x2000, scoped, tag = 'input window, operand 6']
    #allocation13 [shape = 'u8[2097152]{0}', space=vmem, size = 0x200000, scoped, tag = 'input window, operand 7']
    #allocation14 [shape = 'u8[32768]{0}', space=vmem, size = 0x8000, scoped, tag = 'input window, operand 8']
    #allocation15 [shape = 'u8[131072]{0}', space=vmem, size = 0x20000, scoped, tag = 'input window, operand 9, single buffered']
    #allocation16 [shape = 'u8[512]{0}', space=vmem, size = 0x400, scoped, tag = 'input window, operand 10, single buffered']
    #allocation17 [shape = 'u8[16384]{0}', space=vmem, size = 0x4000, scoped, tag = 'output window, operand 0, single buffered']
    #allocation18 [shape = 'u8[8192]{0}', space=vmem, size = 0x2000, scoped, tag = 'output window, operand 1, single buffered']
    #allocation19 [shape = 's32[1]{0}', space=sflag, size = 0x4, scoped, tag = 'scoped memory for tpu_custom_call.1']
    %18 = vsyncpa [#allocation3], 0
    %19 = vsyncpa [#allocation6], 0
    %20 = vsyncpa [#allocation9], 0
    %21 = vsyncpa [#allocation4], 0
    %22 = vsyncpa [#allocation19], 0
    loop: start=0, step=1, limit=8
    $region2: #{tpu_custom_call.1} parent=1 // loop_pre_header
      _
    $region3: #{tpu_custom_call.1} parent=1 // loop_header
      %s24 = sphi 0, %s28
      %p25 = scmp.ge.s32.totalorder %s24, 8
      %s32 = sphi 0, %s32
      %s34 = sphi 0, %s32
      %s35 = sphi 0, %s34
      %s49 = sphi 0, %s35
      %s53 = sphi 0, %s53
      %s55 = sphi 0, %s53
      %s56 = sphi 0, %s55
      %s70 = sphi 0, %s56
      %s74 = sphi 0, %s74
      %s76 = sphi 0, %s74
      %s77 = sphi 0, %s76
      %s91 = sphi 0, %s77
      %s95 = sphi 0, %s95
      %s97 = sphi 0, %s95
      %s98 = sphi 0, %s97
      %s112 = sphi 0, %s98
      %s118 = sphi 0, %s120
      %s121 = sphi 0, %s118
      %s122 = sphi 0, %s121
      %s138 = sphi 0, %s122
      %s144 = sphi 0, %s146
      %s147 = sphi 0, %s144
      %s148 = sphi 0, %s147
      %s164 = sphi 0, %s148
      %s170 = sphi 0, %s172
      %s173 = sphi 0, %s170
      %s174 = sphi 0, %s173
      %s190 = sphi 0, %s174
      %s196 = sphi 0, %s198
      %s199 = sphi 0, %s196
      %s200 = sphi 0, %s199
      %s216 = sphi 0, %s200
      %s222 = sphi 0, %s224
      %s225 = sphi 0, %s222
      %s226 = sphi 0, %s225
      %s242 = sphi 0, %s226
      %s246 = sphi 0, %s246
      %s248 = sphi 0, %s246
      %s249 = sphi 0, %s248
      %s263 = sphi 0, %s249
      %s267 = sphi 0, %s267
      %s269 = sphi 0, %s267
      %s270 = sphi 0, %s269
      %s284 = sphi 0, %s270
      %s288 = sphi 0, %s288
      %s290 = sphi 0, %s288
      %s291 = sphi 0, %s290
      %s305 = sphi 0, %s291
      %s309 = sphi 0, %s309
      %s311 = sphi 0, %s309
      %s312 = sphi 0, %s311
      %s326 = sphi 0, %s312
    $region4: #{tpu_custom_call.1} parent=1 // loop_header_branch
      %27 = sbr.rel (%p25) target = $region8
    $region5: #{tpu_custom_call.1} parent=1 // loop_body
      %s29 = ssub.s32 %s24, 1
      %s30 = ssub.s32 %s24, 2
      %s31 = sadd.s32 %s24, 1
      %s33 = sadd.s32 %s32, 1
      %p36 = scmp.eq.s32.totalorder %s24, 5
      %p37 = scmp.ne.s32.totalorder %s32, %s34
      %p38 = scmp.eq.s32.totalorder %s24, 0
      %p39 = por %p37, %p38
      %p40 = scmp.ne.s32.totalorder %s32, %s34
      %p41 = scmp.eq.s32.totalorder %s29, 5
      %p42 = por %p40, %p41
      %p43 = scmp.ne.s32.totalorder %s34, %s35
      %p44 = scmp.eq.s32.totalorder %s29, 0
      %p45 = por %p43, %p44
      %p46 = scmp.ne.s32.totalorder %s34, %s35
      %p47 = scmp.eq.s32.totalorder %s30, 5
      %p48 = por %p46, %p47
      %p50 = scmp.ne.s32.totalorder %s35, %s49
      %p51 = scmp.eq.s32.totalorder %s30, 0
      %p52 = por %p50, %p51
      %s54 = sadd.s32 %s53, 1
      %p57 = scmp.eq.s32.totalorder %s24, 5
      %p58 = scmp.ne.s32.totalorder %s53, %s55
      %p59 = scmp.eq.s32.totalorder %s24, 0
      %p60 = por %p58, %p59
      %p61 = scmp.ne.s32.totalorder %s53, %s55
      %p62 = scmp.eq.s32.totalorder %s29, 5
      %p63 = por %p61, %p62
      %p64 = scmp.ne.s32.totalorder %s55, %s56
      %p65 = scmp.eq.s32.totalorder %s29, 0
      %p66 = por %p64, %p65
      %p67 = scmp.ne.s32.totalorder %s55, %s56
      %p68 = scmp.eq.s32.totalorder %s30, 5
      %p69 = por %p67, %p68
      %p71 = scmp.ne.s32.totalorder %s56, %s70
      %p72 = scmp.eq.s32.totalorder %s30, 0
      %p73 = por %p71, %p72
      %s75 = sadd.s32 %s74, 1
      %p78 = scmp.eq.s32.totalorder %s24, 5
      %p79 = scmp.ne.s32.totalorder %s74, %s76
      %p80 = scmp.eq.s32.totalorder %s24, 0
      %p81 = por %p79, %p80
      %p82 = scmp.ne.s32.totalorder %s74, %s76
      %p83 = scmp.eq.s32.totalorder %s29, 5
      %p84 = por %p82, %p83
      %p85 = scmp.ne.s32.totalorder %s76, %s77
      %p86 = scmp.eq.s32.totalorder %s29, 0
      %p87 = por %p85, %p86
      %p88 = scmp.ne.s32.totalorder %s76, %s77
      %p89 = scmp.eq.s32.totalorder %s30, 5
      %p90 = por %p88, %p89
      %p92 = scmp.ne.s32.totalorder %s77, %s91
      %p93 = scmp.eq.s32.totalorder %s30, 0
      %p94 = por %p92, %p93
      %s96 = sadd.s32 %s95, 1
      %p99 = scmp.eq.s32.totalorder %s24, 5
      %p100 = scmp.ne.s32.totalorder %s95, %s97
      %p101 = scmp.eq.s32.totalorder %s24, 0
      %p102 = por %p100, %p101
      %p103 = scmp.ne.s32.totalorder %s95, %s97
      %p104 = scmp.eq.s32.totalorder %s29, 5
      %p105 = por %p103, %p104
      %p106 = scmp.ne.s32.totalorder %s97, %s98
      %p107 = scmp.eq.s32.totalorder %s29, 0
      %p108 = por %p106, %p107
      %p109 = scmp.ne.s32.totalorder %s97, %s98
      %p110 = scmp.eq.s32.totalorder %s30, 5
      %p111 = por %p109, %p110
      %p113 = scmp.ne.s32.totalorder %s98, %s112
      %p114 = scmp.eq.s32.totalorder %s30, 0
      %p115 = por %p113, %p114
      %s116 = ssub.s32 %s24, %s31
      %p117 = scmp.eq.s32.totalorder %s116, 0
      %s119 = sadd.s32 %s118, 1
      %s120 = scalar_select %p117, %s118, %s119
      %p123 = pneg %p117
      %p124 = scmp.eq.s32.totalorder %s24, 5
      %p125 = por %p123, %p124
      %p126 = scmp.ne.s32.totalorder %s118, %s121
      %p127 = scmp.eq.s32.totalorder %s24, 0
      %p128 = por %p126, %p127
      %p129 = scmp.ne.s32.totalorder %s118, %s121
      %p130 = scmp.eq.s32.totalorder %s29, 5
      %p131 = por %p129, %p130
      %p132 = scmp.ne.s32.totalorder %s121, %s122
      %p133 = scmp.eq.s32.totalorder %s29, 0
      %p134 = por %p132, %p133
      %p135 = scmp.ne.s32.totalorder %s121, %s122
      %p136 = scmp.eq.s32.totalorder %s30, 5
      %p137 = por %p135, %p136
      %p139 = scmp.ne.s32.totalorder %s122, %s138
      %p140 = scmp.eq.s32.totalorder %s30, 0
      %p141 = por %p139, %p140
      %s142 = ssub.s32 %s24, %s31
      %p143 = scmp.eq.s32.totalorder %s142, 0
      %s145 = sadd.s32 %s144, 1
      %s146 = scalar_select %p143, %s144, %s145
      %p149 = pneg %p143
      %p150 = scmp.eq.s32.totalorder %s24, 5
      %p151 = por %p149, %p150
      %p152 = scmp.ne.s32.totalorder %s144, %s147
      %p153 = scmp.eq.s32.totalorder %s24, 0
      %p154 = por %p152, %p153
      %p155 = scmp.ne.s32.totalorder %s144, %s147
      %p156 = scmp.eq.s32.totalorder %s29, 5
      %p157 = por %p155, %p156
      %p158 = scmp.ne.s32.totalorder %s147, %s148
      %p159 = scmp.eq.s32.totalorder %s29, 0
      %p160 = por %p158, %p159
      %p161 = scmp.ne.s32.totalorder %s147, %s148
      %p162 = scmp.eq.s32.totalorder %s30, 5
      %p163 = por %p161, %p162
      %p165 = scmp.ne.s32.totalorder %s148, %s164
      %p166 = scmp.eq.s32.totalorder %s30, 0
      %p167 = por %p165, %p166
      %s168 = ssub.s32 %s24, %s31
      %p169 = scmp.eq.s32.totalorder %s168, 0
      %s171 = sadd.s32 %s170, 1
      %s172 = scalar_select %p169, %s170, %s171
      %p175 = pneg %p169
      %p176 = scmp.eq.s32.totalorder %s24, 5
      %p177 = por %p175, %p176
      %p178 = scmp.ne.s32.totalorder %s170, %s173
      %p179 = scmp.eq.s32.totalorder %s24, 0
      %p180 = por %p178, %p179
      %p181 = scmp.ne.s32.totalorder %s170, %s173
      %p182 = scmp.eq.s32.totalorder %s29, 5
      %p183 = por %p181, %p182
      %p184 = scmp.ne.s32.totalorder %s173, %s174
      %p185 = scmp.eq.s32.totalorder %s29, 0
      %p186 = por %p184, %p185
      %p187 = scmp.ne.s32.totalorder %s173, %s174
      %p188 = scmp.eq.s32.totalorder %s30, 5
      %p189 = por %p187, %p188
      %p191 = scmp.ne.s32.totalorder %s174, %s190
      %p192 = scmp.eq.s32.totalorder %s30, 0
      %p193 = por %p191, %p192
      %s194 = ssub.s32 %s24, %s31
      %p195 = scmp.eq.s32.totalorder %s194, 0
      %s197 = sadd.s32 %s196, 1
      %s198 = scalar_select %p195, %s196, %s197
      %p201 = pneg %p195
      %p202 = scmp.eq.s32.totalorder %s24, 5
      %p203 = por %p201, %p202
      %p204 = scmp.ne.s32.totalorder %s196, %s199
      %p205 = scmp.eq.s32.totalorder %s24, 0
      %p206 = por %p204, %p205
      %p207 = scmp.ne.s32.totalorder %s196, %s199
      %p208 = scmp.eq.s32.totalorder %s29, 5
      %p209 = por %p207, %p208
      %p210 = scmp.ne.s32.totalorder %s199, %s200
      %p211 = scmp.eq.s32.totalorder %s29, 0
      %p212 = por %p210, %p211
      %p213 = scmp.ne.s32.totalorder %s199, %s200
      %p214 = scmp.eq.s32.totalorder %s30, 5
      %p215 = por %p213, %p214
      %p217 = scmp.ne.s32.totalorder %s200, %s216
      %p218 = scmp.eq.s32.totalorder %s30, 0
      %p219 = por %p217, %p218
      %s220 = ssub.s32 %s24, %s31
      %p221 = scmp.eq.s32.totalorder %s220, 0
      %s223 = sadd.s32 %s222, 1
      %s224 = scalar_select %p221, %s222, %s223
      %p227 = pneg %p221
      %p228 = scmp.eq.s32.totalorder %s24, 5
      %p229 = por %p227, %p228
      %p230 = scmp.ne.s32.totalorder %s222, %s225
      %p231 = scmp.eq.s32.totalorder %s24, 0
      %p232 = por %p230, %p231
      %p233 = scmp.ne.s32.totalorder %s222, %s225
      %p234 = scmp.eq.s32.totalorder %s29, 5
      %p235 = por %p233, %p234
      %p236 = scmp.ne.s32.totalorder %s225, %s226
      %p237 = scmp.eq.s32.totalorder %s29, 0
      %p238 = por %p236, %p237
      %p239 = scmp.ne.s32.totalorder %s225, %s226
      %p240 = scmp.eq.s32.totalorder %s30, 5
      %p241 = por %p239, %p240
      %p243 = scmp.ne.s32.totalorder %s226, %s242
      %p244 = scmp.eq.s32.totalorder %s30, 0
      %p245 = por %p243, %p244
      %s247 = sadd.s32 %s246, 1
      %p250 = scmp.eq.s32.totalorder %s24, 5
      %p251 = scmp.ne.s32.totalorder %s246, %s248
      %p252 = scmp.eq.s32.totalorder %s24, 0
      %p253 = por %p251, %p252
      %p254 = scmp.ne.s32.totalorder %s246, %s248
      %p255 = scmp.eq.s32.totalorder %s29, 5
      %p256 = por %p254, %p255
      %p257 = scmp.ne.s32.totalorder %s248, %s249
      %p258 = scmp.eq.s32.totalorder %s29, 0
      %p259 = por %p257, %p258
      %p260 = scmp.ne.s32.totalorder %s248, %s249
      %p261 = scmp.eq.s32.totalorder %s30, 5
      %p262 = por %p260, %p261
      %p264 = scmp.ne.s32.totalorder %s249, %s263
      %p265 = scmp.eq.s32.totalorder %s30, 0
      %p266 = por %p264, %p265
      %s268 = sadd.s32 %s267, 1
      %p271 = scmp.eq.s32.totalorder %s24, 5
      %p272 = scmp.ne.s32.totalorder %s267, %s269
      %p273 = scmp.eq.s32.totalorder %s24, 0
      %p274 = por %p272, %p273
      %p275 = scmp.ne.s32.totalorder %s267, %s269
      %p276 = scmp.eq.s32.totalorder %s29, 5
      %p277 = por %p275, %p276
      %p278 = scmp.ne.s32.totalorder %s269, %s270
      %p279 = scmp.eq.s32.totalorder %s29, 0
      %p280 = por %p278, %p279
      %p281 = scmp.ne.s32.totalorder %s269, %s270
      %p282 = scmp.eq.s32.totalorder %s30, 5
      %p283 = por %p281, %p282
      %p285 = scmp.ne.s32.totalorder %s270, %s284
      %p286 = scmp.eq.s32.totalorder %s30, 0
      %p287 = por %p285, %p286
      %s289 = sadd.s32 %s288, 1
      %p292 = scmp.eq.s32.totalorder %s24, 5
      %p293 = scmp.ne.s32.totalorder %s288, %s290
      %p294 = scmp.eq.s32.totalorder %s24, 0
      %p295 = por %p293, %p294
      %p296 = scmp.ne.s32.totalorder %s288, %s290
      %p297 = scmp.eq.s32.totalorder %s29, 5
      %p298 = por %p296, %p297
      %p299 = scmp.ne.s32.totalorder %s290, %s291
      %p300 = scmp.eq.s32.totalorder %s29, 0
      %p301 = por %p299, %p300
      %p302 = scmp.ne.s32.totalorder %s290, %s291
      %p303 = scmp.eq.s32.totalorder %s30, 5
      %p304 = por %p302, %p303
      %p306 = scmp.ne.s32.totalorder %s291, %s305
      %p307 = scmp.eq.s32.totalorder %s30, 0
      %p308 = por %p306, %p307
      %s310 = sadd.s32 %s309, 1
      %p313 = scmp.eq.s32.totalorder %s24, 5
      %p314 = scmp.ne.s32.totalorder %s309, %s311
      %p315 = scmp.eq.s32.totalorder %s24, 0
      %p316 = por %p314, %p315
      %p317 = scmp.ne.s32.totalorder %s309, %s311
      %p318 = scmp.eq.s32.totalorder %s29, 5
      %p319 = por %p317, %p318
      %p320 = scmp.ne.s32.totalorder %s311, %s312
      %p321 = scmp.eq.s32.totalorder %s29, 0
      %p322 = por %p320, %p321
      %p323 = scmp.ne.s32.totalorder %s311, %s312
      %p324 = scmp.eq.s32.totalorder %s30, 5
      %p325 = por %p323, %p324
      %p327 = scmp.ne.s32.totalorder %s312, %s326
      %p328 = scmp.eq.s32.totalorder %s30, 0
      %p329 = por %p327, %p328
      %p330 = scmp.le.s32.totalorder 1, %s24
      %p331 = scmp.lt.s32.totalorder %s24, 7
      %p332 = pnand %p330, %p331
      %p333 = pneg %p332
      // Predicated region
      $region9: #{tpu_custom_call.1} parent=5 // pred_check
        _
      $region10: #{tpu_custom_call.1} parent=5 // pred_check_branch
        %335 = sbr.rel (%p332) target = $region12
      $region11: #{tpu_custom_call.1} parent=5 // pred_region
        %s336 = ssub.s32 %s24, 1
        // Predicated region
        $region13: #{tpu_custom_call.1} parent=11 // pred_check
          %p337 = pneg %p45
        $region14: #{tpu_custom_call.1} parent=11 // pred_check_branch
          %339 = sbr.rel (%p337) target = $region16
        $region15: #{tpu_custom_call.1} parent=11 // pred_region
          %s341 = ssub.s32 512, 512
          %342 = vsyncadd [#allocation3], %s341
          %s343 = sshll.u32 [#allocation2], 4
          %s344 = int_to_ptr.vmem [resolvable:$true] %s343
          %349 = dma.hbm_to_vmem [thread:$0]  %s0, 512, %s344, [#allocation3], 256, 256, 16
        $region16: #{tpu_custom_call.1} parent=11 // pred_fallthru
          _
        // Predicated region
        $region17: #{tpu_custom_call.1} parent=11 // pred_check
          %p350 = pneg %p66
        $region18: #{tpu_custom_call.1} parent=11 // pred_check_branch
          %352 = sbr.rel (%p350) target = $region20
        $region19: #{tpu_custom_call.1} parent=11 // pred_region
          %s354 = ssub.s32 512, 512
          %355 = vsyncadd [#allocation6], %s354
          %s356 = sshll.u32 [#allocation5], 4
          %s357 = int_to_ptr.vmem [resolvable:$true] %s356
          %362 = dma.hbm_to_vmem [thread:$0]  %s1, 512, %s357, [#allocation6], 256, 256, 16
        $region20: #{tpu_custom_call.1} parent=11 // pred_fallthru
          _
        // Predicated region
        $region21: #{tpu_custom_call.1} parent=11 // pred_check
          %p363 = pneg %p87
        $region22: #{tpu_custom_call.1} parent=11 // pred_check_branch
          %365 = sbr.rel (%p363) target = $region24
        $region23: #{tpu_custom_call.1} parent=11 // pred_region
          %s367 = ssub.s32 256, 256
          %368 = vsyncadd [#allocation6], %s367
          %s369 = sshll.u32 [#allocation7], 4
          %s370 = int_to_ptr.vmem [resolvable:$true] %s369
          %375 = dma.hbm_to_vmem [thread:$0]  %s2, 256, %s370, [#allocation6], 128, 128, 8
        $region24: #{tpu_custom_call.1} parent=11 // pred_fallthru
          _
        // Predicated region
        $region25: #{tpu_custom_call.1} parent=11 // pred_check
          %p376 = pneg %p108
        $region26: #{tpu_custom_call.1} parent=11 // pred_check_branch
          %378 = sbr.rel (%p376) target = $region28
        $region27: #{tpu_custom_call.1} parent=11 // pred_region
          %s380 = ssub.s32 256, 256
          %381 = vsyncadd [#allocation9], %s380
          %s382 = sshll.u32 [#allocation8], 4
          %s383 = int_to_ptr.vmem [resolvable:$true] %s382
          %388 = dma.hbm_to_vmem [thread:$0]  %s3, 256, %s383, [#allocation9], 128, 128, 8
        $region28: #{tpu_custom_call.1} parent=11 // pred_fallthru
          _
        // Predicated region
        $region29: #{tpu_custom_call.1} parent=11 // pred_check
          %p389 = pneg %p259
        $region30: #{tpu_custom_call.1} parent=11 // pred_check_branch
          %391 = sbr.rel (%p389) target = $region32
        $region31: #{tpu_custom_call.1} parent=11 // pred_region
          %s393 = ssub.s32 4096, 4096
          %394 = vsyncadd [#allocation6], %s393
          %s395 = sshll.u32 [#allocation15], 4
          %s396 = int_to_ptr.vmem [resolvable:$true] %s395
          %401 = dma.hbm_to_vmem [thread:$0]  %s9, 4096, %s396, [#allocation6], 128, 128, 8
        $region32: #{tpu_custom_call.1} parent=11 // pred_fallthru
          _
        // Predicated region
        $region33: #{tpu_custom_call.1} parent=11 // pred_check
          %p402 = pneg %p280
        $region34: #{tpu_custom_call.1} parent=11 // pred_check_branch
          %404 = sbr.rel (%p402) target = $region36
        $region35: #{tpu_custom_call.1} parent=11 // pred_region
          %s406 = ssub.s32 16, 16
          %407 = vsyncadd [#allocation9], %s406
          %s409 = sshll.u32 [#allocation16], 4
          %s410 = int_to_ptr.vmem [resolvable:$true] %s409
          %412 = dma.hbm_to_vmem [thread:$0]  %s10, 16, %s410, [#allocation9]
        $region36: #{tpu_custom_call.1} parent=11 // pred_fallthru
          _
      $region12: #{tpu_custom_call.1} parent=5 // pred_fallthru
        _
      %p413 = scmp.lt.s32.totalorder %s24, 6
      // Predicated region
      $region37: #{tpu_custom_call.1} parent=5 // pred_check
        %p414 = pneg %p413
      $region38: #{tpu_custom_call.1} parent=5 // pred_check_branch
        %416 = sbr.rel (%p414) target = $region40
      $region39: #{tpu_custom_call.1} parent=5 // pred_region
        // Predicated region
        $region41: #{tpu_custom_call.1} parent=39 // pred_check
          %p417 = pneg %p128
        $region42: #{tpu_custom_call.1} parent=39 // pred_check_branch
          %419 = sbr.rel (%p417) target = $region44
        $region43: #{tpu_custom_call.1} parent=39 // pred_region
          %s420 = sand.u32 %s24, 1
          %s421 = scalar_lea.sflag [#allocation3], %s420
          %s422 = sand.u32 %s118, 1
          %s423 = smul.addr %s422, 4096
          %s424 = scalar_lea.vmem [#allocation10], %s423
          %s426 = ssub.s32 65536, 65536
          %427 = vsyncadd %s421, %s426
          %s428 = smul.addr %s24, 512
          %s429 = smul.addr %s428, 128
          %s430 = scalar_lea.hbm %s4, %s429
          %s431 = sshll.u32 %s424, 4
          %s432 = int_to_ptr.vmem [resolvable:$true] %s431
          %437 = dma.hbm_to_vmem [thread:$0]  %s430, 65536, %s432, %s421, 2048, 2048, 128
        $region44: #{tpu_custom_call.1} parent=39 // pred_fallthru
          _
        // Predicated region
        $region45: #{tpu_custom_call.1} parent=39 // pred_check
          %p438 = pneg %p154
        $region46: #{tpu_custom_call.1} parent=39 // pred_check_branch
          %440 = sbr.rel (%p438) target = $region48
        $region47: #{tpu_custom_call.1} parent=39 // pred_region
          %s441 = sand.u32 %s24, 1
          %s442 = scalar_lea.sflag [#allocation3], %s441
          %s443 = sand.u32 %s144, 1
          %s444 = smul.addr %s443, 2048
          %s445 = scalar_lea.vmem [#allocation11], %s444
          %s447 = ssub.s32 32768, 32768
          %448 = vsyncadd %s442, %s447
          %s449 = smul.addr %s24, 256
          %s450 = smul.addr %s449, 128
          %s451 = scalar_lea.hbm %s5, %s450
          %s452 = sshll.u32 %s445, 4
          %s453 = int_to_ptr.vmem [resolvable:$true] %s452
          %458 = dma.hbm_to_vmem [thread:$0]  %s451, 32768, %s453, %s442, 1024, 1024, 64
        $region48: #{tpu_custom_call.1} parent=39 // pred_fallthru
          _
        // Predicated region
        $region49: #{tpu_custom_call.1} parent=39 // pred_check
          %p459 = pneg %p180
        $region50: #{tpu_custom_call.1} parent=39 // pred_check_branch
          %461 = sbr.rel (%p459) target = $region52
        $region51: #{tpu_custom_call.1} parent=39 // pred_region
          %s462 = sand.u32 %s24, 1
          %s463 = scalar_lea.sflag [#allocation3], %s462
          %s464 = sand.u32 %s170, 1
          %s465 = smul.addr %s464, 8
          %s466 = scalar_lea.vmem [#allocation12], %s465
          %s468 = ssub.s32 128, 128
          %469 = vsyncadd %s463, %s468
          %s470 = smul.addr %s24, 8
          %s471 = smul.addr %s470, 16
          %s472 = scalar_lea.hbm %s6, %s471
          %s474 = sshll.u32 %s466, 4
          %s475 = int_to_ptr.vmem [resolvable:$true] %s474
          %477 = dma.hbm_to_vmem [thread:$0]  %s472, 128, %s475, %s463
        $region52: #{tpu_custom_call.1} parent=39 // pred_fallthru
          _
        // Predicated region
        $region53: #{tpu_custom_call.1} parent=39 // pred_check
          %p478 = pneg %p206
        $region54: #{tpu_custom_call.1} parent=39 // pred_check_branch
          %480 = sbr.rel (%p478) target = $region56
        $region55: #{tpu_custom_call.1} parent=39 // pred_region
          %s481 = sand.u32 %s24, 1
          %s482 = scalar_lea.sflag [#allocation3], %s481
          %s483 = sand.u32 %s196, 1
          %s484 = smul.addr %s483, 2048
          %s485 = scalar_lea.vmem [#allocation13], %s484
          %s487 = ssub.s32 32768, 32768
          %488 = vsyncadd %s482, %s487
          %s489 = smul.addr %s24, 256
          %s490 = smul.addr %s489, 128
          %s491 = scalar_lea.hbm %s7, %s490
          %s492 = sshll.u32 %s485, 4
          %s493 = int_to_ptr.vmem [resolvable:$true] %s492
          %498 = dma.hbm_to_vmem [thread:$0]  %s491, 32768, %s493, %s482, 256, 256, 16
        $region56: #{tpu_custom_call.1} parent=39 // pred_fallthru
          _
        // Predicated region
        $region57: #{tpu_custom_call.1} parent=39 // pred_check
          %p499 = pneg %p232
        $region58: #{tpu_custom_call.1} parent=39 // pred_check_branch
          %501 = sbr.rel (%p499) target = $region60
        $region59: #{tpu_custom_call.1} parent=39 // pred_region
          %s502 = sand.u32 %s24, 1
          %s503 = scalar_lea.sflag [#allocation3], %s502
          %s504 = sand.u32 %s222, 1
          %s505 = smul.addr %s504, 32
          %s506 = scalar_lea.vmem [#allocation14], %s505
          %s508 = ssub.s32 512, 512
          %509 = vsyncadd %s503, %s508
          %s510 = smul.addr %s24, 4
          %s511 = smul.addr %s510, 128
          %s512 = scalar_lea.hbm %s8, %s511
          %s513 = sshll.u32 %s506, 4
          %s514 = int_to_ptr.vmem [resolvable:$true] %s513
          %519 = dma.hbm_to_vmem [thread:$0]  %s512, 512, %s514, %s503, 256, 256, 16
        $region60: #{tpu_custom_call.1} parent=39 // pred_fallthru
          _
      $region40: #{tpu_custom_call.1} parent=5 // pred_fallthru
        _
      %p520 = scmp.le.s32.totalorder 1, %s24
      %p521 = scmp.lt.s32.totalorder %s24, 7
      %p522 = pnand %p520, %p521
      %p523 = pneg %p522
      // Predicated region
      $region61: #{tpu_custom_call.1} parent=5 // pred_check
        _
      $region62: #{tpu_custom_call.1} parent=5 // pred_check_branch
        %525 = sbr.rel (%p522) target = $region64
      $region63: #{tpu_custom_call.1} parent=5 // pred_region
        %s526 = ssub.s32 %s24, 1
        // Predicated region
        $region65: #{tpu_custom_call.1} parent=63 // pred_check
          %p527 = pneg %p45
        $region66: #{tpu_custom_call.1} parent=63 // pred_check_branch
          %529 = sbr.rel (%p527) target = $region68
        $region67: #{tpu_custom_call.1} parent=63 // pred_region
          %530 = dma.done [#allocation3], 512
        $region68: #{tpu_custom_call.1} parent=63 // pred_fallthru
          _
        // Predicated region
        $region69: #{tpu_custom_call.1} parent=63 // pred_check
          %p531 = pneg %p66
        $region70: #{tpu_custom_call.1} parent=63 // pred_check_branch
          %533 = sbr.rel (%p531) target = $region72
        $region71: #{tpu_custom_call.1} parent=63 // pred_region
          %534 = dma.done [#allocation6], 512
        $region72: #{tpu_custom_call.1} parent=63 // pred_fallthru
          _
        // Predicated region
        $region73: #{tpu_custom_call.1} parent=63 // pred_check
          %p535 = pneg %p87
        $region74: #{tpu_custom_call.1} parent=63 // pred_check_branch
          %537 = sbr.rel (%p535) target = $region76
        $region75: #{tpu_custom_call.1} parent=63 // pred_region
          %538 = dma.done [#allocation6], 256
        $region76: #{tpu_custom_call.1} parent=63 // pred_fallthru
          _
        // Predicated region
        $region77: #{tpu_custom_call.1} parent=63 // pred_check
          %p539 = pneg %p108
        $region78: #{tpu_custom_call.1} parent=63 // pred_check_branch
          %541 = sbr.rel (%p539) target = $region80
        $region79: #{tpu_custom_call.1} parent=63 // pred_region
          %542 = dma.done [#allocation9], 256
        $region80: #{tpu_custom_call.1} parent=63 // pred_fallthru
          _
        %s543 = sand.u32 %s29, 1
        %s544 = scalar_lea.sflag [#allocation3], %s543
        %s545 = sand.u32 %s121, 1
        %s546 = smul.addr %s545, 4096
        %s547 = scalar_lea.vmem [#allocation10], %s546
        // Predicated region
        $region81: #{tpu_custom_call.1} parent=63 // pred_check
          %p548 = pneg %p134
        $region82: #{tpu_custom_call.1} parent=63 // pred_check_branch
          %550 = sbr.rel (%p548) target = $region84
        $region83: #{tpu_custom_call.1} parent=63 // pred_region
          %551 = dma.done %s544, 65536
        $region84: #{tpu_custom_call.1} parent=63 // pred_fallthru
          _
        %s552 = sand.u32 %s29, 1
        %s553 = scalar_lea.sflag [#allocation3], %s552
        %s554 = sand.u32 %s147, 1
        %s555 = smul.addr %s554, 2048
        %s556 = scalar_lea.vmem [#allocation11], %s555
        // Predicated region
        $region85: #{tpu_custom_call.1} parent=63 // pred_check
          %p557 = pneg %p160
        $region86: #{tpu_custom_call.1} parent=63 // pred_check_branch
          %559 = sbr.rel (%p557) target = $region88
        $region87: #{tpu_custom_call.1} parent=63 // pred_region
          %560 = dma.done %s553, 32768
        $region88: #{tpu_custom_call.1} parent=63 // pred_fallthru
          _
        %s561 = sand.u32 %s29, 1
        %s562 = scalar_lea.sflag [#allocation3], %s561
        %s563 = sand.u32 %s173, 1
        %s564 = smul.addr %s563, 8
        %s565 = scalar_lea.vmem [#allocation12], %s564
        // Predicated region
        $region89: #{tpu_custom_call.1} parent=63 // pred_check
          %p566 = pneg %p186
        $region90: #{tpu_custom_call.1} parent=63 // pred_check_branch
          %568 = sbr.rel (%p566) target = $region92
        $region91: #{tpu_custom_call.1} parent=63 // pred_region
          %569 = dma.done %s562, 128
        $region92: #{tpu_custom_call.1} parent=63 // pred_fallthru
          _
        %s570 = sand.u32 %s29, 1
        %s571 = scalar_lea.sflag [#allocation3], %s570
        %s572 = sand.u32 %s199, 1
        %s573 = smul.addr %s572, 2048
        %s574 = scalar_lea.vmem [#allocation13], %s573
        // Predicated region
        $region93: #{tpu_custom_call.1} parent=63 // pred_check
          %p575 = pneg %p212
        $region94: #{tpu_custom_call.1} parent=63 // pred_check_branch
          %577 = sbr.rel (%p575) target = $region96
        $region95: #{tpu_custom_call.1} parent=63 // pred_region
          %578 = dma.done %s571, 32768
        $region96: #{tpu_custom_call.1} parent=63 // pred_fallthru
          _
        %s579 = sand.u32 %s29, 1
        %s580 = scalar_lea.sflag [#allocation3], %s579
        %s581 = sand.u32 %s225, 1
        %s582 = smul.addr %s581, 32
        %s583 = scalar_lea.vmem [#allocation14], %s582
        // Predicated region
        $region97: #{tpu_custom_call.1} parent=63 // pred_check
          %p584 = pneg %p238
        $region98: #{tpu_custom_call.1} parent=63 // pred_check_branch
          %586 = sbr.rel (%p584) target = $region100
        $region99: #{tpu_custom_call.1} parent=63 // pred_region
          %587 = dma.done %s580, 512
        $region100: #{tpu_custom_call.1} parent=63 // pred_fallthru
          _
        // Predicated region
        $region101: #{tpu_custom_call.1} parent=63 // pred_check
          %p588 = pneg %p259
        $region102: #{tpu_custom_call.1} parent=63 // pred_check_branch
          %590 = sbr.rel (%p588) target = $region104
        $region103: #{tpu_custom_call.1} parent=63 // pred_region
          %591 = dma.done [#allocation6], 4096
        $region104: #{tpu_custom_call.1} parent=63 // pred_fallthru
          _
        // Predicated region
        $region105: #{tpu_custom_call.1} parent=63 // pred_check
          %p592 = pneg %p280
        $region106: #{tpu_custom_call.1} parent=63 // pred_check_branch
          %594 = sbr.rel (%p592) target = $region108
        $region107: #{tpu_custom_call.1} parent=63 // pred_region
          %595 = dma.done [#allocation9], 16
        $region108: #{tpu_custom_call.1} parent=63 // pred_fallthru
          _
        %p596 = pneg %p45
        %p597 = pneg %p42
        %p598 = pneg %p66
        %p599 = pneg %p63
        %p600 = pneg %p87
        %p601 = pneg %p84
        %p602 = pneg %p108
        %p603 = pneg %p105
        %s604 = sand.u32 %s29, 1
        %s605 = scalar_lea.sflag [#allocation3], %s604
        %s606 = sand.u32 %s121, 1
        %s607 = smul.addr %s606, 4096
        %s608 = scalar_lea.vmem [#allocation10], %s607
        %p609 = pneg %p134
        %p610 = pneg %p131
        %s611 = sand.u32 %s29, 1
        %s612 = scalar_lea.sflag [#allocation3], %s611
        %s613 = sand.u32 %s147, 1
        %s614 = smul.addr %s613, 2048
        %s615 = scalar_lea.vmem [#allocation11], %s614
        %p616 = pneg %p160
        %p617 = pneg %p157
        %s618 = sand.u32 %s29, 1
        %s619 = scalar_lea.sflag [#allocation3], %s618
        %s620 = sand.u32 %s173, 1
        %s621 = smul.addr %s620, 8
        %s622 = scalar_lea.vmem [#allocation12], %s621
        %p623 = pneg %p186
        %p624 = pneg %p183
        %s625 = sand.u32 %s29, 1
        %s626 = scalar_lea.sflag [#allocation3], %s625
        %s627 = sand.u32 %s199, 1
        %s628 = smul.addr %s627, 2048
        %s629 = scalar_lea.vmem [#allocation13], %s628
        %p630 = pneg %p212
        %p631 = pneg %p209
        %s632 = sand.u32 %s29, 1
        %s633 = scalar_lea.sflag [#allocation3], %s632
        %s634 = sand.u32 %s225, 1
        %s635 = smul.addr %s634, 32
        %s636 = scalar_lea.vmem [#allocation14], %s635
        %p637 = pneg %p238
        %p638 = pneg %p235
        %p639 = pneg %p259
        %p640 = pneg %p256
        %p641 = pneg %p280
        %p642 = pneg %p277
        %p643 = pneg %p301
        %p644 = pneg %p298
        %p645 = pneg %p322
        %p646 = pneg %p319
        %p647 = scmp.eq.s32.totalorder %s29, 0
        // Predicated region
        $region109: #{tpu_custom_call.1} parent=63 // pred_check
          %p648 = pneg %p647
        $region110: #{tpu_custom_call.1} parent=63 // pred_check_branch
          %650 = sbr.rel (%p648) target = $region112
        $region111: #{tpu_custom_call.1} parent=63 // pred_region
          %v651 = vld [vmem:[#allocation2] sm:$0xff]
          %v652 = vld [vmem:[#allocation2 + $0x8] sm:$0xff]
          %v653 = vld [vmem:[#allocation2 + $0x10] sm:$0x3]
          %v654 = vld [vmem:[#allocation2 + $0x18] sm:$0x3]
          %655 = vst [vmem:[#allocation17] sm:$0xff] %v651
          %656 = vst [vmem:[#allocation17 + $0x8] sm:$0xff] %v652
          %657 = vst [vmem:[#allocation17 + $0x10] sm:$0x3] %v653
          %658 = vst [vmem:[#allocation17 + $0x18] sm:$0x3] %v654
        $region112: #{tpu_custom_call.1} parent=63 // pred_fallthru
          _
        %v659 = vld [vmem:[%s583] sm:$0xff]
        %v660 = vld [vmem:[%s583 + $0x8] sm:$0xff]
        %v661 = vld [vmem:[%s583 + $0x10] sm:$0x7f]
        %v662 = vld [vmem:[%s583 + $0x18] sm:$0x7f]
        %v663 = vld [vmem:[%s565] sm:$0xff]
        %v664 = vld [vmem:[#allocation7] sm:$0xff]
        %v665 = vld [vmem:[#allocation7 + $0x8] sm:$0x3]
        %vm666 = vcmp.ne.f32.partialorder %v664, 0.0
        %vm667 = vcmp.ne.f32.partialorder %v665, 0.0
        %v668 = vld [vmem:[#allocation8] sm:$0xff]
        %v669 = vld [vmem:[#allocation8 + $0x8] sm:$0x3]
        %vm670 = vcmp.ne.f32.partialorder %v668, 0.0
        %vm671 = vcmp.ne.f32.partialorder %v669, 0.0
        %v672 = vld [vmem:[#allocation5] sm:$0xff]
        %v673 = vld [vmem:[#allocation5 + $0x8] sm:$0xff]
        %v674 = vld [vmem:[#allocation5 + $0x10] sm:$0xff]
        %v675 = vld [vmem:[#allocation5 + $0x18] sm:$0xff]
        %v676 = vld [vmem:[#allocation17] sm:$0xff]
        %v677 = vld [vmem:[#allocation17 + $0x8] sm:$0xff]
        %v678 = vld [vmem:[#allocation17 + $0x10] sm:$0x3]
        %v679 = vld [vmem:[#allocation17 + $0x18] sm:$0x3]
        %v680 = vld [vmem:[%s547] sm:$0xff]
        %v681 = vld [vmem:[%s547 + $0x8] sm:$0xff]
        %v682 = vld [vmem:[%s547 + $0x10] sm:$0xff]
        %v683 = vld [vmem:[%s547 + $0x18] sm:$0xff]
        %v684 = vld [vmem:[%s547 + $0x20] sm:$0xff]
        %v685 = vld [vmem:[%s547 + $0x28] sm:$0xff]
        %v686 = vld [vmem:[%s547 + $0x80] sm:$0xff]
        %v687 = vld [vmem:[%s547 + $0x88] sm:$0xff]
        %v688 = vld [vmem:[%s547 + $0x90] sm:$0xff]
        %v689 = vld [vmem:[%s547 + $0x98] sm:$0xff]
        %v690 = vld [vmem:[%s547 + $0xa0] sm:$0xff]
        %v691 = vld [vmem:[%s547 + $0xa8] sm:$0xff]
        %v692 = vld [vmem:[%s547 + $0x100] sm:$0xff]
        %v693 = vld [vmem:[%s547 + $0x108] sm:$0xff]
        %v694 = vld [vmem:[%s547 + $0x110] sm:$0xff]
        %v695 = vld [vmem:[%s547 + $0x118] sm:$0xff]
        %v696 = vld [vmem:[%s547 + $0x120] sm:$0xff]
        %v697 = vld [vmem:[%s547 + $0x128] sm:$0xff]
        %v698 = vld [vmem:[%s547 + $0x180] sm:$0xff]
        %v699 = vld [vmem:[%s547 + $0x188] sm:$0xff]
        %v700 = vld [vmem:[%s547 + $0x190] sm:$0xff]
        %v701 = vld [vmem:[%s547 + $0x198] sm:$0xff]
        %v702 = vld [vmem:[%s547 + $0x1a0] sm:$0xff]
        %v703 = vld [vmem:[%s547 + $0x1a8] sm:$0xff]
        %v704 = vld [vmem:[%s547 + $0x200] sm:$0xff]
        %v705 = vld [vmem:[%s547 + $0x208] sm:$0xff]
        %v706 = vld [vmem:[%s547 + $0x210] sm:$0xff]
        %v707 = vld [vmem:[%s547 + $0x218] sm:$0xff]
        %v708 = vld [vmem:[%s547 + $0x220] sm:$0xff]
        %v709 = vld [vmem:[%s547 + $0x228] sm:$0xff]
        %v710 = vld [vmem:[%s547 + $0x280] sm:$0xff]
        %v711 = vld [vmem:[%s547 + $0x288] sm:$0xff]
        %v712 = vld [vmem:[%s547 + $0x290] sm:$0xff]
        %v713 = vld [vmem:[%s547 + $0x298] sm:$0xff]
        %v714 = vld [vmem:[%s547 + $0x2a0] sm:$0xff]
        %v715 = vld [vmem:[%s547 + $0x2a8] sm:$0xff]
        %v716 = vld [vmem:[%s547 + $0x300] sm:$0xff]
        %v717 = vld [vmem:[%s547 + $0x308] sm:$0xff]
        %v718 = vld [vmem:[%s547 + $0x310] sm:$0xff]
        %v719 = vld [vmem:[%s547 + $0x318] sm:$0xff]
        %v720 = vld [vmem:[%s547 + $0x320] sm:$0xff]
        %v721 = vld [vmem:[%s547 + $0x328] sm:$0xff]
        %v722 = vld [vmem:[%s547 + $0x380] sm:$0xff]
        %v723 = vld [vmem:[%s547 + $0x388] sm:$0xff]
        %v724 = vld [vmem:[%s547 + $0x390] sm:$0xff]
        %v725 = vld [vmem:[%s547 + $0x398] sm:$0xff]
        %v726 = vld [vmem:[%s547 + $0x3a0] sm:$0xff]
        %v727 = vld [vmem:[%s547 + $0x3a8] sm:$0xff]
        %v728 = vld [vmem:[%s547 + $0x400] sm:$0xff]
        %v729 = vld [vmem:[%s547 + $0x408] sm:$0xff]
        %v730 = vld [vmem:[%s547 + $0x410] sm:$0xff]
        %v731 = vld [vmem:[%s547 + $0x418] sm:$0xff]
        %v732 = vld [vmem:[%s547 + $0x420] sm:$0xff]
        %v733 = vld [vmem:[%s547 + $0x428] sm:$0xff]
        %v734 = vld [vmem:[%s547 + $0x480] sm:$0xff]
        %v735 = vld [vmem:[%s547 + $0x488] sm:$0xff]
        %v736 = vld [vmem:[%s547 + $0x490] sm:$0xff]
        %v737 = vld [vmem:[%s547 + $0x498] sm:$0xff]
        %v738 = vld [vmem:[%s547 + $0x4a0] sm:$0xff]
        %v739 = vld [vmem:[%s547 + $0x4a8] sm:$0xff]
        %v740 = vld [vmem:[%s547 + $0x500] sm:$0xff]
        %v741 = vld [vmem:[%s547 + $0x508] sm:$0xff]
        %v742 = vld [vmem:[%s547 + $0x510] sm:$0xff]
        %v743 = vld [vmem:[%s547 + $0x518] sm:$0xff]
        %v744 = vld [vmem:[%s547 + $0x520] sm:$0xff]
        %v745 = vld [vmem:[%s547 + $0x528] sm:$0xff]
        %v746 = vld [vmem:[%s547 + $0x580] sm:$0xff]
        %v747 = vld [vmem:[%s547 + $0x588] sm:$0xff]
        %v748 = vld [vmem:[%s547 + $0x590] sm:$0xff]
        %v749 = vld [vmem:[%s547 + $0x598] sm:$0xff]
        %v750 = vld [vmem:[%s547 + $0x5a0] sm:$0xff]
        %v751 = vld [vmem:[%s547 + $0x5a8] sm:$0xff]
        %v752 = vld [vmem:[%s547 + $0x600] sm:$0xff]
        %v753 = vld [vmem:[%s547 + $0x608] sm:$0xff]
        %v754 = vld [vmem:[%s547 + $0x610] sm:$0xff]
        %v755 = vld [vmem:[%s547 + $0x618] sm:$0xff]
        %v756 = vld [vmem:[%s547 + $0x620] sm:$0xff]
        %v757 = vld [vmem:[%s547 + $0x628] sm:$0xff]
        %v758 = vld [vmem:[%s547 + $0x680] sm:$0xff]
        %v759 = vld [vmem:[%s547 + $0x688] sm:$0xff]
        %v760 = vld [vmem:[%s547 + $0x690] sm:$0xff]
        %v761 = vld [vmem:[%s547 + $0x698] sm:$0xff]
        %v762 = vld [vmem:[%s547 + $0x6a0] sm:$0xff]
        %v763 = vld [vmem:[%s547 + $0x6a8] sm:$0xff]
        %v764 = vld [vmem:[%s547 + $0x700] sm:$0xff]
        %v765 = vld [vmem:[%s547 + $0x708] sm:$0xff]
        %v766 = vld [vmem:[%s547 + $0x710] sm:$0xff]
        %v767 = vld [vmem:[%s547 + $0x718] sm:$0xff]
        %v768 = vld [vmem:[%s547 + $0x720] sm:$0xff]
        %v769 = vld [vmem:[%s547 + $0x728] sm:$0xff]
        %v770 = vld [vmem:[%s547 + $0x780] sm:$0xff]
        %v771 = vld [vmem:[%s547 + $0x788] sm:$0xff]
        %v772 = vld [vmem:[%s547 + $0x790] sm:$0xff]
        %v773 = vld [vmem:[%s547 + $0x798] sm:$0xff]
        %v774 = vld [vmem:[%s547 + $0x7a0] sm:$0xff]
        %v775 = vld [vmem:[%s547 + $0x7a8] sm:$0xff]
        %v776 = vld [vmem:[%s547 + $0x800] sm:$0xff]
        %v777 = vld [vmem:[%s547 + $0x808] sm:$0xff]
        %v778 = vld [vmem:[%s547 + $0x810] sm:$0xff]
        %v779 = vld [vmem:[%s547 + $0x818] sm:$0xff]
        %v780 = vld [vmem:[%s547 + $0x820] sm:$0xff]
        %v781 = vld [vmem:[%s547 + $0x828] sm:$0xff]
        %v782 = vld [vmem:[%s547 + $0x880] sm:$0xff]
        %v783 = vld [vmem:[%s547 + $0x888] sm:$0xff]
        %v784 = vld [vmem:[%s547 + $0x890] sm:$0xff]
        %v785 = vld [vmem:[%s547 + $0x898] sm:$0xff]
        %v786 = vld [vmem:[%s547 + $0x8a0] sm:$0xff]
        %v787 = vld [vmem:[%s547 + $0x8a8] sm:$0xff]
        %v788 = vld [vmem:[%s547 + $0x900] sm:$0xff]
        %v789 = vld [vmem:[%s547 + $0x908] sm:$0xff]
        %v790 = vld [vmem:[%s547 + $0x910] sm:$0xff]
        %v791 = vld [vmem:[%s547 + $0x918] sm:$0xff]
        %v792 = vld [vmem:[%s547 + $0x920] sm:$0xff]
        %v793 = vld [vmem:[%s547 + $0x928] sm:$0xff]
        %v794 = vld [vmem:[%s547 + $0x980] sm:$0xff]
        %v795 = vld [vmem:[%s547 + $0x988] sm:$0xff]
        %v796 = vld [vmem:[%s547 + $0x990] sm:$0xff]
        %v797 = vld [vmem:[%s547 + $0x998] sm:$0xff]
        %v798 = vld [vmem:[%s547 + $0x9a0] sm:$0xff]
        %v799 = vld [vmem:[%s547 + $0x9a8] sm:$0xff]
        %v800 = vld [vmem:[%s547 + $0xa00] sm:$0xff]
        %v801 = vld [vmem:[%s547 + $0xa08] sm:$0xff]
        %v802 = vld [vmem:[%s547 + $0xa10] sm:$0xff]
        %v803 = vld [vmem:[%s547 + $0xa18] sm:$0xff]
        %v804 = vld [vmem:[%s547 + $0xa20] sm:$0xff]
        %v805 = vld [vmem:[%s547 + $0xa28] sm:$0xff]
        %v806 = vld [vmem:[%s547 + $0xa80] sm:$0xff]
        %v807 = vld [vmem:[%s547 + $0xa88] sm:$0xff]
        %v808 = vld [vmem:[%s547 + $0xa90] sm:$0xff]
        %v809 = vld [vmem:[%s547 + $0xa98] sm:$0xff]
        %v810 = vld [vmem:[%s547 + $0xaa0] sm:$0xff]
        %v811 = vld [vmem:[%s547 + $0xaa8] sm:$0xff]
        %v812 = vld [vmem:[%s547 + $0xb00] sm:$0xff]
        %v813 = vld [vmem:[%s547 + $0xb08] sm:$0xff]
        %v814 = vld [vmem:[%s547 + $0xb10] sm:$0xff]
        %v815 = vld [vmem:[%s547 + $0xb18] sm:$0xff]
        %v816 = vld [vmem:[%s547 + $0xb20] sm:$0xff]
        %v817 = vld [vmem:[%s547 + $0xb28] sm:$0xff]
        %v818 = vld [vmem:[%s547 + $0xb80] sm:$0xff]
        %v819 = vld [vmem:[%s547 + $0xb88] sm:$0xff]
        %v820 = vld [vmem:[%s547 + $0xb90] sm:$0xff]
        %v821 = vld [vmem:[%s547 + $0xb98] sm:$0xff]
        %v822 = vld [vmem:[%s547 + $0xba0] sm:$0xff]
        %v823 = vld [vmem:[%s547 + $0xba8] sm:$0xff]
        %v824 = vld [vmem:[%s547 + $0xc00] sm:$0xff]
        %v825 = vld [vmem:[%s547 + $0xc08] sm:$0xff]
        %v826 = vld [vmem:[%s547 + $0xc10] sm:$0xff]
        %v827 = vld [vmem:[%s547 + $0xc18] sm:$0xff]
        %v828 = vld [vmem:[%s547 + $0xc20] sm:$0xff]
        %v829 = vld [vmem:[%s547 + $0xc28] sm:$0xff]
        %v830 = vld [vmem:[%s547 + $0xc80] sm:$0xff]
        %v831 = vld [vmem:[%s547 + $0xc88] sm:$0xff]
        %v832 = vld [vmem:[%s547 + $0xc90] sm:$0xff]
        %v833 = vld [vmem:[%s547 + $0xc98] sm:$0xff]
        %v834 = vld [vmem:[%s547 + $0xca0] sm:$0xff]
        %v835 = vld [vmem:[%s547 + $0xca8] sm:$0xff]
        %v836 = vld [vmem:[%s547 + $0xd00] sm:$0xff]
        %v837 = vld [vmem:[%s547 + $0xd08] sm:$0xff]
        %v838 = vld [vmem:[%s547 + $0xd10] sm:$0xff]
        %v839 = vld [vmem:[%s547 + $0xd18] sm:$0xff]
        %v840 = vld [vmem:[%s547 + $0xd20] sm:$0xff]
        %v841 = vld [vmem:[%s547 + $0xd28] sm:$0xff]
        %v842 = vld [vmem:[%s547 + $0xd80] sm:$0xff]
        %v843 = vld [vmem:[%s547 + $0xd88] sm:$0xff]
        %v844 = vld [vmem:[%s547 + $0xd90] sm:$0xff]
        %v845 = vld [vmem:[%s547 + $0xd98] sm:$0xff]
        %v846 = vld [vmem:[%s547 + $0xda0] sm:$0xff]
        %v847 = vld [vmem:[%s547 + $0xda8] sm:$0xff]
        %v848 = vld [vmem:[%s547 + $0xe00] sm:$0xff]
        %v849 = vld [vmem:[%s547 + $0xe08] sm:$0xff]
        %v850 = vld [vmem:[%s547 + $0xe10] sm:$0xff]
        %v851 = vld [vmem:[%s547 + $0xe18] sm:$0xff]
        %v852 = vld [vmem:[%s547 + $0xe20] sm:$0xff]
        %v853 = vld [vmem:[%s547 + $0xe28] sm:$0xff]
        %v854 = vld [vmem:[%s547 + $0xe80] sm:$0xff]
        %v855 = vld [vmem:[%s547 + $0xe88] sm:$0xff]
        %v856 = vld [vmem:[%s547 + $0xe90] sm:$0xff]
        %v857 = vld [vmem:[%s547 + $0xe98] sm:$0xff]
        %v858 = vld [vmem:[%s547 + $0xea0] sm:$0xff]
        %v859 = vld [vmem:[%s547 + $0xea8] sm:$0xff]
        %v860 = vld [vmem:[%s547 + $0xf00] sm:$0xff]
        %v861 = vld [vmem:[%s547 + $0xf08] sm:$0xff]
        %v862 = vld [vmem:[%s547 + $0xf10] sm:$0xff]
        %v863 = vld [vmem:[%s547 + $0xf18] sm:$0xff]
        %v864 = vld [vmem:[%s547 + $0xf20] sm:$0xff]
        %v865 = vld [vmem:[%s547 + $0xf28] sm:$0xff]
        %v866 = vld [vmem:[%s547 + $0xf80] sm:$0xff]
        %v867 = vld [vmem:[%s547 + $0xf88] sm:$0xff]
        %v868 = vld [vmem:[%s547 + $0xf90] sm:$0xff]
        %v869 = vld [vmem:[%s547 + $0xf98] sm:$0xff]
        %v870 = vld [vmem:[%s547 + $0xfa0] sm:$0xff]
        %v871 = vld [vmem:[%s547 + $0xfa8] sm:$0xff]
        %872 = vmatprep.subr.mxu0 %v681
        %873 = vmatpush1.msra.mxu0 %v680
        %874 = vmatprep.subr.mxu0 %v687
        %875 = vmatpush1.msra.mxu0 %v686
        %876 = vmatprep.subr.mxu0 %v693
        %877 = vmatpush1.msra.mxu0 %v692
        %878 = vmatprep.subr.mxu0 %v699
        %879 = vmatpush1.msra.mxu0 %v698
        %880 = vmatprep.subr.mxu0 %v705
        %881 = vmatpush1.msra.mxu0 %v704
        %882 = vmatprep.subr.mxu0 %v711
        %883 = vmatpush1.msra.mxu0 %v710
        %884 = vmatprep.subr.mxu0 %v717
        %885 = vmatpush1.msra.mxu0 %v716
        %886 = vmatprep.subr.mxu0 %v723
        %887 = vmatpush1.msra.mxu0 %v722
        %888 = vmatprep.subr.mxu0 %v729
        %889 = vmatpush1.msra.mxu0 %v728
        %890 = vmatprep.subr.mxu0 %v735
        %891 = vmatpush1.msra.mxu0 %v734
        %892 = vmatprep.subr.mxu0 %v741
        %893 = vmatpush1.msra.mxu0 %v740
        %894 = vmatprep.subr.mxu0 %v747
        %895 = vmatpush1.msra.mxu0 %v746
        %896 = vmatprep.subr.mxu0 %v753
        %897 = vmatpush1.msra.mxu0 %v752
        %898 = vmatprep.subr.mxu0 %v759
        %899 = vmatpush1.msra.mxu0 %v758
        %900 = vmatprep.subr.mxu0 %v765
        %901 = vmatpush1.msra.mxu0 %v764
        %902 = vmatprep.subr.mxu0 %v771
        %903 = vmatpush1.msra.mxu0 %v770
        %904 = vmatprep.subr.mxu0 %v777
        %905 = vmatpush1.msra.mxu0 %v776
        %906 = vmatprep.subr.mxu0 %v783
        %907 = vmatpush1.msra.mxu0 %v782
        %908 = vmatprep.subr.mxu0 %v789
        %909 = vmatpush1.msra.mxu0 %v788
        %910 = vmatprep.subr.mxu0 %v795
        %911 = vmatpush1.msra.mxu0 %v794
        %912 = vmatprep.subr.mxu0 %v801
        %913 = vmatpush1.msra.mxu0 %v800
        %914 = vmatprep.subr.mxu0 %v807
        %915 = vmatpush1.msra.mxu0 %v806
        %916 = vmatprep.subr.mxu0 %v813
        %917 = vmatpush1.msra.mxu0 %v812
        %918 = vmatprep.subr.mxu0 %v819
        %919 = vmatpush1.msra.mxu0 %v818
        %920 = vmatprep.subr.mxu0 %v825
        %921 = vmatpush1.msra.mxu0 %v824
        %922 = vmatprep.subr.mxu0 %v831
        %923 = vmatpush1.msra.mxu0 %v830
        %924 = vmatprep.subr.mxu0 %v837
        %925 = vmatpush1.msra.mxu0 %v836
        %926 = vmatprep.subr.mxu0 %v843
        %927 = vmatpush1.msra.mxu0 %v842
        %928 = vmatprep.subr.mxu0 %v849
        %929 = vmatpush1.msra.mxu0 %v848
        %930 = vmatprep.subr.mxu0 %v855
        %931 = vmatpush1.msra.mxu0 %v854
        %932 = vmatprep.subr.mxu0 %v861
        %933 = vmatpush1.msra.mxu0 %v860
        %934 = vmatprep.subr.mxu0 %v867
        %935 = vmatpush1.msra.mxu0 %v866
        %936 = vmatprep.mubr.f32.mxu0 %v677
        %937 = vmatmul.mubr.f32.gmra.mrb[0].mxu0 %v676
        %v938 = vpop.f32.mrb[0].mxu0
        %v939 = vadd.f32 0.0, %v938
        %v940 = vpop.f32.mrb[0].mxu0
        %v941 = vadd.f32 0.0, %v940
        %942 = vmatprep.mubr.f32.mxu0 %v679
        %943 = vmatmul.mubr.f32.gmra.mrb[0].mxu0 %v678
        %v944 = vpop.f32.mrb[0].mxu0
        %v945 = vadd.f32 0.0, %v944
        %v946 = vpop.f32.mrb[0].mxu0
        %v947 = vadd.f32 0.0, %v946
        %948 = vdwg.mxu0
        %949 = vmatprep.subr.mxu0 %v683
        %950 = vmatpush1.msra.mxu0 %v682
        %951 = vmatprep.subr.mxu0 %v689
        %952 = vmatpush1.msra.mxu0 %v688
        %953 = vmatprep.subr.mxu0 %v695
        %954 = vmatpush1.msra.mxu0 %v694
        %955 = vmatprep.subr.mxu0 %v701
        %956 = vmatpush1.msra.mxu0 %v700
        %957 = vmatprep.subr.mxu0 %v707
        %958 = vmatpush1.msra.mxu0 %v706
        %959 = vmatprep.subr.mxu0 %v713
        %960 = vmatpush1.msra.mxu0 %v712
        %961 = vmatprep.subr.mxu0 %v719
        %962 = vmatpush1.msra.mxu0 %v718
        %963 = vmatprep.subr.mxu0 %v725
        %964 = vmatpush1.msra.mxu0 %v724
        %965 = vmatprep.subr.mxu0 %v731
        %966 = vmatpush1.msra.mxu0 %v730
        %967 = vmatprep.subr.mxu0 %v737
        %968 = vmatpush1.msra.mxu0 %v736
        %969 = vmatprep.subr.mxu0 %v743
        %970 = vmatpush1.msra.mxu0 %v742
        %971 = vmatprep.subr.mxu0 %v749
        %972 = vmatpush1.msra.mxu0 %v748
        %973 = vmatprep.subr.mxu0 %v755
        %974 = vmatpush1.msra.mxu0 %v754
        %975 = vmatprep.subr.mxu0 %v761
        %976 = vmatpush1.msra.mxu0 %v760
        %977 = vmatprep.subr.mxu0 %v767
        %978 = vmatpush1.msra.mxu0 %v766
        %979 = vmatprep.subr.mxu0 %v773
        %980 = vmatpush1.msra.mxu0 %v772
        %981 = vmatprep.subr.mxu0 %v779
        %982 = vmatpush1.msra.mxu0 %v778
        %983 = vmatprep.subr.mxu0 %v785
        %984 = vmatpush1.msra.mxu0 %v784
        %985 = vmatprep.subr.mxu0 %v791
        %986 = vmatpush1.msra.mxu0 %v790
        %987 = vmatprep.subr.mxu0 %v797
        %988 = vmatpush1.msra.mxu0 %v796
        %989 = vmatprep.subr.mxu0 %v803
        %990 = vmatpush1.msra.mxu0 %v802
        %991 = vmatprep.subr.mxu0 %v809
        %992 = vmatpush1.msra.mxu0 %v808
        %993 = vmatprep.subr.mxu0 %v815
        %994 = vmatpush1.msra.mxu0 %v814
        %995 = vmatprep.subr.mxu0 %v821
        %996 = vmatpush1.msra.mxu0 %v820
        %997 = vmatprep.subr.mxu0 %v827
        %998 = vmatpush1.msra.mxu0 %v826
        %999 = vmatprep.subr.mxu0 %v833
        %1000 = vmatpush1.msra.mxu0 %v832
        %1001 = vmatprep.subr.mxu0 %v839
        %1002 = vmatpush1.msra.mxu0 %v838
        %1003 = vmatprep.subr.mxu0 %v845
        %1004 = vmatpush1.msra.mxu0 %v844
        %1005 = vmatprep.subr.mxu0 %v851
        %1006 = vmatpush1.msra.mxu0 %v850
        %1007 = vmatprep.subr.mxu0 %v857
        %1008 = vmatpush1.msra.mxu0 %v856
        %1009 = vmatprep.subr.mxu0 %v863
        %1010 = vmatpush1.msra.mxu0 %v862
        %1011 = vmatprep.subr.mxu0 %v869
        %1012 = vmatpush1.msra.mxu0 %v868
        %1013 = vmatprep.mubr.f32.mxu0 %v677
        %1014 = vmatmul.mubr.f32.gmra.mrb[0].mxu0 %v676
        %v1015 = vpop.f32.mrb[0].mxu0
        %v1016 = vadd.f32 0.0, %v1015
        %v1017 = vpop.f32.mrb[0].mxu0
        %v1018 = vadd.f32 0.0, %v1017
        %1019 = vmatprep.mubr.f32.mxu0 %v679
        %1020 = vmatmul.mubr.f32.gmra.mrb[0].mxu0 %v678
        %v1021 = vpop.f32.mrb[0].mxu0
        %v1022 = vadd.f32 0.0, %v1021
        %v1023 = vpop.f32.mrb[0].mxu0
        %v1024 = vadd.f32 0.0, %v1023
        %1025 = vdwg.mxu0
        %1026 = vmatprep.subr.mxu0 %v685
        %1027 = vmatpush1.msra.mxu0 %v684
        %1028 = vmatprep.subr.mxu0 %v691
        %1029 = vmatpush1.msra.mxu0 %v690
        %1030 = vmatprep.subr.mxu0 %v697
        %1031 = vmatpush1.msra.mxu0 %v696
        %1032 = vmatprep.subr.mxu0 %v703
        %1033 = vmatpush1.msra.mxu0 %v702
        %1034 = vmatprep.subr.mxu0 %v709
        %1035 = vmatpush1.msra.mxu0 %v708
        %1036 = vmatprep.subr.mxu0 %v715
        %1037 = vmatpush1.msra.mxu0 %v714
        %1038 = vmatprep.subr.mxu0 %v721
        %1039 = vmatpush1.msra.mxu0 %v720
        %1040 = vmatprep.subr.mxu0 %v727
        %1041 = vmatpush1.msra.mxu0 %v726
        %1042 = vmatprep.subr.mxu0 %v733
        %1043 = vmatpush1.msra.mxu0 %v732
        %1044 = vmatprep.subr.mxu0 %v739
        %1045 = vmatpush1.msra.mxu0 %v738
        %1046 = vmatprep.subr.mxu0 %v745
        %1047 = vmatpush1.msra.mxu0 %v744
        %1048 = vmatprep.subr.mxu0 %v751
        %1049 = vmatpush1.msra.mxu0 %v750
        %1050 = vmatprep.subr.mxu0 %v757
        %1051 = vmatpush1.msra.mxu0 %v756
        %1052 = vmatprep.subr.mxu0 %v763
        %1053 = vmatpush1.msra.mxu0 %v762
        %1054 = vmatprep.subr.mxu0 %v769
        %1055 = vmatpush1.msra.mxu0 %v768
        %1056 = vmatprep.subr.mxu0 %v775
        %1057 = vmatpush1.msra.mxu0 %v774
        %1058 = vmatprep.subr.mxu0 %v781
        %1059 = vmatpush1.msra.mxu0 %v780
        %1060 = vmatprep.subr.mxu0 %v787
        %1061 = vmatpush1.msra.mxu0 %v786
        %1062 = vmatprep.subr.mxu0 %v793
        %1063 = vmatpush1.msra.mxu0 %v792
        %1064 = vmatprep.subr.mxu0 %v799
        %1065 = vmatpush1.msra.mxu0 %v798
        %1066 = vmatprep.subr.mxu0 %v805
        %1067 = vmatpush1.msra.mxu0 %v804
        %1068 = vmatprep.subr.mxu0 %v811
        %1069 = vmatpush1.msra.mxu0 %v810
        %1070 = vmatprep.subr.mxu0 %v817
        %1071 = vmatpush1.msra.mxu0 %v816
        %1072 = vmatprep.subr.mxu0 %v823
        %1073 = vmatpush1.msra.mxu0 %v822
        %1074 = vmatprep.subr.mxu0 %v829
        %1075 = vmatpush1.msra.mxu0 %v828
        %1076 = vmatprep.subr.mxu0 %v835
        %1077 = vmatpush1.msra.mxu0 %v834
        %1078 = vmatprep.subr.mxu0 %v841
        %1079 = vmatpush1.msra.mxu0 %v840
        %1080 = vmatprep.subr.mxu0 %v847
        %1081 = vmatpush1.msra.mxu0 %v846
        %1082 = vmatprep.subr.mxu0 %v853
        %1083 = vmatpush1.msra.mxu0 %v852
        %1084 = vmatprep.subr.mxu0 %v859
        %1085 = vmatpush1.msra.mxu0 %v858
        %1086 = vmatprep.subr.mxu0 %v865
        %1087 = vmatpush1.msra.mxu0 %v864
        %1088 = vmatprep.subr.mxu0 %v871
        %1089 = vmatpush1.msra.mxu0 %v870
        %1090 = vmatprep.mubr.f32.mxu0 %v677
        %1091 = vmatmul.mubr.f32.gmra.mrb[0].mxu0 %v676
        %v1092 = vpop.f32.mrb[0].mxu0
        %v1093 = vadd.f32 0.0, %v1092
        %v1094 = vpop.f32.mrb[0].mxu0
        %v1095 = vadd.f32 0.0, %v1094
        %1096 = vmatprep.mubr.f32.mxu0 %v679
        %1097 = vmatmul.mubr.f32.gmra.mrb[0].mxu0 %v678
        %v1098 = vpop.f32.mrb[0].mxu0
        %v1099 = vadd.f32 0.0, %v1098
        %v1100 = vpop.f32.mrb[0].mxu0
        %v1101 = vadd.f32 0.0, %v1100
        %1102 = vdwg.mxu0
        %v1103 = vlaneseq
        %v1104 = vshrl.u32 %v1103, 7
        %v1105 = vsub.s32 0, %v1104
        %v1106 = vrot.slane %v659, %v1105
        %v1107 = vlaneseq
        %v1108 = vshrl.u32 %v1107, 7
        %v1109 = vsub.s32 0, %v1108
        %v1110 = vrot.slane %v660, %v1109
        %v1111 = vadd.f32 %v939, %v1106
        %v1112 = vadd.f32 %v941, %v1110
        %v1113 = vadd.f32 %v945, %v1106
        %v1114 = vadd.f32 %v947, %v1110
        %v1115 = vlaneseq
        %v1116 = vshrl.u32 %v1115, 7
        %v1117 = vsub.s32 1, %v1116
        %v1118 = vrot.slane %v659, %v1117
        %v1119 = vlaneseq
        %v1120 = vshrl.u32 %v1119, 7
        %v1121 = vsub.s32 1, %v1120
        %v1122 = vrot.slane %v660, %v1121
        %v1123 = vadd.f32 %v1016, %v1118
        %v1124 = vadd.f32 %v1018, %v1122
        %v1125 = vadd.f32 %v1022, %v1118
        %v1126 = vadd.f32 %v1024, %v1122
        %v1127 = vlaneseq
        %v1128 = vshrl.u32 %v1127, 7
        %v1129 = vsub.s32 2, %v1128
        %v1130 = vrot.slane %v659, %v1129
        %v1131 = vlaneseq
        %v1132 = vshrl.u32 %v1131, 7
        %v1133 = vsub.s32 2, %v1132
        %v1134 = vrot.slane %v660, %v1133
        %v1135 = vadd.f32 %v1093, %v1130
        %v1136 = vadd.f32 %v1095, %v1134
        %v1137 = vadd.f32 %v1099, %v1130
        %v1138 = vadd.f32 %v1101, %v1134
        %vm1139 = vcmask 261120
        %v1141 = vsel %vm1139, %v1111, 0
        %v1144 = vsel %vm1139, %v1113, 0
        %v1147 = vsel %vm1139, %v1123, 0
        %v1150 = vsel %vm1139, %v1125, 0
        %1152 = vmatprep.subr.mxu0 0.0
        %1153 = vmatpush1.xpose.msra.mxu0 %v1147
        %1154 = vmatprep.subr.mxu0 0.0
        %1155 = vmatpush1.xpose.msra.mxu0 %v1150
        %1156 = vmatprep.subr.mxu0 0.0
        %1157 = vmatpush1.xpose.msra.mxu0 0.0
        %1158 = vmatprep.subr.mxu0 0.0
        %1159 = vmatpush1.xpose.msra.mxu0 0.0
        %1160 = vmatprep.subr.mxu0 0.0
        %1161 = vmatpush1.xpose.msra.mxu0 0.0
        %1162 = vmatprep.subr.mxu0 0.0
        %1163 = vmatpush1.xpose.msra.mxu0 0.0
        %1164 = vmatprep.subr.mxu0 0.0
        %1165 = vmatpush1.xpose.msra.mxu0 0.0
        %1166 = vmatprep.subr.mxu0 0.0
        %1167 = vmatpush1.xpose.msra.mxu0 0.0
        %1168 = vmatprep.subr.mxu0 0.0
        %1169 = vmatpush1.xpose.msra.mxu0 0.0
        %1170 = vmatprep.subr.mxu0 0.0
        %1171 = vmatpush1.xpose.msra.mxu0 0.0
        %1172 = vmatprep.subr.mxu0 0.0
        %1173 = vmatpush1.xpose.msra.mxu0 0.0
        %1174 = vmatprep.subr.mxu0 0.0
        %1175 = vmatpush1.xpose.msra.mxu0 0.0
        %1176 = vmatprep.subr.mxu0 0.0
        %1177 = vmatpush1.xpose.msra.mxu0 0.0
        %1178 = vmatprep.subr.mxu0 0.0
        %1179 = vmatpush1.xpose.msra.mxu0 0.0
        %1180 = vmatprep.subr.mxu0 0.0
        %1181 = vmatpush1.xpose.msra.mxu0 0.0
        %1182 = vmatprep.subr.mxu0 0.0
        %1183 = vmatpush1.xpose.msra.mxu0 0.0
        %1184 = vmatprep.subr.mxu0 0.0
        %1185 = vmatpush1.xpose.msra.mxu0 0.0
        %1186 = vmatprep.subr.mxu0 0.0
        %1187 = vmatpush1.xpose.msra.mxu0 0.0
        %1188 = vmatprep.subr.mxu0 0.0
        %1189 = vmatpush1.xpose.msra.mxu0 0.0
        %1190 = vmatprep.subr.mxu0 0.0
        %1191 = vmatpush1.xpose.msra.mxu0 0.0
        %1192 = vmatprep.subr.mxu0 0.0
        %1193 = vmatpush1.xpose.msra.mxu0 0.0
        %1194 = vmatprep.subr.mxu0 0.0
        %1195 = vmatpush1.xpose.msra.mxu0 0.0
        %1196 = vmatprep.subr.mxu0 0.0
        %1197 = vmatpush1.xpose.msra.mxu0 0.0
        %1198 = vmatprep.subr.mxu0 0.0
        %1199 = vmatpush1.xpose.msra.mxu0 0.0
        %1200 = vmatprep.subr.mxu0 0.0
        %1201 = vmatpush1.xpose.msra.mxu0 0.0
        %1202 = vmatprep.subr.mxu0 0.0
        %1203 = vmatpush1.xpose.msra.mxu0 0.0
        %1204 = vmatprep.subr.mxu0 0.0
        %1205 = vmatpush1.xpose.msra.mxu0 0.0
        %1206 = vmatprep.subr.mxu0 0.0
        %1207 = vmatpush1.xpose.msra.mxu0 0.0
        %1208 = vmatprep.subr.mxu0 0.0
        %1209 = vmatpush1.xpose.msra.mxu0 0.0
        %1210 = vmatprep.subr.mxu0 0.0
        %1211 = vmatpush1.xpose.msra.mxu0 0.0
        %1212 = vmatprep.subr.mxu0 0.0
        %1213 = vmatpush1.xpose.msra.mxu0 0.0
        %1214 = vmatprep.subr.mxu0 0.0
        %1215 = vmatpush1.xpose.msra.mxu0 0.0
        %1216 = vmatprep.mubr.f32.mxu0 0.0
        %1217 = vmatmul.mubr.f32.gmra.mrb[0].mxu0 %v1141
        %v1218 = vpop.f32.mrb[0].mxu0
        %v1219 = vadd.f32 0.0, %v1218
        %v1220 = vpop.f32.mrb[0].mxu0
        %1221 = vmatprep.mubr.f32.mxu0 0.0
        %1222 = vmatmul.mubr.f32.gmra.mrb[0].mxu0 %v1144
        %v1223 = vpop.f32.mrb[0].mxu0
        %v1224 = vadd.f32 0.0, %v1223
        %v1225 = vpop.f32.mrb[0].mxu0
        %1226 = vdwg.mxu0
        %v1227 = vmul.f32 %v1219, 0.17677669
        %v1228 = vmul.f32 %v1224, 0.17677669
        %v1229 = vsel %vm666, %v1227, -1e+09
        %v1230 = vsel %vm667, %v1228, -1e+09
        %vm1231 = vcmask 80896
        %v1232 = vsel %vm1231, %v1229, -inf
        %1233 = vmax.xlane.f32.xlu0 %v1232
        %v1234 = vpop.xlane.xlu0 %1233
        %vm1235 = vcmask 74752
        %v1236 = vsel %vm1235, %v1230, -inf
        %1237 = vmax.xlane.f32.xlu0 %v1236
        %v1238 = vpop.xlane.xlu0 %1237
        %v1239 = vsub.f32 %v1229, %v1234
        %v1240 = vsub.f32 %v1230, %v1238
        %v1241 = vmul.f32 %v1239, 1.442695
        %v1242 = vpow.pop %v1241
        %v1243 = vmul.f32 %v1240, 1.442695
        %v1244 = vpow.pop %v1243
        %v1245 = vsel %vm1231, %v1242, 0.0
        %1246 = vadd.xlane.f32.xlu0 %v1245
        %v1247 = vpop.xlane.xlu0 %1246
        %v1248 = vsel %vm1235, %v1244, 0.0
        %1249 = vadd.xlane.f32.xlu0 %v1248
        %v1250 = vpop.xlane.xlu0 %1249
        %v1251 = vrcp.pop %v1247
        %v1252 = vmul.f32 %v1242, %v1251
        %v1253 = vrcp.pop %v1250
        %v1254 = vmul.f32 %v1244, %v1253
        %v1256 = vsel %vm1231, %v1252, 0
        %v1259 = vsel %vm1231, %v1254, 0
        %vm1261 = vcmask 1041408
        %v1263 = vsel %vm1261, %v1137, 0
        %1265 = vmatprep.subr.mxu0 0.0
        %1266 = vmatpush1.msra.mxu0 %v1135
        %1267 = vmatprep.subr.mxu0 0.0
        %1268 = vmatpush1.msra.mxu0 %v1263
        %1269 = vmatprep.subr.mxu0 0.0
        %1270 = vmatpush1.msra.mxu0 0.0
        %1271 = vmatprep.subr.mxu0 0.0
        %1272 = vmatpush1.msra.mxu0 0.0
        %1273 = vmatprep.subr.mxu0 0.0
        %1274 = vmatpush1.msra.mxu0 0.0
        %1275 = vmatprep.subr.mxu0 0.0
        %1276 = vmatpush1.msra.mxu0 0.0
        %1277 = vmatprep.subr.mxu0 0.0
        %1278 = vmatpush1.msra.mxu0 0.0
        %1279 = vmatprep.subr.mxu0 0.0
        %1280 = vmatpush1.msra.mxu0 0.0
        %1281 = vmatprep.subr.mxu0 0.0
        %1282 = vmatpush1.msra.mxu0 0.0
        %1283 = vmatprep.subr.mxu0 0.0
        %1284 = vmatpush1.msra.mxu0 0.0
        %1285 = vmatprep.subr.mxu0 0.0
        %1286 = vmatpush1.msra.mxu0 0.0
        %1287 = vmatprep.subr.mxu0 0.0
        %1288 = vmatpush1.msra.mxu0 0.0
        %1289 = vmatprep.subr.mxu0 0.0
        %1290 = vmatpush1.msra.mxu0 0.0
        %1291 = vmatprep.subr.mxu0 0.0
        %1292 = vmatpush1.msra.mxu0 0.0
        %1293 = vmatprep.subr.mxu0 0.0
        %1294 = vmatpush1.msra.mxu0 0.0
        %1295 = vmatprep.subr.mxu0 0.0
        %1296 = vmatpush1.msra.mxu0 0.0
        %1297 = vmatprep.subr.mxu0 0.0
        %1298 = vmatpush1.msra.mxu0 0.0
        %1299 = vmatprep.subr.mxu0 0.0
        %1300 = vmatpush1.msra.mxu0 0.0
        %1301 = vmatprep.subr.mxu0 0.0
        %1302 = vmatpush1.msra.mxu0 0.0
        %1303 = vmatprep.subr.mxu0 0.0
        %1304 = vmatpush1.msra.mxu0 0.0
        %1305 = vmatprep.subr.mxu0 0.0
        %1306 = vmatpush1.msra.mxu0 0.0
        %1307 = vmatprep.subr.mxu0 0.0
        %1308 = vmatpush1.msra.mxu0 0.0
        %1309 = vmatprep.subr.mxu0 0.0
        %1310 = vmatpush1.msra.mxu0 0.0
        %1311 = vmatprep.subr.mxu0 0.0
        %1312 = vmatpush1.msra.mxu0 0.0
        %1313 = vmatprep.subr.mxu0 0.0
        %1314 = vmatpush1.msra.mxu0 0.0
        %1315 = vmatprep.subr.mxu0 0.0
        %1316 = vmatpush1.msra.mxu0 0.0
        %1317 = vmatprep.subr.mxu0 0.0
        %1318 = vmatpush1.msra.mxu0 0.0
        %1319 = vmatprep.subr.mxu0 0.0
        %1320 = vmatpush1.msra.mxu0 0.0
        %1321 = vmatprep.subr.mxu0 0.0
        %1322 = vmatpush1.msra.mxu0 0.0
        %1323 = vmatprep.subr.mxu0 0.0
        %1324 = vmatpush1.msra.mxu0 0.0
        %1325 = vmatprep.subr.mxu0 0.0
        %1326 = vmatpush1.msra.mxu0 0.0
        %1327 = vmatprep.subr.mxu0 0.0
        %1328 = vmatpush1.msra.mxu0 0.0
        %1329 = vmatprep.mubr.f32.mxu0 0.0
        %1330 = vmatmul.mubr.f32.gmra.mrb[0].mxu0 %v1256
        %v1331 = vpop.f32.mrb[0].mxu0
        %v1332 = vadd.f32 0.0, %v1331
        %v1333 = vpop.f32.mrb[0].mxu0
        %1334 = vmatprep.mubr.f32.mxu0 0.0
        %1335 = vmatmul.mubr.f32.gmra.mrb[0].mxu0 %v1259
        %v1336 = vpop.f32.mrb[0].mxu0
        %v1337 = vadd.f32 0.0, %v1336
        %v1338 = vpop.f32.mrb[0].mxu0
        %1339 = vdwg.mxu0
        %v1340 = vld [vmem:[%s547 + $0x30] sm:$0xff]
        %v1341 = vld [vmem:[%s547 + $0x38] sm:$0xff]
        %v1342 = vld [vmem:[%s547 + $0xb0] sm:$0xff]
        %v1343 = vld [vmem:[%s547 + $0xb8] sm:$0xff]
        %v1344 = vld [vmem:[%s547 + $0x130] sm:$0xff]
        %v1345 = vld [vmem:[%s547 + $0x138] sm:$0xff]
        %v1346 = vld [vmem:[%s547 + $0x1b0] sm:$0xff]
        %v1347 = vld [vmem:[%s547 + $0x1b8] sm:$0xff]
        %1348 = vrot.lane.b32.xlu0 %v1111, 96
        %v1349 = vpop.permute.xlu0 %1348
        %1350 = vrot.lane.b32.xlu0 %v1113, 96
        %v1351 = vpop.permute.xlu0 %1350
        %1352 = vrot.lane.b32.xlu0 %v1123, 96
        %v1353 = vpop.permute.xlu0 %1352
        %1354 = vrot.lane.b32.xlu0 %v1125, 96
        %v1355 = vpop.permute.xlu0 %1354
        %v1356 = vsel %vm1139, %v1349, 0
        %v1358 = vsel %vm1139, %v1351, 0
        %v1360 = vsel %vm1139, %v1353, 0
        %v1362 = vsel %vm1139, %v1355, 0
        %1364 = vmatprep.subr.mxu0 0.0
        %1365 = vmatpush1.xpose.msra.mxu0 %v1360
        %1366 = vmatprep.subr.mxu0 0.0
        %1367 = vmatpush1.xpose.msra.mxu0 %v1362
        %1368 = vmatprep.subr.mxu0 0.0
        %1369 = vmatpush1.xpose.msra.mxu0 0.0
        %1370 = vmatprep.subr.mxu0 0.0
        %1371 = vmatpush1.xpose.msra.mxu0 0.0
        %1372 = vmatprep.subr.mxu0 0.0
        %1373 = vmatpush1.xpose.msra.mxu0 0.0
        %1374 = vmatprep.subr.mxu0 0.0
        %1375 = vmatpush1.xpose.msra.mxu0 0.0
        %1376 = vmatprep.subr.mxu0 0.0
        %1377 = vmatpush1.xpose.msra.mxu0 0.0
        %1378 = vmatprep.subr.mxu0 0.0
        %1379 = vmatpush1.xpose.msra.mxu0 0.0
        %1380 = vmatprep.subr.mxu0 0.0
        %1381 = vmatpush1.xpose.msra.mxu0 0.0
        %1382 = vmatprep.subr.mxu0 0.0
        %1383 = vmatpush1.xpose.msra.mxu0 0.0
        %1384 = vmatprep.subr.mxu0 0.0
        %1385 = vmatpush1.xpose.msra.mxu0 0.0
        %1386 = vmatprep.subr.mxu0 0.0
        %1387 = vmatpush1.xpose.msra.mxu0 0.0
        %1388 = vmatprep.subr.mxu0 0.0
        %1389 = vmatpush1.xpose.msra.mxu0 0.0
        %1390 = vmatprep.subr.mxu0 0.0
        %1391 = vmatpush1.xpose.msra.mxu0 0.0
        %1392 = vmatprep.subr.mxu0 0.0
        %1393 = vmatpush1.xpose.msra.mxu0 0.0
        %1394 = vmatprep.subr.mxu0 0.0
        %1395 = vmatpush1.xpose.msra.mxu0 0.0
        %1396 = vmatprep.subr.mxu0 0.0
        %1397 = vmatpush1.xpose.msra.mxu0 0.0
        %1398 = vmatprep.subr.mxu0 0.0
        %1399 = vmatpush1.xpose.msra.mxu0 0.0
        %1400 = vmatprep.subr.mxu0 0.0
        %1401 = vmatpush1.xpose.msra.mxu0 0.0
        %1402 = vmatprep.subr.mxu0 0.0
        %1403 = vmatpush1.xpose.msra.mxu0 0.0
        %1404 = vmatprep.subr.mxu0 0.0
        %1405 = vmatpush1.xpose.msra.mxu0 0.0
        %1406 = vmatprep.subr.mxu0 0.0
        %1407 = vmatpush1.xpose.msra.mxu0 0.0
        %1408 = vmatprep.subr.mxu0 0.0
        %1409 = vmatpush1.xpose.msra.mxu0 0.0
        %1410 = vmatprep.subr.mxu0 0.0
        %1411 = vmatpush1.xpose.msra.mxu0 0.0
        %1412 = vmatprep.subr.mxu0 0.0
        %1413 = vmatpush1.xpose.msra.mxu0 0.0
        %1414 = vmatprep.subr.mxu0 0.0
        %1415 = vmatpush1.xpose.msra.mxu0 0.0
        %1416 = vmatprep.subr.mxu0 0.0
        %1417 = vmatpush1.xpose.msra.mxu0 0.0
        %1418 = vmatprep.subr.mxu0 0.0
        %1419 = vmatpush1.xpose.msra.mxu0 0.0
        %1420 = vmatprep.subr.mxu0 0.0
        %1421 = vmatpush1.xpose.msra.mxu0 0.0
        %1422 = vmatprep.subr.mxu0 0.0
        %1423 = vmatpush1.xpose.msra.mxu0 0.0
        %1424 = vmatprep.subr.mxu0 0.0
        %1425 = vmatpush1.xpose.msra.mxu0 0.0
        %1426 = vmatprep.subr.mxu0 0.0
        %1427 = vmatpush1.xpose.msra.mxu0 0.0
        %1428 = vmatprep.mubr.f32.mxu0 0.0
        %1429 = vmatmul.mubr.f32.gmra.mrb[0].mxu0 %v1356
        %v1430 = vpop.f32.mrb[0].mxu0
        %v1431 = vadd.f32 0.0, %v1430
        %v1432 = vpop.f32.mrb[0].mxu0
        %1433 = vmatprep.mubr.f32.mxu0 0.0
        %1434 = vmatmul.mubr.f32.gmra.mrb[0].mxu0 %v1358
        %v1435 = vpop.f32.mrb[0].mxu0
        %v1436 = vadd.f32 0.0, %v1435
        %v1437 = vpop.f32.mrb[0].mxu0
        %1438 = vdwg.mxu0
        %v1439 = vmul.f32 %v1431, 0.17677669
        %v1440 = vmul.f32 %v1436, 0.17677669
        %v1441 = vsel %vm666, %v1439, -1e+09
        %v1442 = vsel %vm667, %v1440, -1e+09
        %v1443 = vsel %vm1231, %v1441, -inf
        %1444 = vmax.xlane.f32.xlu0 %v1443
        %v1445 = vpop.xlane.xlu0 %1444
        %v1446 = vsel %vm1235, %v1442, -inf
        %1447 = vmax.xlane.f32.xlu0 %v1446
        %v1448 = vpop.xlane.xlu0 %1447
        %v1449 = vsub.f32 %v1441, %v1445
        %v1450 = vsub.f32 %v1442, %v1448
        %v1451 = vmul.f32 %v1449, 1.442695
        %v1452 = vpow.pop %v1451
        %v1453 = vmul.f32 %v1450, 1.442695
        %v1454 = vpow.pop %v1453
        %v1455 = vsel %vm1231, %v1452, 0.0
        %1456 = vadd.xlane.f32.xlu0 %v1455
        %v1457 = vpop.xlane.xlu0 %1456
        %v1458 = vsel %vm1235, %v1454, 0.0
        %1459 = vadd.xlane.f32.xlu0 %v1458
        %v1460 = vpop.xlane.xlu0 %1459
        %v1461 = vrcp.pop %v1457
        %v1462 = vmul.f32 %v1452, %v1461
        %v1463 = vrcp.pop %v1460
        %v1464 = vmul.f32 %v1454, %v1463
        %1466 = vrot.lane.b32.xlu0 %v1135, 96
        %v1467 = vpop.permute.xlu0 %1466
        %1468 = vrot.lane.b32.xlu0 %v1137, 96
        %v1469 = vpop.permute.xlu0 %1468
        %v1472 = vsel %vm1231, %v1462, 0
        %v1475 = vsel %vm1231, %v1464, 0
        %v1477 = vsel %vm1261, %v1469, 0
        %1479 = vmatprep.subr.mxu0 0.0
        %1480 = vmatpush1.msra.mxu0 %v1467
        %1481 = vmatprep.subr.mxu0 0.0
        %1482 = vmatpush1.msra.mxu0 %v1477
        %1483 = vmatprep.subr.mxu0 0.0
        %1484 = vmatpush1.msra.mxu0 0.0
        %1485 = vmatprep.subr.mxu0 0.0
        %1486 = vmatpush1.msra.mxu0 0.0
        %1487 = vmatprep.subr.mxu0 0.0
        %1488 = vmatpush1.msra.mxu0 0.0
        %1489 = vmatprep.subr.mxu0 0.0
        %1490 = vmatpush1.msra.mxu0 0.0
        %1491 = vmatprep.subr.mxu0 0.0
        %1492 = vmatpush1.msra.mxu0 0.0
        %1493 = vmatprep.subr.mxu0 0.0
        %1494 = vmatpush1.msra.mxu0 0.0
        %1495 = vmatprep.subr.mxu0 0.0
        %1496 = vmatpush1.msra.mxu0 0.0
        %1497 = vmatprep.subr.mxu0 0.0
        %1498 = vmatpush1.msra.mxu0 0.0
        %1499 = vmatprep.subr.mxu0 0.0
        %1500 = vmatpush1.msra.mxu0 0.0
        %1501 = vmatprep.subr.mxu0 0.0
        %1502 = vmatpush1.msra.mxu0 0.0
        %1503 = vmatprep.subr.mxu0 0.0
        %1504 = vmatpush1.msra.mxu0 0.0
        %1505 = vmatprep.subr.mxu0 0.0
        %1506 = vmatpush1.msra.mxu0 0.0
        %1507 = vmatprep.subr.mxu0 0.0
        %1508 = vmatpush1.msra.mxu0 0.0
        %1509 = vmatprep.subr.mxu0 0.0
        %1510 = vmatpush1.msra.mxu0 0.0
        %1511 = vmatprep.subr.mxu0 0.0
        %1512 = vmatpush1.msra.mxu0 0.0
        %1513 = vmatprep.subr.mxu0 0.0
        %1514 = vmatpush1.msra.mxu0 0.0
        %1515 = vmatprep.subr.mxu0 0.0
        %1516 = vmatpush1.msra.mxu0 0.0
        %1517 = vmatprep.subr.mxu0 0.0
        %1518 = vmatpush1.msra.mxu0 0.0
        %1519 = vmatprep.subr.mxu0 0.0
        %1520 = vmatpush1.msra.mxu0 0.0
        %1521 = vmatprep.subr.mxu0 0.0
        %1522 = vmatpush1.msra.mxu0 0.0
        %1523 = vmatprep.subr.mxu0 0.0
        %1524 = vmatpush1.msra.mxu0 0.0
        %1525 = vmatprep.subr.mxu0 0.0
        %1526 = vmatpush1.msra.mxu0 0.0
        %1527 = vmatprep.subr.mxu0 0.0
        %1528 = vmatpush1.msra.mxu0 0.0
        %1529 = vmatprep.subr.mxu0 0.0
        %1530 = vmatpush1.msra.mxu0 0.0
        %1531 = vmatprep.subr.mxu0 0.0
        %1532 = vmatpush1.msra.mxu0 0.0
        %1533 = vmatprep.subr.mxu0 0.0
        %1534 = vmatpush1.msra.mxu0 0.0
        %1535 = vmatprep.subr.mxu0 0.0
        %1536 = vmatpush1.msra.mxu0 0.0
        %1537 = vmatprep.subr.mxu0 0.0
        %1538 = vmatpush1.msra.mxu0 0.0
        %1539 = vmatprep.subr.mxu0 0.0
        %1540 = vmatpush1.msra.mxu0 0.0
        %1541 = vmatprep.subr.mxu0 0.0
        %1542 = vmatpush1.msra.mxu0 0.0
        %1543 = vmatprep.mubr.f32.mxu0 0.0
        %1544 = vmatmul.mubr.f32.gmra.mrb[0].mxu0 %v1472
        %v1545 = vpop.f32.mrb[0].mxu0
        %v1546 = vadd.f32 0.0, %v1545
        %v1547 = vpop.f32.mrb[0].mxu0
        %1548 = vmatprep.mubr.f32.mxu0 0.0
        %1549 = vmatmul.mubr.f32.gmra.mrb[0].mxu0 %v1475
        %v1550 = vpop.f32.mrb[0].mxu0
        %v1551 = vadd.f32 0.0, %v1550
        %v1552 = vpop.f32.mrb[0].mxu0
        %1553 = vdwg.mxu0
        %v1554 = vld [vmem:[%s547 + $0x230] sm:$0xff]
        %v1555 = vld [vmem:[%s547 + $0x238] sm:$0xff]
        %v1556 = vld [vmem:[%s547 + $0x2b0] sm:$0xff]
        %v1557 = vld [vmem:[%s547 + $0x2b8] sm:$0xff]
        %v1558 = vld [vmem:[%s547 + $0x330] sm:$0xff]
        %v1559 = vld [vmem:[%s547 + $0x338] sm:$0xff]
        %v1560 = vld [vmem:[%s547 + $0x3b0] sm:$0xff]
        %v1561 = vld [vmem:[%s547 + $0x3b8] sm:$0xff]
        %v1563 = vsel %vm1139, %v1546, 0
        %v1566 = vsel %vm1139, %v1551, 0
        %1568 = vmatprep.subr.mxu0 %v1555
        %1569 = vmatpush1.msra.mxu0 %v1554
        %1570 = vmatprep.subr.mxu0 %v1557
        %1571 = vmatpush1.msra.mxu0 %v1556
        %1572 = vmatprep.subr.mxu0 %v1559
        %1573 = vmatpush1.msra.mxu0 %v1558
        %1574 = vmatprep.subr.mxu0 %v1561
        %1575 = vmatpush1.msra.mxu0 %v1560
        %1576 = vmatprep.subr.mxu0 0.0
        %1577 = vmatpush1.msra.mxu0 0.0
        %1578 = vmatprep.subr.mxu0 0.0
        %1579 = vmatpush1.msra.mxu0 0.0
        %1580 = vmatprep.subr.mxu0 0.0
        %1581 = vmatpush1.msra.mxu0 0.0
        %1582 = vmatprep.subr.mxu0 0.0
        %1583 = vmatpush1.msra.mxu0 0.0
        %1584 = vmatprep.subr.mxu0 0.0
        %1585 = vmatpush1.msra.mxu0 0.0
        %1586 = vmatprep.subr.mxu0 0.0
        %1587 = vmatpush1.msra.mxu0 0.0
        %1588 = vmatprep.subr.mxu0 0.0
        %1589 = vmatpush1.msra.mxu0 0.0
        %1590 = vmatprep.subr.mxu0 0.0
        %1591 = vmatpush1.msra.mxu0 0.0
        %1592 = vmatprep.subr.mxu0 0.0
        %1593 = vmatpush1.msra.mxu0 0.0
        %1594 = vmatprep.subr.mxu0 0.0
        %1595 = vmatpush1.msra.mxu0 0.0
        %1596 = vmatprep.subr.mxu0 0.0
        %1597 = vmatpush1.msra.mxu0 0.0
        %1598 = vmatprep.subr.mxu0 0.0
        %1599 = vmatpush1.msra.mxu0 0.0
        %1600 = vmatprep.subr.mxu0 0.0
        %1601 = vmatpush1.msra.mxu0 0.0
        %1602 = vmatprep.subr.mxu0 0.0
        %1603 = vmatpush1.msra.mxu0 0.0
        %1604 = vmatprep.subr.mxu0 0.0
        %1605 = vmatpush1.msra.mxu0 0.0
        %1606 = vmatprep.subr.mxu0 0.0
        %1607 = vmatpush1.msra.mxu0 0.0
        %1608 = vmatprep.subr.mxu0 0.0
        %1609 = vmatpush1.msra.mxu0 0.0
        %1610 = vmatprep.subr.mxu0 0.0
        %1611 = vmatpush1.msra.mxu0 0.0
        %1612 = vmatprep.subr.mxu0 0.0
        %1613 = vmatpush1.msra.mxu0 0.0
        %1614 = vmatprep.subr.mxu0 0.0
        %1615 = vmatpush1.msra.mxu0 0.0
        %1616 = vmatprep.subr.mxu0 0.0
        %1617 = vmatpush1.msra.mxu0 0.0
        %1618 = vmatprep.subr.mxu0 0.0
        %1619 = vmatpush1.msra.mxu0 0.0
        %1620 = vmatprep.subr.mxu0 0.0
        %1621 = vmatpush1.msra.mxu0 0.0
        %1622 = vmatprep.subr.mxu0 0.0
        %1623 = vmatpush1.msra.mxu0 0.0
        %1624 = vmatprep.subr.mxu0 0.0
        %1625 = vmatpush1.msra.mxu0 0.0
        %1626 = vmatprep.subr.mxu0 0.0
        %1627 = vmatpush1.msra.mxu0 0.0
        %1628 = vmatprep.subr.mxu0 0.0
        %1629 = vmatpush1.msra.mxu0 0.0
        %1630 = vmatprep.subr.mxu0 0.0
        %1631 = vmatpush1.msra.mxu0 0.0
        %1632 = vmatprep.mubr.f32.mxu0 0.0
        %1633 = vmatmul.mubr.f32.gmra.mrb[0].mxu0 %v1563
        %v1634 = vpop.f32.mrb[0].mxu0
        %v1635 = vadd.f32 0.0, %v1634
        %v1636 = vpop.f32.mrb[0].mxu0
        %v1637 = vadd.f32 0.0, %v1636
        %1638 = vmatprep.mubr.f32.mxu0 0.0
        %1639 = vmatmul.mubr.f32.gmra.mrb[0].mxu0 %v1566
        %v1640 = vpop.f32.mrb[0].mxu0
        %v1641 = vadd.f32 0.0, %v1640
        %v1642 = vpop.f32.mrb[0].mxu0
        %v1643 = vadd.f32 0.0, %v1642
        %1644 = vdwg.mxu0
        %v1646 = vsel %vm1139, %v1332, 0
        %v1649 = vsel %vm1139, %v1337, 0
        %1651 = vmatprep.subr.mxu0 %v1341
        %1652 = vmatpush1.msra.mxu0 %v1340
        %1653 = vmatprep.subr.mxu0 %v1343
        %1654 = vmatpush1.msra.mxu0 %v1342
        %1655 = vmatprep.subr.mxu0 %v1345
        %1656 = vmatpush1.msra.mxu0 %v1344
        %1657 = vmatprep.subr.mxu0 %v1347
        %1658 = vmatpush1.msra.mxu0 %v1346
        %1659 = vmatprep.subr.mxu0 0.0
        %1660 = vmatpush1.msra.mxu0 0.0
        %1661 = vmatprep.subr.mxu0 0.0
        %1662 = vmatpush1.msra.mxu0 0.0
        %1663 = vmatprep.subr.mxu0 0.0
        %1664 = vmatpush1.msra.mxu0 0.0
        %1665 = vmatprep.subr.mxu0 0.0
        %1666 = vmatpush1.msra.mxu0 0.0
        %1667 = vmatprep.subr.mxu0 0.0
        %1668 = vmatpush1.msra.mxu0 0.0
        %1669 = vmatprep.subr.mxu0 0.0
        %1670 = vmatpush1.msra.mxu0 0.0
        %1671 = vmatprep.subr.mxu0 0.0
        %1672 = vmatpush1.msra.mxu0 0.0
        %1673 = vmatprep.subr.mxu0 0.0
        %1674 = vmatpush1.msra.mxu0 0.0
        %1675 = vmatprep.subr.mxu0 0.0
        %1676 = vmatpush1.msra.mxu0 0.0
        %1677 = vmatprep.subr.mxu0 0.0
        %1678 = vmatpush1.msra.mxu0 0.0
        %1679 = vmatprep.subr.mxu0 0.0
        %1680 = vmatpush1.msra.mxu0 0.0
        %1681 = vmatprep.subr.mxu0 0.0
        %1682 = vmatpush1.msra.mxu0 0.0
        %1683 = vmatprep.subr.mxu0 0.0
        %1684 = vmatpush1.msra.mxu0 0.0
        %1685 = vmatprep.subr.mxu0 0.0
        %1686 = vmatpush1.msra.mxu0 0.0
        %1687 = vmatprep.subr.mxu0 0.0
        %1688 = vmatpush1.msra.mxu0 0.0
        %1689 = vmatprep.subr.mxu0 0.0
        %1690 = vmatpush1.msra.mxu0 0.0
        %1691 = vmatprep.subr.mxu0 0.0
        %1692 = vmatpush1.msra.mxu0 0.0
        %1693 = vmatprep.subr.mxu0 0.0
        %1694 = vmatpush1.msra.mxu0 0.0
        %1695 = vmatprep.subr.mxu0 0.0
        %1696 = vmatpush1.msra.mxu0 0.0
        %1697 = vmatprep.subr.mxu0 0.0
        %1698 = vmatpush1.msra.mxu0 0.0
        %1699 = vmatprep.subr.mxu0 0.0
        %1700 = vmatpush1.msra.mxu0 0.0
        %1701 = vmatprep.subr.mxu0 0.0
        %1702 = vmatpush1.msra.mxu0 0.0
        %1703 = vmatprep.subr.mxu0 0.0
        %1704 = vmatpush1.msra.mxu0 0.0
        %1705 = vmatprep.subr.mxu0 0.0
        %1706 = vmatpush1.msra.mxu0 0.0
        %1707 = vmatprep.subr.mxu0 0.0
        %1708 = vmatpush1.msra.mxu0 0.0
        %1709 = vmatprep.subr.mxu0 0.0
        %1710 = vmatpush1.msra.mxu0 0.0
        %1711 = vmatprep.subr.mxu0 0.0
        %1712 = vmatpush1.msra.mxu0 0.0
        %1713 = vmatprep.subr.mxu0 0.0
        %1714 = vmatpush1.msra.mxu0 0.0
        %1715 = vmatprep.mubr.f32.mxu0 0.0
        %1716 = vmatmul.mubr.f32.gmra.mrb[0].mxu0 %v1646
        %v1717 = vpop.f32.mrb[0].mxu0
        %v1718 = vadd.f32 %v1635, %v1717
        %v1719 = vpop.f32.mrb[0].mxu0
        %v1720 = vadd.f32 %v1637, %v1719
        %1721 = vmatprep.mubr.f32.mxu0 0.0
        %1722 = vmatmul.mubr.f32.gmra.mrb[0].mxu0 %v1649
        %v1723 = vpop.f32.mrb[0].mxu0
        %v1724 = vadd.f32 %v1641, %v1723
        %v1725 = vpop.f32.mrb[0].mxu0
        %v1726 = vadd.f32 %v1643, %v1725
        %1727 = vdwg.mxu0
        %1728 = vrot.lane.b32.xlu0 %v1111, 64
        %v1729 = vpop.permute.xlu0 %1728
        %1730 = vrot.lane.b32.xlu0 %v1113, 64
        %v1731 = vpop.permute.xlu0 %1730
        %1732 = vrot.lane.b32.xlu0 %v1123, 64
        %v1733 = vpop.permute.xlu0 %1732
        %1734 = vrot.lane.b32.xlu0 %v1125, 64
        %v1735 = vpop.permute.xlu0 %1734
        %v1736 = vsel %vm1139, %v1729, 0
        %v1738 = vsel %vm1139, %v1731, 0
        %v1740 = vsel %vm1139, %v1733, 0
        %v1742 = vsel %vm1139, %v1735, 0
        %1744 = vmatprep.subr.mxu0 0.0
        %1745 = vmatpush1.xpose.msra.mxu0 %v1740
        %1746 = vmatprep.subr.mxu0 0.0
        %1747 = vmatpush1.xpose.msra.mxu0 %v1742
        %1748 = vmatprep.subr.mxu0 0.0
        %1749 = vmatpush1.xpose.msra.mxu0 0.0
        %1750 = vmatprep.subr.mxu0 0.0
        %1751 = vmatpush1.xpose.msra.mxu0 0.0
        %1752 = vmatprep.subr.mxu0 0.0
        %1753 = vmatpush1.xpose.msra.mxu0 0.0
        %1754 = vmatprep.subr.mxu0 0.0
        %1755 = vmatpush1.xpose.msra.mxu0 0.0
        %1756 = vmatprep.subr.mxu0 0.0
        %1757 = vmatpush1.xpose.msra.mxu0 0.0
        %1758 = vmatprep.subr.mxu0 0.0
        %1759 = vmatpush1.xpose.msra.mxu0 0.0
        %1760 = vmatprep.subr.mxu0 0.0
        %1761 = vmatpush1.xpose.msra.mxu0 0.0
        %1762 = vmatprep.subr.mxu0 0.0
        %1763 = vmatpush1.xpose.msra.mxu0 0.0
        %1764 = vmatprep.subr.mxu0 0.0
        %1765 = vmatpush1.xpose.msra.mxu0 0.0
        %1766 = vmatprep.subr.mxu0 0.0
        %1767 = vmatpush1.xpose.msra.mxu0 0.0
        %1768 = vmatprep.subr.mxu0 0.0
        %1769 = vmatpush1.xpose.msra.mxu0 0.0
        %1770 = vmatprep.subr.mxu0 0.0
        %1771 = vmatpush1.xpose.msra.mxu0 0.0
        %1772 = vmatprep.subr.mxu0 0.0
        %1773 = vmatpush1.xpose.msra.mxu0 0.0
        %1774 = vmatprep.subr.mxu0 0.0
        %1775 = vmatpush1.xpose.msra.mxu0 0.0
        %1776 = vmatprep.subr.mxu0 0.0
        %1777 = vmatpush1.xpose.msra.mxu0 0.0
        %1778 = vmatprep.subr.mxu0 0.0
        %1779 = vmatpush1.xpose.msra.mxu0 0.0
        %1780 = vmatprep.subr.mxu0 0.0
        %1781 = vmatpush1.xpose.msra.mxu0 0.0
        %1782 = vmatprep.subr.mxu0 0.0
        %1783 = vmatpush1.xpose.msra.mxu0 0.0
        %1784 = vmatprep.subr.mxu0 0.0
        %1785 = vmatpush1.xpose.msra.mxu0 0.0
        %1786 = vmatprep.subr.mxu0 0.0
        %1787 = vmatpush1.xpose.msra.mxu0 0.0
        %1788 = vmatprep.subr.mxu0 0.0
        %1789 = vmatpush1.xpose.msra.mxu0 0.0
        %1790 = vmatprep.subr.mxu0 0.0
        %1791 = vmatpush1.xpose.msra.mxu0 0.0
        %1792 = vmatprep.subr.mxu0 0.0
        %1793 = vmatpush1.xpose.msra.mxu0 0.0
        %1794 = vmatprep.subr.mxu0 0.0
        %1795 = vmatpush1.xpose.msra.mxu0 0.0
        %1796 = vmatprep.subr.mxu0 0.0
        %1797 = vmatpush1.xpose.msra.mxu0 0.0
        %1798 = vmatprep.subr.mxu0 0.0
        %1799 = vmatpush1.xpose.msra.mxu0 0.0
        %1800 = vmatprep.subr.mxu0 0.0
        %1801 = vmatpush1.xpose.msra.mxu0 0.0
        %1802 = vmatprep.subr.mxu0 0.0
        %1803 = vmatpush1.xpose.msra.mxu0 0.0
        %1804 = vmatprep.subr.mxu0 0.0
        %1805 = vmatpush1.xpose.msra.mxu0 0.0
        %1806 = vmatprep.subr.mxu0 0.0
        %1807 = vmatpush1.xpose.msra.mxu0 0.0
        %1808 = vmatprep.mubr.f32.mxu0 0.0
        %1809 = vmatmul.mubr.f32.gmra.mrb[0].mxu0 %v1736
        %v1810 = vpop.f32.mrb[0].mxu0
        %v1811 = vadd.f32 0.0, %v1810
        %v1812 = vpop.f32.mrb[0].mxu0
        %1813 = vmatprep.mubr.f32.mxu0 0.0
        %1814 = vmatmul.mubr.f32.gmra.mrb[0].mxu0 %v1738
        %v1815 = vpop.f32.mrb[0].mxu0
        %v1816 = vadd.f32 0.0, %v1815
        %v1817 = vpop.f32.mrb[0].mxu0
        %1818 = vdwg.mxu0
        %v1819 = vmul.f32 %v1811, 0.17677669
        %v1820 = vmul.f32 %v1816, 0.17677669
        %v1821 = vsel %vm666, %v1819, -1e+09
        %v1822 = vsel %vm667, %v1820, -1e+09
        %v1823 = vsel %vm1231, %v1821, -inf
        %1824 = vmax.xlane.f32.xlu0 %v1823
        %v1825 = vpop.xlane.xlu0 %1824
        %v1826 = vsel %vm1235, %v1822, -inf
        %1827 = vmax.xlane.f32.xlu0 %v1826
        %v1828 = vpop.xlane.xlu0 %1827
        %v1829 = vsub.f32 %v1821, %v1825
        %v1830 = vsub.f32 %v1822, %v1828
        %v1831 = vmul.f32 %v1829, 1.442695
        %v1832 = vpow.pop %v1831
        %v1833 = vmul.f32 %v1830, 1.442695
        %v1834 = vpow.pop %v1833
        %v1835 = vsel %vm1231, %v1832, 0.0
        %1836 = vadd.xlane.f32.xlu0 %v1835
        %v1837 = vpop.xlane.xlu0 %1836
        %v1838 = vsel %vm1235, %v1834, 0.0
        %1839 = vadd.xlane.f32.xlu0 %v1838
        %v1840 = vpop.xlane.xlu0 %1839
        %v1841 = vrcp.pop %v1837
        %v1842 = vmul.f32 %v1832, %v1841
        %v1843 = vrcp.pop %v1840
        %v1844 = vmul.f32 %v1834, %v1843
        %1845 = vrot.lane.b32.xlu0 %v1135, 64
        %v1846 = vpop.permute.xlu0 %1845
        %1847 = vrot.lane.b32.xlu0 %v1137, 64
        %v1848 = vpop.permute.xlu0 %1847
        %v1851 = vsel %vm1231, %v1842, 0
        %v1854 = vsel %vm1231, %v1844, 0
        %v1856 = vsel %vm1261, %v1848, 0
        %1858 = vmatprep.subr.mxu0 0.0
        %1859 = vmatpush1.msra.mxu0 %v1846
        %1860 = vmatprep.subr.mxu0 0.0
        %1861 = vmatpush1.msra.mxu0 %v1856
        %1862 = vmatprep.subr.mxu0 0.0
        %1863 = vmatpush1.msra.mxu0 0.0
        %1864 = vmatprep.subr.mxu0 0.0
        %1865 = vmatpush1.msra.mxu0 0.0
        %1866 = vmatprep.subr.mxu0 0.0
        %1867 = vmatpush1.msra.mxu0 0.0
        %1868 = vmatprep.subr.mxu0 0.0
        %1869 = vmatpush1.msra.mxu0 0.0
        %1870 = vmatprep.subr.mxu0 0.0
        %1871 = vmatpush1.msra.mxu0 0.0
        %1872 = vmatprep.subr.mxu0 0.0
        %1873 = vmatpush1.msra.mxu0 0.0
        %1874 = vmatprep.subr.mxu0 0.0
        %1875 = vmatpush1.msra.mxu0 0.0
        %1876 = vmatprep.subr.mxu0 0.0
        %1877 = vmatpush1.msra.mxu0 0.0
        %1878 = vmatprep.subr.mxu0 0.0
        %1879 = vmatpush1.msra.mxu0 0.0
        %1880 = vmatprep.subr.mxu0 0.0
        %1881 = vmatpush1.msra.mxu0 0.0
        %1882 = vmatprep.subr.mxu0 0.0
        %1883 = vmatpush1.msra.mxu0 0.0
        %1884 = vmatprep.subr.mxu0 0.0
        %1885 = vmatpush1.msra.mxu0 0.0
        %1886 = vmatprep.subr.mxu0 0.0
        %1887 = vmatpush1.msra.mxu0 0.0
        %1888 = vmatprep.subr.mxu0 0.0
        %1889 = vmatpush1.msra.mxu0 0.0
        %1890 = vmatprep.subr.mxu0 0.0
        %1891 = vmatpush1.msra.mxu0 0.0
        %1892 = vmatprep.subr.mxu0 0.0
        %1893 = vmatpush1.msra.mxu0 0.0
        %1894 = vmatprep.subr.mxu0 0.0
        %1895 = vmatpush1.msra.mxu0 0.0
        %1896 = vmatprep.subr.mxu0 0.0
        %1897 = vmatpush1.msra.mxu0 0.0
        %1898 = vmatprep.subr.mxu0 0.0
        %1899 = vmatpush1.msra.mxu0 0.0
        %1900 = vmatprep.subr.mxu0 0.0
        %1901 = vmatpush1.msra.mxu0 0.0
        %1902 = vmatprep.subr.mxu0 0.0
        %1903 = vmatpush1.msra.mxu0 0.0
        %1904 = vmatprep.subr.mxu0 0.0
        %1905 = vmatpush1.msra.mxu0 0.0
        %1906 = vmatprep.subr.mxu0 0.0
        %1907 = vmatpush1.msra.mxu0 0.0
        %1908 = vmatprep.subr.mxu0 0.0
        %1909 = vmatpush1.msra.mxu0 0.0
        %1910 = vmatprep.subr.mxu0 0.0
        %1911 = vmatpush1.msra.mxu0 0.0
        %1912 = vmatprep.subr.mxu0 0.0
        %1913 = vmatpush1.msra.mxu0 0.0
        %1914 = vmatprep.subr.mxu0 0.0
        %1915 = vmatpush1.msra.mxu0 0.0
        %1916 = vmatprep.subr.mxu0 0.0
        %1917 = vmatpush1.msra.mxu0 0.0
        %1918 = vmatprep.subr.mxu0 0.0
        %1919 = vmatpush1.msra.mxu0 0.0
        %1920 = vmatprep.subr.mxu0 0.0
        %1921 = vmatpush1.msra.mxu0 0.0
        %1922 = vmatprep.mubr.f32.mxu0 0.0
        %1923 = vmatmul.mubr.f32.gmra.mrb[0].mxu0 %v1851
        %v1924 = vpop.f32.mrb[0].mxu0
        %v1925 = vadd.f32 0.0, %v1924
        %v1926 = vpop.f32.mrb[0].mxu0
        %1927 = vmatprep.mubr.f32.mxu0 0.0
        %1928 = vmatmul.mubr.f32.gmra.mrb[0].mxu0 %v1854
        %v1929 = vpop.f32.mrb[0].mxu0
        %v1930 = vadd.f32 0.0, %v1929
        %v1931 = vpop.f32.mrb[0].mxu0
        %1932 = vdwg.mxu0
        %v1933 = vld [vmem:[%s547 + $0x430] sm:$0xff]
        %v1934 = vld [vmem:[%s547 + $0x438] sm:$0xff]
        %v1935 = vld [vmem:[%s547 + $0x4b0] sm:$0xff]
        %v1936 = vld [vmem:[%s547 + $0x4b8] sm:$0xff]
        %v1937 = vld [vmem:[%s547 + $0x530] sm:$0xff]
        %v1938 = vld [vmem:[%s547 + $0x538] sm:$0xff]
        %v1939 = vld [vmem:[%s547 + $0x5b0] sm:$0xff]
        %v1940 = vld [vmem:[%s547 + $0x5b8] sm:$0xff]
        %v1942 = vsel %vm1139, %v1925, 0
        %v1945 = vsel %vm1139, %v1930, 0
        %1947 = vmatprep.subr.mxu0 %v1934
        %1948 = vmatpush1.msra.mxu0 %v1933
        %1949 = vmatprep.subr.mxu0 %v1936
        %1950 = vmatpush1.msra.mxu0 %v1935
        %1951 = vmatprep.subr.mxu0 %v1938
        %1952 = vmatpush1.msra.mxu0 %v1937
        %1953 = vmatprep.subr.mxu0 %v1940
        %1954 = vmatpush1.msra.mxu0 %v1939
        %1955 = vmatprep.subr.mxu0 0.0
        %1956 = vmatpush1.msra.mxu0 0.0
        %1957 = vmatprep.subr.mxu0 0.0
        %1958 = vmatpush1.msra.mxu0 0.0
        %1959 = vmatprep.subr.mxu0 0.0
        %1960 = vmatpush1.msra.mxu0 0.0
        %1961 = vmatprep.subr.mxu0 0.0
        %1962 = vmatpush1.msra.mxu0 0.0
        %1963 = vmatprep.subr.mxu0 0.0
        %1964 = vmatpush1.msra.mxu0 0.0
        %1965 = vmatprep.subr.mxu0 0.0
        %1966 = vmatpush1.msra.mxu0 0.0
        %1967 = vmatprep.subr.mxu0 0.0
        %1968 = vmatpush1.msra.mxu0 0.0
        %1969 = vmatprep.subr.mxu0 0.0
        %1970 = vmatpush1.msra.mxu0 0.0
        %1971 = vmatprep.subr.mxu0 0.0
        %1972 = vmatpush1.msra.mxu0 0.0
        %1973 = vmatprep.subr.mxu0 0.0
        %1974 = vmatpush1.msra.mxu0 0.0
        %1975 = vmatprep.subr.mxu0 0.0
        %1976 = vmatpush1.msra.mxu0 0.0
        %1977 = vmatprep.subr.mxu0 0.0
        %1978 = vmatpush1.msra.mxu0 0.0
        %1979 = vmatprep.subr.mxu0 0.0
        %1980 = vmatpush1.msra.mxu0 0.0
        %1981 = vmatprep.subr.mxu0 0.0
        %1982 = vmatpush1.msra.mxu0 0.0
        %1983 = vmatprep.subr.mxu0 0.0
        %1984 = vmatpush1.msra.mxu0 0.0
        %1985 = vmatprep.subr.mxu0 0.0
        %1986 = vmatpush1.msra.mxu0 0.0
        %1987 = vmatprep.subr.mxu0 0.0
        %1988 = vmatpush1.msra.mxu0 0.0
        %1989 = vmatprep.subr.mxu0 0.0
        %1990 = vmatpush1.msra.mxu0 0.0
        %1991 = vmatprep.subr.mxu0 0.0
        %1992 = vmatpush1.msra.mxu0 0.0
        %1993 = vmatprep.subr.mxu0 0.0
        %1994 = vmatpush1.msra.mxu0 0.0
        %1995 = vmatprep.subr.mxu0 0.0
        %1996 = vmatpush1.msra.mxu0 0.0
        %1997 = vmatprep.subr.mxu0 0.0
        %1998 = vmatpush1.msra.mxu0 0.0
        %1999 = vmatprep.subr.mxu0 0.0
        %2000 = vmatpush1.msra.mxu0 0.0
        %2001 = vmatprep.subr.mxu0 0.0
        %2002 = vmatpush1.msra.mxu0 0.0
        %2003 = vmatprep.subr.mxu0 0.0
        %2004 = vmatpush1.msra.mxu0 0.0
        %2005 = vmatprep.subr.mxu0 0.0
        %2006 = vmatpush1.msra.mxu0 0.0
        %2007 = vmatprep.subr.mxu0 0.0
        %2008 = vmatpush1.msra.mxu0 0.0
        %2009 = vmatprep.subr.mxu0 0.0
        %2010 = vmatpush1.msra.mxu0 0.0
        %2011 = vmatprep.mubr.f32.mxu0 0.0
        %2012 = vmatmul.mubr.f32.gmra.mrb[0].mxu0 %v1942
        %v2013 = vpop.f32.mrb[0].mxu0
        %v2014 = vadd.f32 0.0, %v2013
        %v2015 = vpop.f32.mrb[0].mxu0
        %v2016 = vadd.f32 0.0, %v2015
        %2017 = vmatprep.mubr.f32.mxu0 0.0
        %2018 = vmatmul.mubr.f32.gmra.mrb[0].mxu0 %v1945
        %v2019 = vpop.f32.mrb[0].mxu0
        %v2020 = vadd.f32 0.0, %v2019
        %v2021 = vpop.f32.mrb[0].mxu0
        %v2022 = vadd.f32 0.0, %v2021
        %2023 = vdwg.mxu0
        %v2024 = vadd.f32 %v1718, %v2014
        %v2025 = vadd.f32 %v1720, %v2016
        %v2026 = vadd.f32 %v1724, %v2020
        %v2027 = vadd.f32 %v1726, %v2022
        %2028 = vrot.lane.b32.xlu0 %v1111, 32
        %v2029 = vpop.permute.xlu0 %2028
        %2030 = vrot.lane.b32.xlu0 %v1113, 32
        %v2031 = vpop.permute.xlu0 %2030
        %2032 = vrot.lane.b32.xlu0 %v1123, 32
        %v2033 = vpop.permute.xlu0 %2032
        %2034 = vrot.lane.b32.xlu0 %v1125, 32
        %v2035 = vpop.permute.xlu0 %2034
        %v2036 = vsel %vm1139, %v2029, 0
        %v2038 = vsel %vm1139, %v2031, 0
        %v2040 = vsel %vm1139, %v2033, 0
        %v2042 = vsel %vm1139, %v2035, 0
        %2044 = vmatprep.subr.mxu0 0.0
        %2045 = vmatpush1.xpose.msra.mxu0 %v2040
        %2046 = vmatprep.subr.mxu0 0.0
        %2047 = vmatpush1.xpose.msra.mxu0 %v2042
        %2048 = vmatprep.subr.mxu0 0.0
        %2049 = vmatpush1.xpose.msra.mxu0 0.0
        %2050 = vmatprep.subr.mxu0 0.0
        %2051 = vmatpush1.xpose.msra.mxu0 0.0
        %2052 = vmatprep.subr.mxu0 0.0
        %2053 = vmatpush1.xpose.msra.mxu0 0.0
        %2054 = vmatprep.subr.mxu0 0.0
        %2055 = vmatpush1.xpose.msra.mxu0 0.0
        %2056 = vmatprep.subr.mxu0 0.0
        %2057 = vmatpush1.xpose.msra.mxu0 0.0
        %2058 = vmatprep.subr.mxu0 0.0
        %2059 = vmatpush1.xpose.msra.mxu0 0.0
        %2060 = vmatprep.subr.mxu0 0.0
        %2061 = vmatpush1.xpose.msra.mxu0 0.0
        %2062 = vmatprep.subr.mxu0 0.0
        %2063 = vmatpush1.xpose.msra.mxu0 0.0
        %2064 = vmatprep.subr.mxu0 0.0
        %2065 = vmatpush1.xpose.msra.mxu0 0.0
        %2066 = vmatprep.subr.mxu0 0.0
        %2067 = vmatpush1.xpose.msra.mxu0 0.0
        %2068 = vmatprep.subr.mxu0 0.0
        %2069 = vmatpush1.xpose.msra.mxu0 0.0
        %2070 = vmatprep.subr.mxu0 0.0
        %2071 = vmatpush1.xpose.msra.mxu0 0.0
        %2072 = vmatprep.subr.mxu0 0.0
        %2073 = vmatpush1.xpose.msra.mxu0 0.0
        %2074 = vmatprep.subr.mxu0 0.0
        %2075 = vmatpush1.xpose.msra.mxu0 0.0
        %2076 = vmatprep.subr.mxu0 0.0
        %2077 = vmatpush1.xpose.msra.mxu0 0.0
        %2078 = vmatprep.subr.mxu0 0.0
        %2079 = vmatpush1.xpose.msra.mxu0 0.0
        %2080 = vmatprep.subr.mxu0 0.0
        %2081 = vmatpush1.xpose.msra.mxu0 0.0
        %2082 = vmatprep.subr.mxu0 0.0
        %2083 = vmatpush1.xpose.msra.mxu0 0.0
        %2084 = vmatprep.subr.mxu0 0.0
        %2085 = vmatpush1.xpose.msra.mxu0 0.0
        %2086 = vmatprep.subr.mxu0 0.0
        %2087 = vmatpush1.xpose.msra.mxu0 0.0
        %2088 = vmatprep.subr.mxu0 0.0
        %2089 = vmatpush1.xpose.msra.mxu0 0.0
        %2090 = vmatprep.subr.mxu0 0.0
        %2091 = vmatpush1.xpose.msra.mxu0 0.0
        %2092 = vmatprep.subr.mxu0 0.0
        %2093 = vmatpush1.xpose.msra.mxu0 0.0
        %2094 = vmatprep.subr.mxu0 0.0
        %2095 = vmatpush1.xpose.msra.mxu0 0.0
        %2096 = vmatprep.subr.mxu0 0.0
        %2097 = vmatpush1.xpose.msra.mxu0 0.0
        %2098 = vmatprep.subr.mxu0 0.0
        %2099 = vmatpush1.xpose.msra.mxu0 0.0
        %2100 = vmatprep.subr.mxu0 0.0
        %2101 = vmatpush1.xpose.msra.mxu0 0.0
        %2102 = vmatprep.subr.mxu0 0.0
        %2103 = vmatpush1.xpose.msra.mxu0 0.0
        %2104 = vmatprep.subr.mxu0 0.0
        %2105 = vmatpush1.xpose.msra.mxu0 0.0
        %2106 = vmatprep.subr.mxu0 0.0
        %2107 = vmatpush1.xpose.msra.mxu0 0.0
        %2108 = vmatprep.mubr.f32.mxu0 0.0
        %2109 = vmatmul.mubr.f32.gmra.mrb[0].mxu0 %v2036
        %v2110 = vpop.f32.mrb[0].mxu0
        %v2111 = vadd.f32 0.0, %v2110
        %v2112 = vpop.f32.mrb[0].mxu0
        %2113 = vmatprep.mubr.f32.mxu0 0.0
        %2114 = vmatmul.mubr.f32.gmra.mrb[0].mxu0 %v2038
        %v2115 = vpop.f32.mrb[0].mxu0
        %v2116 = vadd.f32 0.0, %v2115
        %v2117 = vpop.f32.mrb[0].mxu0
        %2118 = vdwg.mxu0
        %v2119 = vmul.f32 %v2111, 0.17677669
        %v2120 = vmul.f32 %v2116, 0.17677669
        %v2121 = vsel %vm666, %v2119, -1e+09
        %v2122 = vsel %vm667, %v2120, -1e+09
        %v2123 = vsel %vm1231, %v2121, -inf
        %2124 = vmax.xlane.f32.xlu0 %v2123
        %v2125 = vpop.xlane.xlu0 %2124
        %v2126 = vsel %vm1235, %v2122, -inf
        %2127 = vmax.xlane.f32.xlu0 %v2126
        %v2128 = vpop.xlane.xlu0 %2127
        %v2129 = vsub.f32 %v2121, %v2125
        %v2130 = vsub.f32 %v2122, %v2128
        %v2131 = vmul.f32 %v2129, 1.442695
        %v2132 = vpow.pop %v2131
        %v2133 = vmul.f32 %v2130, 1.442695
        %v2134 = vpow.pop %v2133
        %v2135 = vsel %vm1231, %v2132, 0.0
        %2136 = vadd.xlane.f32.xlu0 %v2135
        %v2137 = vpop.xlane.xlu0 %2136
        %v2138 = vsel %vm1235, %v2134, 0.0
        %2139 = vadd.xlane.f32.xlu0 %v2138
        %v2140 = vpop.xlane.xlu0 %2139
        %v2141 = vrcp.pop %v2137
        %v2142 = vmul.f32 %v2132, %v2141
        %v2143 = vrcp.pop %v2140
        %v2144 = vmul.f32 %v2134, %v2143
        %2145 = vrot.lane.b32.xlu0 %v1135, 32
        %v2146 = vpop.permute.xlu0 %2145
        %2147 = vrot.lane.b32.xlu0 %v1137, 32
        %v2148 = vpop.permute.xlu0 %2147
        %v2151 = vsel %vm1231, %v2142, 0
        %v2154 = vsel %vm1231, %v2144, 0
        %v2156 = vsel %vm1261, %v2148, 0
        %2158 = vmatprep.subr.mxu0 0.0
        %2159 = vmatpush1.msra.mxu0 %v2146
        %2160 = vmatprep.subr.mxu0 0.0
        %2161 = vmatpush1.msra.mxu0 %v2156
        %2162 = vmatprep.subr.mxu0 0.0
        %2163 = vmatpush1.msra.mxu0 0.0
        %2164 = vmatprep.subr.mxu0 0.0
        %2165 = vmatpush1.msra.mxu0 0.0
        %2166 = vmatprep.subr.mxu0 0.0
        %2167 = vmatpush1.msra.mxu0 0.0
        %2168 = vmatprep.subr.mxu0 0.0
        %2169 = vmatpush1.msra.mxu0 0.0
        %2170 = vmatprep.subr.mxu0 0.0
        %2171 = vmatpush1.msra.mxu0 0.0
        %2172 = vmatprep.subr.mxu0 0.0
        %2173 = vmatpush1.msra.mxu0 0.0
        %2174 = vmatprep.subr.mxu0 0.0
        %2175 = vmatpush1.msra.mxu0 0.0
        %2176 = vmatprep.subr.mxu0 0.0
        %2177 = vmatpush1.msra.mxu0 0.0
        %2178 = vmatprep.subr.mxu0 0.0
        %2179 = vmatpush1.msra.mxu0 0.0
        %2180 = vmatprep.subr.mxu0 0.0
        %2181 = vmatpush1.msra.mxu0 0.0
        %2182 = vmatprep.subr.mxu0 0.0
        %2183 = vmatpush1.msra.mxu0 0.0
        %2184 = vmatprep.subr.mxu0 0.0
        %2185 = vmatpush1.msra.mxu0 0.0
        %2186 = vmatprep.subr.mxu0 0.0
        %2187 = vmatpush1.msra.mxu0 0.0
        %2188 = vmatprep.subr.mxu0 0.0
        %2189 = vmatpush1.msra.mxu0 0.0
        %2190 = vmatprep.subr.mxu0 0.0
        %2191 = vmatpush1.msra.mxu0 0.0
        %2192 = vmatprep.subr.mxu0 0.0
        %2193 = vmatpush1.msra.mxu0 0.0
        %2194 = vmatprep.subr.mxu0 0.0
        %2195 = vmatpush1.msra.mxu0 0.0
        %2196 = vmatprep.subr.mxu0 0.0
        %2197 = vmatpush1.msra.mxu0 0.0
        %2198 = vmatprep.subr.mxu0 0.0
        %2199 = vmatpush1.msra.mxu0 0.0
        %2200 = vmatprep.subr.mxu0 0.0
        %2201 = vmatpush1.msra.mxu0 0.0
        %2202 = vmatprep.subr.mxu0 0.0
        %2203 = vmatpush1.msra.mxu0 0.0
        %2204 = vmatprep.subr.mxu0 0.0
        %2205 = vmatpush1.msra.mxu0 0.0
        %2206 = vmatprep.subr.mxu0 0.0
        %2207 = vmatpush1.msra.mxu0 0.0
        %2208 = vmatprep.subr.mxu0 0.0
        %2209 = vmatpush1.msra.mxu0 0.0
        %2210 = vmatprep.subr.mxu0 0.0
        %2211 = vmatpush1.msra.mxu0 0.0
        %2212 = vmatprep.subr.mxu0 0.0
        %2213 = vmatpush1.msra.mxu0 0.0
        %2214 = vmatprep.subr.mxu0 0.0
        %2215 = vmatpush1.msra.mxu0 0.0
        %2216 = vmatprep.subr.mxu0 0.0
        %2217 = vmatpush1.msra.mxu0 0.0
        %2218 = vmatprep.subr.mxu0 0.0
        %2219 = vmatpush1.msra.mxu0 0.0
        %2220 = vmatprep.subr.mxu0 0.0
        %2221 = vmatpush1.msra.mxu0 0.0
        %2222 = vmatprep.mubr.f32.mxu0 0.0
        %2223 = vmatmul.mubr.f32.gmra.mrb[0].mxu0 %v2151
        %v2224 = vpop.f32.mrb[0].mxu0
        %v2225 = vadd.f32 0.0, %v2224
        %v2226 = vpop.f32.mrb[0].mxu0
        %2227 = vmatprep.mubr.f32.mxu0 0.0
        %2228 = vmatmul.mubr.f32.gmra.mrb[0].mxu0 %v2154
        %v2229 = vpop.f32.mrb[0].mxu0
        %v2230 = vadd.f32 0.0, %v2229
        %v2231 = vpop.f32.mrb[0].mxu0
        %2232 = vdwg.mxu0
        %v2233 = vld [vmem:[%s547 + $0x630] sm:$0xff]
        %v2234 = vld [vmem:[%s547 + $0x638] sm:$0xff]
        %v2235 = vld [vmem:[%s547 + $0x6b0] sm:$0xff]
        %v2236 = vld [vmem:[%s547 + $0x6b8] sm:$0xff]
        %v2237 = vld [vmem:[%s547 + $0x730] sm:$0xff]
        %v2238 = vld [vmem:[%s547 + $0x738] sm:$0xff]
        %v2239 = vld [vmem:[%s547 + $0x7b0] sm:$0xff]
        %v2240 = vld [vmem:[%s547 + $0x7b8] sm:$0xff]
        %v2242 = vsel %vm1139, %v2225, 0
        %v2245 = vsel %vm1139, %v2230, 0
        %2247 = vmatprep.subr.mxu0 %v2234
        %2248 = vmatpush1.msra.mxu0 %v2233
        %2249 = vmatprep.subr.mxu0 %v2236
        %2250 = vmatpush1.msra.mxu0 %v2235
        %2251 = vmatprep.subr.mxu0 %v2238
        %2252 = vmatpush1.msra.mxu0 %v2237
        %2253 = vmatprep.subr.mxu0 %v2240
        %2254 = vmatpush1.msra.mxu0 %v2239
        %2255 = vmatprep.subr.mxu0 0.0
        %2256 = vmatpush1.msra.mxu0 0.0
        %2257 = vmatprep.subr.mxu0 0.0
        %2258 = vmatpush1.msra.mxu0 0.0
        %2259 = vmatprep.subr.mxu0 0.0
        %2260 = vmatpush1.msra.mxu0 0.0
        %2261 = vmatprep.subr.mxu0 0.0
        %2262 = vmatpush1.msra.mxu0 0.0
        %2263 = vmatprep.subr.mxu0 0.0
        %2264 = vmatpush1.msra.mxu0 0.0
        %2265 = vmatprep.subr.mxu0 0.0
        %2266 = vmatpush1.msra.mxu0 0.0
        %2267 = vmatprep.subr.mxu0 0.0
        %2268 = vmatpush1.msra.mxu0 0.0
        %2269 = vmatprep.subr.mxu0 0.0
        %2270 = vmatpush1.msra.mxu0 0.0
        %2271 = vmatprep.subr.mxu0 0.0
        %2272 = vmatpush1.msra.mxu0 0.0
        %2273 = vmatprep.subr.mxu0 0.0
        %2274 = vmatpush1.msra.mxu0 0.0
        %2275 = vmatprep.subr.mxu0 0.0
        %2276 = vmatpush1.msra.mxu0 0.0
        %2277 = vmatprep.subr.mxu0 0.0
        %2278 = vmatpush1.msra.mxu0 0.0
        %2279 = vmatprep.subr.mxu0 0.0
        %2280 = vmatpush1.msra.mxu0 0.0
        %2281 = vmatprep.subr.mxu0 0.0
        %2282 = vmatpush1.msra.mxu0 0.0
        %2283 = vmatprep.subr.mxu0 0.0
        %2284 = vmatpush1.msra.mxu0 0.0
        %2285 = vmatprep.subr.mxu0 0.0
        %2286 = vmatpush1.msra.mxu0 0.0
        %2287 = vmatprep.subr.mxu0 0.0
        %2288 = vmatpush1.msra.mxu0 0.0
        %2289 = vmatprep.subr.mxu0 0.0
        %2290 = vmatpush1.msra.mxu0 0.0
        %2291 = vmatprep.subr.mxu0 0.0
        %2292 = vmatpush1.msra.mxu0 0.0
        %2293 = vmatprep.subr.mxu0 0.0
        %2294 = vmatpush1.msra.mxu0 0.0
        %2295 = vmatprep.subr.mxu0 0.0
        %2296 = vmatpush1.msra.mxu0 0.0
        %2297 = vmatprep.subr.mxu0 0.0
        %2298 = vmatpush1.msra.mxu0 0.0
        %2299 = vmatprep.subr.mxu0 0.0
        %2300 = vmatpush1.msra.mxu0 0.0
        %2301 = vmatprep.subr.mxu0 0.0
        %2302 = vmatpush1.msra.mxu0 0.0
        %2303 = vmatprep.subr.mxu0 0.0
        %2304 = vmatpush1.msra.mxu0 0.0
        %2305 = vmatprep.subr.mxu0 0.0
        %2306 = vmatpush1.msra.mxu0 0.0
        %2307 = vmatprep.subr.mxu0 0.0
        %2308 = vmatpush1.msra.mxu0 0.0
        %2309 = vmatprep.subr.mxu0 0.0
        %2310 = vmatpush1.msra.mxu0 0.0
        %2311 = vmatprep.mubr.f32.mxu0 0.0
        %2312 = vmatmul.mubr.f32.gmra.mrb[0].mxu0 %v2242
        %v2313 = vpop.f32.mrb[0].mxu0
        %v2314 = vadd.f32 0.0, %v2313
        %v2315 = vpop.f32.mrb[0].mxu0
        %v2316 = vadd.f32 0.0, %v2315
        %2317 = vmatprep.mubr.f32.mxu0 0.0
        %2318 = vmatmul.mubr.f32.gmra.mrb[0].mxu0 %v2245
        %v2319 = vpop.f32.mrb[0].mxu0
        %v2320 = vadd.f32 0.0, %v2319
        %v2321 = vpop.f32.mrb[0].mxu0
        %v2322 = vadd.f32 0.0, %v2321
        %2323 = vdwg.mxu0
        %v2324 = vadd.f32 %v2024, %v2314
        %v2325 = vadd.f32 %v2025, %v2316
        %v2326 = vadd.f32 %v2026, %v2320
        %v2327 = vadd.f32 %v2027, %v2322
        %v2329 = vsel %vm1139, %v1112, 0
        %v2332 = vsel %vm1139, %v1114, 0
        %v2335 = vsel %vm1139, %v1124, 0
        %v2338 = vsel %vm1139, %v1126, 0
        %2340 = vmatprep.subr.mxu0 0.0
        %2341 = vmatpush1.xpose.msra.mxu0 %v2335
        %2342 = vmatprep.subr.mxu0 0.0
        %2343 = vmatpush1.xpose.msra.mxu0 %v2338
        %2344 = vmatprep.subr.mxu0 0.0
        %2345 = vmatpush1.xpose.msra.mxu0 0.0
        %2346 = vmatprep.subr.mxu0 0.0
        %2347 = vmatpush1.xpose.msra.mxu0 0.0
        %2348 = vmatprep.subr.mxu0 0.0
        %2349 = vmatpush1.xpose.msra.mxu0 0.0
        %2350 = vmatprep.subr.mxu0 0.0
        %2351 = vmatpush1.xpose.msra.mxu0 0.0
        %2352 = vmatprep.subr.mxu0 0.0
        %2353 = vmatpush1.xpose.msra.mxu0 0.0
        %2354 = vmatprep.subr.mxu0 0.0
        %2355 = vmatpush1.xpose.msra.mxu0 0.0
        %2356 = vmatprep.subr.mxu0 0.0
        %2357 = vmatpush1.xpose.msra.mxu0 0.0
        %2358 = vmatprep.subr.mxu0 0.0
        %2359 = vmatpush1.xpose.msra.mxu0 0.0
        %2360 = vmatprep.subr.mxu0 0.0
        %2361 = vmatpush1.xpose.msra.mxu0 0.0
        %2362 = vmatprep.subr.mxu0 0.0
        %2363 = vmatpush1.xpose.msra.mxu0 0.0
        %2364 = vmatprep.subr.mxu0 0.0
        %2365 = vmatpush1.xpose.msra.mxu0 0.0
        %2366 = vmatprep.subr.mxu0 0.0
        %2367 = vmatpush1.xpose.msra.mxu0 0.0
        %2368 = vmatprep.subr.mxu0 0.0
        %2369 = vmatpush1.xpose.msra.mxu0 0.0
        %2370 = vmatprep.subr.mxu0 0.0
        %2371 = vmatpush1.xpose.msra.mxu0 0.0
        %2372 = vmatprep.subr.mxu0 0.0
        %2373 = vmatpush1.xpose.msra.mxu0 0.0
        %2374 = vmatprep.subr.mxu0 0.0
        %2375 = vmatpush1.xpose.msra.mxu0 0.0
        %2376 = vmatprep.subr.mxu0 0.0
        %2377 = vmatpush1.xpose.msra.mxu0 0.0
        %2378 = vmatprep.subr.mxu0 0.0
        %2379 = vmatpush1.xpose.msra.mxu0 0.0
        %2380 = vmatprep.subr.mxu0 0.0
        %2381 = vmatpush1.xpose.msra.mxu0 0.0
        %2382 = vmatprep.subr.mxu0 0.0
        %2383 = vmatpush1.xpose.msra.mxu0 0.0
        %2384 = vmatprep.subr.mxu0 0.0
        %2385 = vmatpush1.xpose.msra.mxu0 0.0
        %2386 = vmatprep.subr.mxu0 0.0
        %2387 = vmatpush1.xpose.msra.mxu0 0.0
        %2388 = vmatprep.subr.mxu0 0.0
        %2389 = vmatpush1.xpose.msra.mxu0 0.0
        %2390 = vmatprep.subr.mxu0 0.0
        %2391 = vmatpush1.xpose.msra.mxu0 0.0
        %2392 = vmatprep.subr.mxu0 0.0
        %2393 = vmatpush1.xpose.msra.mxu0 0.0
        %2394 = vmatprep.subr.mxu0 0.0
        %2395 = vmatpush1.xpose.msra.mxu0 0.0
        %2396 = vmatprep.subr.mxu0 0.0
        %2397 = vmatpush1.xpose.msra.mxu0 0.0
        %2398 = vmatprep.subr.mxu0 0.0
        %2399 = vmatpush1.xpose.msra.mxu0 0.0
        %2400 = vmatprep.subr.mxu0 0.0
        %2401 = vmatpush1.xpose.msra.mxu0 0.0
        %2402 = vmatprep.subr.mxu0 0.0
        %2403 = vmatpush1.xpose.msra.mxu0 0.0
        %2404 = vmatprep.mubr.f32.mxu0 0.0
        %2405 = vmatmul.mubr.f32.gmra.mrb[0].mxu0 %v2329
        %v2406 = vpop.f32.mrb[0].mxu0
        %v2407 = vadd.f32 0.0, %v2406
        %v2408 = vpop.f32.mrb[0].mxu0
        %2409 = vmatprep.mubr.f32.mxu0 0.0
        %2410 = vmatmul.mubr.f32.gmra.mrb[0].mxu0 %v2332
        %v2411 = vpop.f32.mrb[0].mxu0
        %v2412 = vadd.f32 0.0, %v2411
        %v2413 = vpop.f32.mrb[0].mxu0
        %2414 = vdwg.mxu0
        %v2415 = vmul.f32 %v2407, 0.17677669
        %v2416 = vmul.f32 %v2412, 0.17677669
        %v2417 = vsel %vm666, %v2415, -1e+09
        %v2418 = vsel %vm667, %v2416, -1e+09
        %v2419 = vsel %vm1231, %v2417, -inf
        %2420 = vmax.xlane.f32.xlu0 %v2419
        %v2421 = vpop.xlane.xlu0 %2420
        %v2422 = vsel %vm1235, %v2418, -inf
        %2423 = vmax.xlane.f32.xlu0 %v2422
        %v2424 = vpop.xlane.xlu0 %2423
        %v2425 = vsub.f32 %v2417, %v2421
        %v2426 = vsub.f32 %v2418, %v2424
        %v2427 = vmul.f32 %v2425, 1.442695
        %v2428 = vpow.pop %v2427
        %v2429 = vmul.f32 %v2426, 1.442695
        %v2430 = vpow.pop %v2429
        %v2431 = vsel %vm1231, %v2428, 0.0
        %2432 = vadd.xlane.f32.xlu0 %v2431
        %v2433 = vpop.xlane.xlu0 %2432
        %v2434 = vsel %vm1235, %v2430, 0.0
        %2435 = vadd.xlane.f32.xlu0 %v2434
        %v2436 = vpop.xlane.xlu0 %2435
        %v2437 = vrcp.pop %v2433
        %v2438 = vmul.f32 %v2428, %v2437
        %v2439 = vrcp.pop %v2436
        %v2440 = vmul.f32 %v2430, %v2439
        %v2442 = vsel %vm1231, %v2438, 0
        %v2445 = vsel %vm1231, %v2440, 0
        %v2448 = vsel %vm1261, %v1138, 0
        %2450 = vmatprep.subr.mxu0 0.0
        %2451 = vmatpush1.msra.mxu0 %v1136
        %2452 = vmatprep.subr.mxu0 0.0
        %2453 = vmatpush1.msra.mxu0 %v2448
        %2454 = vmatprep.subr.mxu0 0.0
        %2455 = vmatpush1.msra.mxu0 0.0
        %2456 = vmatprep.subr.mxu0 0.0
        %2457 = vmatpush1.msra.mxu0 0.0
        %2458 = vmatprep.subr.mxu0 0.0
        %2459 = vmatpush1.msra.mxu0 0.0
        %2460 = vmatprep.subr.mxu0 0.0
        %2461 = vmatpush1.msra.mxu0 0.0
        %2462 = vmatprep.subr.mxu0 0.0
        %2463 = vmatpush1.msra.mxu0 0.0
        %2464 = vmatprep.subr.mxu0 0.0
        %2465 = vmatpush1.msra.mxu0 0.0
        %2466 = vmatprep.subr.mxu0 0.0
        %2467 = vmatpush1.msra.mxu0 0.0
        %2468 = vmatprep.subr.mxu0 0.0
        %2469 = vmatpush1.msra.mxu0 0.0
        %2470 = vmatprep.subr.mxu0 0.0
        %2471 = vmatpush1.msra.mxu0 0.0
        %2472 = vmatprep.subr.mxu0 0.0
        %2473 = vmatpush1.msra.mxu0 0.0
        %2474 = vmatprep.subr.mxu0 0.0
        %2475 = vmatpush1.msra.mxu0 0.0
        %2476 = vmatprep.subr.mxu0 0.0
        %2477 = vmatpush1.msra.mxu0 0.0
        %2478 = vmatprep.subr.mxu0 0.0
        %2479 = vmatpush1.msra.mxu0 0.0
        %2480 = vmatprep.subr.mxu0 0.0
        %2481 = vmatpush1.msra.mxu0 0.0
        %2482 = vmatprep.subr.mxu0 0.0
        %2483 = vmatpush1.msra.mxu0 0.0
        %2484 = vmatprep.subr.mxu0 0.0
        %2485 = vmatpush1.msra.mxu0 0.0
        %2486 = vmatprep.subr.mxu0 0.0
        %2487 = vmatpush1.msra.mxu0 0.0
        %2488 = vmatprep.subr.mxu0 0.0
        %2489 = vmatpush1.msra.mxu0 0.0
        %2490 = vmatprep.subr.mxu0 0.0
        %2491 = vmatpush1.msra.mxu0 0.0
        %2492 = vmatprep.subr.mxu0 0.0
        %2493 = vmatpush1.msra.mxu0 0.0
        %2494 = vmatprep.subr.mxu0 0.0
        %2495 = vmatpush1.msra.mxu0 0.0
        %2496 = vmatprep.subr.mxu0 0.0
        %2497 = vmatpush1.msra.mxu0 0.0
        %2498 = vmatprep.subr.mxu0 0.0
        %2499 = vmatpush1.msra.mxu0 0.0
        %2500 = vmatprep.subr.mxu0 0.0
        %2501 = vmatpush1.msra.mxu0 0.0
        %2502 = vmatprep.subr.mxu0 0.0
        %2503 = vmatpush1.msra.mxu0 0.0
        %2504 = vmatprep.subr.mxu0 0.0
        %2505 = vmatpush1.msra.mxu0 0.0
        %2506 = vmatprep.subr.mxu0 0.0
        %2507 = vmatpush1.msra.mxu0 0.0
        %2508 = vmatprep.subr.mxu0 0.0
        %2509 = vmatpush1.msra.mxu0 0.0
        %2510 = vmatprep.subr.mxu0 0.0
        %2511 = vmatpush1.msra.mxu0 0.0
        %2512 = vmatprep.subr.mxu0 0.0
        %2513 = vmatpush1.msra.mxu0 0.0
        %2514 = vmatprep.mubr.f32.mxu0 0.0
        %2515 = vmatmul.mubr.f32.gmra.mrb[0].mxu0 %v2442
        %v2516 = vpop.f32.mrb[0].mxu0
        %v2517 = vadd.f32 0.0, %v2516
        %v2518 = vpop.f32.mrb[0].mxu0
        %2519 = vmatprep.mubr.f32.mxu0 0.0
        %2520 = vmatmul.mubr.f32.gmra.mrb[0].mxu0 %v2445
        %v2521 = vpop.f32.mrb[0].mxu0
        %v2522 = vadd.f32 0.0, %v2521
        %v2523 = vpop.f32.mrb[0].mxu0
        %2524 = vdwg.mxu0
        %v2525 = vld [vmem:[%s547 + $0x830] sm:$0xff]
        %v2526 = vld [vmem:[%s547 + $0x838] sm:$0xff]
        %v2527 = vld [vmem:[%s547 + $0x8b0] sm:$0xff]
        %v2528 = vld [vmem:[%s547 + $0x8b8] sm:$0xff]
        %v2529 = vld [vmem:[%s547 + $0x930] sm:$0xff]
        %v2530 = vld [vmem:[%s547 + $0x938] sm:$0xff]
        %v2531 = vld [vmem:[%s547 + $0x9b0] sm:$0xff]
        %v2532 = vld [vmem:[%s547 + $0x9b8] sm:$0xff]
        %v2534 = vsel %vm1139, %v2517, 0
        %v2537 = vsel %vm1139, %v2522, 0
        %2539 = vmatprep.subr.mxu0 %v2526
        %2540 = vmatpush1.msra.mxu0 %v2525
        %2541 = vmatprep.subr.mxu0 %v2528
        %2542 = vmatpush1.msra.mxu0 %v2527
        %2543 = vmatprep.subr.mxu0 %v2530
        %2544 = vmatpush1.msra.mxu0 %v2529
        %2545 = vmatprep.subr.mxu0 %v2532
        %2546 = vmatpush1.msra.mxu0 %v2531
        %2547 = vmatprep.subr.mxu0 0.0
        %2548 = vmatpush1.msra.mxu0 0.0
        %2549 = vmatprep.subr.mxu0 0.0
        %2550 = vmatpush1.msra.mxu0 0.0
        %2551 = vmatprep.subr.mxu0 0.0
        %2552 = vmatpush1.msra.mxu0 0.0
        %2553 = vmatprep.subr.mxu0 0.0
        %2554 = vmatpush1.msra.mxu0 0.0
        %2555 = vmatprep.subr.mxu0 0.0
        %2556 = vmatpush1.msra.mxu0 0.0
        %2557 = vmatprep.subr.mxu0 0.0
        %2558 = vmatpush1.msra.mxu0 0.0
        %2559 = vmatprep.subr.mxu0 0.0
        %2560 = vmatpush1.msra.mxu0 0.0
        %2561 = vmatprep.subr.mxu0 0.0
        %2562 = vmatpush1.msra.mxu0 0.0
        %2563 = vmatprep.subr.mxu0 0.0
        %2564 = vmatpush1.msra.mxu0 0.0
        %2565 = vmatprep.subr.mxu0 0.0
        %2566 = vmatpush1.msra.mxu0 0.0
        %2567 = vmatprep.subr.mxu0 0.0
        %2568 = vmatpush1.msra.mxu0 0.0
        %2569 = vmatprep.subr.mxu0 0.0
        %2570 = vmatpush1.msra.mxu0 0.0
        %2571 = vmatprep.subr.mxu0 0.0
        %2572 = vmatpush1.msra.mxu0 0.0
        %2573 = vmatprep.subr.mxu0 0.0
        %2574 = vmatpush1.msra.mxu0 0.0
        %2575 = vmatprep.subr.mxu0 0.0
        %2576 = vmatpush1.msra.mxu0 0.0
        %2577 = vmatprep.subr.mxu0 0.0
        %2578 = vmatpush1.msra.mxu0 0.0
        %2579 = vmatprep.subr.mxu0 0.0
        %2580 = vmatpush1.msra.mxu0 0.0
        %2581 = vmatprep.subr.mxu0 0.0
        %2582 = vmatpush1.msra.mxu0 0.0
        %2583 = vmatprep.subr.mxu0 0.0
        %2584 = vmatpush1.msra.mxu0 0.0
        %2585 = vmatprep.subr.mxu0 0.0
        %2586 = vmatpush1.msra.mxu0 0.0
        %2587 = vmatprep.subr.mxu0 0.0
        %2588 = vmatpush1.msra.mxu0 0.0
        %2589 = vmatprep.subr.mxu0 0.0
        %2590 = vmatpush1.msra.mxu0 0.0
        %2591 = vmatprep.subr.mxu0 0.0
        %2592 = vmatpush1.msra.mxu0 0.0
        %2593 = vmatprep.subr.mxu0 0.0
        %2594 = vmatpush1.msra.mxu0 0.0
        %2595 = vmatprep.subr.mxu0 0.0
        %2596 = vmatpush1.msra.mxu0 0.0
        %2597 = vmatprep.subr.mxu0 0.0
        %2598 = vmatpush1.msra.mxu0 0.0
        %2599 = vmatprep.subr.mxu0 0.0
        %2600 = vmatpush1.msra.mxu0 0.0
        %2601 = vmatprep.subr.mxu0 0.0
        %2602 = vmatpush1.msra.mxu0 0.0
        %2603 = vmatprep.mubr.f32.mxu0 0.0
        %2604 = vmatmul.mubr.f32.gmra.mrb[0].mxu0 %v2534
        %v2605 = vpop.f32.mrb[0].mxu0
        %v2606 = vadd.f32 0.0, %v2605
        %v2607 = vpop.f32.mrb[0].mxu0
        %v2608 = vadd.f32 0.0, %v2607
        %2609 = vmatprep.mubr.f32.mxu0 0.0
        %2610 = vmatmul.mubr.f32.gmra.mrb[0].mxu0 %v2537
        %v2611 = vpop.f32.mrb[0].mxu0
        %v2612 = vadd.f32 0.0, %v2611
        %v2613 = vpop.f32.mrb[0].mxu0
        %v2614 = vadd.f32 0.0, %v2613
        %2615 = vdwg.mxu0
        %v2616 = vadd.f32 %v2324, %v2606
        %v2617 = vadd.f32 %v2325, %v2608
        %v2618 = vadd.f32 %v2326, %v2612
        %v2619 = vadd.f32 %v2327, %v2614
        %2620 = vrot.lane.b32.xlu0 %v1112, 96
        %v2621 = vpop.permute.xlu0 %2620
        %2622 = vrot.lane.b32.xlu0 %v1114, 96
        %v2623 = vpop.permute.xlu0 %2622
        %2624 = vrot.lane.b32.xlu0 %v1124, 96
        %v2625 = vpop.permute.xlu0 %2624
        %2626 = vrot.lane.b32.xlu0 %v1126, 96
        %v2627 = vpop.permute.xlu0 %2626
        %v2628 = vsel %vm1139, %v2621, 0
        %v2630 = vsel %vm1139, %v2623, 0
        %v2632 = vsel %vm1139, %v2625, 0
        %v2634 = vsel %vm1139, %v2627, 0
        %2636 = vmatprep.subr.mxu0 0.0
        %2637 = vmatpush1.xpose.msra.mxu0 %v2632
        %2638 = vmatprep.subr.mxu0 0.0
        %2639 = vmatpush1.xpose.msra.mxu0 %v2634
        %2640 = vmatprep.subr.mxu0 0.0
        %2641 = vmatpush1.xpose.msra.mxu0 0.0
        %2642 = vmatprep.subr.mxu0 0.0
        %2643 = vmatpush1.xpose.msra.mxu0 0.0
        %2644 = vmatprep.subr.mxu0 0.0
        %2645 = vmatpush1.xpose.msra.mxu0 0.0
        %2646 = vmatprep.subr.mxu0 0.0
        %2647 = vmatpush1.xpose.msra.mxu0 0.0
        %2648 = vmatprep.subr.mxu0 0.0
        %2649 = vmatpush1.xpose.msra.mxu0 0.0
        %2650 = vmatprep.subr.mxu0 0.0
        %2651 = vmatpush1.xpose.msra.mxu0 0.0
        %2652 = vmatprep.subr.mxu0 0.0
        %2653 = vmatpush1.xpose.msra.mxu0 0.0
        %2654 = vmatprep.subr.mxu0 0.0
        %2655 = vmatpush1.xpose.msra.mxu0 0.0
        %2656 = vmatprep.subr.mxu0 0.0
        %2657 = vmatpush1.xpose.msra.mxu0 0.0
        %2658 = vmatprep.subr.mxu0 0.0
        %2659 = vmatpush1.xpose.msra.mxu0 0.0
        %2660 = vmatprep.subr.mxu0 0.0
        %2661 = vmatpush1.xpose.msra.mxu0 0.0
        %2662 = vmatprep.subr.mxu0 0.0
        %2663 = vmatpush1.xpose.msra.mxu0 0.0
        %2664 = vmatprep.subr.mxu0 0.0
        %2665 = vmatpush1.xpose.msra.mxu0 0.0
        %2666 = vmatprep.subr.mxu0 0.0
        %2667 = vmatpush1.xpose.msra.mxu0 0.0
        %2668 = vmatprep.subr.mxu0 0.0
        %2669 = vmatpush1.xpose.msra.mxu0 0.0
        %2670 = vmatprep.subr.mxu0 0.0
        %2671 = vmatpush1.xpose.msra.mxu0 0.0
        %2672 = vmatprep.subr.mxu0 0.0
        %2673 = vmatpush1.xpose.msra.mxu0 0.0
        %2674 = vmatprep.subr.mxu0 0.0
        %2675 = vmatpush1.xpose.msra.mxu0 0.0
        %2676 = vmatprep.subr.mxu0 0.0
        %2677 = vmatpush1.xpose.msra.mxu0 0.0
        %2678 = vmatprep.subr.mxu0 0.0
        %2679 = vmatpush1.xpose.msra.mxu0 0.0
        %2680 = vmatprep.subr.mxu0 0.0
        %2681 = vmatpush1.xpose.msra.mxu0 0.0
        %2682 = vmatprep.subr.mxu0 0.0
        %2683 = vmatpush1.xpose.msra.mxu0 0.0
        %2684 = vmatprep.subr.mxu0 0.0
        %2685 = vmatpush1.xpose.msra.mxu0 0.0
        %2686 = vmatprep.subr.mxu0 0.0
        %2687 = vmatpush1.xpose.msra.mxu0 0.0
        %2688 = vmatprep.subr.mxu0 0.0
        %2689 = vmatpush1.xpose.msra.mxu0 0.0
        %2690 = vmatprep.subr.mxu0 0.0
        %2691 = vmatpush1.xpose.msra.mxu0 0.0
        %2692 = vmatprep.subr.mxu0 0.0
        %2693 = vmatpush1.xpose.msra.mxu0 0.0
        %2694 = vmatprep.subr.mxu0 0.0
        %2695 = vmatpush1.xpose.msra.mxu0 0.0
        %2696 = vmatprep.subr.mxu0 0.0
        %2697 = vmatpush1.xpose.msra.mxu0 0.0
        %2698 = vmatprep.subr.mxu0 0.0
        %2699 = vmatpush1.xpose.msra.mxu0 0.0
        %2700 = vmatprep.mubr.f32.mxu0 0.0
        %2701 = vmatmul.mubr.f32.gmra.mrb[0].mxu0 %v2628
        %v2702 = vpop.f32.mrb[0].mxu0
        %v2703 = vadd.f32 0.0, %v2702
        %v2704 = vpop.f32.mrb[0].mxu0
        %2705 = vmatprep.mubr.f32.mxu0 0.0
        %2706 = vmatmul.mubr.f32.gmra.mrb[0].mxu0 %v2630
        %v2707 = vpop.f32.mrb[0].mxu0
        %v2708 = vadd.f32 0.0, %v2707
        %v2709 = vpop.f32.mrb[0].mxu0
        %2710 = vdwg.mxu0
        %v2711 = vmul.f32 %v2703, 0.17677669
        %v2712 = vmul.f32 %v2708, 0.17677669
        %v2713 = vsel %vm666, %v2711, -1e+09
        %v2714 = vsel %vm667, %v2712, -1e+09
        %v2715 = vsel %vm1231, %v2713, -inf
        %2716 = vmax.xlane.f32.xlu0 %v2715
        %v2717 = vpop.xlane.xlu0 %2716
        %v2718 = vsel %vm1235, %v2714, -inf
        %2719 = vmax.xlane.f32.xlu0 %v2718
        %v2720 = vpop.xlane.xlu0 %2719
        %v2721 = vsub.f32 %v2713, %v2717
        %v2722 = vsub.f32 %v2714, %v2720
        %v2723 = vmul.f32 %v2721, 1.442695
        %v2724 = vpow.pop %v2723
        %v2725 = vmul.f32 %v2722, 1.442695
        %v2726 = vpow.pop %v2725
        %v2727 = vsel %vm1231, %v2724, 0.0
        %2728 = vadd.xlane.f32.xlu0 %v2727
        %v2729 = vpop.xlane.xlu0 %2728
        %v2730 = vsel %vm1235, %v2726, 0.0
        %2731 = vadd.xlane.f32.xlu0 %v2730
        %v2732 = vpop.xlane.xlu0 %2731
        %v2733 = vrcp.pop %v2729
        %v2734 = vmul.f32 %v2724, %v2733
        %v2735 = vrcp.pop %v2732
        %v2736 = vmul.f32 %v2726, %v2735
        %2738 = vrot.lane.b32.xlu0 %v1136, 96
        %v2739 = vpop.permute.xlu0 %2738
        %2740 = vrot.lane.b32.xlu0 %v1138, 96
        %v2741 = vpop.permute.xlu0 %2740
        %v2744 = vsel %vm1231, %v2734, 0
        %v2747 = vsel %vm1231, %v2736, 0
        %v2749 = vsel %vm1261, %v2741, 0
        %2751 = vmatprep.subr.mxu0 0.0
        %2752 = vmatpush1.msra.mxu0 %v2739
        %2753 = vmatprep.subr.mxu0 0.0
        %2754 = vmatpush1.msra.mxu0 %v2749
        %2755 = vmatprep.subr.mxu0 0.0
        %2756 = vmatpush1.msra.mxu0 0.0
        %2757 = vmatprep.subr.mxu0 0.0
        %2758 = vmatpush1.msra.mxu0 0.0
        %2759 = vmatprep.subr.mxu0 0.0
        %2760 = vmatpush1.msra.mxu0 0.0
        %2761 = vmatprep.subr.mxu0 0.0
        %2762 = vmatpush1.msra.mxu0 0.0
        %2763 = vmatprep.subr.mxu0 0.0
        %2764 = vmatpush1.msra.mxu0 0.0
        %2765 = vmatprep.subr.mxu0 0.0
        %2766 = vmatpush1.msra.mxu0 0.0
        %2767 = vmatprep.subr.mxu0 0.0
        %2768 = vmatpush1.msra.mxu0 0.0
        %2769 = vmatprep.subr.mxu0 0.0
        %2770 = vmatpush1.msra.mxu0 0.0
        %2771 = vmatprep.subr.mxu0 0.0
        %2772 = vmatpush1.msra.mxu0 0.0
        %2773 = vmatprep.subr.mxu0 0.0
        %2774 = vmatpush1.msra.mxu0 0.0
        %2775 = vmatprep.subr.mxu0 0.0
        %2776 = vmatpush1.msra.mxu0 0.0
        %2777 = vmatprep.subr.mxu0 0.0
        %2778 = vmatpush1.msra.mxu0 0.0
        %2779 = vmatprep.subr.mxu0 0.0
        %2780 = vmatpush1.msra.mxu0 0.0
        %2781 = vmatprep.subr.mxu0 0.0
        %2782 = vmatpush1.msra.mxu0 0.0
        %2783 = vmatprep.subr.mxu0 0.0
        %2784 = vmatpush1.msra.mxu0 0.0
        %2785 = vmatprep.subr.mxu0 0.0
        %2786 = vmatpush1.msra.mxu0 0.0
        %2787 = vmatprep.subr.mxu0 0.0
        %2788 = vmatpush1.msra.mxu0 0.0
        %2789 = vmatprep.subr.mxu0 0.0
        %2790 = vmatpush1.msra.mxu0 0.0
        %2791 = vmatprep.subr.mxu0 0.0
        %2792 = vmatpush1.msra.mxu0 0.0
        %2793 = vmatprep.subr.mxu0 0.0
        %2794 = vmatpush1.msra.mxu0 0.0
        %2795 = vmatprep.subr.mxu0 0.0
        %2796 = vmatpush1.msra.mxu0 0.0
        %2797 = vmatprep.subr.mxu0 0.0
        %2798 = vmatpush1.msra.mxu0 0.0
        %2799 = vmatprep.subr.mxu0 0.0
        %2800 = vmatpush1.msra.mxu0 0.0
        %2801 = vmatprep.subr.mxu0 0.0
        %2802 = vmatpush1.msra.mxu0 0.0
        %2803 = vmatprep.subr.mxu0 0.0
        %2804 = vmatpush1.msra.mxu0 0.0
        %2805 = vmatprep.subr.mxu0 0.0
        %2806 = vmatpush1.msra.mxu0 0.0
        %2807 = vmatprep.subr.mxu0 0.0
        %2808 = vmatpush1.msra.mxu0 0.0
        %2809 = vmatprep.subr.mxu0 0.0
        %2810 = vmatpush1.msra.mxu0 0.0
        %2811 = vmatprep.subr.mxu0 0.0
        %2812 = vmatpush1.msra.mxu0 0.0
        %2813 = vmatprep.subr.mxu0 0.0
        %2814 = vmatpush1.msra.mxu0 0.0
        %2815 = vmatprep.mubr.f32.mxu0 0.0
        %2816 = vmatmul.mubr.f32.gmra.mrb[0].mxu0 %v2744
        %v2817 = vpop.f32.mrb[0].mxu0
        %v2818 = vadd.f32 0.0, %v2817
        %v2819 = vpop.f32.mrb[0].mxu0
        %2820 = vmatprep.mubr.f32.mxu0 0.0
        %2821 = vmatmul.mubr.f32.gmra.mrb[0].mxu0 %v2747
        %v2822 = vpop.f32.mrb[0].mxu0
        %v2823 = vadd.f32 0.0, %v2822
        %v2824 = vpop.f32.mrb[0].mxu0
        %2825 = vdwg.mxu0
        %v2826 = vld [vmem:[%s547 + $0xa30] sm:$0xff]
        %v2827 = vld [vmem:[%s547 + $0xa38] sm:$0xff]
        %v2828 = vld [vmem:[%s547 + $0xab0] sm:$0xff]
        %v2829 = vld [vmem:[%s547 + $0xab8] sm:$0xff]
        %v2830 = vld [vmem:[%s547 + $0xb30] sm:$0xff]
        %v2831 = vld [vmem:[%s547 + $0xb38] sm:$0xff]
        %v2832 = vld [vmem:[%s547 + $0xbb0] sm:$0xff]
        %v2833 = vld [vmem:[%s547 + $0xbb8] sm:$0xff]
        %v2835 = vsel %vm1139, %v2818, 0
        %v2838 = vsel %vm1139, %v2823, 0
        %2840 = vmatprep.subr.mxu0 %v2827
        %2841 = vmatpush1.msra.mxu0 %v2826
        %2842 = vmatprep.subr.mxu0 %v2829
        %2843 = vmatpush1.msra.mxu0 %v2828
        %2844 = vmatprep.subr.mxu0 %v2831
        %2845 = vmatpush1.msra.mxu0 %v2830
        %2846 = vmatprep.subr.mxu0 %v2833
        %2847 = vmatpush1.msra.mxu0 %v2832
        %2848 = vmatprep.subr.mxu0 0.0
        %2849 = vmatpush1.msra.mxu0 0.0
        %2850 = vmatprep.subr.mxu0 0.0
        %2851 = vmatpush1.msra.mxu0 0.0
        %2852 = vmatprep.subr.mxu0 0.0
        %2853 = vmatpush1.msra.mxu0 0.0
        %2854 = vmatprep.subr.mxu0 0.0
        %2855 = vmatpush1.msra.mxu0 0.0
        %2856 = vmatprep.subr.mxu0 0.0
        %2857 = vmatpush1.msra.mxu0 0.0
        %2858 = vmatprep.subr.mxu0 0.0
        %2859 = vmatpush1.msra.mxu0 0.0
        %2860 = vmatprep.subr.mxu0 0.0
        %2861 = vmatpush1.msra.mxu0 0.0
        %2862 = vmatprep.subr.mxu0 0.0
        %2863 = vmatpush1.msra.mxu0 0.0
        %2864 = vmatprep.subr.mxu0 0.0
        %2865 = vmatpush1.msra.mxu0 0.0
        %2866 = vmatprep.subr.mxu0 0.0
        %2867 = vmatpush1.msra.mxu0 0.0
        %2868 = vmatprep.subr.mxu0 0.0
        %2869 = vmatpush1.msra.mxu0 0.0
        %2870 = vmatprep.subr.mxu0 0.0
        %2871 = vmatpush1.msra.mxu0 0.0
        %2872 = vmatprep.subr.mxu0 0.0
        %2873 = vmatpush1.msra.mxu0 0.0
        %2874 = vmatprep.subr.mxu0 0.0
        %2875 = vmatpush1.msra.mxu0 0.0
        %2876 = vmatprep.subr.mxu0 0.0
        %2877 = vmatpush1.msra.mxu0 0.0
        %2878 = vmatprep.subr.mxu0 0.0
        %2879 = vmatpush1.msra.mxu0 0.0
        %2880 = vmatprep.subr.mxu0 0.0
        %2881 = vmatpush1.msra.mxu0 0.0
        %2882 = vmatprep.subr.mxu0 0.0
        %2883 = vmatpush1.msra.mxu0 0.0
        %2884 = vmatprep.subr.mxu0 0.0
        %2885 = vmatpush1.msra.mxu0 0.0
        %2886 = vmatprep.subr.mxu0 0.0
        %2887 = vmatpush1.msra.mxu0 0.0
        %2888 = vmatprep.subr.mxu0 0.0
        %2889 = vmatpush1.msra.mxu0 0.0
        %2890 = vmatprep.subr.mxu0 0.0
        %2891 = vmatpush1.msra.mxu0 0.0
        %2892 = vmatprep.subr.mxu0 0.0
        %2893 = vmatpush1.msra.mxu0 0.0
        %2894 = vmatprep.subr.mxu0 0.0
        %2895 = vmatpush1.msra.mxu0 0.0
        %2896 = vmatprep.subr.mxu0 0.0
        %2897 = vmatpush1.msra.mxu0 0.0
        %2898 = vmatprep.subr.mxu0 0.0
        %2899 = vmatpush1.msra.mxu0 0.0
        %2900 = vmatprep.subr.mxu0 0.0
        %2901 = vmatpush1.msra.mxu0 0.0
        %2902 = vmatprep.subr.mxu0 0.0
        %2903 = vmatpush1.msra.mxu0 0.0
        %2904 = vmatprep.mubr.f32.mxu0 0.0
        %2905 = vmatmul.mubr.f32.gmra.mrb[0].mxu0 %v2835
        %v2906 = vpop.f32.mrb[0].mxu0
        %v2907 = vadd.f32 0.0, %v2906
        %v2908 = vpop.f32.mrb[0].mxu0
        %v2909 = vadd.f32 0.0, %v2908
        %2910 = vmatprep.mubr.f32.mxu0 0.0
        %2911 = vmatmul.mubr.f32.gmra.mrb[0].mxu0 %v2838
        %v2912 = vpop.f32.mrb[0].mxu0
        %v2913 = vadd.f32 0.0, %v2912
        %v2914 = vpop.f32.mrb[0].mxu0
        %v2915 = vadd.f32 0.0, %v2914
        %2916 = vdwg.mxu0
        %v2917 = vadd.f32 %v2616, %v2907
        %v2918 = vadd.f32 %v2617, %v2909
        %v2919 = vadd.f32 %v2618, %v2913
        %v2920 = vadd.f32 %v2619, %v2915
        %2921 = vrot.lane.b32.xlu0 %v1112, 64
        %v2922 = vpop.permute.xlu0 %2921
        %2923 = vrot.lane.b32.xlu0 %v1114, 64
        %v2924 = vpop.permute.xlu0 %2923
        %2925 = vrot.lane.b32.xlu0 %v1124, 64
        %v2926 = vpop.permute.xlu0 %2925
        %2927 = vrot.lane.b32.xlu0 %v1126, 64
        %v2928 = vpop.permute.xlu0 %2927
        %v2929 = vsel %vm1139, %v2922, 0
        %v2931 = vsel %vm1139, %v2924, 0
        %v2933 = vsel %vm1139, %v2926, 0
        %v2935 = vsel %vm1139, %v2928, 0
        %2937 = vmatprep.subr.mxu0 0.0
        %2938 = vmatpush1.xpose.msra.mxu0 %v2933
        %2939 = vmatprep.subr.mxu0 0.0
        %2940 = vmatpush1.xpose.msra.mxu0 %v2935
        %2941 = vmatprep.subr.mxu0 0.0
        %2942 = vmatpush1.xpose.msra.mxu0 0.0
        %2943 = vmatprep.subr.mxu0 0.0
        %2944 = vmatpush1.xpose.msra.mxu0 0.0
        %2945 = vmatprep.subr.mxu0 0.0
        %2946 = vmatpush1.xpose.msra.mxu0 0.0
        %2947 = vmatprep.subr.mxu0 0.0
        %2948 = vmatpush1.xpose.msra.mxu0 0.0
        %2949 = vmatprep.subr.mxu0 0.0
        %2950 = vmatpush1.xpose.msra.mxu0 0.0
        %2951 = vmatprep.subr.mxu0 0.0
        %2952 = vmatpush1.xpose.msra.mxu0 0.0
        %2953 = vmatprep.subr.mxu0 0.0
        %2954 = vmatpush1.xpose.msra.mxu0 0.0
        %2955 = vmatprep.subr.mxu0 0.0
        %2956 = vmatpush1.xpose.msra.mxu0 0.0
        %2957 = vmatprep.subr.mxu0 0.0
        %2958 = vmatpush1.xpose.msra.mxu0 0.0
        %2959 = vmatprep.subr.mxu0 0.0
        %2960 = vmatpush1.xpose.msra.mxu0 0.0
        %2961 = vmatprep.subr.mxu0 0.0
        %2962 = vmatpush1.xpose.msra.mxu0 0.0
        %2963 = vmatprep.subr.mxu0 0.0
        %2964 = vmatpush1.xpose.msra.mxu0 0.0
        %2965 = vmatprep.subr.mxu0 0.0
        %2966 = vmatpush1.xpose.msra.mxu0 0.0
        %2967 = vmatprep.subr.mxu0 0.0
        %2968 = vmatpush1.xpose.msra.mxu0 0.0
        %2969 = vmatprep.subr.mxu0 0.0
        %2970 = vmatpush1.xpose.msra.mxu0 0.0
        %2971 = vmatprep.subr.mxu0 0.0
        %2972 = vmatpush1.xpose.msra.mxu0 0.0
        %2973 = vmatprep.subr.mxu0 0.0
        %2974 = vmatpush1.xpose.msra.mxu0 0.0
        %2975 = vmatprep.subr.mxu0 0.0
        %2976 = vmatpush1.xpose.msra.mxu0 0.0
        %2977 = vmatprep.subr.mxu0 0.0
        %2978 = vmatpush1.xpose.msra.mxu0 0.0
        %2979 = vmatprep.subr.mxu0 0.0
        %2980 = vmatpush1.xpose.msra.mxu0 0.0
        %2981 = vmatprep.subr.mxu0 0.0
        %2982 = vmatpush1.xpose.msra.mxu0 0.0
        %2983 = vmatprep.subr.mxu0 0.0
        %2984 = vmatpush1.xpose.msra.mxu0 0.0
        %2985 = vmatprep.subr.mxu0 0.0
        %2986 = vmatpush1.xpose.msra.mxu0 0.0
        %2987 = vmatprep.subr.mxu0 0.0
        %2988 = vmatpush1.xpose.msra.mxu0 0.0
        %2989 = vmatprep.subr.mxu0 0.0
        %2990 = vmatpush1.xpose.msra.mxu0 0.0
        %2991 = vmatprep.subr.mxu0 0.0
        %2992 = vmatpush1.xpose.msra.mxu0 0.0
        %2993 = vmatprep.subr.mxu0 0.0
        %2994 = vmatpush1.xpose.msra.mxu0 0.0
        %2995 = vmatprep.subr.mxu0 0.0
        %2996 = vmatpush1.xpose.msra.mxu0 0.0
        %2997 = vmatprep.subr.mxu0 0.0
        %2998 = vmatpush1.xpose.msra.mxu0 0.0
        %2999 = vmatprep.subr.mxu0 0.0
        %3000 = vmatpush1.xpose.msra.mxu0 0.0
        %3001 = vmatprep.mubr.f32.mxu0 0.0
        %3002 = vmatmul.mubr.f32.gmra.mrb[0].mxu0 %v2929
        %v3003 = vpop.f32.mrb[0].mxu0
        %v3004 = vadd.f32 0.0, %v3003
        %v3005 = vpop.f32.mrb[0].mxu0
        %3006 = vmatprep.mubr.f32.mxu0 0.0
        %3007 = vmatmul.mubr.f32.gmra.mrb[0].mxu0 %v2931
        %v3008 = vpop.f32.mrb[0].mxu0
        %v3009 = vadd.f32 0.0, %v3008
        %v3010 = vpop.f32.mrb[0].mxu0
        %3011 = vdwg.mxu0
        %v3012 = vmul.f32 %v3004, 0.17677669
        %v3013 = vmul.f32 %v3009, 0.17677669
        %v3014 = vsel %vm666, %v3012, -1e+09
        %v3015 = vsel %vm667, %v3013, -1e+09
        %v3016 = vsel %vm1231, %v3014, -inf
        %3017 = vmax.xlane.f32.xlu0 %v3016
        %v3018 = vpop.xlane.xlu0 %3017
        %v3019 = vsel %vm1235, %v3015, -inf
        %3020 = vmax.xlane.f32.xlu0 %v3019
        %v3021 = vpop.xlane.xlu0 %3020
        %v3022 = vsub.f32 %v3014, %v3018
        %v3023 = vsub.f32 %v3015, %v3021
        %v3024 = vmul.f32 %v3022, 1.442695
        %v3025 = vpow.pop %v3024
        %v3026 = vmul.f32 %v3023, 1.442695
        %v3027 = vpow.pop %v3026
        %v3028 = vsel %vm1231, %v3025, 0.0
        %3029 = vadd.xlane.f32.xlu0 %v3028
        %v3030 = vpop.xlane.xlu0 %3029
        %v3031 = vsel %vm1235, %v3027, 0.0
        %3032 = vadd.xlane.f32.xlu0 %v3031
        %v3033 = vpop.xlane.xlu0 %3032
        %v3034 = vrcp.pop %v3030
        %v3035 = vmul.f32 %v3025, %v3034
        %v3036 = vrcp.pop %v3033
        %v3037 = vmul.f32 %v3027, %v3036
        %3038 = vrot.lane.b32.xlu0 %v1136, 64
        %v3039 = vpop.permute.xlu0 %3038
        %3040 = vrot.lane.b32.xlu0 %v1138, 64
        %v3041 = vpop.permute.xlu0 %3040
        %v3044 = vsel %vm1231, %v3035, 0
        %v3047 = vsel %vm1231, %v3037, 0
        %v3049 = vsel %vm1261, %v3041, 0
        %3051 = vmatprep.subr.mxu0 0.0
        %3052 = vmatpush1.msra.mxu0 %v3039
        %3053 = vmatprep.subr.mxu0 0.0
        %3054 = vmatpush1.msra.mxu0 %v3049
        %3055 = vmatprep.subr.mxu0 0.0
        %3056 = vmatpush1.msra.mxu0 0.0
        %3057 = vmatprep.subr.mxu0 0.0
        %3058 = vmatpush1.msra.mxu0 0.0
        %3059 = vmatprep.subr.mxu0 0.0
        %3060 = vmatpush1.msra.mxu0 0.0
        %3061 = vmatprep.subr.mxu0 0.0
        %3062 = vmatpush1.msra.mxu0 0.0
        %3063 = vmatprep.subr.mxu0 0.0
        %3064 = vmatpush1.msra.mxu0 0.0
        %3065 = vmatprep.subr.mxu0 0.0
        %3066 = vmatpush1.msra.mxu0 0.0
        %3067 = vmatprep.subr.mxu0 0.0
        %3068 = vmatpush1.msra.mxu0 0.0
        %3069 = vmatprep.subr.mxu0 0.0
        %3070 = vmatpush1.msra.mxu0 0.0
        %3071 = vmatprep.subr.mxu0 0.0
        %3072 = vmatpush1.msra.mxu0 0.0
        %3073 = vmatprep.subr.mxu0 0.0
        %3074 = vmatpush1.msra.mxu0 0.0
        %3075 = vmatprep.subr.mxu0 0.0
        %3076 = vmatpush1.msra.mxu0 0.0
        %3077 = vmatprep.subr.mxu0 0.0
        %3078 = vmatpush1.msra.mxu0 0.0
        %3079 = vmatprep.subr.mxu0 0.0
        %3080 = vmatpush1.msra.mxu0 0.0
        %3081 = vmatprep.subr.mxu0 0.0
        %3082 = vmatpush1.msra.mxu0 0.0
        %3083 = vmatprep.subr.mxu0 0.0
        %3084 = vmatpush1.msra.mxu0 0.0
        %3085 = vmatprep.subr.mxu0 0.0
        %3086 = vmatpush1.msra.mxu0 0.0
        %3087 = vmatprep.subr.mxu0 0.0
        %3088 = vmatpush1.msra.mxu0 0.0
        %3089 = vmatprep.subr.mxu0 0.0
        %3090 = vmatpush1.msra.mxu0 0.0
        %3091 = vmatprep.subr.mxu0 0.0
        %3092 = vmatpush1.msra.mxu0 0.0
        %3093 = vmatprep.subr.mxu0 0.0
        %3094 = vmatpush1.msra.mxu0 0.0
        %3095 = vmatprep.subr.mxu0 0.0
        %3096 = vmatpush1.msra.mxu0 0.0
        %3097 = vmatprep.subr.mxu0 0.0
        %3098 = vmatpush1.msra.mxu0 0.0
        %3099 = vmatprep.subr.mxu0 0.0
        %3100 = vmatpush1.msra.mxu0 0.0
        %3101 = vmatprep.subr.mxu0 0.0
        %3102 = vmatpush1.msra.mxu0 0.0
        %3103 = vmatprep.subr.mxu0 0.0
        %3104 = vmatpush1.msra.mxu0 0.0
        %3105 = vmatprep.subr.mxu0 0.0
        %3106 = vmatpush1.msra.mxu0 0.0
        %3107 = vmatprep.subr.mxu0 0.0
        %3108 = vmatpush1.msra.mxu0 0.0
        %3109 = vmatprep.subr.mxu0 0.0
        %3110 = vmatpush1.msra.mxu0 0.0
        %3111 = vmatprep.subr.mxu0 0.0
        %3112 = vmatpush1.msra.mxu0 0.0
        %3113 = vmatprep.subr.mxu0 0.0
        %3114 = vmatpush1.msra.mxu0 0.0
        %3115 = vmatprep.mubr.f32.mxu0 0.0
        %3116 = vmatmul.mubr.f32.gmra.mrb[0].mxu0 %v3044
        %v3117 = vpop.f32.mrb[0].mxu0
        %v3118 = vadd.f32 0.0, %v3117
        %v3119 = vpop.f32.mrb[0].mxu0
        %3120 = vmatprep.mubr.f32.mxu0 0.0
        %3121 = vmatmul.mubr.f32.gmra.mrb[0].mxu0 %v3047
        %v3122 = vpop.f32.mrb[0].mxu0
        %v3123 = vadd.f32 0.0, %v3122
        %v3124 = vpop.f32.mrb[0].mxu0
        %3125 = vdwg.mxu0
        %v3126 = vld [vmem:[%s547 + $0xc30] sm:$0xff]
        %v3127 = vld [vmem:[%s547 + $0xc38] sm:$0xff]
        %v3128 = vld [vmem:[%s547 + $0xcb0] sm:$0xff]
        %v3129 = vld [vmem:[%s547 + $0xcb8] sm:$0xff]
        %v3130 = vld [vmem:[%s547 + $0xd30] sm:$0xff]
        %v3131 = vld [vmem:[%s547 + $0xd38] sm:$0xff]
        %v3132 = vld [vmem:[%s547 + $0xdb0] sm:$0xff]
        %v3133 = vld [vmem:[%s547 + $0xdb8] sm:$0xff]
        %v3135 = vsel %vm1139, %v3118, 0
        %v3138 = vsel %vm1139, %v3123, 0
        %3140 = vmatprep.subr.mxu0 %v3127
        %3141 = vmatpush1.msra.mxu0 %v3126
        %3142 = vmatprep.subr.mxu0 %v3129
        %3143 = vmatpush1.msra.mxu0 %v3128
        %3144 = vmatprep.subr.mxu0 %v3131
        %3145 = vmatpush1.msra.mxu0 %v3130
        %3146 = vmatprep.subr.mxu0 %v3133
        %3147 = vmatpush1.msra.mxu0 %v3132
        %3148 = vmatprep.subr.mxu0 0.0
        %3149 = vmatpush1.msra.mxu0 0.0
        %3150 = vmatprep.subr.mxu0 0.0
        %3151 = vmatpush1.msra.mxu0 0.0
        %3152 = vmatprep.subr.mxu0 0.0
        %3153 = vmatpush1.msra.mxu0 0.0
        %3154 = vmatprep.subr.mxu0 0.0
        %3155 = vmatpush1.msra.mxu0 0.0
        %3156 = vmatprep.subr.mxu0 0.0
        %3157 = vmatpush1.msra.mxu0 0.0
        %3158 = vmatprep.subr.mxu0 0.0
        %3159 = vmatpush1.msra.mxu0 0.0
        %3160 = vmatprep.subr.mxu0 0.0
        %3161 = vmatpush1.msra.mxu0 0.0
        %3162 = vmatprep.subr.mxu0 0.0
        %3163 = vmatpush1.msra.mxu0 0.0
        %3164 = vmatprep.subr.mxu0 0.0
        %3165 = vmatpush1.msra.mxu0 0.0
        %3166 = vmatprep.subr.mxu0 0.0
        %3167 = vmatpush1.msra.mxu0 0.0
        %3168 = vmatprep.subr.mxu0 0.0
        %3169 = vmatpush1.msra.mxu0 0.0
        %3170 = vmatprep.subr.mxu0 0.0
        %3171 = vmatpush1.msra.mxu0 0.0
        %3172 = vmatprep.subr.mxu0 0.0
        %3173 = vmatpush1.msra.mxu0 0.0
        %3174 = vmatprep.subr.mxu0 0.0
        %3175 = vmatpush1.msra.mxu0 0.0
        %3176 = vmatprep.subr.mxu0 0.0
        %3177 = vmatpush1.msra.mxu0 0.0
        %3178 = vmatprep.subr.mxu0 0.0
        %3179 = vmatpush1.msra.mxu0 0.0
        %3180 = vmatprep.subr.mxu0 0.0
        %3181 = vmatpush1.msra.mxu0 0.0
        %3182 = vmatprep.subr.mxu0 0.0
        %3183 = vmatpush1.msra.mxu0 0.0
        %3184 = vmatprep.subr.mxu0 0.0
        %3185 = vmatpush1.msra.mxu0 0.0
        %3186 = vmatprep.subr.mxu0 0.0
        %3187 = vmatpush1.msra.mxu0 0.0
        %3188 = vmatprep.subr.mxu0 0.0
        %3189 = vmatpush1.msra.mxu0 0.0
        %3190 = vmatprep.subr.mxu0 0.0
        %3191 = vmatpush1.msra.mxu0 0.0
        %3192 = vmatprep.subr.mxu0 0.0
        %3193 = vmatpush1.msra.mxu0 0.0
        %3194 = vmatprep.subr.mxu0 0.0
        %3195 = vmatpush1.msra.mxu0 0.0
        %3196 = vmatprep.subr.mxu0 0.0
        %3197 = vmatpush1.msra.mxu0 0.0
        %3198 = vmatprep.subr.mxu0 0.0
        %3199 = vmatpush1.msra.mxu0 0.0
        %3200 = vmatprep.subr.mxu0 0.0
        %3201 = vmatpush1.msra.mxu0 0.0
        %3202 = vmatprep.subr.mxu0 0.0
        %3203 = vmatpush1.msra.mxu0 0.0
        %3204 = vmatprep.mubr.f32.mxu0 0.0
        %3205 = vmatmul.mubr.f32.gmra.mrb[0].mxu0 %v3135
        %v3206 = vpop.f32.mrb[0].mxu0
        %v3207 = vadd.f32 0.0, %v3206
        %v3208 = vpop.f32.mrb[0].mxu0
        %v3209 = vadd.f32 0.0, %v3208
        %3210 = vmatprep.mubr.f32.mxu0 0.0
        %3211 = vmatmul.mubr.f32.gmra.mrb[0].mxu0 %v3138
        %v3212 = vpop.f32.mrb[0].mxu0
        %v3213 = vadd.f32 0.0, %v3212
        %v3214 = vpop.f32.mrb[0].mxu0
        %v3215 = vadd.f32 0.0, %v3214
        %3216 = vdwg.mxu0
        %v3217 = vadd.f32 %v2917, %v3207
        %v3218 = vadd.f32 %v2918, %v3209
        %v3219 = vadd.f32 %v2919, %v3213
        %v3220 = vadd.f32 %v2920, %v3215
        %3221 = vrot.lane.b32.xlu0 %v1112, 32
        %v3222 = vpop.permute.xlu0 %3221
        %3223 = vrot.lane.b32.xlu0 %v1114, 32
        %v3224 = vpop.permute.xlu0 %3223
        %3225 = vrot.lane.b32.xlu0 %v1124, 32
        %v3226 = vpop.permute.xlu0 %3225
        %3227 = vrot.lane.b32.xlu0 %v1126, 32
        %v3228 = vpop.permute.xlu0 %3227
        %v3229 = vsel %vm1139, %v3222, 0
        %v3231 = vsel %vm1139, %v3224, 0
        %v3233 = vsel %vm1139, %v3226, 0
        %v3235 = vsel %vm1139, %v3228, 0
        %3237 = vmatprep.subr.mxu0 0.0
        %3238 = vmatpush1.xpose.msra.mxu0 %v3233
        %3239 = vmatprep.subr.mxu0 0.0
        %3240 = vmatpush1.xpose.msra.mxu0 %v3235
        %3241 = vmatprep.subr.mxu0 0.0
        %3242 = vmatpush1.xpose.msra.mxu0 0.0
        %3243 = vmatprep.subr.mxu0 0.0
        %3244 = vmatpush1.xpose.msra.mxu0 0.0
        %3245 = vmatprep.subr.mxu0 0.0
        %3246 = vmatpush1.xpose.msra.mxu0 0.0
        %3247 = vmatprep.subr.mxu0 0.0
        %3248 = vmatpush1.xpose.msra.mxu0 0.0
        %3249 = vmatprep.subr.mxu0 0.0
        %3250 = vmatpush1.xpose.msra.mxu0 0.0
        %3251 = vmatprep.subr.mxu0 0.0
        %3252 = vmatpush1.xpose.msra.mxu0 0.0
        %3253 = vmatprep.subr.mxu0 0.0
        %3254 = vmatpush1.xpose.msra.mxu0 0.0
        %3255 = vmatprep.subr.mxu0 0.0
        %3256 = vmatpush1.xpose.msra.mxu0 0.0
        %3257 = vmatprep.subr.mxu0 0.0
        %3258 = vmatpush1.xpose.msra.mxu0 0.0
        %3259 = vmatprep.subr.mxu0 0.0
        %3260 = vmatpush1.xpose.msra.mxu0 0.0
        %3261 = vmatprep.subr.mxu0 0.0
        %3262 = vmatpush1.xpose.msra.mxu0 0.0
        %3263 = vmatprep.subr.mxu0 0.0
        %3264 = vmatpush1.xpose.msra.mxu0 0.0
        %3265 = vmatprep.subr.mxu0 0.0
        %3266 = vmatpush1.xpose.msra.mxu0 0.0
        %3267 = vmatprep.subr.mxu0 0.0
        %3268 = vmatpush1.xpose.msra.mxu0 0.0
        %3269 = vmatprep.subr.mxu0 0.0
        %3270 = vmatpush1.xpose.msra.mxu0 0.0
        %3271 = vmatprep.subr.mxu0 0.0
        %3272 = vmatpush1.xpose.msra.mxu0 0.0
        %3273 = vmatprep.subr.mxu0 0.0
        %3274 = vmatpush1.xpose.msra.mxu0 0.0
        %3275 = vmatprep.subr.mxu0 0.0
        %3276 = vmatpush1.xpose.msra.mxu0 0.0
        %3277 = vmatprep.subr.mxu0 0.0
        %3278 = vmatpush1.xpose.msra.mxu0 0.0
        %3279 = vmatprep.subr.mxu0 0.0
        %3280 = vmatpush1.xpose.msra.mxu0 0.0
        %3281 = vmatprep.subr.mxu0 0.0
        %3282 = vmatpush1.xpose.msra.mxu0 0.0
        %3283 = vmatprep.subr.mxu0 0.0
        %3284 = vmatpush1.xpose.msra.mxu0 0.0
        %3285 = vmatprep.subr.mxu0 0.0
        %3286 = vmatpush1.xpose.msra.mxu0 0.0
        %3287 = vmatprep.subr.mxu0 0.0
        %3288 = vmatpush1.xpose.msra.mxu0 0.0
        %3289 = vmatprep.subr.mxu0 0.0
        %3290 = vmatpush1.xpose.msra.mxu0 0.0
        %3291 = vmatprep.subr.mxu0 0.0
        %3292 = vmatpush1.xpose.msra.mxu0 0.0
        %3293 = vmatprep.subr.mxu0 0.0
        %3294 = vmatpush1.xpose.msra.mxu0 0.0
        %3295 = vmatprep.subr.mxu0 0.0
        %3296 = vmatpush1.xpose.msra.mxu0 0.0
        %3297 = vmatprep.subr.mxu0 0.0
        %3298 = vmatpush1.xpose.msra.mxu0 0.0
        %3299 = vmatprep.subr.mxu0 0.0
        %3300 = vmatpush1.xpose.msra.mxu0 0.0
        %3301 = vmatprep.mubr.f32.mxu0 0.0
        %3302 = vmatmul.mubr.f32.gmra.mrb[0].mxu0 %v3229
        %v3303 = vpop.f32.mrb[0].mxu0
        %v3304 = vadd.f32 0.0, %v3303
        %v3305 = vpop.f32.mrb[0].mxu0
        %3306 = vmatprep.mubr.f32.mxu0 0.0
        %3307 = vmatmul.mubr.f32.gmra.mrb[0].mxu0 %v3231
        %v3308 = vpop.f32.mrb[0].mxu0
        %v3309 = vadd.f32 0.0, %v3308
        %v3310 = vpop.f32.mrb[0].mxu0
        %3311 = vdwg.mxu0
        %v3312 = vmul.f32 %v3304, 0.17677669
        %v3313 = vmul.f32 %v3309, 0.17677669
        %v3314 = vsel %vm666, %v3312, -1e+09
        %v3315 = vsel %vm667, %v3313, -1e+09
        %v3316 = vsel %vm1231, %v3314, -inf
        %3317 = vmax.xlane.f32.xlu0 %v3316
        %v3318 = vpop.xlane.xlu0 %3317
        %v3319 = vsel %vm1235, %v3315, -inf
        %3320 = vmax.xlane.f32.xlu0 %v3319
        %v3321 = vpop.xlane.xlu0 %3320
        %v3322 = vsub.f32 %v3314, %v3318
        %v3323 = vsub.f32 %v3315, %v3321
        %v3324 = vmul.f32 %v3322, 1.442695
        %v3325 = vpow.pop %v3324
        %v3326 = vmul.f32 %v3323, 1.442695
        %v3327 = vpow.pop %v3326
        %v3328 = vsel %vm1231, %v3325, 0.0
        %3329 = vadd.xlane.f32.xlu0 %v3328
        %v3330 = vpop.xlane.xlu0 %3329
        %v3331 = vsel %vm1235, %v3327, 0.0
        %3332 = vadd.xlane.f32.xlu0 %v3331
        %v3333 = vpop.xlane.xlu0 %3332
        %v3334 = vrcp.pop %v3330
        %v3335 = vmul.f32 %v3325, %v3334
        %v3336 = vrcp.pop %v3333
        %v3337 = vmul.f32 %v3327, %v3336
        %3338 = vrot.lane.b32.xlu0 %v1136, 32
        %v3339 = vpop.permute.xlu0 %3338
        %3340 = vrot.lane.b32.xlu0 %v1138, 32
        %v3341 = vpop.permute.xlu0 %3340
        %v3344 = vsel %vm1231, %v3335, 0
        %v3347 = vsel %vm1231, %v3337, 0
        %v3349 = vsel %vm1261, %v3341, 0
        %3351 = vmatprep.subr.mxu0 0.0
        %3352 = vmatpush1.msra.mxu0 %v3339
        %3353 = vmatprep.subr.mxu0 0.0
        %3354 = vmatpush1.msra.mxu0 %v3349
        %3355 = vmatprep.subr.mxu0 0.0
        %3356 = vmatpush1.msra.mxu0 0.0
        %3357 = vmatprep.subr.mxu0 0.0
        %3358 = vmatpush1.msra.mxu0 0.0
        %3359 = vmatprep.subr.mxu0 0.0
        %3360 = vmatpush1.msra.mxu0 0.0
        %3361 = vmatprep.subr.mxu0 0.0
        %3362 = vmatpush1.msra.mxu0 0.0
        %3363 = vmatprep.subr.mxu0 0.0
        %3364 = vmatpush1.msra.mxu0 0.0
        %3365 = vmatprep.subr.mxu0 0.0
        %3366 = vmatpush1.msra.mxu0 0.0
        %3367 = vmatprep.subr.mxu0 0.0
        %3368 = vmatpush1.msra.mxu0 0.0
        %3369 = vmatprep.subr.mxu0 0.0
        %3370 = vmatpush1.msra.mxu0 0.0
        %3371 = vmatprep.subr.mxu0 0.0
        %3372 = vmatpush1.msra.mxu0 0.0
        %3373 = vmatprep.subr.mxu0 0.0
        %3374 = vmatpush1.msra.mxu0 0.0
        %3375 = vmatprep.subr.mxu0 0.0
        %3376 = vmatpush1.msra.mxu0 0.0
        %3377 = vmatprep.subr.mxu0 0.0
        %3378 = vmatpush1.msra.mxu0 0.0
        %3379 = vmatprep.subr.mxu0 0.0
        %3380 = vmatpush1.msra.mxu0 0.0
        %3381 = vmatprep.subr.mxu0 0.0
        %3382 = vmatpush1.msra.mxu0 0.0
        %3383 = vmatprep.subr.mxu0 0.0
        %3384 = vmatpush1.msra.mxu0 0.0
        %3385 = vmatprep.subr.mxu0 0.0
        %3386 = vmatpush1.msra.mxu0 0.0
        %3387 = vmatprep.subr.mxu0 0.0
        %3388 = vmatpush1.msra.mxu0 0.0
        %3389 = vmatprep.subr.mxu0 0.0
        %3390 = vmatpush1.msra.mxu0 0.0
        %3391 = vmatprep.subr.mxu0 0.0
        %3392 = vmatpush1.msra.mxu0 0.0
        %3393 = vmatprep.subr.mxu0 0.0
        %3394 = vmatpush1.msra.mxu0 0.0
        %3395 = vmatprep.subr.mxu0 0.0
        %3396 = vmatpush1.msra.mxu0 0.0
        %3397 = vmatprep.subr.mxu0 0.0
        %3398 = vmatpush1.msra.mxu0 0.0
        %3399 = vmatprep.subr.mxu0 0.0
        %3400 = vmatpush1.msra.mxu0 0.0
        %3401 = vmatprep.subr.mxu0 0.0
        %3402 = vmatpush1.msra.mxu0 0.0
        %3403 = vmatprep.subr.mxu0 0.0
        %3404 = vmatpush1.msra.mxu0 0.0
        %3405 = vmatprep.subr.mxu0 0.0
        %3406 = vmatpush1.msra.mxu0 0.0
        %3407 = vmatprep.subr.mxu0 0.0
        %3408 = vmatpush1.msra.mxu0 0.0
        %3409 = vmatprep.subr.mxu0 0.0
        %3410 = vmatpush1.msra.mxu0 0.0
        %3411 = vmatprep.subr.mxu0 0.0
        %3412 = vmatpush1.msra.mxu0 0.0
        %3413 = vmatprep.subr.mxu0 0.0
        %3414 = vmatpush1.msra.mxu0 0.0
        %3415 = vmatprep.mubr.f32.mxu0 0.0
        %3416 = vmatmul.mubr.f32.gmra.mrb[0].mxu0 %v3344
        %v3417 = vpop.f32.mrb[0].mxu0
        %v3418 = vadd.f32 0.0, %v3417
        %v3419 = vpop.f32.mrb[0].mxu0
        %3420 = vmatprep.mubr.f32.mxu0 0.0
        %3421 = vmatmul.mubr.f32.gmra.mrb[0].mxu0 %v3347
        %v3422 = vpop.f32.mrb[0].mxu0
        %v3423 = vadd.f32 0.0, %v3422
        %v3424 = vpop.f32.mrb[0].mxu0
        %3425 = vdwg.mxu0
        %v3426 = vld [vmem:[%s547 + $0xe30] sm:$0xff]
        %v3427 = vld [vmem:[%s547 + $0xe38] sm:$0xff]
        %v3428 = vld [vmem:[%s547 + $0xeb0] sm:$0xff]
        %v3429 = vld [vmem:[%s547 + $0xeb8] sm:$0xff]
        %v3430 = vld [vmem:[%s547 + $0xf30] sm:$0xff]
        %v3431 = vld [vmem:[%s547 + $0xf38] sm:$0xff]
        %v3432 = vld [vmem:[%s547 + $0xfb0] sm:$0xff]
        %v3433 = vld [vmem:[%s547 + $0xfb8] sm:$0xff]
        %v3435 = vsel %vm1139, %v3418, 0
        %v3438 = vsel %vm1139, %v3423, 0
        %3440 = vmatprep.subr.mxu0 %v3427
        %3441 = vmatpush1.msra.mxu0 %v3426
        %3442 = vmatprep.subr.mxu0 %v3429
        %3443 = vmatpush1.msra.mxu0 %v3428
        %3444 = vmatprep.subr.mxu0 %v3431
        %3445 = vmatpush1.msra.mxu0 %v3430
        %3446 = vmatprep.subr.mxu0 %v3433
        %3447 = vmatpush1.msra.mxu0 %v3432
        %3448 = vmatprep.subr.mxu0 0.0
        %3449 = vmatpush1.msra.mxu0 0.0
        %3450 = vmatprep.subr.mxu0 0.0
        %3451 = vmatpush1.msra.mxu0 0.0
        %3452 = vmatprep.subr.mxu0 0.0
        %3453 = vmatpush1.msra.mxu0 0.0
        %3454 = vmatprep.subr.mxu0 0.0
        %3455 = vmatpush1.msra.mxu0 0.0
        %3456 = vmatprep.subr.mxu0 0.0
        %3457 = vmatpush1.msra.mxu0 0.0
        %3458 = vmatprep.subr.mxu0 0.0
        %3459 = vmatpush1.msra.mxu0 0.0
        %3460 = vmatprep.subr.mxu0 0.0
        %3461 = vmatpush1.msra.mxu0 0.0
        %3462 = vmatprep.subr.mxu0 0.0
        %3463 = vmatpush1.msra.mxu0 0.0
        %3464 = vmatprep.subr.mxu0 0.0
        %3465 = vmatpush1.msra.mxu0 0.0
        %3466 = vmatprep.subr.mxu0 0.0
        %3467 = vmatpush1.msra.mxu0 0.0
        %3468 = vmatprep.subr.mxu0 0.0
        %3469 = vmatpush1.msra.mxu0 0.0
        %3470 = vmatprep.subr.mxu0 0.0
        %3471 = vmatpush1.msra.mxu0 0.0
        %3472 = vmatprep.subr.mxu0 0.0
        %3473 = vmatpush1.msra.mxu0 0.0
        %3474 = vmatprep.subr.mxu0 0.0
        %3475 = vmatpush1.msra.mxu0 0.0
        %3476 = vmatprep.subr.mxu0 0.0
        %3477 = vmatpush1.msra.mxu0 0.0
        %3478 = vmatprep.subr.mxu0 0.0
        %3479 = vmatpush1.msra.mxu0 0.0
        %3480 = vmatprep.subr.mxu0 0.0
        %3481 = vmatpush1.msra.mxu0 0.0
        %3482 = vmatprep.subr.mxu0 0.0
        %3483 = vmatpush1.msra.mxu0 0.0
        %3484 = vmatprep.subr.mxu0 0.0
        %3485 = vmatpush1.msra.mxu0 0.0
        %3486 = vmatprep.subr.mxu0 0.0
        %3487 = vmatpush1.msra.mxu0 0.0
        %3488 = vmatprep.subr.mxu0 0.0
        %3489 = vmatpush1.msra.mxu0 0.0
        %3490 = vmatprep.subr.mxu0 0.0
        %3491 = vmatpush1.msra.mxu0 0.0
        %3492 = vmatprep.subr.mxu0 0.0
        %3493 = vmatpush1.msra.mxu0 0.0
        %3494 = vmatprep.subr.mxu0 0.0
        %3495 = vmatpush1.msra.mxu0 0.0
        %3496 = vmatprep.subr.mxu0 0.0
        %3497 = vmatpush1.msra.mxu0 0.0
        %3498 = vmatprep.subr.mxu0 0.0
        %3499 = vmatpush1.msra.mxu0 0.0
        %3500 = vmatprep.subr.mxu0 0.0
        %3501 = vmatpush1.msra.mxu0 0.0
        %3502 = vmatprep.subr.mxu0 0.0
        %3503 = vmatpush1.msra.mxu0 0.0
        %3504 = vmatprep.mubr.f32.mxu0 0.0
        %3505 = vmatmul.mubr.f32.gmra.mrb[0].mxu0 %v3435
        %v3506 = vpop.f32.mrb[0].mxu0
        %v3507 = vadd.f32 0.0, %v3506
        %v3508 = vpop.f32.mrb[0].mxu0
        %v3509 = vadd.f32 0.0, %v3508
        %3510 = vmatprep.mubr.f32.mxu0 0.0
        %3511 = vmatmul.mubr.f32.gmra.mrb[0].mxu0 %v3438
        %v3512 = vpop.f32.mrb[0].mxu0
        %v3513 = vadd.f32 0.0, %v3512
        %v3514 = vpop.f32.mrb[0].mxu0
        %v3515 = vadd.f32 0.0, %v3514
        %3516 = vdwg.mxu0
        %v3517 = vadd.f32 %v3217, %v3507
        %v3518 = vadd.f32 %v3218, %v3509
        %v3519 = vadd.f32 %v3219, %v3513
        %v3520 = vadd.f32 %v3220, %v3515
        %v3521 = vlaneseq
        %v3522 = vshrl.u32 %v3521, 7
        %v3523 = vsub.s32 3, %v3522
        %v3524 = vrot.slane %v659, %v3523
        %v3525 = vlaneseq
        %v3526 = vshrl.u32 %v3525, 7
        %v3527 = vsub.s32 3, %v3526
        %v3528 = vrot.slane %v660, %v3527
        %v3529 = vadd.f32 %v3517, %v3524
        %v3530 = vadd.f32 %v3518, %v3528
        %v3531 = vadd.f32 %v3519, %v3524
        %v3532 = vadd.f32 %v3520, %v3528
        %v3533 = vadd.f32 %v676, %v3529
        %v3534 = vadd.f32 %v677, %v3530
        %v3535 = vadd.f32 %v678, %v3531
        %v3536 = vadd.f32 %v679, %v3532
        %v3537 = vadd.f32 %v3533, %v3534
        %3538 = vadd.xlane.f32.xlu0 %v3537
        %v3539 = vpop.xlane.xlu0 %3538
        %v3540 = vsel %vm1261, %v3535, 0.0
        %v3541 = vsel %vm1261, %v3536, 0.0
        %v3542 = vadd.f32 %v3540, %v3541
        %3543 = vadd.xlane.f32.xlu0 %v3542
        %v3544 = vpop.xlane.xlu0 %3543
        %v3545 = vrcp.pop 256.0
        %v3546 = vmul.f32 %v3539, %v3545
        %v3547 = vmul.f32 %v3544, %v3545
        %v3548 = vsub.f32 %v3533, %v3546
        %v3549 = vsub.f32 %v3534, %v3546
        %v3550 = vsub.f32 %v3535, %v3547
        %v3551 = vsub.f32 %v3536, %v3547
        %v3552 = vmul.f32 %v3548, %v3548
        %v3553 = vmul.f32 %v3549, %v3549
        %v3554 = vmul.f32 %v3550, %v3550
        %v3555 = vmul.f32 %v3551, %v3551
        %v3556 = vadd.f32 %v3552, %v3553
        %3557 = vadd.xlane.f32.xlu0 %v3556
        %v3558 = vpop.xlane.xlu0 %3557
        %v3559 = vsel %vm1261, %v3554, 0.0
        %v3560 = vsel %vm1261, %v3555, 0.0
        %v3561 = vadd.f32 %v3559, %v3560
        %3562 = vadd.xlane.f32.xlu0 %v3561
        %v3563 = vpop.xlane.xlu0 %3562
        %v3564 = vmul.f32 %v3558, %v3545
        %v3565 = vmul.f32 %v3563, %v3545
        %v3566 = vadd.f32 %v3564, 1e-05
        %v3567 = vadd.f32 %v3565, 1e-05
        %v3568 = vrsqrt.pop %v3566
        %v3569 = vrsqrt.pop %v3567
        %v3570 = vmul.f32 %v3548, %v3568
        %v3571 = vmul.f32 %v3549, %v3568
        %v3572 = vmul.f32 %v3550, %v3569
        %v3573 = vmul.f32 %v3551, %v3569
        %v3574 = vlaneseq
        %v3575 = vshrl.u32 %v3574, 7
        %v3576 = vsub.s32 0, %v3575
        %v3577 = vrot.slane %v661, %v3576
        %v3578 = vlaneseq
        %v3579 = vshrl.u32 %v3578, 7
        %v3580 = vsub.s32 0, %v3579
        %v3581 = vrot.slane %v662, %v3580
        %v3582 = vmul.f32 %v3570, %v3577
        %v3583 = vmul.f32 %v3571, %v3581
        %v3584 = vmul.f32 %v3572, %v3577
        %v3585 = vmul.f32 %v3573, %v3581
        %v3586 = vlaneseq
        %v3587 = vshrl.u32 %v3586, 7
        %v3588 = vsub.s32 1, %v3587
        %v3589 = vrot.slane %v661, %v3588
        %v3590 = vlaneseq
        %v3591 = vshrl.u32 %v3590, 7
        %v3592 = vsub.s32 1, %v3591
        %v3593 = vrot.slane %v662, %v3592
        %v3594 = vadd.f32 %v3582, %v3589
        %v3595 = vadd.f32 %v3583, %v3593
        %v3596 = vadd.f32 %v3584, %v3589
        %v3597 = vadd.f32 %v3585, %v3593
        %v3598 = vld [vmem:[%s547 + $0x40] sm:$0xff]
        %v3599 = vld [vmem:[%s547 + $0x48] sm:$0xff]
        %v3600 = vld [vmem:[%s547 + $0xc0] sm:$0xff]
        %v3601 = vld [vmem:[%s547 + $0xc8] sm:$0xff]
        %v3602 = vld [vmem:[%s547 + $0x140] sm:$0xff]
        %v3603 = vld [vmem:[%s547 + $0x148] sm:$0xff]
        %v3604 = vld [vmem:[%s547 + $0x1c0] sm:$0xff]
        %v3605 = vld [vmem:[%s547 + $0x1c8] sm:$0xff]
        %v3606 = vld [vmem:[%s547 + $0x240] sm:$0xff]
        %v3607 = vld [vmem:[%s547 + $0x248] sm:$0xff]
        %v3608 = vld [vmem:[%s547 + $0x2c0] sm:$0xff]
        %v3609 = vld [vmem:[%s547 + $0x2c8] sm:$0xff]
        %v3610 = vld [vmem:[%s547 + $0x340] sm:$0xff]
        %v3611 = vld [vmem:[%s547 + $0x348] sm:$0xff]
        %v3612 = vld [vmem:[%s547 + $0x3c0] sm:$0xff]
        %v3613 = vld [vmem:[%s547 + $0x3c8] sm:$0xff]
        %v3614 = vld [vmem:[%s547 + $0x440] sm:$0xff]
        %v3615 = vld [vmem:[%s547 + $0x448] sm:$0xff]
        %v3616 = vld [vmem:[%s547 + $0x4c0] sm:$0xff]
        %v3617 = vld [vmem:[%s547 + $0x4c8] sm:$0xff]
        %v3618 = vld [vmem:[%s547 + $0x540] sm:$0xff]
        %v3619 = vld [vmem:[%s547 + $0x548] sm:$0xff]
        %v3620 = vld [vmem:[%s547 + $0x5c0] sm:$0xff]
        %v3621 = vld [vmem:[%s547 + $0x5c8] sm:$0xff]
        %v3622 = vld [vmem:[%s547 + $0x640] sm:$0xff]
        %v3623 = vld [vmem:[%s547 + $0x648] sm:$0xff]
        %v3624 = vld [vmem:[%s547 + $0x6c0] sm:$0xff]
        %v3625 = vld [vmem:[%s547 + $0x6c8] sm:$0xff]
        %v3626 = vld [vmem:[%s547 + $0x740] sm:$0xff]
        %v3627 = vld [vmem:[%s547 + $0x748] sm:$0xff]
        %v3628 = vld [vmem:[%s547 + $0x7c0] sm:$0xff]
        %v3629 = vld [vmem:[%s547 + $0x7c8] sm:$0xff]
        %v3630 = vld [vmem:[%s547 + $0x840] sm:$0xff]
        %v3631 = vld [vmem:[%s547 + $0x848] sm:$0xff]
        %v3632 = vld [vmem:[%s547 + $0x8c0] sm:$0xff]
        %v3633 = vld [vmem:[%s547 + $0x8c8] sm:$0xff]
        %v3634 = vld [vmem:[%s547 + $0x940] sm:$0xff]
        %v3635 = vld [vmem:[%s547 + $0x948] sm:$0xff]
        %v3636 = vld [vmem:[%s547 + $0x9c0] sm:$0xff]
        %v3637 = vld [vmem:[%s547 + $0x9c8] sm:$0xff]
        %v3638 = vld [vmem:[%s547 + $0xa40] sm:$0xff]
        %v3639 = vld [vmem:[%s547 + $0xa48] sm:$0xff]
        %v3640 = vld [vmem:[%s547 + $0xac0] sm:$0xff]
        %v3641 = vld [vmem:[%s547 + $0xac8] sm:$0xff]
        %v3642 = vld [vmem:[%s547 + $0xb40] sm:$0xff]
        %v3643 = vld [vmem:[%s547 + $0xb48] sm:$0xff]
        %v3644 = vld [vmem:[%s547 + $0xbc0] sm:$0xff]
        %v3645 = vld [vmem:[%s547 + $0xbc8] sm:$0xff]
        %v3646 = vld [vmem:[%s547 + $0xc40] sm:$0xff]
        %v3647 = vld [vmem:[%s547 + $0xc48] sm:$0xff]
        %v3648 = vld [vmem:[%s547 + $0xcc0] sm:$0xff]
        %v3649 = vld [vmem:[%s547 + $0xcc8] sm:$0xff]
        %v3650 = vld [vmem:[%s547 + $0xd40] sm:$0xff]
        %v3651 = vld [vmem:[%s547 + $0xd48] sm:$0xff]
        %v3652 = vld [vmem:[%s547 + $0xdc0] sm:$0xff]
        %v3653 = vld [vmem:[%s547 + $0xdc8] sm:$0xff]
        %v3654 = vld [vmem:[%s547 + $0xe40] sm:$0xff]
        %v3655 = vld [vmem:[%s547 + $0xe48] sm:$0xff]
        %v3656 = vld [vmem:[%s547 + $0xec0] sm:$0xff]
        %v3657 = vld [vmem:[%s547 + $0xec8] sm:$0xff]
        %v3658 = vld [vmem:[%s547 + $0xf40] sm:$0xff]
        %v3659 = vld [vmem:[%s547 + $0xf48] sm:$0xff]
        %v3660 = vld [vmem:[%s547 + $0xfc0] sm:$0xff]
        %v3661 = vld [vmem:[%s547 + $0xfc8] sm:$0xff]
        %v3662 = vlaneseq
        %v3663 = vshrl.u32 %v3662, 7
        %v3664 = vsub.s32 4, %v3663
        %v3665 = vrot.slane %v659, %v3664
        %v3666 = vlaneseq
        %v3667 = vshrl.u32 %v3666, 7
        %v3668 = vsub.s32 4, %v3667
        %v3669 = vrot.slane %v660, %v3668
        %3670 = vmatprep.subr.mxu0 %v3599
        %3671 = vmatpush1.msra.mxu0 %v3598
        %3672 = vmatprep.subr.mxu0 %v3601
        %3673 = vmatpush1.msra.mxu0 %v3600
        %3674 = vmatprep.subr.mxu0 %v3603
        %3675 = vmatpush1.msra.mxu0 %v3602
        %3676 = vmatprep.subr.mxu0 %v3605
        %3677 = vmatpush1.msra.mxu0 %v3604
        %3678 = vmatprep.subr.mxu0 %v3607
        %3679 = vmatpush1.msra.mxu0 %v3606
        %3680 = vmatprep.subr.mxu0 %v3609
        %3681 = vmatpush1.msra.mxu0 %v3608
        %3682 = vmatprep.subr.mxu0 %v3611
        %3683 = vmatpush1.msra.mxu0 %v3610
        %3684 = vmatprep.subr.mxu0 %v3613
        %3685 = vmatpush1.msra.mxu0 %v3612
        %3686 = vmatprep.subr.mxu0 %v3615
        %3687 = vmatpush1.msra.mxu0 %v3614
        %3688 = vmatprep.subr.mxu0 %v3617
        %3689 = vmatpush1.msra.mxu0 %v3616
        %3690 = vmatprep.subr.mxu0 %v3619
        %3691 = vmatpush1.msra.mxu0 %v3618
        %3692 = vmatprep.subr.mxu0 %v3621
        %3693 = vmatpush1.msra.mxu0 %v3620
        %3694 = vmatprep.subr.mxu0 %v3623
        %3695 = vmatpush1.msra.mxu0 %v3622
        %3696 = vmatprep.subr.mxu0 %v3625
        %3697 = vmatpush1.msra.mxu0 %v3624
        %3698 = vmatprep.subr.mxu0 %v3627
        %3699 = vmatpush1.msra.mxu0 %v3626
        %3700 = vmatprep.subr.mxu0 %v3629
        %3701 = vmatpush1.msra.mxu0 %v3628
        %3702 = vmatprep.subr.mxu0 %v3631
        %3703 = vmatpush1.msra.mxu0 %v3630
        %3704 = vmatprep.subr.mxu0 %v3633
        %3705 = vmatpush1.msra.mxu0 %v3632
        %3706 = vmatprep.subr.mxu0 %v3635
        %3707 = vmatpush1.msra.mxu0 %v3634
        %3708 = vmatprep.subr.mxu0 %v3637
        %3709 = vmatpush1.msra.mxu0 %v3636
        %3710 = vmatprep.subr.mxu0 %v3639
        %3711 = vmatpush1.msra.mxu0 %v3638
        %3712 = vmatprep.subr.mxu0 %v3641
        %3713 = vmatpush1.msra.mxu0 %v3640
        %3714 = vmatprep.subr.mxu0 %v3643
        %3715 = vmatpush1.msra.mxu0 %v3642
        %3716 = vmatprep.subr.mxu0 %v3645
        %3717 = vmatpush1.msra.mxu0 %v3644
        %3718 = vmatprep.subr.mxu0 %v3647
        %3719 = vmatpush1.msra.mxu0 %v3646
        %3720 = vmatprep.subr.mxu0 %v3649
        %3721 = vmatpush1.msra.mxu0 %v3648
        %3722 = vmatprep.subr.mxu0 %v3651
        %3723 = vmatpush1.msra.mxu0 %v3650
        %3724 = vmatprep.subr.mxu0 %v3653
        %3725 = vmatpush1.msra.mxu0 %v3652
        %3726 = vmatprep.subr.mxu0 %v3655
        %3727 = vmatpush1.msra.mxu0 %v3654
        %3728 = vmatprep.subr.mxu0 %v3657
        %3729 = vmatpush1.msra.mxu0 %v3656
        %3730 = vmatprep.subr.mxu0 %v3659
        %3731 = vmatpush1.msra.mxu0 %v3658
        %3732 = vmatprep.subr.mxu0 %v3661
        %3733 = vmatpush1.msra.mxu0 %v3660
        %3734 = vmatprep.mubr.f32.mxu0 %v3595
        %3735 = vmatmul.mubr.f32.gmra.mrb[0].mxu0 %v3594
        %v3736 = vpop.f32.mrb[0].mxu0
        %v3737 = vadd.f32 %v3665, %v3736
        %v3738 = vpop.f32.mrb[0].mxu0
        %v3739 = vadd.f32 %v3669, %v3738
        %3740 = vmatprep.mubr.f32.mxu0 %v3597
        %3741 = vmatmul.mubr.f32.gmra.mrb[0].mxu0 %v3596
        %v3742 = vpop.f32.mrb[0].mxu0
        %v3743 = vadd.f32 %v3665, %v3742
        %v3744 = vpop.f32.mrb[0].mxu0
        %v3745 = vadd.f32 %v3669, %v3744
        %3746 = vdwg.mxu0
        %v3747 = vld [vmem:[%s547 + $0x50] sm:$0xff]
        %v3748 = vld [vmem:[%s547 + $0x58] sm:$0xff]
        %v3749 = vld [vmem:[%s547 + $0x60] sm:$0xff]
        %v3750 = vld [vmem:[%s547 + $0x68] sm:$0xff]
        %v3751 = vld [vmem:[%s547 + $0xd0] sm:$0xff]
        %v3752 = vld [vmem:[%s547 + $0xd8] sm:$0xff]
        %v3753 = vld [vmem:[%s547 + $0xe0] sm:$0xff]
        %v3754 = vld [vmem:[%s547 + $0xe8] sm:$0xff]
        %v3755 = vld [vmem:[%s547 + $0x150] sm:$0xff]
        %v3756 = vld [vmem:[%s547 + $0x158] sm:$0xff]
        %v3757 = vld [vmem:[%s547 + $0x160] sm:$0xff]
        %v3758 = vld [vmem:[%s547 + $0x168] sm:$0xff]
        %v3759 = vld [vmem:[%s547 + $0x1d0] sm:$0xff]
        %v3760 = vld [vmem:[%s547 + $0x1d8] sm:$0xff]
        %v3761 = vld [vmem:[%s547 + $0x1e0] sm:$0xff]
        %v3762 = vld [vmem:[%s547 + $0x1e8] sm:$0xff]
        %v3763 = vld [vmem:[%s547 + $0x250] sm:$0xff]
        %v3764 = vld [vmem:[%s547 + $0x258] sm:$0xff]
        %v3765 = vld [vmem:[%s547 + $0x260] sm:$0xff]
        %v3766 = vld [vmem:[%s547 + $0x268] sm:$0xff]
        %v3767 = vld [vmem:[%s547 + $0x2d0] sm:$0xff]
        %v3768 = vld [vmem:[%s547 + $0x2d8] sm:$0xff]
        %v3769 = vld [vmem:[%s547 + $0x2e0] sm:$0xff]
        %v3770 = vld [vmem:[%s547 + $0x2e8] sm:$0xff]
        %v3771 = vld [vmem:[%s547 + $0x350] sm:$0xff]
        %v3772 = vld [vmem:[%s547 + $0x358] sm:$0xff]
        %v3773 = vld [vmem:[%s547 + $0x360] sm:$0xff]
        %v3774 = vld [vmem:[%s547 + $0x368] sm:$0xff]
        %v3775 = vld [vmem:[%s547 + $0x3d0] sm:$0xff]
        %v3776 = vld [vmem:[%s547 + $0x3d8] sm:$0xff]
        %v3777 = vld [vmem:[%s547 + $0x3e0] sm:$0xff]
        %v3778 = vld [vmem:[%s547 + $0x3e8] sm:$0xff]
        %v3779 = vld [vmem:[%s547 + $0x450] sm:$0xff]
        %v3780 = vld [vmem:[%s547 + $0x458] sm:$0xff]
        %v3781 = vld [vmem:[%s547 + $0x460] sm:$0xff]
        %v3782 = vld [vmem:[%s547 + $0x468] sm:$0xff]
        %v3783 = vld [vmem:[%s547 + $0x4d0] sm:$0xff]
        %v3784 = vld [vmem:[%s547 + $0x4d8] sm:$0xff]
        %v3785 = vld [vmem:[%s547 + $0x4e0] sm:$0xff]
        %v3786 = vld [vmem:[%s547 + $0x4e8] sm:$0xff]
        %v3787 = vld [vmem:[%s547 + $0x550] sm:$0xff]
        %v3788 = vld [vmem:[%s547 + $0x558] sm:$0xff]
        %v3789 = vld [vmem:[%s547 + $0x560] sm:$0xff]
        %v3790 = vld [vmem:[%s547 + $0x568] sm:$0xff]
        %v3791 = vld [vmem:[%s547 + $0x5d0] sm:$0xff]
        %v3792 = vld [vmem:[%s547 + $0x5d8] sm:$0xff]
        %v3793 = vld [vmem:[%s547 + $0x5e0] sm:$0xff]
        %v3794 = vld [vmem:[%s547 + $0x5e8] sm:$0xff]
        %v3795 = vld [vmem:[%s547 + $0x650] sm:$0xff]
        %v3796 = vld [vmem:[%s547 + $0x658] sm:$0xff]
        %v3797 = vld [vmem:[%s547 + $0x660] sm:$0xff]
        %v3798 = vld [vmem:[%s547 + $0x668] sm:$0xff]
        %v3799 = vld [vmem:[%s547 + $0x6d0] sm:$0xff]
        %v3800 = vld [vmem:[%s547 + $0x6d8] sm:$0xff]
        %v3801 = vld [vmem:[%s547 + $0x6e0] sm:$0xff]
        %v3802 = vld [vmem:[%s547 + $0x6e8] sm:$0xff]
        %v3803 = vld [vmem:[%s547 + $0x750] sm:$0xff]
        %v3804 = vld [vmem:[%s547 + $0x758] sm:$0xff]
        %v3805 = vld [vmem:[%s547 + $0x760] sm:$0xff]
        %v3806 = vld [vmem:[%s547 + $0x768] sm:$0xff]
        %v3807 = vld [vmem:[%s547 + $0x7d0] sm:$0xff]
        %v3808 = vld [vmem:[%s547 + $0x7d8] sm:$0xff]
        %v3809 = vld [vmem:[%s547 + $0x7e0] sm:$0xff]
        %v3810 = vld [vmem:[%s547 + $0x7e8] sm:$0xff]
        %v3811 = vld [vmem:[%s547 + $0x850] sm:$0xff]
        %v3812 = vld [vmem:[%s547 + $0x858] sm:$0xff]
        %v3813 = vld [vmem:[%s547 + $0x860] sm:$0xff]
        %v3814 = vld [vmem:[%s547 + $0x868] sm:$0xff]
        %v3815 = vld [vmem:[%s547 + $0x8d0] sm:$0xff]
        %v3816 = vld [vmem:[%s547 + $0x8d8] sm:$0xff]
        %v3817 = vld [vmem:[%s547 + $0x8e0] sm:$0xff]
        %v3818 = vld [vmem:[%s547 + $0x8e8] sm:$0xff]
        %v3819 = vld [vmem:[%s547 + $0x950] sm:$0xff]
        %v3820 = vld [vmem:[%s547 + $0x958] sm:$0xff]
        %v3821 = vld [vmem:[%s547 + $0x960] sm:$0xff]
        %v3822 = vld [vmem:[%s547 + $0x968] sm:$0xff]
        %v3823 = vld [vmem:[%s547 + $0x9d0] sm:$0xff]
        %v3824 = vld [vmem:[%s547 + $0x9d8] sm:$0xff]
        %v3825 = vld [vmem:[%s547 + $0x9e0] sm:$0xff]
        %v3826 = vld [vmem:[%s547 + $0x9e8] sm:$0xff]
        %v3827 = vld [vmem:[%s547 + $0xa50] sm:$0xff]
        %v3828 = vld [vmem:[%s547 + $0xa58] sm:$0xff]
        %v3829 = vld [vmem:[%s547 + $0xa60] sm:$0xff]
        %v3830 = vld [vmem:[%s547 + $0xa68] sm:$0xff]
        %v3831 = vld [vmem:[%s547 + $0xad0] sm:$0xff]
        %v3832 = vld [vmem:[%s547 + $0xad8] sm:$0xff]
        %v3833 = vld [vmem:[%s547 + $0xae0] sm:$0xff]
        %v3834 = vld [vmem:[%s547 + $0xae8] sm:$0xff]
        %v3835 = vld [vmem:[%s547 + $0xb50] sm:$0xff]
        %v3836 = vld [vmem:[%s547 + $0xb58] sm:$0xff]
        %v3837 = vld [vmem:[%s547 + $0xb60] sm:$0xff]
        %v3838 = vld [vmem:[%s547 + $0xb68] sm:$0xff]
        %v3839 = vld [vmem:[%s547 + $0xbd0] sm:$0xff]
        %v3840 = vld [vmem:[%s547 + $0xbd8] sm:$0xff]
        %v3841 = vld [vmem:[%s547 + $0xbe0] sm:$0xff]
        %v3842 = vld [vmem:[%s547 + $0xbe8] sm:$0xff]
        %v3843 = vld [vmem:[%s547 + $0xc50] sm:$0xff]
        %v3844 = vld [vmem:[%s547 + $0xc58] sm:$0xff]
        %v3845 = vld [vmem:[%s547 + $0xc60] sm:$0xff]
        %v3846 = vld [vmem:[%s547 + $0xc68] sm:$0xff]
        %v3847 = vld [vmem:[%s547 + $0xcd0] sm:$0xff]
        %v3848 = vld [vmem:[%s547 + $0xcd8] sm:$0xff]
        %v3849 = vld [vmem:[%s547 + $0xce0] sm:$0xff]
        %v3850 = vld [vmem:[%s547 + $0xce8] sm:$0xff]
        %v3851 = vld [vmem:[%s547 + $0xd50] sm:$0xff]
        %v3852 = vld [vmem:[%s547 + $0xd58] sm:$0xff]
        %v3853 = vld [vmem:[%s547 + $0xd60] sm:$0xff]
        %v3854 = vld [vmem:[%s547 + $0xd68] sm:$0xff]
        %v3855 = vld [vmem:[%s547 + $0xdd0] sm:$0xff]
        %v3856 = vld [vmem:[%s547 + $0xdd8] sm:$0xff]
        %v3857 = vld [vmem:[%s547 + $0xde0] sm:$0xff]
        %v3858 = vld [vmem:[%s547 + $0xde8] sm:$0xff]
        %v3859 = vld [vmem:[%s547 + $0xe50] sm:$0xff]
        %v3860 = vld [vmem:[%s547 + $0xe58] sm:$0xff]
        %v3861 = vld [vmem:[%s547 + $0xe60] sm:$0xff]
        %v3862 = vld [vmem:[%s547 + $0xe68] sm:$0xff]
        %v3863 = vld [vmem:[%s547 + $0xed0] sm:$0xff]
        %v3864 = vld [vmem:[%s547 + $0xed8] sm:$0xff]
        %v3865 = vld [vmem:[%s547 + $0xee0] sm:$0xff]
        %v3866 = vld [vmem:[%s547 + $0xee8] sm:$0xff]
        %v3867 = vld [vmem:[%s547 + $0xf50] sm:$0xff]
        %v3868 = vld [vmem:[%s547 + $0xf58] sm:$0xff]
        %v3869 = vld [vmem:[%s547 + $0xf60] sm:$0xff]
        %v3870 = vld [vmem:[%s547 + $0xf68] sm:$0xff]
        %v3871 = vld [vmem:[%s547 + $0xfd0] sm:$0xff]
        %v3872 = vld [vmem:[%s547 + $0xfd8] sm:$0xff]
        %v3873 = vld [vmem:[%s547 + $0xfe0] sm:$0xff]
        %v3874 = vld [vmem:[%s547 + $0xfe8] sm:$0xff]
        %3875 = vmatprep.subr.mxu0 %v3748
        %3876 = vmatpush1.msra.mxu0 %v3747
        %3877 = vmatprep.subr.mxu0 %v3752
        %3878 = vmatpush1.msra.mxu0 %v3751
        %3879 = vmatprep.subr.mxu0 %v3756
        %3880 = vmatpush1.msra.mxu0 %v3755
        %3881 = vmatprep.subr.mxu0 %v3760
        %3882 = vmatpush1.msra.mxu0 %v3759
        %3883 = vmatprep.subr.mxu0 %v3764
        %3884 = vmatpush1.msra.mxu0 %v3763
        %3885 = vmatprep.subr.mxu0 %v3768
        %3886 = vmatpush1.msra.mxu0 %v3767
        %3887 = vmatprep.subr.mxu0 %v3772
        %3888 = vmatpush1.msra.mxu0 %v3771
        %3889 = vmatprep.subr.mxu0 %v3776
        %3890 = vmatpush1.msra.mxu0 %v3775
        %3891 = vmatprep.subr.mxu0 %v3780
        %3892 = vmatpush1.msra.mxu0 %v3779
        %3893 = vmatprep.subr.mxu0 %v3784
        %3894 = vmatpush1.msra.mxu0 %v3783
        %3895 = vmatprep.subr.mxu0 %v3788
        %3896 = vmatpush1.msra.mxu0 %v3787
        %3897 = vmatprep.subr.mxu0 %v3792
        %3898 = vmatpush1.msra.mxu0 %v3791
        %3899 = vmatprep.subr.mxu0 %v3796
        %3900 = vmatpush1.msra.mxu0 %v3795
        %3901 = vmatprep.subr.mxu0 %v3800
        %3902 = vmatpush1.msra.mxu0 %v3799
        %3903 = vmatprep.subr.mxu0 %v3804
        %3904 = vmatpush1.msra.mxu0 %v3803
        %3905 = vmatprep.subr.mxu0 %v3808
        %3906 = vmatpush1.msra.mxu0 %v3807
        %3907 = vmatprep.subr.mxu0 %v3812
        %3908 = vmatpush1.msra.mxu0 %v3811
        %3909 = vmatprep.subr.mxu0 %v3816
        %3910 = vmatpush1.msra.mxu0 %v3815
        %3911 = vmatprep.subr.mxu0 %v3820
        %3912 = vmatpush1.msra.mxu0 %v3819
        %3913 = vmatprep.subr.mxu0 %v3824
        %3914 = vmatpush1.msra.mxu0 %v3823
        %3915 = vmatprep.subr.mxu0 %v3828
        %3916 = vmatpush1.msra.mxu0 %v3827
        %3917 = vmatprep.subr.mxu0 %v3832
        %3918 = vmatpush1.msra.mxu0 %v3831
        %3919 = vmatprep.subr.mxu0 %v3836
        %3920 = vmatpush1.msra.mxu0 %v3835
        %3921 = vmatprep.subr.mxu0 %v3840
        %3922 = vmatpush1.msra.mxu0 %v3839
        %3923 = vmatprep.subr.mxu0 %v3844
        %3924 = vmatpush1.msra.mxu0 %v3843
        %3925 = vmatprep.subr.mxu0 %v3848
        %3926 = vmatpush1.msra.mxu0 %v3847
        %3927 = vmatprep.subr.mxu0 %v3852
        %3928 = vmatpush1.msra.mxu0 %v3851
        %3929 = vmatprep.subr.mxu0 %v3856
        %3930 = vmatpush1.msra.mxu0 %v3855
        %3931 = vmatprep.subr.mxu0 %v3860
        %3932 = vmatpush1.msra.mxu0 %v3859
        %3933 = vmatprep.subr.mxu0 %v3864
        %3934 = vmatpush1.msra.mxu0 %v3863
        %3935 = vmatprep.subr.mxu0 %v3868
        %3936 = vmatpush1.msra.mxu0 %v3867
        %3937 = vmatprep.subr.mxu0 %v3872
        %3938 = vmatpush1.msra.mxu0 %v3871
        %3939 = vmatprep.mubr.f32.mxu0 %v673
        %3940 = vmatmul.mubr.f32.gmra.mrb[0].mxu0 %v672
        %v3941 = vpop.f32.mrb[0].mxu0
        %v3942 = vadd.f32 0.0, %v3941
        %v3943 = vpop.f32.mrb[0].mxu0
        %v3944 = vadd.f32 0.0, %v3943
        %3945 = vmatprep.mubr.f32.mxu0 %v675
        %3946 = vmatmul.mubr.f32.gmra.mrb[0].mxu0 %v674
        %v3947 = vpop.f32.mrb[0].mxu0
        %v3948 = vadd.f32 0.0, %v3947
        %v3949 = vpop.f32.mrb[0].mxu0
        %v3950 = vadd.f32 0.0, %v3949
        %3951 = vdwg.mxu0
        %3952 = vmatprep.subr.mxu0 %v3750
        %3953 = vmatpush1.msra.mxu0 %v3749
        %3954 = vmatprep.subr.mxu0 %v3754
        %3955 = vmatpush1.msra.mxu0 %v3753
        %3956 = vmatprep.subr.mxu0 %v3758
        %3957 = vmatpush1.msra.mxu0 %v3757
        %3958 = vmatprep.subr.mxu0 %v3762
        %3959 = vmatpush1.msra.mxu0 %v3761
        %3960 = vmatprep.subr.mxu0 %v3766
        %3961 = vmatpush1.msra.mxu0 %v3765
        %3962 = vmatprep.subr.mxu0 %v3770
        %3963 = vmatpush1.msra.mxu0 %v3769
        %3964 = vmatprep.subr.mxu0 %v3774
        %3965 = vmatpush1.msra.mxu0 %v3773
        %3966 = vmatprep.subr.mxu0 %v3778
        %3967 = vmatpush1.msra.mxu0 %v3777
        %3968 = vmatprep.subr.mxu0 %v3782
        %3969 = vmatpush1.msra.mxu0 %v3781
        %3970 = vmatprep.subr.mxu0 %v3786
        %3971 = vmatpush1.msra.mxu0 %v3785
        %3972 = vmatprep.subr.mxu0 %v3790
        %3973 = vmatpush1.msra.mxu0 %v3789
        %3974 = vmatprep.subr.mxu0 %v3794
        %3975 = vmatpush1.msra.mxu0 %v3793
        %3976 = vmatprep.subr.mxu0 %v3798
        %3977 = vmatpush1.msra.mxu0 %v3797
        %3978 = vmatprep.subr.mxu0 %v3802
        %3979 = vmatpush1.msra.mxu0 %v3801
        %3980 = vmatprep.subr.mxu0 %v3806
        %3981 = vmatpush1.msra.mxu0 %v3805
        %3982 = vmatprep.subr.mxu0 %v3810
        %3983 = vmatpush1.msra.mxu0 %v3809
        %3984 = vmatprep.subr.mxu0 %v3814
        %3985 = vmatpush1.msra.mxu0 %v3813
        %3986 = vmatprep.subr.mxu0 %v3818
        %3987 = vmatpush1.msra.mxu0 %v3817
        %3988 = vmatprep.subr.mxu0 %v3822
        %3989 = vmatpush1.msra.mxu0 %v3821
        %3990 = vmatprep.subr.mxu0 %v3826
        %3991 = vmatpush1.msra.mxu0 %v3825
        %3992 = vmatprep.subr.mxu0 %v3830
        %3993 = vmatpush1.msra.mxu0 %v3829
        %3994 = vmatprep.subr.mxu0 %v3834
        %3995 = vmatpush1.msra.mxu0 %v3833
        %3996 = vmatprep.subr.mxu0 %v3838
        %3997 = vmatpush1.msra.mxu0 %v3837
        %3998 = vmatprep.subr.mxu0 %v3842
        %3999 = vmatpush1.msra.mxu0 %v3841
        %4000 = vmatprep.subr.mxu0 %v3846
        %4001 = vmatpush1.msra.mxu0 %v3845
        %4002 = vmatprep.subr.mxu0 %v3850
        %4003 = vmatpush1.msra.mxu0 %v3849
        %4004 = vmatprep.subr.mxu0 %v3854
        %4005 = vmatpush1.msra.mxu0 %v3853
        %4006 = vmatprep.subr.mxu0 %v3858
        %4007 = vmatpush1.msra.mxu0 %v3857
        %4008 = vmatprep.subr.mxu0 %v3862
        %4009 = vmatpush1.msra.mxu0 %v3861
        %4010 = vmatprep.subr.mxu0 %v3866
        %4011 = vmatpush1.msra.mxu0 %v3865
        %4012 = vmatprep.subr.mxu0 %v3870
        %4013 = vmatpush1.msra.mxu0 %v3869
        %4014 = vmatprep.subr.mxu0 %v3874
        %4015 = vmatpush1.msra.mxu0 %v3873
        %4016 = vmatprep.mubr.f32.mxu0 %v673
        %4017 = vmatmul.mubr.f32.gmra.mrb[0].mxu0 %v672
        %v4018 = vpop.f32.mrb[0].mxu0
        %v4019 = vadd.f32 0.0, %v4018
        %v4020 = vpop.f32.mrb[0].mxu0
        %v4021 = vadd.f32 0.0, %v4020
        %4022 = vmatprep.mubr.f32.mxu0 %v675
        %4023 = vmatmul.mubr.f32.gmra.mrb[0].mxu0 %v674
        %v4024 = vpop.f32.mrb[0].mxu0
        %v4025 = vadd.f32 0.0, %v4024
        %v4026 = vpop.f32.mrb[0].mxu0
        %v4027 = vadd.f32 0.0, %v4026
        %4028 = vdwg.mxu0
        %v4029 = vlaneseq
        %v4030 = vshrl.u32 %v4029, 7
        %v4031 = vsub.s32 5, %v4030
        %v4032 = vrot.slane %v659, %v4031
        %v4033 = vlaneseq
        %v4034 = vshrl.u32 %v4033, 7
        %v4035 = vsub.s32 5, %v4034
        %v4036 = vrot.slane %v660, %v4035
        %v4037 = vadd.f32 %v3942, %v4032
        %v4038 = vadd.f32 %v3944, %v4036
        %v4039 = vadd.f32 %v3948, %v4032
        %v4040 = vadd.f32 %v3950, %v4036
        %v4041 = vlaneseq
        %v4042 = vshrl.u32 %v4041, 7
        %v4043 = vsub.s32 6, %v4042
        %v4044 = vrot.slane %v659, %v4043
        %v4045 = vlaneseq
        %v4046 = vshrl.u32 %v4045, 7
        %v4047 = vsub.s32 6, %v4046
        %v4048 = vrot.slane %v660, %v4047
        %v4049 = vadd.f32 %v4019, %v4044
        %v4050 = vadd.f32 %v4021, %v4048
        %v4051 = vadd.f32 %v4025, %v4044
        %v4052 = vadd.f32 %v4027, %v4048
        %v4054 = vsel %vm1139, %v3737, 0
        %v4057 = vsel %vm1139, %v3743, 0
        %v4060 = vsel %vm1139, %v4037, 0
        %v4063 = vsel %vm1139, %v4039, 0
        %4065 = vmatprep.subr.mxu0 0.0
        %4066 = vmatpush1.xpose.msra.mxu0 %v4060
        %4067 = vmatprep.subr.mxu0 0.0
        %4068 = vmatpush1.xpose.msra.mxu0 %v4063
        %4069 = vmatprep.subr.mxu0 0.0
        %4070 = vmatpush1.xpose.msra.mxu0 0.0
        %4071 = vmatprep.subr.mxu0 0.0
        %4072 = vmatpush1.xpose.msra.mxu0 0.0
        %4073 = vmatprep.subr.mxu0 0.0
        %4074 = vmatpush1.xpose.msra.mxu0 0.0
        %4075 = vmatprep.subr.mxu0 0.0
        %4076 = vmatpush1.xpose.msra.mxu0 0.0
        %4077 = vmatprep.subr.mxu0 0.0
        %4078 = vmatpush1.xpose.msra.mxu0 0.0
        %4079 = vmatprep.subr.mxu0 0.0
        %4080 = vmatpush1.xpose.msra.mxu0 0.0
        %4081 = vmatprep.subr.mxu0 0.0
        %4082 = vmatpush1.xpose.msra.mxu0 0.0
        %4083 = vmatprep.subr.mxu0 0.0
        %4084 = vmatpush1.xpose.msra.mxu0 0.0
        %4085 = vmatprep.subr.mxu0 0.0
        %4086 = vmatpush1.xpose.msra.mxu0 0.0
        %4087 = vmatprep.subr.mxu0 0.0
        %4088 = vmatpush1.xpose.msra.mxu0 0.0
        %4089 = vmatprep.subr.mxu0 0.0
        %4090 = vmatpush1.xpose.msra.mxu0 0.0
        %4091 = vmatprep.subr.mxu0 0.0
        %4092 = vmatpush1.xpose.msra.mxu0 0.0
        %4093 = vmatprep.subr.mxu0 0.0
        %4094 = vmatpush1.xpose.msra.mxu0 0.0
        %4095 = vmatprep.subr.mxu0 0.0
        %4096 = vmatpush1.xpose.msra.mxu0 0.0
        %4097 = vmatprep.subr.mxu0 0.0
        %4098 = vmatpush1.xpose.msra.mxu0 0.0
        %4099 = vmatprep.subr.mxu0 0.0
        %4100 = vmatpush1.xpose.msra.mxu0 0.0
        %4101 = vmatprep.subr.mxu0 0.0
        %4102 = vmatpush1.xpose.msra.mxu0 0.0
        %4103 = vmatprep.subr.mxu0 0.0
        %4104 = vmatpush1.xpose.msra.mxu0 0.0
        %4105 = vmatprep.subr.mxu0 0.0
        %4106 = vmatpush1.xpose.msra.mxu0 0.0
        %4107 = vmatprep.subr.mxu0 0.0
        %4108 = vmatpush1.xpose.msra.mxu0 0.0
        %4109 = vmatprep.subr.mxu0 0.0
        %4110 = vmatpush1.xpose.msra.mxu0 0.0
        %4111 = vmatprep.subr.mxu0 0.0
        %4112 = vmatpush1.xpose.msra.mxu0 0.0
        %4113 = vmatprep.subr.mxu0 0.0
        %4114 = vmatpush1.xpose.msra.mxu0 0.0
        %4115 = vmatprep.subr.mxu0 0.0
        %4116 = vmatpush1.xpose.msra.mxu0 0.0
        %4117 = vmatprep.subr.mxu0 0.0
        %4118 = vmatpush1.xpose.msra.mxu0 0.0
        %4119 = vmatprep.subr.mxu0 0.0
        %4120 = vmatpush1.xpose.msra.mxu0 0.0
        %4121 = vmatprep.subr.mxu0 0.0
        %4122 = vmatpush1.xpose.msra.mxu0 0.0
        %4123 = vmatprep.subr.mxu0 0.0
        %4124 = vmatpush1.xpose.msra.mxu0 0.0
        %4125 = vmatprep.subr.mxu0 0.0
        %4126 = vmatpush1.xpose.msra.mxu0 0.0
        %4127 = vmatprep.subr.mxu0 0.0
        %4128 = vmatpush1.xpose.msra.mxu0 0.0
        %4129 = vmatprep.mubr.f32.mxu0 0.0
        %4130 = vmatmul.mubr.f32.gmra.mrb[0].mxu0 %v4054
        %v4131 = vpop.f32.mrb[0].mxu0
        %v4132 = vadd.f32 0.0, %v4131
        %v4133 = vpop.f32.mrb[0].mxu0
        %4134 = vmatprep.mubr.f32.mxu0 0.0
        %4135 = vmatmul.mubr.f32.gmra.mrb[0].mxu0 %v4057
        %v4136 = vpop.f32.mrb[0].mxu0
        %v4137 = vadd.f32 0.0, %v4136
        %v4138 = vpop.f32.mrb[0].mxu0
        %4139 = vdwg.mxu0
        %v4140 = vmul.f32 %v4132, 0.17677669
        %v4141 = vmul.f32 %v4137, 0.17677669
        %v4142 = vsel %vm670, %v4140, -1e+09
        %v4143 = vsel %vm671, %v4141, -1e+09
        %vm4144 = vcmask 130048
        %v4145 = vsel %vm4144, %v4142, -inf
        %4146 = vmax.xlane.f32.xlu0 %v4145
        %v4147 = vpop.xlane.xlu0 %4146
        %vm4148 = vcmask 123904
        %v4149 = vsel %vm4148, %v4143, -inf
        %4150 = vmax.xlane.f32.xlu0 %v4149
        %v4151 = vpop.xlane.xlu0 %4150
        %v4152 = vsub.f32 %v4142, %v4147
        %v4153 = vsub.f32 %v4143, %v4151
        %v4154 = vmul.f32 %v4152, 1.442695
        %v4155 = vpow.pop %v4154
        %v4156 = vmul.f32 %v4153, 1.442695
        %v4157 = vpow.pop %v4156
        %v4158 = vsel %vm4144, %v4155, 0.0
        %4159 = vadd.xlane.f32.xlu0 %v4158
        %v4160 = vpop.xlane.xlu0 %4159
        %v4161 = vsel %vm4148, %v4157, 0.0
        %4162 = vadd.xlane.f32.xlu0 %v4161
        %v4163 = vpop.xlane.xlu0 %4162
        %v4164 = vrcp.pop %v4160
        %v4165 = vmul.f32 %v4155, %v4164
        %v4166 = vrcp.pop %v4163
        %v4167 = vmul.f32 %v4157, %v4166
        %v4169 = vsel %vm4144, %v4165, 0
        %v4172 = vsel %vm4144, %v4167, 0
        %4174 = vmatprep.subr.mxu0 0.0
        %4175 = vmatpush1.msra.mxu0 %v4049
        %4176 = vmatprep.subr.mxu0 0.0
        %4177 = vmatpush1.msra.mxu0 %v4051
        %4178 = vmatprep.subr.mxu0 0.0
        %4179 = vmatpush1.msra.mxu0 0.0
        %4180 = vmatprep.subr.mxu0 0.0
        %4181 = vmatpush1.msra.mxu0 0.0
        %4182 = vmatprep.subr.mxu0 0.0
        %4183 = vmatpush1.msra.mxu0 0.0
        %4184 = vmatprep.subr.mxu0 0.0
        %4185 = vmatpush1.msra.mxu0 0.0
        %4186 = vmatprep.subr.mxu0 0.0
        %4187 = vmatpush1.msra.mxu0 0.0
        %4188 = vmatprep.subr.mxu0 0.0
        %4189 = vmatpush1.msra.mxu0 0.0
        %4190 = vmatprep.subr.mxu0 0.0
        %4191 = vmatpush1.msra.mxu0 0.0
        %4192 = vmatprep.subr.mxu0 0.0
        %4193 = vmatpush1.msra.mxu0 0.0
        %4194 = vmatprep.subr.mxu0 0.0
        %4195 = vmatpush1.msra.mxu0 0.0
        %4196 = vmatprep.subr.mxu0 0.0
        %4197 = vmatpush1.msra.mxu0 0.0
        %4198 = vmatprep.subr.mxu0 0.0
        %4199 = vmatpush1.msra.mxu0 0.0
        %4200 = vmatprep.subr.mxu0 0.0
        %4201 = vmatpush1.msra.mxu0 0.0
        %4202 = vmatprep.subr.mxu0 0.0
        %4203 = vmatpush1.msra.mxu0 0.0
        %4204 = vmatprep.subr.mxu0 0.0
        %4205 = vmatpush1.msra.mxu0 0.0
        %4206 = vmatprep.subr.mxu0 0.0
        %4207 = vmatpush1.msra.mxu0 0.0
        %4208 = vmatprep.subr.mxu0 0.0
        %4209 = vmatpush1.msra.mxu0 0.0
        %4210 = vmatprep.subr.mxu0 0.0
        %4211 = vmatpush1.msra.mxu0 0.0
        %4212 = vmatprep.subr.mxu0 0.0
        %4213 = vmatpush1.msra.mxu0 0.0
        %4214 = vmatprep.subr.mxu0 0.0
        %4215 = vmatpush1.msra.mxu0 0.0
        %4216 = vmatprep.subr.mxu0 0.0
        %4217 = vmatpush1.msra.mxu0 0.0
        %4218 = vmatprep.subr.mxu0 0.0
        %4219 = vmatpush1.msra.mxu0 0.0
        %4220 = vmatprep.subr.mxu0 0.0
        %4221 = vmatpush1.msra.mxu0 0.0
        %4222 = vmatprep.subr.mxu0 0.0
        %4223 = vmatpush1.msra.mxu0 0.0
        %4224 = vmatprep.subr.mxu0 0.0
        %4225 = vmatpush1.msra.mxu0 0.0
        %4226 = vmatprep.subr.mxu0 0.0
        %4227 = vmatpush1.msra.mxu0 0.0
        %4228 = vmatprep.subr.mxu0 0.0
        %4229 = vmatpush1.msra.mxu0 0.0
        %4230 = vmatprep.subr.mxu0 0.0
        %4231 = vmatpush1.msra.mxu0 0.0
        %4232 = vmatprep.subr.mxu0 0.0
        %4233 = vmatpush1.msra.mxu0 0.0
        %4234 = vmatprep.subr.mxu0 0.0
        %4235 = vmatpush1.msra.mxu0 0.0
        %4236 = vmatprep.subr.mxu0 0.0
        %4237 = vmatpush1.msra.mxu0 0.0
        %4238 = vmatprep.mubr.f32.mxu0 0.0
        %4239 = vmatmul.mubr.f32.gmra.mrb[0].mxu0 %v4169
        %v4240 = vpop.f32.mrb[0].mxu0
        %v4241 = vadd.f32 0.0, %v4240
        %v4242 = vpop.f32.mrb[0].mxu0
        %4243 = vmatprep.mubr.f32.mxu0 0.0
        %4244 = vmatmul.mubr.f32.gmra.mrb[0].mxu0 %v4172
        %v4245 = vpop.f32.mrb[0].mxu0
        %v4246 = vadd.f32 0.0, %v4245
        %v4247 = vpop.f32.mrb[0].mxu0
        %4248 = vdwg.mxu0
        %v4249 = vld [vmem:[%s547 + $0x70] sm:$0xff]
        %v4250 = vld [vmem:[%s547 + $0x78] sm:$0xff]
        %v4251 = vld [vmem:[%s547 + $0xf0] sm:$0xff]
        %v4252 = vld [vmem:[%s547 + $0xf8] sm:$0xff]
        %v4253 = vld [vmem:[%s547 + $0x170] sm:$0xff]
        %v4254 = vld [vmem:[%s547 + $0x178] sm:$0xff]
        %v4255 = vld [vmem:[%s547 + $0x1f0] sm:$0xff]
        %v4256 = vld [vmem:[%s547 + $0x1f8] sm:$0xff]
        %4257 = vrot.lane.b32.xlu0 %v3737, 96
        %v4258 = vpop.permute.xlu0 %4257
        %4259 = vrot.lane.b32.xlu0 %v3743, 96
        %v4260 = vpop.permute.xlu0 %4259
        %4261 = vrot.lane.b32.xlu0 %v4037, 96
        %v4262 = vpop.permute.xlu0 %4261
        %4263 = vrot.lane.b32.xlu0 %v4039, 96
        %v4264 = vpop.permute.xlu0 %4263
        %v4265 = vsel %vm1139, %v4258, 0
        %v4267 = vsel %vm1139, %v4260, 0
        %v4269 = vsel %vm1139, %v4262, 0
        %v4271 = vsel %vm1139, %v4264, 0
        %4273 = vmatprep.subr.mxu0 0.0
        %4274 = vmatpush1.xpose.msra.mxu0 %v4269
        %4275 = vmatprep.subr.mxu0 0.0
        %4276 = vmatpush1.xpose.msra.mxu0 %v4271
        %4277 = vmatprep.subr.mxu0 0.0
        %4278 = vmatpush1.xpose.msra.mxu0 0.0
        %4279 = vmatprep.subr.mxu0 0.0
        %4280 = vmatpush1.xpose.msra.mxu0 0.0
        %4281 = vmatprep.subr.mxu0 0.0
        %4282 = vmatpush1.xpose.msra.mxu0 0.0
        %4283 = vmatprep.subr.mxu0 0.0
        %4284 = vmatpush1.xpose.msra.mxu0 0.0
        %4285 = vmatprep.subr.mxu0 0.0
        %4286 = vmatpush1.xpose.msra.mxu0 0.0
        %4287 = vmatprep.subr.mxu0 0.0
        %4288 = vmatpush1.xpose.msra.mxu0 0.0
        %4289 = vmatprep.subr.mxu0 0.0
        %4290 = vmatpush1.xpose.msra.mxu0 0.0
        %4291 = vmatprep.subr.mxu0 0.0
        %4292 = vmatpush1.xpose.msra.mxu0 0.0
        %4293 = vmatprep.subr.mxu0 0.0
        %4294 = vmatpush1.xpose.msra.mxu0 0.0
        %4295 = vmatprep.subr.mxu0 0.0
        %4296 = vmatpush1.xpose.msra.mxu0 0.0
        %4297 = vmatprep.subr.mxu0 0.0
        %4298 = vmatpush1.xpose.msra.mxu0 0.0
        %4299 = vmatprep.subr.mxu0 0.0
        %4300 = vmatpush1.xpose.msra.mxu0 0.0
        %4301 = vmatprep.subr.mxu0 0.0
        %4302 = vmatpush1.xpose.msra.mxu0 0.0
        %4303 = vmatprep.subr.mxu0 0.0
        %4304 = vmatpush1.xpose.msra.mxu0 0.0
        %4305 = vmatprep.subr.mxu0 0.0
        %4306 = vmatpush1.xpose.msra.mxu0 0.0
        %4307 = vmatprep.subr.mxu0 0.0
        %4308 = vmatpush1.xpose.msra.mxu0 0.0
        %4309 = vmatprep.subr.mxu0 0.0
        %4310 = vmatpush1.xpose.msra.mxu0 0.0
        %4311 = vmatprep.subr.mxu0 0.0
        %4312 = vmatpush1.xpose.msra.mxu0 0.0
        %4313 = vmatprep.subr.mxu0 0.0
        %4314 = vmatpush1.xpose.msra.mxu0 0.0
        %4315 = vmatprep.subr.mxu0 0.0
        %4316 = vmatpush1.xpose.msra.mxu0 0.0
        %4317 = vmatprep.subr.mxu0 0.0
        %4318 = vmatpush1.xpose.msra.mxu0 0.0
        %4319 = vmatprep.subr.mxu0 0.0
        %4320 = vmatpush1.xpose.msra.mxu0 0.0
        %4321 = vmatprep.subr.mxu0 0.0
        %4322 = vmatpush1.xpose.msra.mxu0 0.0
        %4323 = vmatprep.subr.mxu0 0.0
        %4324 = vmatpush1.xpose.msra.mxu0 0.0
        %4325 = vmatprep.subr.mxu0 0.0
        %4326 = vmatpush1.xpose.msra.mxu0 0.0
        %4327 = vmatprep.subr.mxu0 0.0
        %4328 = vmatpush1.xpose.msra.mxu0 0.0
        %4329 = vmatprep.subr.mxu0 0.0
        %4330 = vmatpush1.xpose.msra.mxu0 0.0
        %4331 = vmatprep.subr.mxu0 0.0
        %4332 = vmatpush1.xpose.msra.mxu0 0.0
        %4333 = vmatprep.subr.mxu0 0.0
        %4334 = vmatpush1.xpose.msra.mxu0 0.0
        %4335 = vmatprep.subr.mxu0 0.0
        %4336 = vmatpush1.xpose.msra.mxu0 0.0
        %4337 = vmatprep.mubr.f32.mxu0 0.0
        %4338 = vmatmul.mubr.f32.gmra.mrb[0].mxu0 %v4265
        %v4339 = vpop.f32.mrb[0].mxu0
        %v4340 = vadd.f32 0.0, %v4339
        %v4341 = vpop.f32.mrb[0].mxu0
        %4342 = vmatprep.mubr.f32.mxu0 0.0
        %4343 = vmatmul.mubr.f32.gmra.mrb[0].mxu0 %v4267
        %v4344 = vpop.f32.mrb[0].mxu0
        %v4345 = vadd.f32 0.0, %v4344
        %v4346 = vpop.f32.mrb[0].mxu0
        %4347 = vdwg.mxu0
        %v4348 = vmul.f32 %v4340, 0.17677669
        %v4349 = vmul.f32 %v4345, 0.17677669
        %v4350 = vsel %vm670, %v4348, -1e+09
        %v4351 = vsel %vm671, %v4349, -1e+09
        %v4352 = vsel %vm4144, %v4350, -inf
        %4353 = vmax.xlane.f32.xlu0 %v4352
        %v4354 = vpop.xlane.xlu0 %4353
        %v4355 = vsel %vm4148, %v4351, -inf
        %4356 = vmax.xlane.f32.xlu0 %v4355
        %v4357 = vpop.xlane.xlu0 %4356
        %v4358 = vsub.f32 %v4350, %v4354
        %v4359 = vsub.f32 %v4351, %v4357
        %v4360 = vmul.f32 %v4358, 1.442695
        %v4361 = vpow.pop %v4360
        %v4362 = vmul.f32 %v4359, 1.442695
        %v4363 = vpow.pop %v4362
        %v4364 = vsel %vm4144, %v4361, 0.0
        %4365 = vadd.xlane.f32.xlu0 %v4364
        %v4366 = vpop.xlane.xlu0 %4365
        %v4367 = vsel %vm4148, %v4363, 0.0
        %4368 = vadd.xlane.f32.xlu0 %v4367
        %v4369 = vpop.xlane.xlu0 %4368
        %v4370 = vrcp.pop %v4366
        %v4371 = vmul.f32 %v4361, %v4370
        %v4372 = vrcp.pop %v4369
        %v4373 = vmul.f32 %v4363, %v4372
        %4376 = vrot.lane.b32.xlu0 %v4049, 96
        %v4377 = vpop.permute.xlu0 %4376
        %4378 = vrot.lane.b32.xlu0 %v4051, 96
        %v4379 = vpop.permute.xlu0 %4378
        %v4383 = vsel %vm4144, %v4371, 0
        %v4386 = vsel %vm4144, %v4373, 0
        %4388 = vmatprep.subr.mxu0 0.0
        %4389 = vmatpush1.msra.mxu0 %v4377
        %4390 = vmatprep.subr.mxu0 0.0
        %4391 = vmatpush1.msra.mxu0 %v4379
        %4392 = vmatprep.subr.mxu0 0.0
        %4393 = vmatpush1.msra.mxu0 0.0
        %4394 = vmatprep.subr.mxu0 0.0
        %4395 = vmatpush1.msra.mxu0 0.0
        %4396 = vmatprep.subr.mxu0 0.0
        %4397 = vmatpush1.msra.mxu0 0.0
        %4398 = vmatprep.subr.mxu0 0.0
        %4399 = vmatpush1.msra.mxu0 0.0
        %4400 = vmatprep.subr.mxu0 0.0
        %4401 = vmatpush1.msra.mxu0 0.0
        %4402 = vmatprep.subr.mxu0 0.0
        %4403 = vmatpush1.msra.mxu0 0.0
        %4404 = vmatprep.subr.mxu0 0.0
        %4405 = vmatpush1.msra.mxu0 0.0
        %4406 = vmatprep.subr.mxu0 0.0
        %4407 = vmatpush1.msra.mxu0 0.0
        %4408 = vmatprep.subr.mxu0 0.0
        %4409 = vmatpush1.msra.mxu0 0.0
        %4410 = vmatprep.subr.mxu0 0.0
        %4411 = vmatpush1.msra.mxu0 0.0
        %4412 = vmatprep.subr.mxu0 0.0
        %4413 = vmatpush1.msra.mxu0 0.0
        %4414 = vmatprep.subr.mxu0 0.0
        %4415 = vmatpush1.msra.mxu0 0.0
        %4416 = vmatprep.subr.mxu0 0.0
        %4417 = vmatpush1.msra.mxu0 0.0
        %4418 = vmatprep.subr.mxu0 0.0
        %4419 = vmatpush1.msra.mxu0 0.0
        %4420 = vmatprep.subr.mxu0 0.0
        %4421 = vmatpush1.msra.mxu0 0.0
        %4422 = vmatprep.subr.mxu0 0.0
        %4423 = vmatpush1.msra.mxu0 0.0
        %4424 = vmatprep.subr.mxu0 0.0
        %4425 = vmatpush1.msra.mxu0 0.0
        %4426 = vmatprep.subr.mxu0 0.0
        %4427 = vmatpush1.msra.mxu0 0.0
        %4428 = vmatprep.subr.mxu0 0.0
        %4429 = vmatpush1.msra.mxu0 0.0
        %4430 = vmatprep.subr.mxu0 0.0
        %4431 = vmatpush1.msra.mxu0 0.0
        %4432 = vmatprep.subr.mxu0 0.0
        %4433 = vmatpush1.msra.mxu0 0.0
        %4434 = vmatprep.subr.mxu0 0.0
        %4435 = vmatpush1.msra.mxu0 0.0
        %4436 = vmatprep.subr.mxu0 0.0
        %4437 = vmatpush1.msra.mxu0 0.0
        %4438 = vmatprep.subr.mxu0 0.0
        %4439 = vmatpush1.msra.mxu0 0.0
        %4440 = vmatprep.subr.mxu0 0.0
        %4441 = vmatpush1.msra.mxu0 0.0
        %4442 = vmatprep.subr.mxu0 0.0
        %4443 = vmatpush1.msra.mxu0 0.0
        %4444 = vmatprep.subr.mxu0 0.0
        %4445 = vmatpush1.msra.mxu0 0.0
        %4446 = vmatprep.subr.mxu0 0.0
        %4447 = vmatpush1.msra.mxu0 0.0
        %4448 = vmatprep.subr.mxu0 0.0
        %4449 = vmatpush1.msra.mxu0 0.0
        %4450 = vmatprep.subr.mxu0 0.0
        %4451 = vmatpush1.msra.mxu0 0.0
        %4452 = vmatprep.mubr.f32.mxu0 0.0
        %4453 = vmatmul.mubr.f32.gmra.mrb[0].mxu0 %v4383
        %v4454 = vpop.f32.mrb[0].mxu0
        %v4455 = vadd.f32 0.0, %v4454
        %v4456 = vpop.f32.mrb[0].mxu0
        %4457 = vmatprep.mubr.f32.mxu0 0.0
        %4458 = vmatmul.mubr.f32.gmra.mrb[0].mxu0 %v4386
        %v4459 = vpop.f32.mrb[0].mxu0
        %v4460 = vadd.f32 0.0, %v4459
        %v4461 = vpop.f32.mrb[0].mxu0
        %4462 = vdwg.mxu0
        %v4463 = vld [vmem:[%s547 + $0x270] sm:$0xff]
        %v4464 = vld [vmem:[%s547 + $0x278] sm:$0xff]
        %v4465 = vld [vmem:[%s547 + $0x2f0] sm:$0xff]
        %v4466 = vld [vmem:[%s547 + $0x2f8] sm:$0xff]
        %v4467 = vld [vmem:[%s547 + $0x370] sm:$0xff]
        %v4468 = vld [vmem:[%s547 + $0x378] sm:$0xff]
        %v4469 = vld [vmem:[%s547 + $0x3f0] sm:$0xff]
        %v4470 = vld [vmem:[%s547 + $0x3f8] sm:$0xff]
        %v4472 = vsel %vm1139, %v4455, 0
        %v4475 = vsel %vm1139, %v4460, 0
        %4477 = vmatprep.subr.mxu0 %v4464
        %4478 = vmatpush1.msra.mxu0 %v4463
        %4479 = vmatprep.subr.mxu0 %v4466
        %4480 = vmatpush1.msra.mxu0 %v4465
        %4481 = vmatprep.subr.mxu0 %v4468
        %4482 = vmatpush1.msra.mxu0 %v4467
        %4483 = vmatprep.subr.mxu0 %v4470
        %4484 = vmatpush1.msra.mxu0 %v4469
        %4485 = vmatprep.subr.mxu0 0.0
        %4486 = vmatpush1.msra.mxu0 0.0
        %4487 = vmatprep.subr.mxu0 0.0
        %4488 = vmatpush1.msra.mxu0 0.0
        %4489 = vmatprep.subr.mxu0 0.0
        %4490 = vmatpush1.msra.mxu0 0.0
        %4491 = vmatprep.subr.mxu0 0.0
        %4492 = vmatpush1.msra.mxu0 0.0
        %4493 = vmatprep.subr.mxu0 0.0
        %4494 = vmatpush1.msra.mxu0 0.0
        %4495 = vmatprep.subr.mxu0 0.0
        %4496 = vmatpush1.msra.mxu0 0.0
        %4497 = vmatprep.subr.mxu0 0.0
        %4498 = vmatpush1.msra.mxu0 0.0
        %4499 = vmatprep.subr.mxu0 0.0
        %4500 = vmatpush1.msra.mxu0 0.0
        %4501 = vmatprep.subr.mxu0 0.0
        %4502 = vmatpush1.msra.mxu0 0.0
        %4503 = vmatprep.subr.mxu0 0.0
        %4504 = vmatpush1.msra.mxu0 0.0
        %4505 = vmatprep.subr.mxu0 0.0
        %4506 = vmatpush1.msra.mxu0 0.0
        %4507 = vmatprep.subr.mxu0 0.0
        %4508 = vmatpush1.msra.mxu0 0.0
        %4509 = vmatprep.subr.mxu0 0.0
        %4510 = vmatpush1.msra.mxu0 0.0
        %4511 = vmatprep.subr.mxu0 0.0
        %4512 = vmatpush1.msra.mxu0 0.0
        %4513 = vmatprep.subr.mxu0 0.0
        %4514 = vmatpush1.msra.mxu0 0.0
        %4515 = vmatprep.subr.mxu0 0.0
        %4516 = vmatpush1.msra.mxu0 0.0
        %4517 = vmatprep.subr.mxu0 0.0
        %4518 = vmatpush1.msra.mxu0 0.0
        %4519 = vmatprep.subr.mxu0 0.0
        %4520 = vmatpush1.msra.mxu0 0.0
        %4521 = vmatprep.subr.mxu0 0.0
        %4522 = vmatpush1.msra.mxu0 0.0
        %4523 = vmatprep.subr.mxu0 0.0
        %4524 = vmatpush1.msra.mxu0 0.0
        %4525 = vmatprep.subr.mxu0 0.0
        %4526 = vmatpush1.msra.mxu0 0.0
        %4527 = vmatprep.subr.mxu0 0.0
        %4528 = vmatpush1.msra.mxu0 0.0
        %4529 = vmatprep.subr.mxu0 0.0
        %4530 = vmatpush1.msra.mxu0 0.0
        %4531 = vmatprep.subr.mxu0 0.0
        %4532 = vmatpush1.msra.mxu0 0.0
        %4533 = vmatprep.subr.mxu0 0.0
        %4534 = vmatpush1.msra.mxu0 0.0
        %4535 = vmatprep.subr.mxu0 0.0
        %4536 = vmatpush1.msra.mxu0 0.0
        %4537 = vmatprep.subr.mxu0 0.0
        %4538 = vmatpush1.msra.mxu0 0.0
        %4539 = vmatprep.subr.mxu0 0.0
        %4540 = vmatpush1.msra.mxu0 0.0
        %4541 = vmatprep.mubr.f32.mxu0 0.0
        %4542 = vmatmul.mubr.f32.gmra.mrb[0].mxu0 %v4472
        %v4543 = vpop.f32.mrb[0].mxu0
        %v4544 = vadd.f32 0.0, %v4543
        %v4545 = vpop.f32.mrb[0].mxu0
        %v4546 = vadd.f32 0.0, %v4545
        %4547 = vmatprep.mubr.f32.mxu0 0.0
        %4548 = vmatmul.mubr.f32.gmra.mrb[0].mxu0 %v4475
        %v4549 = vpop.f32.mrb[0].mxu0
        %v4550 = vadd.f32 0.0, %v4549
        %v4551 = vpop.f32.mrb[0].mxu0
        %v4552 = vadd.f32 0.0, %v4551
        %4553 = vdwg.mxu0
        %v4555 = vsel %vm1139, %v4241, 0
        %v4558 = vsel %vm1139, %v4246, 0
        %4560 = vmatprep.subr.mxu0 %v4250
        %4561 = vmatpush1.msra.mxu0 %v4249
        %4562 = vmatprep.subr.mxu0 %v4252
        %4563 = vmatpush1.msra.mxu0 %v4251
        %4564 = vmatprep.subr.mxu0 %v4254
        %4565 = vmatpush1.msra.mxu0 %v4253
        %4566 = vmatprep.subr.mxu0 %v4256
        %4567 = vmatpush1.msra.mxu0 %v4255
        %4568 = vmatprep.subr.mxu0 0.0
        %4569 = vmatpush1.msra.mxu0 0.0
        %4570 = vmatprep.subr.mxu0 0.0
        %4571 = vmatpush1.msra.mxu0 0.0
        %4572 = vmatprep.subr.mxu0 0.0
        %4573 = vmatpush1.msra.mxu0 0.0
        %4574 = vmatprep.subr.mxu0 0.0
        %4575 = vmatpush1.msra.mxu0 0.0
        %4576 = vmatprep.subr.mxu0 0.0
        %4577 = vmatpush1.msra.mxu0 0.0
        %4578 = vmatprep.subr.mxu0 0.0
        %4579 = vmatpush1.msra.mxu0 0.0
        %4580 = vmatprep.subr.mxu0 0.0
        %4581 = vmatpush1.msra.mxu0 0.0
        %4582 = vmatprep.subr.mxu0 0.0
        %4583 = vmatpush1.msra.mxu0 0.0
        %4584 = vmatprep.subr.mxu0 0.0
        %4585 = vmatpush1.msra.mxu0 0.0
        %4586 = vmatprep.subr.mxu0 0.0
        %4587 = vmatpush1.msra.mxu0 0.0
        %4588 = vmatprep.subr.mxu0 0.0
        %4589 = vmatpush1.msra.mxu0 0.0
        %4590 = vmatprep.subr.mxu0 0.0
        %4591 = vmatpush1.msra.mxu0 0.0
        %4592 = vmatprep.subr.mxu0 0.0
        %4593 = vmatpush1.msra.mxu0 0.0
        %4594 = vmatprep.subr.mxu0 0.0
        %4595 = vmatpush1.msra.mxu0 0.0
        %4596 = vmatprep.subr.mxu0 0.0
        %4597 = vmatpush1.msra.mxu0 0.0
        %4598 = vmatprep.subr.mxu0 0.0
        %4599 = vmatpush1.msra.mxu0 0.0
        %4600 = vmatprep.subr.mxu0 0.0
        %4601 = vmatpush1.msra.mxu0 0.0
        %4602 = vmatprep.subr.mxu0 0.0
        %4603 = vmatpush1.msra.mxu0 0.0
        %4604 = vmatprep.subr.mxu0 0.0
        %4605 = vmatpush1.msra.mxu0 0.0
        %4606 = vmatprep.subr.mxu0 0.0
        %4607 = vmatpush1.msra.mxu0 0.0
        %4608 = vmatprep.subr.mxu0 0.0
        %4609 = vmatpush1.msra.mxu0 0.0
        %4610 = vmatprep.subr.mxu0 0.0
        %4611 = vmatpush1.msra.mxu0 0.0
        %4612 = vmatprep.subr.mxu0 0.0
        %4613 = vmatpush1.msra.mxu0 0.0
        %4614 = vmatprep.subr.mxu0 0.0
        %4615 = vmatpush1.msra.mxu0 0.0
        %4616 = vmatprep.subr.mxu0 0.0
        %4617 = vmatpush1.msra.mxu0 0.0
        %4618 = vmatprep.subr.mxu0 0.0
        %4619 = vmatpush1.msra.mxu0 0.0
        %4620 = vmatprep.subr.mxu0 0.0
        %4621 = vmatpush1.msra.mxu0 0.0
        %4622 = vmatprep.subr.mxu0 0.0
        %4623 = vmatpush1.msra.mxu0 0.0
        %4624 = vmatprep.mubr.f32.mxu0 0.0
        %4625 = vmatmul.mubr.f32.gmra.mrb[0].mxu0 %v4555
        %v4626 = vpop.f32.mrb[0].mxu0
        %v4627 = vadd.f32 %v4544, %v4626
        %v4628 = vpop.f32.mrb[0].mxu0
        %v4629 = vadd.f32 %v4546, %v4628
        %4630 = vmatprep.mubr.f32.mxu0 0.0
        %4631 = vmatmul.mubr.f32.gmra.mrb[0].mxu0 %v4558
        %v4632 = vpop.f32.mrb[0].mxu0
        %v4633 = vadd.f32 %v4550, %v4632
        %v4634 = vpop.f32.mrb[0].mxu0
        %v4635 = vadd.f32 %v4552, %v4634
        %4636 = vdwg.mxu0
        %4637 = vrot.lane.b32.xlu0 %v3737, 64
        %v4638 = vpop.permute.xlu0 %4637
        %4639 = vrot.lane.b32.xlu0 %v3743, 64
        %v4640 = vpop.permute.xlu0 %4639
        %4641 = vrot.lane.b32.xlu0 %v4037, 64
        %v4642 = vpop.permute.xlu0 %4641
        %4643 = vrot.lane.b32.xlu0 %v4039, 64
        %v4644 = vpop.permute.xlu0 %4643
        %v4645 = vsel %vm1139, %v4638, 0
        %v4647 = vsel %vm1139, %v4640, 0
        %v4649 = vsel %vm1139, %v4642, 0
        %v4651 = vsel %vm1139, %v4644, 0
        %4653 = vmatprep.subr.mxu0 0.0
        %4654 = vmatpush1.xpose.msra.mxu0 %v4649
        %4655 = vmatprep.subr.mxu0 0.0
        %4656 = vmatpush1.xpose.msra.mxu0 %v4651
        %4657 = vmatprep.subr.mxu0 0.0
        %4658 = vmatpush1.xpose.msra.mxu0 0.0
        %4659 = vmatprep.subr.mxu0 0.0
        %4660 = vmatpush1.xpose.msra.mxu0 0.0
        %4661 = vmatprep.subr.mxu0 0.0
        %4662 = vmatpush1.xpose.msra.mxu0 0.0
        %4663 = vmatprep.subr.mxu0 0.0
        %4664 = vmatpush1.xpose.msra.mxu0 0.0
        %4665 = vmatprep.subr.mxu0 0.0
        %4666 = vmatpush1.xpose.msra.mxu0 0.0
        %4667 = vmatprep.subr.mxu0 0.0
        %4668 = vmatpush1.xpose.msra.mxu0 0.0
        %4669 = vmatprep.subr.mxu0 0.0
        %4670 = vmatpush1.xpose.msra.mxu0 0.0
        %4671 = vmatprep.subr.mxu0 0.0
        %4672 = vmatpush1.xpose.msra.mxu0 0.0
        %4673 = vmatprep.subr.mxu0 0.0
        %4674 = vmatpush1.xpose.msra.mxu0 0.0
        %4675 = vmatprep.subr.mxu0 0.0
        %4676 = vmatpush1.xpose.msra.mxu0 0.0
        %4677 = vmatprep.subr.mxu0 0.0
        %4678 = vmatpush1.xpose.msra.mxu0 0.0
        %4679 = vmatprep.subr.mxu0 0.0
        %4680 = vmatpush1.xpose.msra.mxu0 0.0
        %4681 = vmatprep.subr.mxu0 0.0
        %4682 = vmatpush1.xpose.msra.mxu0 0.0
        %4683 = vmatprep.subr.mxu0 0.0
        %4684 = vmatpush1.xpose.msra.mxu0 0.0
        %4685 = vmatprep.subr.mxu0 0.0
        %4686 = vmatpush1.xpose.msra.mxu0 0.0
        %4687 = vmatprep.subr.mxu0 0.0
        %4688 = vmatpush1.xpose.msra.mxu0 0.0
        %4689 = vmatprep.subr.mxu0 0.0
        %4690 = vmatpush1.xpose.msra.mxu0 0.0
        %4691 = vmatprep.subr.mxu0 0.0
        %4692 = vmatpush1.xpose.msra.mxu0 0.0
        %4693 = vmatprep.subr.mxu0 0.0
        %4694 = vmatpush1.xpose.msra.mxu0 0.0
        %4695 = vmatprep.subr.mxu0 0.0
        %4696 = vmatpush1.xpose.msra.mxu0 0.0
        %4697 = vmatprep.subr.mxu0 0.0
        %4698 = vmatpush1.xpose.msra.mxu0 0.0
        %4699 = vmatprep.subr.mxu0 0.0
        %4700 = vmatpush1.xpose.msra.mxu0 0.0
        %4701 = vmatprep.subr.mxu0 0.0
        %4702 = vmatpush1.xpose.msra.mxu0 0.0
        %4703 = vmatprep.subr.mxu0 0.0
        %4704 = vmatpush1.xpose.msra.mxu0 0.0
        %4705 = vmatprep.subr.mxu0 0.0
        %4706 = vmatpush1.xpose.msra.mxu0 0.0
        %4707 = vmatprep.subr.mxu0 0.0
        %4708 = vmatpush1.xpose.msra.mxu0 0.0
        %4709 = vmatprep.subr.mxu0 0.0
        %4710 = vmatpush1.xpose.msra.mxu0 0.0
        %4711 = vmatprep.subr.mxu0 0.0
        %4712 = vmatpush1.xpose.msra.mxu0 0.0
        %4713 = vmatprep.subr.mxu0 0.0
        %4714 = vmatpush1.xpose.msra.mxu0 0.0
        %4715 = vmatprep.subr.mxu0 0.0
        %4716 = vmatpush1.xpose.msra.mxu0 0.0
        %4717 = vmatprep.mubr.f32.mxu0 0.0
        %4718 = vmatmul.mubr.f32.gmra.mrb[0].mxu0 %v4645
        %v4719 = vpop.f32.mrb[0].mxu0
        %v4720 = vadd.f32 0.0, %v4719
        %v4721 = vpop.f32.mrb[0].mxu0
        %4722 = vmatprep.mubr.f32.mxu0 0.0
        %4723 = vmatmul.mubr.f32.gmra.mrb[0].mxu0 %v4647
        %v4724 = vpop.f32.mrb[0].mxu0
        %v4725 = vadd.f32 0.0, %v4724
        %v4726 = vpop.f32.mrb[0].mxu0
        %4727 = vdwg.mxu0
        %v4728 = vmul.f32 %v4720, 0.17677669
        %v4729 = vmul.f32 %v4725, 0.17677669
        %v4730 = vsel %vm670, %v4728, -1e+09
        %v4731 = vsel %vm671, %v4729, -1e+09
        %v4732 = vsel %vm4144, %v4730, -inf
        %4733 = vmax.xlane.f32.xlu0 %v4732
        %v4734 = vpop.xlane.xlu0 %4733
        %v4735 = vsel %vm4148, %v4731, -inf
        %4736 = vmax.xlane.f32.xlu0 %v4735
        %v4737 = vpop.xlane.xlu0 %4736
        %v4738 = vsub.f32 %v4730, %v4734
        %v4739 = vsub.f32 %v4731, %v4737
        %v4740 = vmul.f32 %v4738, 1.442695
        %v4741 = vpow.pop %v4740
        %v4742 = vmul.f32 %v4739, 1.442695
        %v4743 = vpow.pop %v4742
        %v4744 = vsel %vm4144, %v4741, 0.0
        %4745 = vadd.xlane.f32.xlu0 %v4744
        %v4746 = vpop.xlane.xlu0 %4745
        %v4747 = vsel %vm4148, %v4743, 0.0
        %4748 = vadd.xlane.f32.xlu0 %v4747
        %v4749 = vpop.xlane.xlu0 %4748
        %v4750 = vrcp.pop %v4746
        %v4751 = vmul.f32 %v4741, %v4750
        %v4752 = vrcp.pop %v4749
        %v4753 = vmul.f32 %v4743, %v4752
        %4754 = vrot.lane.b32.xlu0 %v4049, 64
        %v4755 = vpop.permute.xlu0 %4754
        %4756 = vrot.lane.b32.xlu0 %v4051, 64
        %v4757 = vpop.permute.xlu0 %4756
        %v4761 = vsel %vm4144, %v4751, 0
        %v4764 = vsel %vm4144, %v4753, 0
        %4766 = vmatprep.subr.mxu0 0.0
        %4767 = vmatpush1.msra.mxu0 %v4755
        %4768 = vmatprep.subr.mxu0 0.0
        %4769 = vmatpush1.msra.mxu0 %v4757
        %4770 = vmatprep.subr.mxu0 0.0
        %4771 = vmatpush1.msra.mxu0 0.0
        %4772 = vmatprep.subr.mxu0 0.0
        %4773 = vmatpush1.msra.mxu0 0.0
        %4774 = vmatprep.subr.mxu0 0.0
        %4775 = vmatpush1.msra.mxu0 0.0
        %4776 = vmatprep.subr.mxu0 0.0
        %4777 = vmatpush1.msra.mxu0 0.0
        %4778 = vmatprep.subr.mxu0 0.0
        %4779 = vmatpush1.msra.mxu0 0.0
        %4780 = vmatprep.subr.mxu0 0.0
        %4781 = vmatpush1.msra.mxu0 0.0
        %4782 = vmatprep.subr.mxu0 0.0
        %4783 = vmatpush1.msra.mxu0 0.0
        %4784 = vmatprep.subr.mxu0 0.0
        %4785 = vmatpush1.msra.mxu0 0.0
        %4786 = vmatprep.subr.mxu0 0.0
        %4787 = vmatpush1.msra.mxu0 0.0
        %4788 = vmatprep.subr.mxu0 0.0
        %4789 = vmatpush1.msra.mxu0 0.0
        %4790 = vmatprep.subr.mxu0 0.0
        %4791 = vmatpush1.msra.mxu0 0.0
        %4792 = vmatprep.subr.mxu0 0.0
        %4793 = vmatpush1.msra.mxu0 0.0
        %4794 = vmatprep.subr.mxu0 0.0
        %4795 = vmatpush1.msra.mxu0 0.0
        %4796 = vmatprep.subr.mxu0 0.0
        %4797 = vmatpush1.msra.mxu0 0.0
        %4798 = vmatprep.subr.mxu0 0.0
        %4799 = vmatpush1.msra.mxu0 0.0
        %4800 = vmatprep.subr.mxu0 0.0
        %4801 = vmatpush1.msra.mxu0 0.0
        %4802 = vmatprep.subr.mxu0 0.0
        %4803 = vmatpush1.msra.mxu0 0.0
        %4804 = vmatprep.subr.mxu0 0.0
        %4805 = vmatpush1.msra.mxu0 0.0
        %4806 = vmatprep.subr.mxu0 0.0
        %4807 = vmatpush1.msra.mxu0 0.0
        %4808 = vmatprep.subr.mxu0 0.0
        %4809 = vmatpush1.msra.mxu0 0.0
        %4810 = vmatprep.subr.mxu0 0.0
        %4811 = vmatpush1.msra.mxu0 0.0
        %4812 = vmatprep.subr.mxu0 0.0
        %4813 = vmatpush1.msra.mxu0 0.0
        %4814 = vmatprep.subr.mxu0 0.0
        %4815 = vmatpush1.msra.mxu0 0.0
        %4816 = vmatprep.subr.mxu0 0.0
        %4817 = vmatpush1.msra.mxu0 0.0
        %4818 = vmatprep.subr.mxu0 0.0
        %4819 = vmatpush1.msra.mxu0 0.0
        %4820 = vmatprep.subr.mxu0 0.0
        %4821 = vmatpush1.msra.mxu0 0.0
        %4822 = vmatprep.subr.mxu0 0.0
        %4823 = vmatpush1.msra.mxu0 0.0
        %4824 = vmatprep.subr.mxu0 0.0
        %4825 = vmatpush1.msra.mxu0 0.0
        %4826 = vmatprep.subr.mxu0 0.0
        %4827 = vmatpush1.msra.mxu0 0.0
        %4828 = vmatprep.subr.mxu0 0.0
        %4829 = vmatpush1.msra.mxu0 0.0
        %4830 = vmatprep.mubr.f32.mxu0 0.0
        %4831 = vmatmul.mubr.f32.gmra.mrb[0].mxu0 %v4761
        %v4832 = vpop.f32.mrb[0].mxu0
        %v4833 = vadd.f32 0.0, %v4832
        %v4834 = vpop.f32.mrb[0].mxu0
        %4835 = vmatprep.mubr.f32.mxu0 0.0
        %4836 = vmatmul.mubr.f32.gmra.mrb[0].mxu0 %v4764
        %v4837 = vpop.f32.mrb[0].mxu0
        %v4838 = vadd.f32 0.0, %v4837
        %v4839 = vpop.f32.mrb[0].mxu0
        %4840 = vdwg.mxu0
        %v4841 = vld [vmem:[%s547 + $0x470] sm:$0xff]
        %v4842 = vld [vmem:[%s547 + $0x478] sm:$0xff]
        %v4843 = vld [vmem:[%s547 + $0x4f0] sm:$0xff]
        %v4844 = vld [vmem:[%s547 + $0x4f8] sm:$0xff]
        %v4845 = vld [vmem:[%s547 + $0x570] sm:$0xff]
        %v4846 = vld [vmem:[%s547 + $0x578] sm:$0xff]
        %v4847 = vld [vmem:[%s547 + $0x5f0] sm:$0xff]
        %v4848 = vld [vmem:[%s547 + $0x5f8] sm:$0xff]
        %v4850 = vsel %vm1139, %v4833, 0
        %v4853 = vsel %vm1139, %v4838, 0
        %4855 = vmatprep.subr.mxu0 %v4842
        %4856 = vmatpush1.msra.mxu0 %v4841
        %4857 = vmatprep.subr.mxu0 %v4844
        %4858 = vmatpush1.msra.mxu0 %v4843
        %4859 = vmatprep.subr.mxu0 %v4846
        %4860 = vmatpush1.msra.mxu0 %v4845
        %4861 = vmatprep.subr.mxu0 %v4848
        %4862 = vmatpush1.msra.mxu0 %v4847
        %4863 = vmatprep.subr.mxu0 0.0
        %4864 = vmatpush1.msra.mxu0 0.0
        %4865 = vmatprep.subr.mxu0 0.0
        %4866 = vmatpush1.msra.mxu0 0.0
        %4867 = vmatprep.subr.mxu0 0.0
        %4868 = vmatpush1.msra.mxu0 0.0
        %4869 = vmatprep.subr.mxu0 0.0
        %4870 = vmatpush1.msra.mxu0 0.0
        %4871 = vmatprep.subr.mxu0 0.0
        %4872 = vmatpush1.msra.mxu0 0.0
        %4873 = vmatprep.subr.mxu0 0.0
        %4874 = vmatpush1.msra.mxu0 0.0
        %4875 = vmatprep.subr.mxu0 0.0
        %4876 = vmatpush1.msra.mxu0 0.0
        %4877 = vmatprep.subr.mxu0 0.0
        %4878 = vmatpush1.msra.mxu0 0.0
        %4879 = vmatprep.subr.mxu0 0.0
        %4880 = vmatpush1.msra.mxu0 0.0
        %4881 = vmatprep.subr.mxu0 0.0
        %4882 = vmatpush1.msra.mxu0 0.0
        %4883 = vmatprep.subr.mxu0 0.0
        %4884 = vmatpush1.msra.mxu0 0.0
        %4885 = vmatprep.subr.mxu0 0.0
        %4886 = vmatpush1.msra.mxu0 0.0
        %4887 = vmatprep.subr.mxu0 0.0
        %4888 = vmatpush1.msra.mxu0 0.0
        %4889 = vmatprep.subr.mxu0 0.0
        %4890 = vmatpush1.msra.mxu0 0.0
        %4891 = vmatprep.subr.mxu0 0.0
        %4892 = vmatpush1.msra.mxu0 0.0
        %4893 = vmatprep.subr.mxu0 0.0
        %4894 = vmatpush1.msra.mxu0 0.0
        %4895 = vmatprep.subr.mxu0 0.0
        %4896 = vmatpush1.msra.mxu0 0.0
        %4897 = vmatprep.subr.mxu0 0.0
        %4898 = vmatpush1.msra.mxu0 0.0
        %4899 = vmatprep.subr.mxu0 0.0
        %4900 = vmatpush1.msra.mxu0 0.0
        %4901 = vmatprep.subr.mxu0 0.0
        %4902 = vmatpush1.msra.mxu0 0.0
        %4903 = vmatprep.subr.mxu0 0.0
        %4904 = vmatpush1.msra.mxu0 0.0
        %4905 = vmatprep.subr.mxu0 0.0
        %4906 = vmatpush1.msra.mxu0 0.0
        %4907 = vmatprep.subr.mxu0 0.0
        %4908 = vmatpush1.msra.mxu0 0.0
        %4909 = vmatprep.subr.mxu0 0.0
        %4910 = vmatpush1.msra.mxu0 0.0
        %4911 = vmatprep.subr.mxu0 0.0
        %4912 = vmatpush1.msra.mxu0 0.0
        %4913 = vmatprep.subr.mxu0 0.0
        %4914 = vmatpush1.msra.mxu0 0.0
        %4915 = vmatprep.subr.mxu0 0.0
        %4916 = vmatpush1.msra.mxu0 0.0
        %4917 = vmatprep.subr.mxu0 0.0
        %4918 = vmatpush1.msra.mxu0 0.0
        %4919 = vmatprep.mubr.f32.mxu0 0.0
        %4920 = vmatmul.mubr.f32.gmra.mrb[0].mxu0 %v4850
        %v4921 = vpop.f32.mrb[0].mxu0
        %v4922 = vadd.f32 0.0, %v4921
        %v4923 = vpop.f32.mrb[0].mxu0
        %v4924 = vadd.f32 0.0, %v4923
        %4925 = vmatprep.mubr.f32.mxu0 0.0
        %4926 = vmatmul.mubr.f32.gmra.mrb[0].mxu0 %v4853
        %v4927 = vpop.f32.mrb[0].mxu0
        %v4928 = vadd.f32 0.0, %v4927
        %v4929 = vpop.f32.mrb[0].mxu0
        %v4930 = vadd.f32 0.0, %v4929
        %4931 = vdwg.mxu0
        %v4932 = vadd.f32 %v4627, %v4922
        %v4933 = vadd.f32 %v4629, %v4924
        %v4934 = vadd.f32 %v4633, %v4928
        %v4935 = vadd.f32 %v4635, %v4930
        %4936 = vrot.lane.b32.xlu0 %v3737, 32
        %v4937 = vpop.permute.xlu0 %4936
        %4938 = vrot.lane.b32.xlu0 %v3743, 32
        %v4939 = vpop.permute.xlu0 %4938
        %4940 = vrot.lane.b32.xlu0 %v4037, 32
        %v4941 = vpop.permute.xlu0 %4940
        %4942 = vrot.lane.b32.xlu0 %v4039, 32
        %v4943 = vpop.permute.xlu0 %4942
        %v4944 = vsel %vm1139, %v4937, 0
        %v4946 = vsel %vm1139, %v4939, 0
        %v4948 = vsel %vm1139, %v4941, 0
        %v4950 = vsel %vm1139, %v4943, 0
        %4952 = vmatprep.subr.mxu0 0.0
        %4953 = vmatpush1.xpose.msra.mxu0 %v4948
        %4954 = vmatprep.subr.mxu0 0.0
        %4955 = vmatpush1.xpose.msra.mxu0 %v4950
        %4956 = vmatprep.subr.mxu0 0.0
        %4957 = vmatpush1.xpose.msra.mxu0 0.0
        %4958 = vmatprep.subr.mxu0 0.0
        %4959 = vmatpush1.xpose.msra.mxu0 0.0
        %4960 = vmatprep.subr.mxu0 0.0
        %4961 = vmatpush1.xpose.msra.mxu0 0.0
        %4962 = vmatprep.subr.mxu0 0.0
        %4963 = vmatpush1.xpose.msra.mxu0 0.0
        %4964 = vmatprep.subr.mxu0 0.0
        %4965 = vmatpush1.xpose.msra.mxu0 0.0
        %4966 = vmatprep.subr.mxu0 0.0
        %4967 = vmatpush1.xpose.msra.mxu0 0.0
        %4968 = vmatprep.subr.mxu0 0.0
        %4969 = vmatpush1.xpose.msra.mxu0 0.0
        %4970 = vmatprep.subr.mxu0 0.0
        %4971 = vmatpush1.xpose.msra.mxu0 0.0
        %4972 = vmatprep.subr.mxu0 0.0
        %4973 = vmatpush1.xpose.msra.mxu0 0.0
        %4974 = vmatprep.subr.mxu0 0.0
        %4975 = vmatpush1.xpose.msra.mxu0 0.0
        %4976 = vmatprep.subr.mxu0 0.0
        %4977 = vmatpush1.xpose.msra.mxu0 0.0
        %4978 = vmatprep.subr.mxu0 0.0
        %4979 = vmatpush1.xpose.msra.mxu0 0.0
        %4980 = vmatprep.subr.mxu0 0.0
        %4981 = vmatpush1.xpose.msra.mxu0 0.0
        %4982 = vmatprep.subr.mxu0 0.0
        %4983 = vmatpush1.xpose.msra.mxu0 0.0
        %4984 = vmatprep.subr.mxu0 0.0
        %4985 = vmatpush1.xpose.msra.mxu0 0.0
        %4986 = vmatprep.subr.mxu0 0.0
        %4987 = vmatpush1.xpose.msra.mxu0 0.0
        %4988 = vmatprep.subr.mxu0 0.0
        %4989 = vmatpush1.xpose.msra.mxu0 0.0
        %4990 = vmatprep.subr.mxu0 0.0
        %4991 = vmatpush1.xpose.msra.mxu0 0.0
        %4992 = vmatprep.subr.mxu0 0.0
        %4993 = vmatpush1.xpose.msra.mxu0 0.0
        %4994 = vmatprep.subr.mxu0 0.0
        %4995 = vmatpush1.xpose.msra.mxu0 0.0
        %4996 = vmatprep.subr.mxu0 0.0
        %4997 = vmatpush1.xpose.msra.mxu0 0.0
        %4998 = vmatprep.subr.mxu0 0.0
        %4999 = vmatpush1.xpose.msra.mxu0 0.0
        %5000 = vmatprep.subr.mxu0 0.0
        %5001 = vmatpush1.xpose.msra.mxu0 0.0
        %5002 = vmatprep.subr.mxu0 0.0
        %5003 = vmatpush1.xpose.msra.mxu0 0.0
        %5004 = vmatprep.subr.mxu0 0.0
        %5005 = vmatpush1.xpose.msra.mxu0 0.0
        %5006 = vmatprep.subr.mxu0 0.0
        %5007 = vmatpush1.xpose.msra.mxu0 0.0
        %5008 = vmatprep.subr.mxu0 0.0
        %5009 = vmatpush1.xpose.msra.mxu0 0.0
        %5010 = vmatprep.subr.mxu0 0.0
        %5011 = vmatpush1.xpose.msra.mxu0 0.0
        %5012 = vmatprep.subr.mxu0 0.0
        %5013 = vmatpush1.xpose.msra.mxu0 0.0
        %5014 = vmatprep.subr.mxu0 0.0
        %5015 = vmatpush1.xpose.msra.mxu0 0.0
        %5016 = vmatprep.mubr.f32.mxu0 0.0
        %5017 = vmatmul.mubr.f32.gmra.mrb[0].mxu0 %v4944
        %v5018 = vpop.f32.mrb[0].mxu0
        %v5019 = vadd.f32 0.0, %v5018
        %v5020 = vpop.f32.mrb[0].mxu0
        %5021 = vmatprep.mubr.f32.mxu0 0.0
        %5022 = vmatmul.mubr.f32.gmra.mrb[0].mxu0 %v4946
        %v5023 = vpop.f32.mrb[0].mxu0
        %v5024 = vadd.f32 0.0, %v5023
        %v5025 = vpop.f32.mrb[0].mxu0
        %5026 = vdwg.mxu0
        %v5027 = vmul.f32 %v5019, 0.17677669
        %v5028 = vmul.f32 %v5024, 0.17677669
        %v5029 = vsel %vm670, %v5027, -1e+09
        %v5030 = vsel %vm671, %v5028, -1e+09
        %v5031 = vsel %vm4144, %v5029, -inf
        %5032 = vmax.xlane.f32.xlu0 %v5031
        %v5033 = vpop.xlane.xlu0 %5032
        %v5034 = vsel %vm4148, %v5030, -inf
        %5035 = vmax.xlane.f32.xlu0 %v5034
        %v5036 = vpop.xlane.xlu0 %5035
        %v5037 = vsub.f32 %v5029, %v5033
        %v5038 = vsub.f32 %v5030, %v5036
        %v5039 = vmul.f32 %v5037, 1.442695
        %v5040 = vpow.pop %v5039
        %v5041 = vmul.f32 %v5038, 1.442695
        %v5042 = vpow.pop %v5041
        %v5043 = vsel %vm4144, %v5040, 0.0
        %5044 = vadd.xlane.f32.xlu0 %v5043
        %v5045 = vpop.xlane.xlu0 %5044
        %v5046 = vsel %vm4148, %v5042, 0.0
        %5047 = vadd.xlane.f32.xlu0 %v5046
        %v5048 = vpop.xlane.xlu0 %5047
        %v5049 = vrcp.pop %v5045
        %v5050 = vmul.f32 %v5040, %v5049
        %v5051 = vrcp.pop %v5048
        %v5052 = vmul.f32 %v5042, %v5051
        %5053 = vrot.lane.b32.xlu0 %v4049, 32
        %v5054 = vpop.permute.xlu0 %5053
        %5055 = vrot.lane.b32.xlu0 %v4051, 32
        %v5056 = vpop.permute.xlu0 %5055
        %v5060 = vsel %vm4144, %v5050, 0
        %v5063 = vsel %vm4144, %v5052, 0
        %5065 = vmatprep.subr.mxu0 0.0
        %5066 = vmatpush1.msra.mxu0 %v5054
        %5067 = vmatprep.subr.mxu0 0.0
        %5068 = vmatpush1.msra.mxu0 %v5056
        %5069 = vmatprep.subr.mxu0 0.0
        %5070 = vmatpush1.msra.mxu0 0.0
        %5071 = vmatprep.subr.mxu0 0.0
        %5072 = vmatpush1.msra.mxu0 0.0
        %5073 = vmatprep.subr.mxu0 0.0
        %5074 = vmatpush1.msra.mxu0 0.0
        %5075 = vmatprep.subr.mxu0 0.0
        %5076 = vmatpush1.msra.mxu0 0.0
        %5077 = vmatprep.subr.mxu0 0.0
        %5078 = vmatpush1.msra.mxu0 0.0
        %5079 = vmatprep.subr.mxu0 0.0
        %5080 = vmatpush1.msra.mxu0 0.0
        %5081 = vmatprep.subr.mxu0 0.0
        %5082 = vmatpush1.msra.mxu0 0.0
        %5083 = vmatprep.subr.mxu0 0.0
        %5084 = vmatpush1.msra.mxu0 0.0
        %5085 = vmatprep.subr.mxu0 0.0
        %5086 = vmatpush1.msra.mxu0 0.0
        %5087 = vmatprep.subr.mxu0 0.0
        %5088 = vmatpush1.msra.mxu0 0.0
        %5089 = vmatprep.subr.mxu0 0.0
        %5090 = vmatpush1.msra.mxu0 0.0
        %5091 = vmatprep.subr.mxu0 0.0
        %5092 = vmatpush1.msra.mxu0 0.0
        %5093 = vmatprep.subr.mxu0 0.0
        %5094 = vmatpush1.msra.mxu0 0.0
        %5095 = vmatprep.subr.mxu0 0.0
        %5096 = vmatpush1.msra.mxu0 0.0
        %5097 = vmatprep.subr.mxu0 0.0
        %5098 = vmatpush1.msra.mxu0 0.0
        %5099 = vmatprep.subr.mxu0 0.0
        %5100 = vmatpush1.msra.mxu0 0.0
        %5101 = vmatprep.subr.mxu0 0.0
        %5102 = vmatpush1.msra.mxu0 0.0
        %5103 = vmatprep.subr.mxu0 0.0
        %5104 = vmatpush1.msra.mxu0 0.0
        %5105 = vmatprep.subr.mxu0 0.0
        %5106 = vmatpush1.msra.mxu0 0.0
        %5107 = vmatprep.subr.mxu0 0.0
        %5108 = vmatpush1.msra.mxu0 0.0
        %5109 = vmatprep.subr.mxu0 0.0
        %5110 = vmatpush1.msra.mxu0 0.0
        %5111 = vmatprep.subr.mxu0 0.0
        %5112 = vmatpush1.msra.mxu0 0.0
        %5113 = vmatprep.subr.mxu0 0.0
        %5114 = vmatpush1.msra.mxu0 0.0
        %5115 = vmatprep.subr.mxu0 0.0
        %5116 = vmatpush1.msra.mxu0 0.0
        %5117 = vmatprep.subr.mxu0 0.0
        %5118 = vmatpush1.msra.mxu0 0.0
        %5119 = vmatprep.subr.mxu0 0.0
        %5120 = vmatpush1.msra.mxu0 0.0
        %5121 = vmatprep.subr.mxu0 0.0
        %5122 = vmatpush1.msra.mxu0 0.0
        %5123 = vmatprep.subr.mxu0 0.0
        %5124 = vmatpush1.msra.mxu0 0.0
        %5125 = vmatprep.subr.mxu0 0.0
        %5126 = vmatpush1.msra.mxu0 0.0
        %5127 = vmatprep.subr.mxu0 0.0
        %5128 = vmatpush1.msra.mxu0 0.0
        %5129 = vmatprep.mubr.f32.mxu0 0.0
        %5130 = vmatmul.mubr.f32.gmra.mrb[0].mxu0 %v5060
        %v5131 = vpop.f32.mrb[0].mxu0
        %v5132 = vadd.f32 0.0, %v5131
        %v5133 = vpop.f32.mrb[0].mxu0
        %5134 = vmatprep.mubr.f32.mxu0 0.0
        %5135 = vmatmul.mubr.f32.gmra.mrb[0].mxu0 %v5063
        %v5136 = vpop.f32.mrb[0].mxu0
        %v5137 = vadd.f32 0.0, %v5136
        %v5138 = vpop.f32.mrb[0].mxu0
        %5139 = vdwg.mxu0
        %v5140 = vld [vmem:[%s547 + $0x670] sm:$0xff]
        %v5141 = vld [vmem:[%s547 + $0x678] sm:$0xff]
        %v5142 = vld [vmem:[%s547 + $0x6f0] sm:$0xff]
        %v5143 = vld [vmem:[%s547 + $0x6f8] sm:$0xff]
        %v5144 = vld [vmem:[%s547 + $0x770] sm:$0xff]
        %v5145 = vld [vmem:[%s547 + $0x778] sm:$0xff]
        %v5146 = vld [vmem:[%s547 + $0x7f0] sm:$0xff]
        %v5147 = vld [vmem:[%s547 + $0x7f8] sm:$0xff]
        %v5149 = vsel %vm1139, %v5132, 0
        %v5152 = vsel %vm1139, %v5137, 0
        %5154 = vmatprep.subr.mxu0 %v5141
        %5155 = vmatpush1.msra.mxu0 %v5140
        %5156 = vmatprep.subr.mxu0 %v5143
        %5157 = vmatpush1.msra.mxu0 %v5142
        %5158 = vmatprep.subr.mxu0 %v5145
        %5159 = vmatpush1.msra.mxu0 %v5144
        %5160 = vmatprep.subr.mxu0 %v5147
        %5161 = vmatpush1.msra.mxu0 %v5146
        %5162 = vmatprep.subr.mxu0 0.0
        %5163 = vmatpush1.msra.mxu0 0.0
        %5164 = vmatprep.subr.mxu0 0.0
        %5165 = vmatpush1.msra.mxu0 0.0
        %5166 = vmatprep.subr.mxu0 0.0
        %5167 = vmatpush1.msra.mxu0 0.0
        %5168 = vmatprep.subr.mxu0 0.0
        %5169 = vmatpush1.msra.mxu0 0.0
        %5170 = vmatprep.subr.mxu0 0.0
        %5171 = vmatpush1.msra.mxu0 0.0
        %5172 = vmatprep.subr.mxu0 0.0
        %5173 = vmatpush1.msra.mxu0 0.0
        %5174 = vmatprep.subr.mxu0 0.0
        %5175 = vmatpush1.msra.mxu0 0.0
        %5176 = vmatprep.subr.mxu0 0.0
        %5177 = vmatpush1.msra.mxu0 0.0
        %5178 = vmatprep.subr.mxu0 0.0
        %5179 = vmatpush1.msra.mxu0 0.0
        %5180 = vmatprep.subr.mxu0 0.0
        %5181 = vmatpush1.msra.mxu0 0.0
        %5182 = vmatprep.subr.mxu0 0.0
        %5183 = vmatpush1.msra.mxu0 0.0
        %5184 = vmatprep.subr.mxu0 0.0
        %5185 = vmatpush1.msra.mxu0 0.0
        %5186 = vmatprep.subr.mxu0 0.0
        %5187 = vmatpush1.msra.mxu0 0.0
        %5188 = vmatprep.subr.mxu0 0.0
        %5189 = vmatpush1.msra.mxu0 0.0
        %5190 = vmatprep.subr.mxu0 0.0
        %5191 = vmatpush1.msra.mxu0 0.0
        %5192 = vmatprep.subr.mxu0 0.0
        %5193 = vmatpush1.msra.mxu0 0.0
        %5194 = vmatprep.subr.mxu0 0.0
        %5195 = vmatpush1.msra.mxu0 0.0
        %5196 = vmatprep.subr.mxu0 0.0
        %5197 = vmatpush1.msra.mxu0 0.0
        %5198 = vmatprep.subr.mxu0 0.0
        %5199 = vmatpush1.msra.mxu0 0.0
        %5200 = vmatprep.subr.mxu0 0.0
        %5201 = vmatpush1.msra.mxu0 0.0
        %5202 = vmatprep.subr.mxu0 0.0
        %5203 = vmatpush1.msra.mxu0 0.0
        %5204 = vmatprep.subr.mxu0 0.0
        %5205 = vmatpush1.msra.mxu0 0.0
        %5206 = vmatprep.subr.mxu0 0.0
        %5207 = vmatpush1.msra.mxu0 0.0
        %5208 = vmatprep.subr.mxu0 0.0
        %5209 = vmatpush1.msra.mxu0 0.0
        %5210 = vmatprep.subr.mxu0 0.0
        %5211 = vmatpush1.msra.mxu0 0.0
        %5212 = vmatprep.subr.mxu0 0.0
        %5213 = vmatpush1.msra.mxu0 0.0
        %5214 = vmatprep.subr.mxu0 0.0
        %5215 = vmatpush1.msra.mxu0 0.0
        %5216 = vmatprep.subr.mxu0 0.0
        %5217 = vmatpush1.msra.mxu0 0.0
        %5218 = vmatprep.mubr.f32.mxu0 0.0
        %5219 = vmatmul.mubr.f32.gmra.mrb[0].mxu0 %v5149
        %v5220 = vpop.f32.mrb[0].mxu0
        %v5221 = vadd.f32 0.0, %v5220
        %v5222 = vpop.f32.mrb[0].mxu0
        %v5223 = vadd.f32 0.0, %v5222
        %5224 = vmatprep.mubr.f32.mxu0 0.0
        %5225 = vmatmul.mubr.f32.gmra.mrb[0].mxu0 %v5152
        %v5226 = vpop.f32.mrb[0].mxu0
        %v5227 = vadd.f32 0.0, %v5226
        %v5228 = vpop.f32.mrb[0].mxu0
        %v5229 = vadd.f32 0.0, %v5228
        %5230 = vdwg.mxu0
        %v5231 = vadd.f32 %v4932, %v5221
        %v5232 = vadd.f32 %v4933, %v5223
        %v5233 = vadd.f32 %v4934, %v5227
        %v5234 = vadd.f32 %v4935, %v5229
        %v5236 = vsel %vm1139, %v3739, 0
        %v5239 = vsel %vm1139, %v3745, 0
        %v5242 = vsel %vm1139, %v4038, 0
        %v5245 = vsel %vm1139, %v4040, 0
        %5247 = vmatprep.subr.mxu0 0.0
        %5248 = vmatpush1.xpose.msra.mxu0 %v5242
        %5249 = vmatprep.subr.mxu0 0.0
        %5250 = vmatpush1.xpose.msra.mxu0 %v5245
        %5251 = vmatprep.subr.mxu0 0.0
        %5252 = vmatpush1.xpose.msra.mxu0 0.0
        %5253 = vmatprep.subr.mxu0 0.0
        %5254 = vmatpush1.xpose.msra.mxu0 0.0
        %5255 = vmatprep.subr.mxu0 0.0
        %5256 = vmatpush1.xpose.msra.mxu0 0.0
        %5257 = vmatprep.subr.mxu0 0.0
        %5258 = vmatpush1.xpose.msra.mxu0 0.0
        %5259 = vmatprep.subr.mxu0 0.0
        %5260 = vmatpush1.xpose.msra.mxu0 0.0
        %5261 = vmatprep.subr.mxu0 0.0
        %5262 = vmatpush1.xpose.msra.mxu0 0.0
        %5263 = vmatprep.subr.mxu0 0.0
        %5264 = vmatpush1.xpose.msra.mxu0 0.0
        %5265 = vmatprep.subr.mxu0 0.0
        %5266 = vmatpush1.xpose.msra.mxu0 0.0
        %5267 = vmatprep.subr.mxu0 0.0
        %5268 = vmatpush1.xpose.msra.mxu0 0.0
        %5269 = vmatprep.subr.mxu0 0.0
        %5270 = vmatpush1.xpose.msra.mxu0 0.0
        %5271 = vmatprep.subr.mxu0 0.0
        %5272 = vmatpush1.xpose.msra.mxu0 0.0
        %5273 = vmatprep.subr.mxu0 0.0
        %5274 = vmatpush1.xpose.msra.mxu0 0.0
        %5275 = vmatprep.subr.mxu0 0.0
        %5276 = vmatpush1.xpose.msra.mxu0 0.0
        %5277 = vmatprep.subr.mxu0 0.0
        %5278 = vmatpush1.xpose.msra.mxu0 0.0
        %5279 = vmatprep.subr.mxu0 0.0
        %5280 = vmatpush1.xpose.msra.mxu0 0.0
        %5281 = vmatprep.subr.mxu0 0.0
        %5282 = vmatpush1.xpose.msra.mxu0 0.0
        %5283 = vmatprep.subr.mxu0 0.0
        %5284 = vmatpush1.xpose.msra.mxu0 0.0
        %5285 = vmatprep.subr.mxu0 0.0
        %5286 = vmatpush1.xpose.msra.mxu0 0.0
        %5287 = vmatprep.subr.mxu0 0.0
        %5288 = vmatpush1.xpose.msra.mxu0 0.0
        %5289 = vmatprep.subr.mxu0 0.0
        %5290 = vmatpush1.xpose.msra.mxu0 0.0
        %5291 = vmatprep.subr.mxu0 0.0
        %5292 = vmatpush1.xpose.msra.mxu0 0.0
        %5293 = vmatprep.subr.mxu0 0.0
        %5294 = vmatpush1.xpose.msra.mxu0 0.0
        %5295 = vmatprep.subr.mxu0 0.0
        %5296 = vmatpush1.xpose.msra.mxu0 0.0
        %5297 = vmatprep.subr.mxu0 0.0
        %5298 = vmatpush1.xpose.msra.mxu0 0.0
        %5299 = vmatprep.subr.mxu0 0.0
        %5300 = vmatpush1.xpose.msra.mxu0 0.0
        %5301 = vmatprep.subr.mxu0 0.0
        %5302 = vmatpush1.xpose.msra.mxu0 0.0
        %5303 = vmatprep.subr.mxu0 0.0
        %5304 = vmatpush1.xpose.msra.mxu0 0.0
        %5305 = vmatprep.subr.mxu0 0.0
        %5306 = vmatpush1.xpose.msra.mxu0 0.0
        %5307 = vmatprep.subr.mxu0 0.0
        %5308 = vmatpush1.xpose.msra.mxu0 0.0
        %5309 = vmatprep.subr.mxu0 0.0
        %5310 = vmatpush1.xpose.msra.mxu0 0.0
        %5311 = vmatprep.mubr.f32.mxu0 0.0
        %5312 = vmatmul.mubr.f32.gmra.mrb[0].mxu0 %v5236
        %v5313 = vpop.f32.mrb[0].mxu0
        %v5314 = vadd.f32 0.0, %v5313
        %v5315 = vpop.f32.mrb[0].mxu0
        %5316 = vmatprep.mubr.f32.mxu0 0.0
        %5317 = vmatmul.mubr.f32.gmra.mrb[0].mxu0 %v5239
        %v5318 = vpop.f32.mrb[0].mxu0
        %v5319 = vadd.f32 0.0, %v5318
        %v5320 = vpop.f32.mrb[0].mxu0
        %5321 = vdwg.mxu0
        %v5322 = vmul.f32 %v5314, 0.17677669
        %v5323 = vmul.f32 %v5319, 0.17677669
        %v5324 = vsel %vm670, %v5322, -1e+09
        %v5325 = vsel %vm671, %v5323, -1e+09
        %v5326 = vsel %vm4144, %v5324, -inf
        %5327 = vmax.xlane.f32.xlu0 %v5326
        %v5328 = vpop.xlane.xlu0 %5327
        %v5329 = vsel %vm4148, %v5325, -inf
        %5330 = vmax.xlane.f32.xlu0 %v5329
        %v5331 = vpop.xlane.xlu0 %5330
        %v5332 = vsub.f32 %v5324, %v5328
        %v5333 = vsub.f32 %v5325, %v5331
        %v5334 = vmul.f32 %v5332, 1.442695
        %v5335 = vpow.pop %v5334
        %v5336 = vmul.f32 %v5333, 1.442695
        %v5337 = vpow.pop %v5336
        %v5338 = vsel %vm4144, %v5335, 0.0
        %5339 = vadd.xlane.f32.xlu0 %v5338
        %v5340 = vpop.xlane.xlu0 %5339
        %v5341 = vsel %vm4148, %v5337, 0.0
        %5342 = vadd.xlane.f32.xlu0 %v5341
        %v5343 = vpop.xlane.xlu0 %5342
        %v5344 = vrcp.pop %v5340
        %v5345 = vmul.f32 %v5335, %v5344
        %v5346 = vrcp.pop %v5343
        %v5347 = vmul.f32 %v5337, %v5346
        %v5349 = vsel %vm4144, %v5345, 0
        %v5352 = vsel %vm4144, %v5347, 0
        %5354 = vmatprep.subr.mxu0 0.0
        %5355 = vmatpush1.msra.mxu0 %v4050
        %5356 = vmatprep.subr.mxu0 0.0
        %5357 = vmatpush1.msra.mxu0 %v4052
        %5358 = vmatprep.subr.mxu0 0.0
        %5359 = vmatpush1.msra.mxu0 0.0
        %5360 = vmatprep.subr.mxu0 0.0
        %5361 = vmatpush1.msra.mxu0 0.0
        %5362 = vmatprep.subr.mxu0 0.0
        %5363 = vmatpush1.msra.mxu0 0.0
        %5364 = vmatprep.subr.mxu0 0.0
        %5365 = vmatpush1.msra.mxu0 0.0
        %5366 = vmatprep.subr.mxu0 0.0
        %5367 = vmatpush1.msra.mxu0 0.0
        %5368 = vmatprep.subr.mxu0 0.0
        %5369 = vmatpush1.msra.mxu0 0.0
        %5370 = vmatprep.subr.mxu0 0.0
        %5371 = vmatpush1.msra.mxu0 0.0
        %5372 = vmatprep.subr.mxu0 0.0
        %5373 = vmatpush1.msra.mxu0 0.0
        %5374 = vmatprep.subr.mxu0 0.0
        %5375 = vmatpush1.msra.mxu0 0.0
        %5376 = vmatprep.subr.mxu0 0.0
        %5377 = vmatpush1.msra.mxu0 0.0
        %5378 = vmatprep.subr.mxu0 0.0
        %5379 = vmatpush1.msra.mxu0 0.0
        %5380 = vmatprep.subr.mxu0 0.0
        %5381 = vmatpush1.msra.mxu0 0.0
        %5382 = vmatprep.subr.mxu0 0.0
        %5383 = vmatpush1.msra.mxu0 0.0
        %5384 = vmatprep.subr.mxu0 0.0
        %5385 = vmatpush1.msra.mxu0 0.0
        %5386 = vmatprep.subr.mxu0 0.0
        %5387 = vmatpush1.msra.mxu0 0.0
        %5388 = vmatprep.subr.mxu0 0.0
        %5389 = vmatpush1.msra.mxu0 0.0
        %5390 = vmatprep.subr.mxu0 0.0
        %5391 = vmatpush1.msra.mxu0 0.0
        %5392 = vmatprep.subr.mxu0 0.0
        %5393 = vmatpush1.msra.mxu0 0.0
        %5394 = vmatprep.subr.mxu0 0.0
        %5395 = vmatpush1.msra.mxu0 0.0
        %5396 = vmatprep.subr.mxu0 0.0
        %5397 = vmatpush1.msra.mxu0 0.0
        %5398 = vmatprep.subr.mxu0 0.0
        %5399 = vmatpush1.msra.mxu0 0.0
        %5400 = vmatprep.subr.mxu0 0.0
        %5401 = vmatpush1.msra.mxu0 0.0
        %5402 = vmatprep.subr.mxu0 0.0
        %5403 = vmatpush1.msra.mxu0 0.0
        %5404 = vmatprep.subr.mxu0 0.0
        %5405 = vmatpush1.msra.mxu0 0.0
        %5406 = vmatprep.subr.mxu0 0.0
        %5407 = vmatpush1.msra.mxu0 0.0
        %5408 = vmatprep.subr.mxu0 0.0
        %5409 = vmatpush1.msra.mxu0 0.0
        %5410 = vmatprep.subr.mxu0 0.0
        %5411 = vmatpush1.msra.mxu0 0.0
        %5412 = vmatprep.subr.mxu0 0.0
        %5413 = vmatpush1.msra.mxu0 0.0
        %5414 = vmatprep.subr.mxu0 0.0
        %5415 = vmatpush1.msra.mxu0 0.0
        %5416 = vmatprep.subr.mxu0 0.0
        %5417 = vmatpush1.msra.mxu0 0.0
        %5418 = vmatprep.mubr.f32.mxu0 0.0
        %5419 = vmatmul.mubr.f32.gmra.mrb[0].mxu0 %v5349
        %v5420 = vpop.f32.mrb[0].mxu0
        %v5421 = vadd.f32 0.0, %v5420
        %v5422 = vpop.f32.mrb[0].mxu0
        %5423 = vmatprep.mubr.f32.mxu0 0.0
        %5424 = vmatmul.mubr.f32.gmra.mrb[0].mxu0 %v5352
        %v5425 = vpop.f32.mrb[0].mxu0
        %v5426 = vadd.f32 0.0, %v5425
        %v5427 = vpop.f32.mrb[0].mxu0
        %5428 = vdwg.mxu0
        %v5429 = vld [vmem:[%s547 + $0x870] sm:$0xff]
        %v5430 = vld [vmem:[%s547 + $0x878] sm:$0xff]
        %v5431 = vld [vmem:[%s547 + $0x8f0] sm:$0xff]
        %v5432 = vld [vmem:[%s547 + $0x8f8] sm:$0xff]
        %v5433 = vld [vmem:[%s547 + $0x970] sm:$0xff]
        %v5434 = vld [vmem:[%s547 + $0x978] sm:$0xff]
        %v5435 = vld [vmem:[%s547 + $0x9f0] sm:$0xff]
        %v5436 = vld [vmem:[%s547 + $0x9f8] sm:$0xff]
        %v5438 = vsel %vm1139, %v5421, 0
        %v5441 = vsel %vm1139, %v5426, 0
        %5443 = vmatprep.subr.mxu0 %v5430
        %5444 = vmatpush1.msra.mxu0 %v5429
        %5445 = vmatprep.subr.mxu0 %v5432
        %5446 = vmatpush1.msra.mxu0 %v5431
        %5447 = vmatprep.subr.mxu0 %v5434
        %5448 = vmatpush1.msra.mxu0 %v5433
        %5449 = vmatprep.subr.mxu0 %v5436
        %5450 = vmatpush1.msra.mxu0 %v5435
        %5451 = vmatprep.subr.mxu0 0.0
        %5452 = vmatpush1.msra.mxu0 0.0
        %5453 = vmatprep.subr.mxu0 0.0
        %5454 = vmatpush1.msra.mxu0 0.0
        %5455 = vmatprep.subr.mxu0 0.0
        %5456 = vmatpush1.msra.mxu0 0.0
        %5457 = vmatprep.subr.mxu0 0.0
        %5458 = vmatpush1.msra.mxu0 0.0
        %5459 = vmatprep.subr.mxu0 0.0
        %5460 = vmatpush1.msra.mxu0 0.0
        %5461 = vmatprep.subr.mxu0 0.0
        %5462 = vmatpush1.msra.mxu0 0.0
        %5463 = vmatprep.subr.mxu0 0.0
        %5464 = vmatpush1.msra.mxu0 0.0
        %5465 = vmatprep.subr.mxu0 0.0
        %5466 = vmatpush1.msra.mxu0 0.0
        %5467 = vmatprep.subr.mxu0 0.0
        %5468 = vmatpush1.msra.mxu0 0.0
        %5469 = vmatprep.subr.mxu0 0.0
        %5470 = vmatpush1.msra.mxu0 0.0
        %5471 = vmatprep.subr.mxu0 0.0
        %5472 = vmatpush1.msra.mxu0 0.0
        %5473 = vmatprep.subr.mxu0 0.0
        %5474 = vmatpush1.msra.mxu0 0.0
        %5475 = vmatprep.subr.mxu0 0.0
        %5476 = vmatpush1.msra.mxu0 0.0
        %5477 = vmatprep.subr.mxu0 0.0
        %5478 = vmatpush1.msra.mxu0 0.0
        %5479 = vmatprep.subr.mxu0 0.0
        %5480 = vmatpush1.msra.mxu0 0.0
        %5481 = vmatprep.subr.mxu0 0.0
        %5482 = vmatpush1.msra.mxu0 0.0
        %5483 = vmatprep.subr.mxu0 0.0
        %5484 = vmatpush1.msra.mxu0 0.0
        %5485 = vmatprep.subr.mxu0 0.0
        %5486 = vmatpush1.msra.mxu0 0.0
        %5487 = vmatprep.subr.mxu0 0.0
        %5488 = vmatpush1.msra.mxu0 0.0
        %5489 = vmatprep.subr.mxu0 0.0
        %5490 = vmatpush1.msra.mxu0 0.0
        %5491 = vmatprep.subr.mxu0 0.0
        %5492 = vmatpush1.msra.mxu0 0.0
        %5493 = vmatprep.subr.mxu0 0.0
        %5494 = vmatpush1.msra.mxu0 0.0
        %5495 = vmatprep.subr.mxu0 0.0
        %5496 = vmatpush1.msra.mxu0 0.0
        %5497 = vmatprep.subr.mxu0 0.0
        %5498 = vmatpush1.msra.mxu0 0.0
        %5499 = vmatprep.subr.mxu0 0.0
        %5500 = vmatpush1.msra.mxu0 0.0
        %5501 = vmatprep.subr.mxu0 0.0
        %5502 = vmatpush1.msra.mxu0 0.0
        %5503 = vmatprep.subr.mxu0 0.0
        %5504 = vmatpush1.msra.mxu0 0.0
        %5505 = vmatprep.subr.mxu0 0.0
        %5506 = vmatpush1.msra.mxu0 0.0
        %5507 = vmatprep.mubr.f32.mxu0 0.0
        %5508 = vmatmul.mubr.f32.gmra.mrb[0].mxu0 %v5438
        %v5509 = vpop.f32.mrb[0].mxu0
        %v5510 = vadd.f32 0.0, %v5509
        %v5511 = vpop.f32.mrb[0].mxu0
        %v5512 = vadd.f32 0.0, %v5511
        %5513 = vmatprep.mubr.f32.mxu0 0.0
        %5514 = vmatmul.mubr.f32.gmra.mrb[0].mxu0 %v5441
        %v5515 = vpop.f32.mrb[0].mxu0
        %v5516 = vadd.f32 0.0, %v5515
        %v5517 = vpop.f32.mrb[0].mxu0
        %v5518 = vadd.f32 0.0, %v5517
        %5519 = vdwg.mxu0
        %v5520 = vadd.f32 %v5231, %v5510
        %v5521 = vadd.f32 %v5232, %v5512
        %v5522 = vadd.f32 %v5233, %v5516
        %v5523 = vadd.f32 %v5234, %v5518
        %5524 = vrot.lane.b32.xlu0 %v3739, 96
        %v5525 = vpop.permute.xlu0 %5524
        %5526 = vrot.lane.b32.xlu0 %v3745, 96
        %v5527 = vpop.permute.xlu0 %5526
        %5528 = vrot.lane.b32.xlu0 %v4038, 96
        %v5529 = vpop.permute.xlu0 %5528
        %5530 = vrot.lane.b32.xlu0 %v4040, 96
        %v5531 = vpop.permute.xlu0 %5530
        %v5532 = vsel %vm1139, %v5525, 0
        %v5534 = vsel %vm1139, %v5527, 0
        %v5536 = vsel %vm1139, %v5529, 0
        %v5538 = vsel %vm1139, %v5531, 0
        %5540 = vmatprep.subr.mxu0 0.0
        %5541 = vmatpush1.xpose.msra.mxu0 %v5536
        %5542 = vmatprep.subr.mxu0 0.0
        %5543 = vmatpush1.xpose.msra.mxu0 %v5538
        %5544 = vmatprep.subr.mxu0 0.0
        %5545 = vmatpush1.xpose.msra.mxu0 0.0
        %5546 = vmatprep.subr.mxu0 0.0
        %5547 = vmatpush1.xpose.msra.mxu0 0.0
        %5548 = vmatprep.subr.mxu0 0.0
        %5549 = vmatpush1.xpose.msra.mxu0 0.0
        %5550 = vmatprep.subr.mxu0 0.0
        %5551 = vmatpush1.xpose.msra.mxu0 0.0
        %5552 = vmatprep.subr.mxu0 0.0
        %5553 = vmatpush1.xpose.msra.mxu0 0.0
        %5554 = vmatprep.subr.mxu0 0.0
        %5555 = vmatpush1.xpose.msra.mxu0 0.0
        %5556 = vmatprep.subr.mxu0 0.0
        %5557 = vmatpush1.xpose.msra.mxu0 0.0
        %5558 = vmatprep.subr.mxu0 0.0
        %5559 = vmatpush1.xpose.msra.mxu0 0.0
        %5560 = vmatprep.subr.mxu0 0.0
        %5561 = vmatpush1.xpose.msra.mxu0 0.0
        %5562 = vmatprep.subr.mxu0 0.0
        %5563 = vmatpush1.xpose.msra.mxu0 0.0
        %5564 = vmatprep.subr.mxu0 0.0
        %5565 = vmatpush1.xpose.msra.mxu0 0.0
        %5566 = vmatprep.subr.mxu0 0.0
        %5567 = vmatpush1.xpose.msra.mxu0 0.0
        %5568 = vmatprep.subr.mxu0 0.0
        %5569 = vmatpush1.xpose.msra.mxu0 0.0
        %5570 = vmatprep.subr.mxu0 0.0
        %5571 = vmatpush1.xpose.msra.mxu0 0.0
        %5572 = vmatprep.subr.mxu0 0.0
        %5573 = vmatpush1.xpose.msra.mxu0 0.0
        %5574 = vmatprep.subr.mxu0 0.0
        %5575 = vmatpush1.xpose.msra.mxu0 0.0
        %5576 = vmatprep.subr.mxu0 0.0
        %5577 = vmatpush1.xpose.msra.mxu0 0.0
        %5578 = vmatprep.subr.mxu0 0.0
        %5579 = vmatpush1.xpose.msra.mxu0 0.0
        %5580 = vmatprep.subr.mxu0 0.0
        %5581 = vmatpush1.xpose.msra.mxu0 0.0
        %5582 = vmatprep.subr.mxu0 0.0
        %5583 = vmatpush1.xpose.msra.mxu0 0.0
        %5584 = vmatprep.subr.mxu0 0.0
        %5585 = vmatpush1.xpose.msra.mxu0 0.0
        %5586 = vmatprep.subr.mxu0 0.0
        %5587 = vmatpush1.xpose.msra.mxu0 0.0
        %5588 = vmatprep.subr.mxu0 0.0
        %5589 = vmatpush1.xpose.msra.mxu0 0.0
        %5590 = vmatprep.subr.mxu0 0.0
        %5591 = vmatpush1.xpose.msra.mxu0 0.0
        %5592 = vmatprep.subr.mxu0 0.0
        %5593 = vmatpush1.xpose.msra.mxu0 0.0
        %5594 = vmatprep.subr.mxu0 0.0
        %5595 = vmatpush1.xpose.msra.mxu0 0.0
        %5596 = vmatprep.subr.mxu0 0.0
        %5597 = vmatpush1.xpose.msra.mxu0 0.0
        %5598 = vmatprep.subr.mxu0 0.0
        %5599 = vmatpush1.xpose.msra.mxu0 0.0
        %5600 = vmatprep.subr.mxu0 0.0
        %5601 = vmatpush1.xpose.msra.mxu0 0.0
        %5602 = vmatprep.subr.mxu0 0.0
        %5603 = vmatpush1.xpose.msra.mxu0 0.0
        %5604 = vmatprep.mubr.f32.mxu0 0.0
        %5605 = vmatmul.mubr.f32.gmra.mrb[0].mxu0 %v5532
        %v5606 = vpop.f32.mrb[0].mxu0
        %v5607 = vadd.f32 0.0, %v5606
        %v5608 = vpop.f32.mrb[0].mxu0
        %5609 = vmatprep.mubr.f32.mxu0 0.0
        %5610 = vmatmul.mubr.f32.gmra.mrb[0].mxu0 %v5534
        %v5611 = vpop.f32.mrb[0].mxu0
        %v5612 = vadd.f32 0.0, %v5611
        %v5613 = vpop.f32.mrb[0].mxu0
        %5614 = vdwg.mxu0
        %v5615 = vmul.f32 %v5607, 0.17677669
        %v5616 = vmul.f32 %v5612, 0.17677669
        %v5617 = vsel %vm670, %v5615, -1e+09
        %v5618 = vsel %vm671, %v5616, -1e+09
        %v5619 = vsel %vm4144, %v5617, -inf
        %5620 = vmax.xlane.f32.xlu0 %v5619
        %v5621 = vpop.xlane.xlu0 %5620
        %v5622 = vsel %vm4148, %v5618, -inf
        %5623 = vmax.xlane.f32.xlu0 %v5622
        %v5624 = vpop.xlane.xlu0 %5623
        %v5625 = vsub.f32 %v5617, %v5621
        %v5626 = vsub.f32 %v5618, %v5624
        %v5627 = vmul.f32 %v5625, 1.442695
        %v5628 = vpow.pop %v5627
        %v5629 = vmul.f32 %v5626, 1.442695
        %v5630 = vpow.pop %v5629
        %v5631 = vsel %vm4144, %v5628, 0.0
        %5632 = vadd.xlane.f32.xlu0 %v5631
        %v5633 = vpop.xlane.xlu0 %5632
        %v5634 = vsel %vm4148, %v5630, 0.0
        %5635 = vadd.xlane.f32.xlu0 %v5634
        %v5636 = vpop.xlane.xlu0 %5635
        %v5637 = vrcp.pop %v5633
        %v5638 = vmul.f32 %v5628, %v5637
        %v5639 = vrcp.pop %v5636
        %v5640 = vmul.f32 %v5630, %v5639
        %5643 = vrot.lane.b32.xlu0 %v4050, 96
        %v5644 = vpop.permute.xlu0 %5643
        %5645 = vrot.lane.b32.xlu0 %v4052, 96
        %v5646 = vpop.permute.xlu0 %5645
        %v5650 = vsel %vm4144, %v5638, 0
        %v5653 = vsel %vm4144, %v5640, 0
        %5655 = vmatprep.subr.mxu0 0.0
        %5656 = vmatpush1.msra.mxu0 %v5644
        %5657 = vmatprep.subr.mxu0 0.0
        %5658 = vmatpush1.msra.mxu0 %v5646
        %5659 = vmatprep.subr.mxu0 0.0
        %5660 = vmatpush1.msra.mxu0 0.0
        %5661 = vmatprep.subr.mxu0 0.0
        %5662 = vmatpush1.msra.mxu0 0.0
        %5663 = vmatprep.subr.mxu0 0.0
        %5664 = vmatpush1.msra.mxu0 0.0
        %5665 = vmatprep.subr.mxu0 0.0
        %5666 = vmatpush1.msra.mxu0 0.0
        %5667 = vmatprep.subr.mxu0 0.0
        %5668 = vmatpush1.msra.mxu0 0.0
        %5669 = vmatprep.subr.mxu0 0.0
        %5670 = vmatpush1.msra.mxu0 0.0
        %5671 = vmatprep.subr.mxu0 0.0
        %5672 = vmatpush1.msra.mxu0 0.0
        %5673 = vmatprep.subr.mxu0 0.0
        %5674 = vmatpush1.msra.mxu0 0.0
        %5675 = vmatprep.subr.mxu0 0.0
        %5676 = vmatpush1.msra.mxu0 0.0
        %5677 = vmatprep.subr.mxu0 0.0
        %5678 = vmatpush1.msra.mxu0 0.0
        %5679 = vmatprep.subr.mxu0 0.0
        %5680 = vmatpush1.msra.mxu0 0.0
        %5681 = vmatprep.subr.mxu0 0.0
        %5682 = vmatpush1.msra.mxu0 0.0
        %5683 = vmatprep.subr.mxu0 0.0
        %5684 = vmatpush1.msra.mxu0 0.0
        %5685 = vmatprep.subr.mxu0 0.0
        %5686 = vmatpush1.msra.mxu0 0.0
        %5687 = vmatprep.subr.mxu0 0.0
        %5688 = vmatpush1.msra.mxu0 0.0
        %5689 = vmatprep.subr.mxu0 0.0
        %5690 = vmatpush1.msra.mxu0 0.0
        %5691 = vmatprep.subr.mxu0 0.0
        %5692 = vmatpush1.msra.mxu0 0.0
        %5693 = vmatprep.subr.mxu0 0.0
        %5694 = vmatpush1.msra.mxu0 0.0
        %5695 = vmatprep.subr.mxu0 0.0
        %5696 = vmatpush1.msra.mxu0 0.0
        %5697 = vmatprep.subr.mxu0 0.0
        %5698 = vmatpush1.msra.mxu0 0.0
        %5699 = vmatprep.subr.mxu0 0.0
        %5700 = vmatpush1.msra.mxu0 0.0
        %5701 = vmatprep.subr.mxu0 0.0
        %5702 = vmatpush1.msra.mxu0 0.0
        %5703 = vmatprep.subr.mxu0 0.0
        %5704 = vmatpush1.msra.mxu0 0.0
        %5705 = vmatprep.subr.mxu0 0.0
        %5706 = vmatpush1.msra.mxu0 0.0
        %5707 = vmatprep.subr.mxu0 0.0
        %5708 = vmatpush1.msra.mxu0 0.0
        %5709 = vmatprep.subr.mxu0 0.0
        %5710 = vmatpush1.msra.mxu0 0.0
        %5711 = vmatprep.subr.mxu0 0.0
        %5712 = vmatpush1.msra.mxu0 0.0
        %5713 = vmatprep.subr.mxu0 0.0
        %5714 = vmatpush1.msra.mxu0 0.0
        %5715 = vmatprep.subr.mxu0 0.0
        %5716 = vmatpush1.msra.mxu0 0.0
        %5717 = vmatprep.subr.mxu0 0.0
        %5718 = vmatpush1.msra.mxu0 0.0
        %5719 = vmatprep.mubr.f32.mxu0 0.0
        %5720 = vmatmul.mubr.f32.gmra.mrb[0].mxu0 %v5650
        %v5721 = vpop.f32.mrb[0].mxu0
        %v5722 = vadd.f32 0.0, %v5721
        %v5723 = vpop.f32.mrb[0].mxu0
        %5724 = vmatprep.mubr.f32.mxu0 0.0
        %5725 = vmatmul.mubr.f32.gmra.mrb[0].mxu0 %v5653
        %v5726 = vpop.f32.mrb[0].mxu0
        %v5727 = vadd.f32 0.0, %v5726
        %v5728 = vpop.f32.mrb[0].mxu0
        %5729 = vdwg.mxu0
        %v5730 = vld [vmem:[%s547 + $0xa70] sm:$0xff]
        %v5731 = vld [vmem:[%s547 + $0xa78] sm:$0xff]
        %v5732 = vld [vmem:[%s547 + $0xaf0] sm:$0xff]
        %v5733 = vld [vmem:[%s547 + $0xaf8] sm:$0xff]
        %v5734 = vld [vmem:[%s547 + $0xb70] sm:$0xff]
        %v5735 = vld [vmem:[%s547 + $0xb78] sm:$0xff]
        %v5736 = vld [vmem:[%s547 + $0xbf0] sm:$0xff]
        %v5737 = vld [vmem:[%s547 + $0xbf8] sm:$0xff]
        %v5739 = vsel %vm1139, %v5722, 0
        %v5742 = vsel %vm1139, %v5727, 0
        %5744 = vmatprep.subr.mxu0 %v5731
        %5745 = vmatpush1.msra.mxu0 %v5730
        %5746 = vmatprep.subr.mxu0 %v5733
        %5747 = vmatpush1.msra.mxu0 %v5732
        %5748 = vmatprep.subr.mxu0 %v5735
        %5749 = vmatpush1.msra.mxu0 %v5734
        %5750 = vmatprep.subr.mxu0 %v5737
        %5751 = vmatpush1.msra.mxu0 %v5736
        %5752 = vmatprep.subr.mxu0 0.0
        %5753 = vmatpush1.msra.mxu0 0.0
        %5754 = vmatprep.subr.mxu0 0.0
        %5755 = vmatpush1.msra.mxu0 0.0
        %5756 = vmatprep.subr.mxu0 0.0
        %5757 = vmatpush1.msra.mxu0 0.0
        %5758 = vmatprep.subr.mxu0 0.0
        %5759 = vmatpush1.msra.mxu0 0.0
        %5760 = vmatprep.subr.mxu0 0.0
        %5761 = vmatpush1.msra.mxu0 0.0
        %5762 = vmatprep.subr.mxu0 0.0
        %5763 = vmatpush1.msra.mxu0 0.0
        %5764 = vmatprep.subr.mxu0 0.0
        %5765 = vmatpush1.msra.mxu0 0.0
        %5766 = vmatprep.subr.mxu0 0.0
        %5767 = vmatpush1.msra.mxu0 0.0
        %5768 = vmatprep.subr.mxu0 0.0
        %5769 = vmatpush1.msra.mxu0 0.0
        %5770 = vmatprep.subr.mxu0 0.0
        %5771 = vmatpush1.msra.mxu0 0.0
        %5772 = vmatprep.subr.mxu0 0.0
        %5773 = vmatpush1.msra.mxu0 0.0
        %5774 = vmatprep.subr.mxu0 0.0
        %5775 = vmatpush1.msra.mxu0 0.0
        %5776 = vmatprep.subr.mxu0 0.0
        %5777 = vmatpush1.msra.mxu0 0.0
        %5778 = vmatprep.subr.mxu0 0.0
        %5779 = vmatpush1.msra.mxu0 0.0
        %5780 = vmatprep.subr.mxu0 0.0
        %5781 = vmatpush1.msra.mxu0 0.0
        %5782 = vmatprep.subr.mxu0 0.0
        %5783 = vmatpush1.msra.mxu0 0.0
        %5784 = vmatprep.subr.mxu0 0.0
        %5785 = vmatpush1.msra.mxu0 0.0
        %5786 = vmatprep.subr.mxu0 0.0
        %5787 = vmatpush1.msra.mxu0 0.0
        %5788 = vmatprep.subr.mxu0 0.0
        %5789 = vmatpush1.msra.mxu0 0.0
        %5790 = vmatprep.subr.mxu0 0.0
        %5791 = vmatpush1.msra.mxu0 0.0
        %5792 = vmatprep.subr.mxu0 0.0
        %5793 = vmatpush1.msra.mxu0 0.0
        %5794 = vmatprep.subr.mxu0 0.0
        %5795 = vmatpush1.msra.mxu0 0.0
        %5796 = vmatprep.subr.mxu0 0.0
        %5797 = vmatpush1.msra.mxu0 0.0
        %5798 = vmatprep.subr.mxu0 0.0
        %5799 = vmatpush1.msra.mxu0 0.0
        %5800 = vmatprep.subr.mxu0 0.0
        %5801 = vmatpush1.msra.mxu0 0.0
        %5802 = vmatprep.subr.mxu0 0.0
        %5803 = vmatpush1.msra.mxu0 0.0
        %5804 = vmatprep.subr.mxu0 0.0
        %5805 = vmatpush1.msra.mxu0 0.0
        %5806 = vmatprep.subr.mxu0 0.0
        %5807 = vmatpush1.msra.mxu0 0.0
        %5808 = vmatprep.mubr.f32.mxu0 0.0
        %5809 = vmatmul.mubr.f32.gmra.mrb[0].mxu0 %v5739
        %v5810 = vpop.f32.mrb[0].mxu0
        %v5811 = vadd.f32 0.0, %v5810
        %v5812 = vpop.f32.mrb[0].mxu0
        %v5813 = vadd.f32 0.0, %v5812
        %5814 = vmatprep.mubr.f32.mxu0 0.0
        %5815 = vmatmul.mubr.f32.gmra.mrb[0].mxu0 %v5742
        %v5816 = vpop.f32.mrb[0].mxu0
        %v5817 = vadd.f32 0.0, %v5816
        %v5818 = vpop.f32.mrb[0].mxu0
        %v5819 = vadd.f32 0.0, %v5818
        %5820 = vdwg.mxu0
        %v5821 = vadd.f32 %v5520, %v5811
        %v5822 = vadd.f32 %v5521, %v5813
        %v5823 = vadd.f32 %v5522, %v5817
        %v5824 = vadd.f32 %v5523, %v5819
        %5825 = vrot.lane.b32.xlu0 %v3739, 64
        %v5826 = vpop.permute.xlu0 %5825
        %5827 = vrot.lane.b32.xlu0 %v3745, 64
        %v5828 = vpop.permute.xlu0 %5827
        %5829 = vrot.lane.b32.xlu0 %v4038, 64
        %v5830 = vpop.permute.xlu0 %5829
        %5831 = vrot.lane.b32.xlu0 %v4040, 64
        %v5832 = vpop.permute.xlu0 %5831
        %v5833 = vsel %vm1139, %v5826, 0
        %v5835 = vsel %vm1139, %v5828, 0
        %v5837 = vsel %vm1139, %v5830, 0
        %v5839 = vsel %vm1139, %v5832, 0
        %5841 = vmatprep.subr.mxu0 0.0
        %5842 = vmatpush1.xpose.msra.mxu0 %v5837
        %5843 = vmatprep.subr.mxu0 0.0
        %5844 = vmatpush1.xpose.msra.mxu0 %v5839
        %5845 = vmatprep.subr.mxu0 0.0
        %5846 = vmatpush1.xpose.msra.mxu0 0.0
        %5847 = vmatprep.subr.mxu0 0.0
        %5848 = vmatpush1.xpose.msra.mxu0 0.0
        %5849 = vmatprep.subr.mxu0 0.0
        %5850 = vmatpush1.xpose.msra.mxu0 0.0
        %5851 = vmatprep.subr.mxu0 0.0
        %5852 = vmatpush1.xpose.msra.mxu0 0.0
        %5853 = vmatprep.subr.mxu0 0.0
        %5854 = vmatpush1.xpose.msra.mxu0 0.0
        %5855 = vmatprep.subr.mxu0 0.0
        %5856 = vmatpush1.xpose.msra.mxu0 0.0
        %5857 = vmatprep.subr.mxu0 0.0
        %5858 = vmatpush1.xpose.msra.mxu0 0.0
        %5859 = vmatprep.subr.mxu0 0.0
        %5860 = vmatpush1.xpose.msra.mxu0 0.0
        %5861 = vmatprep.subr.mxu0 0.0
        %5862 = vmatpush1.xpose.msra.mxu0 0.0
        %5863 = vmatprep.subr.mxu0 0.0
        %5864 = vmatpush1.xpose.msra.mxu0 0.0
        %5865 = vmatprep.subr.mxu0 0.0
        %5866 = vmatpush1.xpose.msra.mxu0 0.0
        %5867 = vmatprep.subr.mxu0 0.0
        %5868 = vmatpush1.xpose.msra.mxu0 0.0
        %5869 = vmatprep.subr.mxu0 0.0
        %5870 = vmatpush1.xpose.msra.mxu0 0.0
        %5871 = vmatprep.subr.mxu0 0.0
        %5872 = vmatpush1.xpose.msra.mxu0 0.0
        %5873 = vmatprep.subr.mxu0 0.0
        %5874 = vmatpush1.xpose.msra.mxu0 0.0
        %5875 = vmatprep.subr.mxu0 0.0
        %5876 = vmatpush1.xpose.msra.mxu0 0.0
        %5877 = vmatprep.subr.mxu0 0.0
        %5878 = vmatpush1.xpose.msra.mxu0 0.0
        %5879 = vmatprep.subr.mxu0 0.0
        %5880 = vmatpush1.xpose.msra.mxu0 0.0
        %5881 = vmatprep.subr.mxu0 0.0
        %5882 = vmatpush1.xpose.msra.mxu0 0.0
        %5883 = vmatprep.subr.mxu0 0.0
        %5884 = vmatpush1.xpose.msra.mxu0 0.0
        %5885 = vmatprep.subr.mxu0 0.0
        %5886 = vmatpush1.xpose.msra.mxu0 0.0
        %5887 = vmatprep.subr.mxu0 0.0
        %5888 = vmatpush1.xpose.msra.mxu0 0.0
        %5889 = vmatprep.subr.mxu0 0.0
        %5890 = vmatpush1.xpose.msra.mxu0 0.0
        %5891 = vmatprep.subr.mxu0 0.0
        %5892 = vmatpush1.xpose.msra.mxu0 0.0
        %5893 = vmatprep.subr.mxu0 0.0
        %5894 = vmatpush1.xpose.msra.mxu0 0.0
        %5895 = vmatprep.subr.mxu0 0.0
        %5896 = vmatpush1.xpose.msra.mxu0 0.0
        %5897 = vmatprep.subr.mxu0 0.0
        %5898 = vmatpush1.xpose.msra.mxu0 0.0
        %5899 = vmatprep.subr.mxu0 0.0
        %5900 = vmatpush1.xpose.msra.mxu0 0.0
        %5901 = vmatprep.subr.mxu0 0.0
        %5902 = vmatpush1.xpose.msra.mxu0 0.0
        %5903 = vmatprep.subr.mxu0 0.0
        %5904 = vmatpush1.xpose.msra.mxu0 0.0
        %5905 = vmatprep.mubr.f32.mxu0 0.0
        %5906 = vmatmul.mubr.f32.gmra.mrb[0].mxu0 %v5833
        %v5907 = vpop.f32.mrb[0].mxu0
        %v5908 = vadd.f32 0.0, %v5907
        %v5909 = vpop.f32.mrb[0].mxu0
        %5910 = vmatprep.mubr.f32.mxu0 0.0
        %5911 = vmatmul.mubr.f32.gmra.mrb[0].mxu0 %v5835
        %v5912 = vpop.f32.mrb[0].mxu0
        %v5913 = vadd.f32 0.0, %v5912
        %v5914 = vpop.f32.mrb[0].mxu0
        %5915 = vdwg.mxu0
        %v5916 = vmul.f32 %v5908, 0.17677669
        %v5917 = vmul.f32 %v5913, 0.17677669
        %v5918 = vsel %vm670, %v5916, -1e+09
        %v5919 = vsel %vm671, %v5917, -1e+09
        %v5920 = vsel %vm4144, %v5918, -inf
        %5921 = vmax.xlane.f32.xlu0 %v5920
        %v5922 = vpop.xlane.xlu0 %5921
        %v5923 = vsel %vm4148, %v5919, -inf
        %5924 = vmax.xlane.f32.xlu0 %v5923
        %v5925 = vpop.xlane.xlu0 %5924
        %v5926 = vsub.f32 %v5918, %v5922
        %v5927 = vsub.f32 %v5919, %v5925
        %v5928 = vmul.f32 %v5926, 1.442695
        %v5929 = vpow.pop %v5928
        %v5930 = vmul.f32 %v5927, 1.442695
        %v5931 = vpow.pop %v5930
        %v5932 = vsel %vm4144, %v5929, 0.0
        %5933 = vadd.xlane.f32.xlu0 %v5932
        %v5934 = vpop.xlane.xlu0 %5933
        %v5935 = vsel %vm4148, %v5931, 0.0
        %5936 = vadd.xlane.f32.xlu0 %v5935
        %v5937 = vpop.xlane.xlu0 %5936
        %v5938 = vrcp.pop %v5934
        %v5939 = vmul.f32 %v5929, %v5938
        %v5940 = vrcp.pop %v5937
        %v5941 = vmul.f32 %v5931, %v5940
        %5942 = vrot.lane.b32.xlu0 %v4050, 64
        %v5943 = vpop.permute.xlu0 %5942
        %5944 = vrot.lane.b32.xlu0 %v4052, 64
        %v5945 = vpop.permute.xlu0 %5944
        %v5949 = vsel %vm4144, %v5939, 0
        %v5952 = vsel %vm4144, %v5941, 0
        %5954 = vmatprep.subr.mxu0 0.0
        %5955 = vmatpush1.msra.mxu0 %v5943
        %5956 = vmatprep.subr.mxu0 0.0
        %5957 = vmatpush1.msra.mxu0 %v5945
        %5958 = vmatprep.subr.mxu0 0.0
        %5959 = vmatpush1.msra.mxu0 0.0
        %5960 = vmatprep.subr.mxu0 0.0
        %5961 = vmatpush1.msra.mxu0 0.0
        %5962 = vmatprep.subr.mxu0 0.0
        %5963 = vmatpush1.msra.mxu0 0.0
        %5964 = vmatprep.subr.mxu0 0.0
        %5965 = vmatpush1.msra.mxu0 0.0
        %5966 = vmatprep.subr.mxu0 0.0
        %5967 = vmatpush1.msra.mxu0 0.0
        %5968 = vmatprep.subr.mxu0 0.0
        %5969 = vmatpush1.msra.mxu0 0.0
        %5970 = vmatprep.subr.mxu0 0.0
        %5971 = vmatpush1.msra.mxu0 0.0
        %5972 = vmatprep.subr.mxu0 0.0
        %5973 = vmatpush1.msra.mxu0 0.0
        %5974 = vmatprep.subr.mxu0 0.0
        %5975 = vmatpush1.msra.mxu0 0.0
        %5976 = vmatprep.subr.mxu0 0.0
        %5977 = vmatpush1.msra.mxu0 0.0
        %5978 = vmatprep.subr.mxu0 0.0
        %5979 = vmatpush1.msra.mxu0 0.0
        %5980 = vmatprep.subr.mxu0 0.0
        %5981 = vmatpush1.msra.mxu0 0.0
        %5982 = vmatprep.subr.mxu0 0.0
        %5983 = vmatpush1.msra.mxu0 0.0
        %5984 = vmatprep.subr.mxu0 0.0
        %5985 = vmatpush1.msra.mxu0 0.0
        %5986 = vmatprep.subr.mxu0 0.0
        %5987 = vmatpush1.msra.mxu0 0.0
        %5988 = vmatprep.subr.mxu0 0.0
        %5989 = vmatpush1.msra.mxu0 0.0
        %5990 = vmatprep.subr.mxu0 0.0
        %5991 = vmatpush1.msra.mxu0 0.0
        %5992 = vmatprep.subr.mxu0 0.0
        %5993 = vmatpush1.msra.mxu0 0.0
        %5994 = vmatprep.subr.mxu0 0.0
        %5995 = vmatpush1.msra.mxu0 0.0
        %5996 = vmatprep.subr.mxu0 0.0
        %5997 = vmatpush1.msra.mxu0 0.0
        %5998 = vmatprep.subr.mxu0 0.0
        %5999 = vmatpush1.msra.mxu0 0.0
        %6000 = vmatprep.subr.mxu0 0.0
        %6001 = vmatpush1.msra.mxu0 0.0
        %6002 = vmatprep.subr.mxu0 0.0
        %6003 = vmatpush1.msra.mxu0 0.0
        %6004 = vmatprep.subr.mxu0 0.0
        %6005 = vmatpush1.msra.mxu0 0.0
        %6006 = vmatprep.subr.mxu0 0.0
        %6007 = vmatpush1.msra.mxu0 0.0
        %6008 = vmatprep.subr.mxu0 0.0
        %6009 = vmatpush1.msra.mxu0 0.0
        %6010 = vmatprep.subr.mxu0 0.0
        %6011 = vmatpush1.msra.mxu0 0.0
        %6012 = vmatprep.subr.mxu0 0.0
        %6013 = vmatpush1.msra.mxu0 0.0
        %6014 = vmatprep.subr.mxu0 0.0
        %6015 = vmatpush1.msra.mxu0 0.0
        %6016 = vmatprep.subr.mxu0 0.0
        %6017 = vmatpush1.msra.mxu0 0.0
        %6018 = vmatprep.mubr.f32.mxu0 0.0
        %6019 = vmatmul.mubr.f32.gmra.mrb[0].mxu0 %v5949
        %v6020 = vpop.f32.mrb[0].mxu0
        %v6021 = vadd.f32 0.0, %v6020
        %v6022 = vpop.f32.mrb[0].mxu0
        %6023 = vmatprep.mubr.f32.mxu0 0.0
        %6024 = vmatmul.mubr.f32.gmra.mrb[0].mxu0 %v5952
        %v6025 = vpop.f32.mrb[0].mxu0
        %v6026 = vadd.f32 0.0, %v6025
        %v6027 = vpop.f32.mrb[0].mxu0
        %6028 = vdwg.mxu0
        %v6029 = vld [vmem:[%s547 + $0xc70] sm:$0xff]
        %v6030 = vld [vmem:[%s547 + $0xc78] sm:$0xff]
        %v6031 = vld [vmem:[%s547 + $0xcf0] sm:$0xff]
        %v6032 = vld [vmem:[%s547 + $0xcf8] sm:$0xff]
        %v6033 = vld [vmem:[%s547 + $0xd70] sm:$0xff]
        %v6034 = vld [vmem:[%s547 + $0xd78] sm:$0xff]
        %v6035 = vld [vmem:[%s547 + $0xdf0] sm:$0xff]
        %v6036 = vld [vmem:[%s547 + $0xdf8] sm:$0xff]
        %v6038 = vsel %vm1139, %v6021, 0
        %v6041 = vsel %vm1139, %v6026, 0
        %6043 = vmatprep.subr.mxu0 %v6030
        %6044 = vmatpush1.msra.mxu0 %v6029
        %6045 = vmatprep.subr.mxu0 %v6032
        %6046 = vmatpush1.msra.mxu0 %v6031
        %6047 = vmatprep.subr.mxu0 %v6034
        %6048 = vmatpush1.msra.mxu0 %v6033
        %6049 = vmatprep.subr.mxu0 %v6036
        %6050 = vmatpush1.msra.mxu0 %v6035
        %6051 = vmatprep.subr.mxu0 0.0
        %6052 = vmatpush1.msra.mxu0 0.0
        %6053 = vmatprep.subr.mxu0 0.0
        %6054 = vmatpush1.msra.mxu0 0.0
        %6055 = vmatprep.subr.mxu0 0.0
        %6056 = vmatpush1.msra.mxu0 0.0
        %6057 = vmatprep.subr.mxu0 0.0
        %6058 = vmatpush1.msra.mxu0 0.0
        %6059 = vmatprep.subr.mxu0 0.0
        %6060 = vmatpush1.msra.mxu0 0.0
        %6061 = vmatprep.subr.mxu0 0.0
        %6062 = vmatpush1.msra.mxu0 0.0
        %6063 = vmatprep.subr.mxu0 0.0
        %6064 = vmatpush1.msra.mxu0 0.0
        %6065 = vmatprep.subr.mxu0 0.0
        %6066 = vmatpush1.msra.mxu0 0.0
        %6067 = vmatprep.subr.mxu0 0.0
        %6068 = vmatpush1.msra.mxu0 0.0
        %6069 = vmatprep.subr.mxu0 0.0
        %6070 = vmatpush1.msra.mxu0 0.0
        %6071 = vmatprep.subr.mxu0 0.0
        %6072 = vmatpush1.msra.mxu0 0.0
        %6073 = vmatprep.subr.mxu0 0.0
        %6074 = vmatpush1.msra.mxu0 0.0
        %6075 = vmatprep.subr.mxu0 0.0
        %6076 = vmatpush1.msra.mxu0 0.0
        %6077 = vmatprep.subr.mxu0 0.0
        %6078 = vmatpush1.msra.mxu0 0.0
        %6079 = vmatprep.subr.mxu0 0.0
        %6080 = vmatpush1.msra.mxu0 0.0
        %6081 = vmatprep.subr.mxu0 0.0
        %6082 = vmatpush1.msra.mxu0 0.0
        %6083 = vmatprep.subr.mxu0 0.0
        %6084 = vmatpush1.msra.mxu0 0.0
        %6085 = vmatprep.subr.mxu0 0.0
        %6086 = vmatpush1.msra.mxu0 0.0
        %6087 = vmatprep.subr.mxu0 0.0
        %6088 = vmatpush1.msra.mxu0 0.0
        %6089 = vmatprep.subr.mxu0 0.0
        %6090 = vmatpush1.msra.mxu0 0.0
        %6091 = vmatprep.subr.mxu0 0.0
        %6092 = vmatpush1.msra.mxu0 0.0
        %6093 = vmatprep.subr.mxu0 0.0
        %6094 = vmatpush1.msra.mxu0 0.0
        %6095 = vmatprep.subr.mxu0 0.0
        %6096 = vmatpush1.msra.mxu0 0.0
        %6097 = vmatprep.subr.mxu0 0.0
        %6098 = vmatpush1.msra.mxu0 0.0
        %6099 = vmatprep.subr.mxu0 0.0
        %6100 = vmatpush1.msra.mxu0 0.0
        %6101 = vmatprep.subr.mxu0 0.0
        %6102 = vmatpush1.msra.mxu0 0.0
        %6103 = vmatprep.subr.mxu0 0.0
        %6104 = vmatpush1.msra.mxu0 0.0
        %6105 = vmatprep.subr.mxu0 0.0
        %6106 = vmatpush1.msra.mxu0 0.0
        %6107 = vmatprep.mubr.f32.mxu0 0.0
        %6108 = vmatmul.mubr.f32.gmra.mrb[0].mxu0 %v6038
        %v6109 = vpop.f32.mrb[0].mxu0
        %v6110 = vadd.f32 0.0, %v6109
        %v6111 = vpop.f32.mrb[0].mxu0
        %v6112 = vadd.f32 0.0, %v6111
        %6113 = vmatprep.mubr.f32.mxu0 0.0
        %6114 = vmatmul.mubr.f32.gmra.mrb[0].mxu0 %v6041
        %v6115 = vpop.f32.mrb[0].mxu0
        %v6116 = vadd.f32 0.0, %v6115
        %v6117 = vpop.f32.mrb[0].mxu0
        %v6118 = vadd.f32 0.0, %v6117
        %6119 = vdwg.mxu0
        %v6120 = vadd.f32 %v5821, %v6110
        %v6121 = vadd.f32 %v5822, %v6112
        %v6122 = vadd.f32 %v5823, %v6116
        %v6123 = vadd.f32 %v5824, %v6118
        %6124 = vrot.lane.b32.xlu0 %v3739, 32
        %v6125 = vpop.permute.xlu0 %6124
        %6126 = vrot.lane.b32.xlu0 %v3745, 32
        %v6127 = vpop.permute.xlu0 %6126
        %6128 = vrot.lane.b32.xlu0 %v4038, 32
        %v6129 = vpop.permute.xlu0 %6128
        %6130 = vrot.lane.b32.xlu0 %v4040, 32
        %v6131 = vpop.permute.xlu0 %6130
        %v6132 = vsel %vm1139, %v6125, 0
        %v6134 = vsel %vm1139, %v6127, 0
        %v6136 = vsel %vm1139, %v6129, 0
        %v6138 = vsel %vm1139, %v6131, 0
        %6140 = vmatprep.subr.mxu0 0.0
        %6141 = vmatpush1.xpose.msra.mxu0 %v6136
        %6142 = vmatprep.subr.mxu0 0.0
        %6143 = vmatpush1.xpose.msra.mxu0 %v6138
        %6144 = vmatprep.subr.mxu0 0.0
        %6145 = vmatpush1.xpose.msra.mxu0 0.0
        %6146 = vmatprep.subr.mxu0 0.0
        %6147 = vmatpush1.xpose.msra.mxu0 0.0
        %6148 = vmatprep.subr.mxu0 0.0
        %6149 = vmatpush1.xpose.msra.mxu0 0.0
        %6150 = vmatprep.subr.mxu0 0.0
        %6151 = vmatpush1.xpose.msra.mxu0 0.0
        %6152 = vmatprep.subr.mxu0 0.0
        %6153 = vmatpush1.xpose.msra.mxu0 0.0
        %6154 = vmatprep.subr.mxu0 0.0
        %6155 = vmatpush1.xpose.msra.mxu0 0.0
        %6156 = vmatprep.subr.mxu0 0.0
        %6157 = vmatpush1.xpose.msra.mxu0 0.0
        %6158 = vmatprep.subr.mxu0 0.0
        %6159 = vmatpush1.xpose.msra.mxu0 0.0
        %6160 = vmatprep.subr.mxu0 0.0
        %6161 = vmatpush1.xpose.msra.mxu0 0.0
        %6162 = vmatprep.subr.mxu0 0.0
        %6163 = vmatpush1.xpose.msra.mxu0 0.0
        %6164 = vmatprep.subr.mxu0 0.0
        %6165 = vmatpush1.xpose.msra.mxu0 0.0
        %6166 = vmatprep.subr.mxu0 0.0
        %6167 = vmatpush1.xpose.msra.mxu0 0.0
        %6168 = vmatprep.subr.mxu0 0.0
        %6169 = vmatpush1.xpose.msra.mxu0 0.0
        %6170 = vmatprep.subr.mxu0 0.0
        %6171 = vmatpush1.xpose.msra.mxu0 0.0
        %6172 = vmatprep.subr.mxu0 0.0
        %6173 = vmatpush1.xpose.msra.mxu0 0.0
        %6174 = vmatprep.subr.mxu0 0.0
        %6175 = vmatpush1.xpose.msra.mxu0 0.0
        %6176 = vmatprep.subr.mxu0 0.0
        %6177 = vmatpush1.xpose.msra.mxu0 0.0
        %6178 = vmatprep.subr.mxu0 0.0
        %6179 = vmatpush1.xpose.msra.mxu0 0.0
        %6180 = vmatprep.subr.mxu0 0.0
        %6181 = vmatpush1.xpose.msra.mxu0 0.0
        %6182 = vmatprep.subr.mxu0 0.0
        %6183 = vmatpush1.xpose.msra.mxu0 0.0
        %6184 = vmatprep.subr.mxu0 0.0
        %6185 = vmatpush1.xpose.msra.mxu0 0.0
        %6186 = vmatprep.subr.mxu0 0.0
        %6187 = vmatpush1.xpose.msra.mxu0 0.0
        %6188 = vmatprep.subr.mxu0 0.0
        %6189 = vmatpush1.xpose.msra.mxu0 0.0
        %6190 = vmatprep.subr.mxu0 0.0
        %6191 = vmatpush1.xpose.msra.mxu0 0.0
        %6192 = vmatprep.subr.mxu0 0.0
        %6193 = vmatpush1.xpose.msra.mxu0 0.0
        %6194 = vmatprep.subr.mxu0 0.0
        %6195 = vmatpush1.xpose.msra.mxu0 0.0
        %6196 = vmatprep.subr.mxu0 0.0
        %6197 = vmatpush1.xpose.msra.mxu0 0.0
        %6198 = vmatprep.subr.mxu0 0.0
        %6199 = vmatpush1.xpose.msra.mxu0 0.0
        %6200 = vmatprep.subr.mxu0 0.0
        %6201 = vmatpush1.xpose.msra.mxu0 0.0
        %6202 = vmatprep.subr.mxu0 0.0
        %6203 = vmatpush1.xpose.msra.mxu0 0.0
        %6204 = vmatprep.mubr.f32.mxu0 0.0
        %6205 = vmatmul.mubr.f32.gmra.mrb[0].mxu0 %v6132
        %v6206 = vpop.f32.mrb[0].mxu0
        %v6207 = vadd.f32 0.0, %v6206
        %v6208 = vpop.f32.mrb[0].mxu0
        %6209 = vmatprep.mubr.f32.mxu0 0.0
        %6210 = vmatmul.mubr.f32.gmra.mrb[0].mxu0 %v6134
        %v6211 = vpop.f32.mrb[0].mxu0
        %v6212 = vadd.f32 0.0, %v6211
        %v6213 = vpop.f32.mrb[0].mxu0
        %6214 = vdwg.mxu0
        %v6215 = vmul.f32 %v6207, 0.17677669
        %v6216 = vmul.f32 %v6212, 0.17677669
        %v6217 = vsel %vm670, %v6215, -1e+09
        %v6218 = vsel %vm671, %v6216, -1e+09
        %v6219 = vsel %vm4144, %v6217, -inf
        %6220 = vmax.xlane.f32.xlu0 %v6219
        %v6221 = vpop.xlane.xlu0 %6220
        %v6222 = vsel %vm4148, %v6218, -inf
        %6223 = vmax.xlane.f32.xlu0 %v6222
        %v6224 = vpop.xlane.xlu0 %6223
        %v6225 = vsub.f32 %v6217, %v6221
        %v6226 = vsub.f32 %v6218, %v6224
        %v6227 = vmul.f32 %v6225, 1.442695
        %v6228 = vpow.pop %v6227
        %v6229 = vmul.f32 %v6226, 1.442695
        %v6230 = vpow.pop %v6229
        %v6231 = vsel %vm4144, %v6228, 0.0
        %6232 = vadd.xlane.f32.xlu0 %v6231
        %v6233 = vpop.xlane.xlu0 %6232
        %v6234 = vsel %vm4148, %v6230, 0.0
        %6235 = vadd.xlane.f32.xlu0 %v6234
        %v6236 = vpop.xlane.xlu0 %6235
        %v6237 = vrcp.pop %v6233
        %v6238 = vmul.f32 %v6228, %v6237
        %v6239 = vrcp.pop %v6236
        %v6240 = vmul.f32 %v6230, %v6239
        %6241 = vrot.lane.b32.xlu0 %v4050, 32
        %v6242 = vpop.permute.xlu0 %6241
        %6243 = vrot.lane.b32.xlu0 %v4052, 32
        %v6244 = vpop.permute.xlu0 %6243
        %v6248 = vsel %vm4144, %v6238, 0
        %v6251 = vsel %vm4144, %v6240, 0
        %6253 = vmatprep.subr.mxu0 0.0
        %6254 = vmatpush1.msra.mxu0 %v6242
        %6255 = vmatprep.subr.mxu0 0.0
        %6256 = vmatpush1.msra.mxu0 %v6244
        %6257 = vmatprep.subr.mxu0 0.0
        %6258 = vmatpush1.msra.mxu0 0.0
        %6259 = vmatprep.subr.mxu0 0.0
        %6260 = vmatpush1.msra.mxu0 0.0
        %6261 = vmatprep.subr.mxu0 0.0
        %6262 = vmatpush1.msra.mxu0 0.0
        %6263 = vmatprep.subr.mxu0 0.0
        %6264 = vmatpush1.msra.mxu0 0.0
        %6265 = vmatprep.subr.mxu0 0.0
        %6266 = vmatpush1.msra.mxu0 0.0
        %6267 = vmatprep.subr.mxu0 0.0
        %6268 = vmatpush1.msra.mxu0 0.0
        %6269 = vmatprep.subr.mxu0 0.0
        %6270 = vmatpush1.msra.mxu0 0.0
        %6271 = vmatprep.subr.mxu0 0.0
        %6272 = vmatpush1.msra.mxu0 0.0
        %6273 = vmatprep.subr.mxu0 0.0
        %6274 = vmatpush1.msra.mxu0 0.0
        %6275 = vmatprep.subr.mxu0 0.0
        %6276 = vmatpush1.msra.mxu0 0.0
        %6277 = vmatprep.subr.mxu0 0.0
        %6278 = vmatpush1.msra.mxu0 0.0
        %6279 = vmatprep.subr.mxu0 0.0
        %6280 = vmatpush1.msra.mxu0 0.0
        %6281 = vmatprep.subr.mxu0 0.0
        %6282 = vmatpush1.msra.mxu0 0.0
        %6283 = vmatprep.subr.mxu0 0.0
        %6284 = vmatpush1.msra.mxu0 0.0
        %6285 = vmatprep.subr.mxu0 0.0
        %6286 = vmatpush1.msra.mxu0 0.0
        %6287 = vmatprep.subr.mxu0 0.0
        %6288 = vmatpush1.msra.mxu0 0.0
        %6289 = vmatprep.subr.mxu0 0.0
        %6290 = vmatpush1.msra.mxu0 0.0
        %6291 = vmatprep.subr.mxu0 0.0
        %6292 = vmatpush1.msra.mxu0 0.0
        %6293 = vmatprep.subr.mxu0 0.0
        %6294 = vmatpush1.msra.mxu0 0.0
        %6295 = vmatprep.subr.mxu0 0.0
        %6296 = vmatpush1.msra.mxu0 0.0
        %6297 = vmatprep.subr.mxu0 0.0
        %6298 = vmatpush1.msra.mxu0 0.0
        %6299 = vmatprep.subr.mxu0 0.0
        %6300 = vmatpush1.msra.mxu0 0.0
        %6301 = vmatprep.subr.mxu0 0.0
        %6302 = vmatpush1.msra.mxu0 0.0
        %6303 = vmatprep.subr.mxu0 0.0
        %6304 = vmatpush1.msra.mxu0 0.0
        %6305 = vmatprep.subr.mxu0 0.0
        %6306 = vmatpush1.msra.mxu0 0.0
        %6307 = vmatprep.subr.mxu0 0.0
        %6308 = vmatpush1.msra.mxu0 0.0
        %6309 = vmatprep.subr.mxu0 0.0
        %6310 = vmatpush1.msra.mxu0 0.0
        %6311 = vmatprep.subr.mxu0 0.0
        %6312 = vmatpush1.msra.mxu0 0.0
        %6313 = vmatprep.subr.mxu0 0.0
        %6314 = vmatpush1.msra.mxu0 0.0
        %6315 = vmatprep.subr.mxu0 0.0
        %6316 = vmatpush1.msra.mxu0 0.0
        %6317 = vmatprep.mubr.f32.mxu0 0.0
        %6318 = vmatmul.mubr.f32.gmra.mrb[0].mxu0 %v6248
        %v6319 = vpop.f32.mrb[0].mxu0
        %v6320 = vadd.f32 0.0, %v6319
        %v6321 = vpop.f32.mrb[0].mxu0
        %6322 = vmatprep.mubr.f32.mxu0 0.0
        %6323 = vmatmul.mubr.f32.gmra.mrb[0].mxu0 %v6251
        %v6324 = vpop.f32.mrb[0].mxu0
        %v6325 = vadd.f32 0.0, %v6324
        %v6326 = vpop.f32.mrb[0].mxu0
        %6327 = vdwg.mxu0
        %v6328 = vld [vmem:[%s547 + $0xe70] sm:$0xff]
        %v6329 = vld [vmem:[%s547 + $0xe78] sm:$0xff]
        %v6330 = vld [vmem:[%s547 + $0xef0] sm:$0xff]
        %v6331 = vld [vmem:[%s547 + $0xef8] sm:$0xff]
        %v6332 = vld [vmem:[%s547 + $0xf70] sm:$0xff]
        %v6333 = vld [vmem:[%s547 + $0xf78] sm:$0xff]
        %v6334 = vld [vmem:[%s547 + $0xff0] sm:$0xff]
        %v6335 = vld [vmem:[%s547 + $0xff8] sm:$0xff]
        %v6337 = vsel %vm1139, %v6320, 0
        %v6340 = vsel %vm1139, %v6325, 0
        %6342 = vmatprep.subr.mxu0 %v6329
        %6343 = vmatpush1.msra.mxu0 %v6328
        %6344 = vmatprep.subr.mxu0 %v6331
        %6345 = vmatpush1.msra.mxu0 %v6330
        %6346 = vmatprep.subr.mxu0 %v6333
        %6347 = vmatpush1.msra.mxu0 %v6332
        %6348 = vmatprep.subr.mxu0 %v6335
        %6349 = vmatpush1.msra.mxu0 %v6334
        %6350 = vmatprep.subr.mxu0 0.0
        %6351 = vmatpush1.msra.mxu0 0.0
        %6352 = vmatprep.subr.mxu0 0.0
        %6353 = vmatpush1.msra.mxu0 0.0
        %6354 = vmatprep.subr.mxu0 0.0
        %6355 = vmatpush1.msra.mxu0 0.0
        %6356 = vmatprep.subr.mxu0 0.0
        %6357 = vmatpush1.msra.mxu0 0.0
        %6358 = vmatprep.subr.mxu0 0.0
        %6359 = vmatpush1.msra.mxu0 0.0
        %6360 = vmatprep.subr.mxu0 0.0
        %6361 = vmatpush1.msra.mxu0 0.0
        %6362 = vmatprep.subr.mxu0 0.0
        %6363 = vmatpush1.msra.mxu0 0.0
        %6364 = vmatprep.subr.mxu0 0.0
        %6365 = vmatpush1.msra.mxu0 0.0
        %6366 = vmatprep.subr.mxu0 0.0
        %6367 = vmatpush1.msra.mxu0 0.0
        %6368 = vmatprep.subr.mxu0 0.0
        %6369 = vmatpush1.msra.mxu0 0.0
        %6370 = vmatprep.subr.mxu0 0.0
        %6371 = vmatpush1.msra.mxu0 0.0
        %6372 = vmatprep.subr.mxu0 0.0
        %6373 = vmatpush1.msra.mxu0 0.0
        %6374 = vmatprep.subr.mxu0 0.0
        %6375 = vmatpush1.msra.mxu0 0.0
        %6376 = vmatprep.subr.mxu0 0.0
        %6377 = vmatpush1.msra.mxu0 0.0
        %6378 = vmatprep.subr.mxu0 0.0
        %6379 = vmatpush1.msra.mxu0 0.0
        %6380 = vmatprep.subr.mxu0 0.0
        %6381 = vmatpush1.msra.mxu0 0.0
        %6382 = vmatprep.subr.mxu0 0.0
        %6383 = vmatpush1.msra.mxu0 0.0
        %6384 = vmatprep.subr.mxu0 0.0
        %6385 = vmatpush1.msra.mxu0 0.0
        %6386 = vmatprep.subr.mxu0 0.0
        %6387 = vmatpush1.msra.mxu0 0.0
        %6388 = vmatprep.subr.mxu0 0.0
        %6389 = vmatpush1.msra.mxu0 0.0
        %6390 = vmatprep.subr.mxu0 0.0
        %6391 = vmatpush1.msra.mxu0 0.0
        %6392 = vmatprep.subr.mxu0 0.0
        %6393 = vmatpush1.msra.mxu0 0.0
        %6394 = vmatprep.subr.mxu0 0.0
        %6395 = vmatpush1.msra.mxu0 0.0
        %6396 = vmatprep.subr.mxu0 0.0
        %6397 = vmatpush1.msra.mxu0 0.0
        %6398 = vmatprep.subr.mxu0 0.0
        %6399 = vmatpush1.msra.mxu0 0.0
        %6400 = vmatprep.subr.mxu0 0.0
        %6401 = vmatpush1.msra.mxu0 0.0
        %6402 = vmatprep.subr.mxu0 0.0
        %6403 = vmatpush1.msra.mxu0 0.0
        %6404 = vmatprep.subr.mxu0 0.0
        %6405 = vmatpush1.msra.mxu0 0.0
        %6406 = vmatprep.mubr.f32.mxu0 0.0
        %6407 = vmatmul.mubr.f32.gmra.mrb[0].mxu0 %v6337
        %v6408 = vpop.f32.mrb[0].mxu0
        %v6409 = vadd.f32 0.0, %v6408
        %v6410 = vpop.f32.mrb[0].mxu0
        %v6411 = vadd.f32 0.0, %v6410
        %6412 = vmatprep.mubr.f32.mxu0 0.0
        %6413 = vmatmul.mubr.f32.gmra.mrb[0].mxu0 %v6340
        %v6414 = vpop.f32.mrb[0].mxu0
        %v6415 = vadd.f32 0.0, %v6414
        %v6416 = vpop.f32.mrb[0].mxu0
        %v6417 = vadd.f32 0.0, %v6416
        %6418 = vdwg.mxu0
        %v6419 = vadd.f32 %v6120, %v6409
        %v6420 = vadd.f32 %v6121, %v6411
        %v6421 = vadd.f32 %v6122, %v6415
        %v6422 = vadd.f32 %v6123, %v6417
        %v6423 = vlaneseq
        %v6424 = vshrl.u32 %v6423, 7
        %v6425 = vsub.s32 7, %v6424
        %v6426 = vrot.slane %v659, %v6425
        %v6427 = vlaneseq
        %v6428 = vshrl.u32 %v6427, 7
        %v6429 = vsub.s32 7, %v6428
        %v6430 = vrot.slane %v660, %v6429
        %v6431 = vadd.f32 %v6419, %v6426
        %v6432 = vadd.f32 %v6420, %v6430
        %v6433 = vadd.f32 %v6421, %v6426
        %v6434 = vadd.f32 %v6422, %v6430
        %v6435 = vadd.f32 %v3594, %v6431
        %v6436 = vadd.f32 %v3595, %v6432
        %v6437 = vadd.f32 %v3596, %v6433
        %v6438 = vadd.f32 %v3597, %v6434
        %v6439 = vadd.f32 %v6435, %v6436
        %6440 = vadd.xlane.f32.xlu0 %v6439
        %v6441 = vpop.xlane.xlu0 %6440
        %v6442 = vsel %vm1261, %v6437, 0.0
        %v6443 = vsel %vm1261, %v6438, 0.0
        %v6444 = vadd.f32 %v6442, %v6443
        %6445 = vadd.xlane.f32.xlu0 %v6444
        %v6446 = vpop.xlane.xlu0 %6445
        %v6447 = vmul.f32 %v6441, %v3545
        %v6448 = vmul.f32 %v6446, %v3545
        %v6449 = vsub.f32 %v6435, %v6447
        %v6450 = vsub.f32 %v6436, %v6447
        %v6451 = vsub.f32 %v6437, %v6448
        %v6452 = vsub.f32 %v6438, %v6448
        %v6453 = vmul.f32 %v6449, %v6449
        %v6454 = vmul.f32 %v6450, %v6450
        %v6455 = vmul.f32 %v6451, %v6451
        %v6456 = vmul.f32 %v6452, %v6452
        %v6457 = vadd.f32 %v6453, %v6454
        %6458 = vadd.xlane.f32.xlu0 %v6457
        %v6459 = vpop.xlane.xlu0 %6458
        %v6460 = vsel %vm1261, %v6455, 0.0
        %v6461 = vsel %vm1261, %v6456, 0.0
        %v6462 = vadd.f32 %v6460, %v6461
        %6463 = vadd.xlane.f32.xlu0 %v6462
        %v6464 = vpop.xlane.xlu0 %6463
        %v6465 = vmul.f32 %v6459, %v3545
        %v6466 = vmul.f32 %v6464, %v3545
        %v6467 = vadd.f32 %v6465, 1e-05
        %v6468 = vadd.f32 %v6466, 1e-05
        %v6469 = vrsqrt.pop %v6467
        %v6470 = vrsqrt.pop %v6468
        %v6471 = vmul.f32 %v6449, %v6469
        %v6472 = vmul.f32 %v6450, %v6469
        %v6473 = vmul.f32 %v6451, %v6470
        %v6474 = vmul.f32 %v6452, %v6470
        %v6475 = vlaneseq
        %v6476 = vshrl.u32 %v6475, 7
        %v6477 = vsub.s32 2, %v6476
        %v6478 = vrot.slane %v661, %v6477
        %v6479 = vlaneseq
        %v6480 = vshrl.u32 %v6479, 7
        %v6481 = vsub.s32 2, %v6480
        %v6482 = vrot.slane %v662, %v6481
        %v6483 = vmul.f32 %v6471, %v6478
        %v6484 = vmul.f32 %v6472, %v6482
        %v6485 = vmul.f32 %v6473, %v6478
        %v6486 = vmul.f32 %v6474, %v6482
        %v6487 = vlaneseq
        %v6488 = vshrl.u32 %v6487, 7
        %v6489 = vsub.s32 3, %v6488
        %v6490 = vrot.slane %v661, %v6489
        %v6491 = vlaneseq
        %v6492 = vshrl.u32 %v6491, 7
        %v6493 = vsub.s32 3, %v6492
        %v6494 = vrot.slane %v662, %v6493
        %v6495 = vadd.f32 %v6483, %v6490
        %v6496 = vadd.f32 %v6484, %v6494
        %v6497 = vadd.f32 %v6485, %v6490
        %v6498 = vadd.f32 %v6486, %v6494
        %v6499 = vld [vmem:[%s556] sm:$0xff]
        %v6500 = vld [vmem:[%s556 + $0x8] sm:$0xff]
        %v6501 = vld [vmem:[%s556 + $0x10] sm:$0xff]
        %v6502 = vld [vmem:[%s556 + $0x18] sm:$0xff]
        %v6503 = vld [vmem:[%s556 + $0x20] sm:$0xff]
        %v6504 = vld [vmem:[%s556 + $0x28] sm:$0xff]
        %v6505 = vld [vmem:[%s556 + $0x30] sm:$0xff]
        %v6506 = vld [vmem:[%s556 + $0x38] sm:$0xff]
        %v6507 = vld [vmem:[%s556 + $0x40] sm:$0xff]
        %v6508 = vld [vmem:[%s556 + $0x48] sm:$0xff]
        %v6509 = vld [vmem:[%s556 + $0x50] sm:$0xff]
        %v6510 = vld [vmem:[%s556 + $0x58] sm:$0xff]
        %v6511 = vld [vmem:[%s556 + $0x60] sm:$0xff]
        %v6512 = vld [vmem:[%s556 + $0x68] sm:$0xff]
        %v6513 = vld [vmem:[%s556 + $0x70] sm:$0xff]
        %v6514 = vld [vmem:[%s556 + $0x78] sm:$0xff]
        %v6515 = vld [vmem:[%s556 + $0x80] sm:$0xff]
        %v6516 = vld [vmem:[%s556 + $0x88] sm:$0xff]
        %v6517 = vld [vmem:[%s556 + $0x90] sm:$0xff]
        %v6518 = vld [vmem:[%s556 + $0x98] sm:$0xff]
        %v6519 = vld [vmem:[%s556 + $0xa0] sm:$0xff]
        %v6520 = vld [vmem:[%s556 + $0xa8] sm:$0xff]
        %v6521 = vld [vmem:[%s556 + $0xb0] sm:$0xff]
        %v6522 = vld [vmem:[%s556 + $0xb8] sm:$0xff]
        %v6523 = vld [vmem:[%s556 + $0xc0] sm:$0xff]
        %v6524 = vld [vmem:[%s556 + $0xc8] sm:$0xff]
        %v6525 = vld [vmem:[%s556 + $0xd0] sm:$0xff]
        %v6526 = vld [vmem:[%s556 + $0xd8] sm:$0xff]
        %v6527 = vld [vmem:[%s556 + $0xe0] sm:$0xff]
        %v6528 = vld [vmem:[%s556 + $0xe8] sm:$0xff]
        %v6529 = vld [vmem:[%s556 + $0xf0] sm:$0xff]
        %v6530 = vld [vmem:[%s556 + $0xf8] sm:$0xff]
        %v6531 = vld [vmem:[%s556 + $0x100] sm:$0xff]
        %v6532 = vld [vmem:[%s556 + $0x108] sm:$0xff]
        %v6533 = vld [vmem:[%s556 + $0x110] sm:$0xff]
        %v6534 = vld [vmem:[%s556 + $0x118] sm:$0xff]
        %v6535 = vld [vmem:[%s556 + $0x120] sm:$0xff]
        %v6536 = vld [vmem:[%s556 + $0x128] sm:$0xff]
        %v6537 = vld [vmem:[%s556 + $0x130] sm:$0xff]
        %v6538 = vld [vmem:[%s556 + $0x138] sm:$0xff]
        %v6539 = vld [vmem:[%s556 + $0x140] sm:$0xff]
        %v6540 = vld [vmem:[%s556 + $0x148] sm:$0xff]
        %v6541 = vld [vmem:[%s556 + $0x150] sm:$0xff]
        %v6542 = vld [vmem:[%s556 + $0x158] sm:$0xff]
        %v6543 = vld [vmem:[%s556 + $0x160] sm:$0xff]
        %v6544 = vld [vmem:[%s556 + $0x168] sm:$0xff]
        %v6545 = vld [vmem:[%s556 + $0x170] sm:$0xff]
        %v6546 = vld [vmem:[%s556 + $0x178] sm:$0xff]
        %v6547 = vld [vmem:[%s556 + $0x180] sm:$0xff]
        %v6548 = vld [vmem:[%s556 + $0x188] sm:$0xff]
        %v6549 = vld [vmem:[%s556 + $0x190] sm:$0xff]
        %v6550 = vld [vmem:[%s556 + $0x198] sm:$0xff]
        %v6551 = vld [vmem:[%s556 + $0x1a0] sm:$0xff]
        %v6552 = vld [vmem:[%s556 + $0x1a8] sm:$0xff]
        %v6553 = vld [vmem:[%s556 + $0x1b0] sm:$0xff]
        %v6554 = vld [vmem:[%s556 + $0x1b8] sm:$0xff]
        %v6555 = vld [vmem:[%s556 + $0x1c0] sm:$0xff]
        %v6556 = vld [vmem:[%s556 + $0x1c8] sm:$0xff]
        %v6557 = vld [vmem:[%s556 + $0x1d0] sm:$0xff]
        %v6558 = vld [vmem:[%s556 + $0x1d8] sm:$0xff]
        %v6559 = vld [vmem:[%s556 + $0x1e0] sm:$0xff]
        %v6560 = vld [vmem:[%s556 + $0x1e8] sm:$0xff]
        %v6561 = vld [vmem:[%s556 + $0x1f0] sm:$0xff]
        %v6562 = vld [vmem:[%s556 + $0x1f8] sm:$0xff]
        %v6563 = vld [vmem:[%s556 + $0x200] sm:$0xff]
        %v6564 = vld [vmem:[%s556 + $0x208] sm:$0xff]
        %v6565 = vld [vmem:[%s556 + $0x210] sm:$0xff]
        %v6566 = vld [vmem:[%s556 + $0x218] sm:$0xff]
        %v6567 = vld [vmem:[%s556 + $0x220] sm:$0xff]
        %v6568 = vld [vmem:[%s556 + $0x228] sm:$0xff]
        %v6569 = vld [vmem:[%s556 + $0x230] sm:$0xff]
        %v6570 = vld [vmem:[%s556 + $0x238] sm:$0xff]
        %v6571 = vld [vmem:[%s556 + $0x240] sm:$0xff]
        %v6572 = vld [vmem:[%s556 + $0x248] sm:$0xff]
        %v6573 = vld [vmem:[%s556 + $0x250] sm:$0xff]
        %v6574 = vld [vmem:[%s556 + $0x258] sm:$0xff]
        %v6575 = vld [vmem:[%s556 + $0x260] sm:$0xff]
        %v6576 = vld [vmem:[%s556 + $0x268] sm:$0xff]
        %v6577 = vld [vmem:[%s556 + $0x270] sm:$0xff]
        %v6578 = vld [vmem:[%s556 + $0x278] sm:$0xff]
        %v6579 = vld [vmem:[%s556 + $0x280] sm:$0xff]
        %v6580 = vld [vmem:[%s556 + $0x288] sm:$0xff]
        %v6581 = vld [vmem:[%s556 + $0x290] sm:$0xff]
        %v6582 = vld [vmem:[%s556 + $0x298] sm:$0xff]
        %v6583 = vld [vmem:[%s556 + $0x2a0] sm:$0xff]
        %v6584 = vld [vmem:[%s556 + $0x2a8] sm:$0xff]
        %v6585 = vld [vmem:[%s556 + $0x2b0] sm:$0xff]
        %v6586 = vld [vmem:[%s556 + $0x2b8] sm:$0xff]
        %v6587 = vld [vmem:[%s556 + $0x2c0] sm:$0xff]
        %v6588 = vld [vmem:[%s556 + $0x2c8] sm:$0xff]
        %v6589 = vld [vmem:[%s556 + $0x2d0] sm:$0xff]
        %v6590 = vld [vmem:[%s556 + $0x2d8] sm:$0xff]
        %v6591 = vld [vmem:[%s556 + $0x2e0] sm:$0xff]
        %v6592 = vld [vmem:[%s556 + $0x2e8] sm:$0xff]
        %v6593 = vld [vmem:[%s556 + $0x2f0] sm:$0xff]
        %v6594 = vld [vmem:[%s556 + $0x2f8] sm:$0xff]
        %v6595 = vld [vmem:[%s556 + $0x300] sm:$0xff]
        %v6596 = vld [vmem:[%s556 + $0x308] sm:$0xff]
        %v6597 = vld [vmem:[%s556 + $0x310] sm:$0xff]
        %v6598 = vld [vmem:[%s556 + $0x318] sm:$0xff]
        %v6599 = vld [vmem:[%s556 + $0x320] sm:$0xff]
        %v6600 = vld [vmem:[%s556 + $0x328] sm:$0xff]
        %v6601 = vld [vmem:[%s556 + $0x330] sm:$0xff]
        %v6602 = vld [vmem:[%s556 + $0x338] sm:$0xff]
        %v6603 = vld [vmem:[%s556 + $0x340] sm:$0xff]
        %v6604 = vld [vmem:[%s556 + $0x348] sm:$0xff]
        %v6605 = vld [vmem:[%s556 + $0x350] sm:$0xff]
        %v6606 = vld [vmem:[%s556 + $0x358] sm:$0xff]
        %v6607 = vld [vmem:[%s556 + $0x360] sm:$0xff]
        %v6608 = vld [vmem:[%s556 + $0x368] sm:$0xff]
        %v6609 = vld [vmem:[%s556 + $0x370] sm:$0xff]
        %v6610 = vld [vmem:[%s556 + $0x378] sm:$0xff]
        %v6611 = vld [vmem:[%s556 + $0x380] sm:$0xff]
        %v6612 = vld [vmem:[%s556 + $0x388] sm:$0xff]
        %v6613 = vld [vmem:[%s556 + $0x390] sm:$0xff]
        %v6614 = vld [vmem:[%s556 + $0x398] sm:$0xff]
        %v6615 = vld [vmem:[%s556 + $0x3a0] sm:$0xff]
        %v6616 = vld [vmem:[%s556 + $0x3a8] sm:$0xff]
        %v6617 = vld [vmem:[%s556 + $0x3b0] sm:$0xff]
        %v6618 = vld [vmem:[%s556 + $0x3b8] sm:$0xff]
        %v6619 = vld [vmem:[%s556 + $0x3c0] sm:$0xff]
        %v6620 = vld [vmem:[%s556 + $0x3c8] sm:$0xff]
        %v6621 = vld [vmem:[%s556 + $0x3d0] sm:$0xff]
        %v6622 = vld [vmem:[%s556 + $0x3d8] sm:$0xff]
        %v6623 = vld [vmem:[%s556 + $0x3e0] sm:$0xff]
        %v6624 = vld [vmem:[%s556 + $0x3e8] sm:$0xff]
        %v6625 = vld [vmem:[%s556 + $0x3f0] sm:$0xff]
        %v6626 = vld [vmem:[%s556 + $0x3f8] sm:$0xff]
        %v6627 = vld [vmem:[%s556 + $0x400] sm:$0xff]
        %v6628 = vld [vmem:[%s556 + $0x408] sm:$0xff]
        %v6629 = vld [vmem:[%s556 + $0x410] sm:$0xff]
        %v6630 = vld [vmem:[%s556 + $0x418] sm:$0xff]
        %v6631 = vld [vmem:[%s556 + $0x420] sm:$0xff]
        %v6632 = vld [vmem:[%s556 + $0x428] sm:$0xff]
        %v6633 = vld [vmem:[%s556 + $0x430] sm:$0xff]
        %v6634 = vld [vmem:[%s556 + $0x438] sm:$0xff]
        %v6635 = vld [vmem:[%s556 + $0x440] sm:$0xff]
        %v6636 = vld [vmem:[%s556 + $0x448] sm:$0xff]
        %v6637 = vld [vmem:[%s556 + $0x450] sm:$0xff]
        %v6638 = vld [vmem:[%s556 + $0x458] sm:$0xff]
        %v6639 = vld [vmem:[%s556 + $0x460] sm:$0xff]
        %v6640 = vld [vmem:[%s556 + $0x468] sm:$0xff]
        %v6641 = vld [vmem:[%s556 + $0x470] sm:$0xff]
        %v6642 = vld [vmem:[%s556 + $0x478] sm:$0xff]
        %v6643 = vld [vmem:[%s556 + $0x480] sm:$0xff]
        %v6644 = vld [vmem:[%s556 + $0x488] sm:$0xff]
        %v6645 = vld [vmem:[%s556 + $0x490] sm:$0xff]
        %v6646 = vld [vmem:[%s556 + $0x498] sm:$0xff]
        %v6647 = vld [vmem:[%s556 + $0x4a0] sm:$0xff]
        %v6648 = vld [vmem:[%s556 + $0x4a8] sm:$0xff]
        %v6649 = vld [vmem:[%s556 + $0x4b0] sm:$0xff]
        %v6650 = vld [vmem:[%s556 + $0x4b8] sm:$0xff]
        %v6651 = vld [vmem:[%s556 + $0x4c0] sm:$0xff]
        %v6652 = vld [vmem:[%s556 + $0x4c8] sm:$0xff]
        %v6653 = vld [vmem:[%s556 + $0x4d0] sm:$0xff]
        %v6654 = vld [vmem:[%s556 + $0x4d8] sm:$0xff]
        %v6655 = vld [vmem:[%s556 + $0x4e0] sm:$0xff]
        %v6656 = vld [vmem:[%s556 + $0x4e8] sm:$0xff]
        %v6657 = vld [vmem:[%s556 + $0x4f0] sm:$0xff]
        %v6658 = vld [vmem:[%s556 + $0x4f8] sm:$0xff]
        %v6659 = vld [vmem:[%s556 + $0x500] sm:$0xff]
        %v6660 = vld [vmem:[%s556 + $0x508] sm:$0xff]
        %v6661 = vld [vmem:[%s556 + $0x510] sm:$0xff]
        %v6662 = vld [vmem:[%s556 + $0x518] sm:$0xff]
        %v6663 = vld [vmem:[%s556 + $0x520] sm:$0xff]
        %v6664 = vld [vmem:[%s556 + $0x528] sm:$0xff]
        %v6665 = vld [vmem:[%s556 + $0x530] sm:$0xff]
        %v6666 = vld [vmem:[%s556 + $0x538] sm:$0xff]
        %v6667 = vld [vmem:[%s556 + $0x540] sm:$0xff]
        %v6668 = vld [vmem:[%s556 + $0x548] sm:$0xff]
        %v6669 = vld [vmem:[%s556 + $0x550] sm:$0xff]
        %v6670 = vld [vmem:[%s556 + $0x558] sm:$0xff]
        %v6671 = vld [vmem:[%s556 + $0x560] sm:$0xff]
        %v6672 = vld [vmem:[%s556 + $0x568] sm:$0xff]
        %v6673 = vld [vmem:[%s556 + $0x570] sm:$0xff]
        %v6674 = vld [vmem:[%s556 + $0x578] sm:$0xff]
        %v6675 = vld [vmem:[%s556 + $0x580] sm:$0xff]
        %v6676 = vld [vmem:[%s556 + $0x588] sm:$0xff]
        %v6677 = vld [vmem:[%s556 + $0x590] sm:$0xff]
        %v6678 = vld [vmem:[%s556 + $0x598] sm:$0xff]
        %v6679 = vld [vmem:[%s556 + $0x5a0] sm:$0xff]
        %v6680 = vld [vmem:[%s556 + $0x5a8] sm:$0xff]
        %v6681 = vld [vmem:[%s556 + $0x5b0] sm:$0xff]
        %v6682 = vld [vmem:[%s556 + $0x5b8] sm:$0xff]
        %v6683 = vld [vmem:[%s556 + $0x5c0] sm:$0xff]
        %v6684 = vld [vmem:[%s556 + $0x5c8] sm:$0xff]
        %v6685 = vld [vmem:[%s556 + $0x5d0] sm:$0xff]
        %v6686 = vld [vmem:[%s556 + $0x5d8] sm:$0xff]
        %v6687 = vld [vmem:[%s556 + $0x5e0] sm:$0xff]
        %v6688 = vld [vmem:[%s556 + $0x5e8] sm:$0xff]
        %v6689 = vld [vmem:[%s556 + $0x5f0] sm:$0xff]
        %v6690 = vld [vmem:[%s556 + $0x5f8] sm:$0xff]
        %v6691 = vld [vmem:[%s556 + $0x600] sm:$0xff]
        %v6692 = vld [vmem:[%s556 + $0x608] sm:$0xff]
        %v6693 = vld [vmem:[%s556 + $0x610] sm:$0xff]
        %v6694 = vld [vmem:[%s556 + $0x618] sm:$0xff]
        %v6695 = vld [vmem:[%s556 + $0x620] sm:$0xff]
        %v6696 = vld [vmem:[%s556 + $0x628] sm:$0xff]
        %v6697 = vld [vmem:[%s556 + $0x630] sm:$0xff]
        %v6698 = vld [vmem:[%s556 + $0x638] sm:$0xff]
        %v6699 = vld [vmem:[%s556 + $0x640] sm:$0xff]
        %v6700 = vld [vmem:[%s556 + $0x648] sm:$0xff]
        %v6701 = vld [vmem:[%s556 + $0x650] sm:$0xff]
        %v6702 = vld [vmem:[%s556 + $0x658] sm:$0xff]
        %v6703 = vld [vmem:[%s556 + $0x660] sm:$0xff]
        %v6704 = vld [vmem:[%s556 + $0x668] sm:$0xff]
        %v6705 = vld [vmem:[%s556 + $0x670] sm:$0xff]
        %v6706 = vld [vmem:[%s556 + $0x678] sm:$0xff]
        %v6707 = vld [vmem:[%s556 + $0x680] sm:$0xff]
        %v6708 = vld [vmem:[%s556 + $0x688] sm:$0xff]
        %v6709 = vld [vmem:[%s556 + $0x690] sm:$0xff]
        %v6710 = vld [vmem:[%s556 + $0x698] sm:$0xff]
        %v6711 = vld [vmem:[%s556 + $0x6a0] sm:$0xff]
        %v6712 = vld [vmem:[%s556 + $0x6a8] sm:$0xff]
        %v6713 = vld [vmem:[%s556 + $0x6b0] sm:$0xff]
        %v6714 = vld [vmem:[%s556 + $0x6b8] sm:$0xff]
        %v6715 = vld [vmem:[%s556 + $0x6c0] sm:$0xff]
        %v6716 = vld [vmem:[%s556 + $0x6c8] sm:$0xff]
        %v6717 = vld [vmem:[%s556 + $0x6d0] sm:$0xff]
        %v6718 = vld [vmem:[%s556 + $0x6d8] sm:$0xff]
        %v6719 = vld [vmem:[%s556 + $0x6e0] sm:$0xff]
        %v6720 = vld [vmem:[%s556 + $0x6e8] sm:$0xff]
        %v6721 = vld [vmem:[%s556 + $0x6f0] sm:$0xff]
        %v6722 = vld [vmem:[%s556 + $0x6f8] sm:$0xff]
        %v6723 = vld [vmem:[%s556 + $0x700] sm:$0xff]
        %v6724 = vld [vmem:[%s556 + $0x708] sm:$0xff]
        %v6725 = vld [vmem:[%s556 + $0x710] sm:$0xff]
        %v6726 = vld [vmem:[%s556 + $0x718] sm:$0xff]
        %v6727 = vld [vmem:[%s556 + $0x720] sm:$0xff]
        %v6728 = vld [vmem:[%s556 + $0x728] sm:$0xff]
        %v6729 = vld [vmem:[%s556 + $0x730] sm:$0xff]
        %v6730 = vld [vmem:[%s556 + $0x738] sm:$0xff]
        %v6731 = vld [vmem:[%s556 + $0x740] sm:$0xff]
        %v6732 = vld [vmem:[%s556 + $0x748] sm:$0xff]
        %v6733 = vld [vmem:[%s556 + $0x750] sm:$0xff]
        %v6734 = vld [vmem:[%s556 + $0x758] sm:$0xff]
        %v6735 = vld [vmem:[%s556 + $0x760] sm:$0xff]
        %v6736 = vld [vmem:[%s556 + $0x768] sm:$0xff]
        %v6737 = vld [vmem:[%s556 + $0x770] sm:$0xff]
        %v6738 = vld [vmem:[%s556 + $0x778] sm:$0xff]
        %v6739 = vld [vmem:[%s556 + $0x780] sm:$0xff]
        %v6740 = vld [vmem:[%s556 + $0x788] sm:$0xff]
        %v6741 = vld [vmem:[%s556 + $0x790] sm:$0xff]
        %v6742 = vld [vmem:[%s556 + $0x798] sm:$0xff]
        %v6743 = vld [vmem:[%s556 + $0x7a0] sm:$0xff]
        %v6744 = vld [vmem:[%s556 + $0x7a8] sm:$0xff]
        %v6745 = vld [vmem:[%s556 + $0x7b0] sm:$0xff]
        %v6746 = vld [vmem:[%s556 + $0x7b8] sm:$0xff]
        %v6747 = vld [vmem:[%s556 + $0x7c0] sm:$0xff]
        %v6748 = vld [vmem:[%s556 + $0x7c8] sm:$0xff]
        %v6749 = vld [vmem:[%s556 + $0x7d0] sm:$0xff]
        %v6750 = vld [vmem:[%s556 + $0x7d8] sm:$0xff]
        %v6751 = vld [vmem:[%s556 + $0x7e0] sm:$0xff]
        %v6752 = vld [vmem:[%s556 + $0x7e8] sm:$0xff]
        %v6753 = vld [vmem:[%s556 + $0x7f0] sm:$0xff]
        %v6754 = vld [vmem:[%s556 + $0x7f8] sm:$0xff]
        %v6756 = vlaneseq
        %v6757 = vshrl.u32 %v6756, 7
        %v6758 = vsub.s32 0, %v6757
        %v6759 = vrot.slane %v663, %v6758
        %v6760 = vlaneseq
        %v6761 = vshrl.u32 %v6760, 7
        %v6762 = vsub.s32 1, %v6761
        %v6763 = vrot.slane %v663, %v6762
        %v6764 = vlaneseq
        %v6765 = vshrl.u32 %v6764, 7
        %v6766 = vsub.s32 2, %v6765
        %v6767 = vrot.slane %v663, %v6766
        %v6768 = vlaneseq
        %v6769 = vshrl.u32 %v6768, 7
        %v6770 = vsub.s32 3, %v6769
        %v6771 = vrot.slane %v663, %v6770
        %v6772 = vlaneseq
        %v6773 = vshrl.u32 %v6772, 7
        %v6774 = vsub.s32 4, %v6773
        %v6775 = vrot.slane %v663, %v6774
        %v6776 = vlaneseq
        %v6777 = vshrl.u32 %v6776, 7
        %v6778 = vsub.s32 5, %v6777
        %v6779 = vrot.slane %v663, %v6778
        %v6780 = vlaneseq
        %v6781 = vshrl.u32 %v6780, 7
        %v6782 = vsub.s32 6, %v6781
        %v6783 = vrot.slane %v663, %v6782
        %v6784 = vlaneseq
        %v6785 = vshrl.u32 %v6784, 7
        %v6786 = vsub.s32 7, %v6785
        %v6787 = vrot.slane %v663, %v6786
        %6796 = vmatprep.subr.mxu0 %v6500
        %6797 = vmatpush1.msra.mxu0 %v6499
        %6798 = vmatprep.subr.mxu0 %v6508
        %6799 = vmatpush1.msra.mxu0 %v6507
        %6800 = vmatprep.subr.mxu0 %v6516
        %6801 = vmatpush1.msra.mxu0 %v6515
        %6802 = vmatprep.subr.mxu0 %v6524
        %6803 = vmatpush1.msra.mxu0 %v6523
        %6804 = vmatprep.subr.mxu0 %v6532
        %6805 = vmatpush1.msra.mxu0 %v6531
        %6806 = vmatprep.subr.mxu0 %v6540
        %6807 = vmatpush1.msra.mxu0 %v6539
        %6808 = vmatprep.subr.mxu0 %v6548
        %6809 = vmatpush1.msra.mxu0 %v6547
        %6810 = vmatprep.subr.mxu0 %v6556
        %6811 = vmatpush1.msra.mxu0 %v6555
        %6812 = vmatprep.subr.mxu0 %v6564
        %6813 = vmatpush1.msra.mxu0 %v6563
        %6814 = vmatprep.subr.mxu0 %v6572
        %6815 = vmatpush1.msra.mxu0 %v6571
        %6816 = vmatprep.subr.mxu0 %v6580
        %6817 = vmatpush1.msra.mxu0 %v6579
        %6818 = vmatprep.subr.mxu0 %v6588
        %6819 = vmatpush1.msra.mxu0 %v6587
        %6820 = vmatprep.subr.mxu0 %v6596
        %6821 = vmatpush1.msra.mxu0 %v6595
        %6822 = vmatprep.subr.mxu0 %v6604
        %6823 = vmatpush1.msra.mxu0 %v6603
        %6824 = vmatprep.subr.mxu0 %v6612
        %6825 = vmatpush1.msra.mxu0 %v6611
        %6826 = vmatprep.subr.mxu0 %v6620
        %6827 = vmatpush1.msra.mxu0 %v6619
        %6828 = vmatprep.subr.mxu0 %v6628
        %6829 = vmatpush1.msra.mxu0 %v6627
        %6830 = vmatprep.subr.mxu0 %v6636
        %6831 = vmatpush1.msra.mxu0 %v6635
        %6832 = vmatprep.subr.mxu0 %v6644
        %6833 = vmatpush1.msra.mxu0 %v6643
        %6834 = vmatprep.subr.mxu0 %v6652
        %6835 = vmatpush1.msra.mxu0 %v6651
        %6836 = vmatprep.subr.mxu0 %v6660
        %6837 = vmatpush1.msra.mxu0 %v6659
        %6838 = vmatprep.subr.mxu0 %v6668
        %6839 = vmatpush1.msra.mxu0 %v6667
        %6840 = vmatprep.subr.mxu0 %v6676
        %6841 = vmatpush1.msra.mxu0 %v6675
        %6842 = vmatprep.subr.mxu0 %v6684
        %6843 = vmatpush1.msra.mxu0 %v6683
        %6844 = vmatprep.subr.mxu0 %v6692
        %6845 = vmatpush1.msra.mxu0 %v6691
        %6846 = vmatprep.subr.mxu0 %v6700
        %6847 = vmatpush1.msra.mxu0 %v6699
        %6848 = vmatprep.subr.mxu0 %v6708
        %6849 = vmatpush1.msra.mxu0 %v6707
        %6850 = vmatprep.subr.mxu0 %v6716
        %6851 = vmatpush1.msra.mxu0 %v6715
        %6852 = vmatprep.subr.mxu0 %v6724
        %6853 = vmatpush1.msra.mxu0 %v6723
        %6854 = vmatprep.subr.mxu0 %v6732
        %6855 = vmatpush1.msra.mxu0 %v6731
        %6856 = vmatprep.subr.mxu0 %v6740
        %6857 = vmatpush1.msra.mxu0 %v6739
        %6858 = vmatprep.subr.mxu0 %v6748
        %6859 = vmatpush1.msra.mxu0 %v6747
        %6860 = vmatprep.mubr.f32.mxu0 %v6496
        %6861 = vmatmul.mubr.f32.gmra.mrb[0].mxu0 %v6495
        %v6862 = vpop.f32.mrb[0].mxu0
        %v6863 = vadd.f32 %v6759, %v6862
        %v6864 = vpop.f32.mrb[0].mxu0
        %v6865 = vadd.f32 %v6763, %v6864
        %6866 = vmatprep.mubr.f32.mxu0 %v6498
        %6867 = vmatmul.mubr.f32.gmra.mrb[0].mxu0 %v6497
        %v6868 = vpop.f32.mrb[0].mxu0
        %v6869 = vadd.f32 %v6759, %v6868
        %v6870 = vpop.f32.mrb[0].mxu0
        %v6871 = vadd.f32 %v6763, %v6870
        %6872 = vdwg.mxu0
        %6873 = vmatprep.subr.mxu0 %v6502
        %6874 = vmatpush1.msra.mxu0 %v6501
        %6875 = vmatprep.subr.mxu0 %v6510
        %6876 = vmatpush1.msra.mxu0 %v6509
        %6877 = vmatprep.subr.mxu0 %v6518
        %6878 = vmatpush1.msra.mxu0 %v6517
        %6879 = vmatprep.subr.mxu0 %v6526
        %6880 = vmatpush1.msra.mxu0 %v6525
        %6881 = vmatprep.subr.mxu0 %v6534
        %6882 = vmatpush1.msra.mxu0 %v6533
        %6883 = vmatprep.subr.mxu0 %v6542
        %6884 = vmatpush1.msra.mxu0 %v6541
        %6885 = vmatprep.subr.mxu0 %v6550
        %6886 = vmatpush1.msra.mxu0 %v6549
        %6887 = vmatprep.subr.mxu0 %v6558
        %6888 = vmatpush1.msra.mxu0 %v6557
        %6889 = vmatprep.subr.mxu0 %v6566
        %6890 = vmatpush1.msra.mxu0 %v6565
        %6891 = vmatprep.subr.mxu0 %v6574
        %6892 = vmatpush1.msra.mxu0 %v6573
        %6893 = vmatprep.subr.mxu0 %v6582
        %6894 = vmatpush1.msra.mxu0 %v6581
        %6895 = vmatprep.subr.mxu0 %v6590
        %6896 = vmatpush1.msra.mxu0 %v6589
        %6897 = vmatprep.subr.mxu0 %v6598
        %6898 = vmatpush1.msra.mxu0 %v6597
        %6899 = vmatprep.subr.mxu0 %v6606
        %6900 = vmatpush1.msra.mxu0 %v6605
        %6901 = vmatprep.subr.mxu0 %v6614
        %6902 = vmatpush1.msra.mxu0 %v6613
        %6903 = vmatprep.subr.mxu0 %v6622
        %6904 = vmatpush1.msra.mxu0 %v6621
        %6905 = vmatprep.subr.mxu0 %v6630
        %6906 = vmatpush1.msra.mxu0 %v6629
        %6907 = vmatprep.subr.mxu0 %v6638
        %6908 = vmatpush1.msra.mxu0 %v6637
        %6909 = vmatprep.subr.mxu0 %v6646
        %6910 = vmatpush1.msra.mxu0 %v6645
        %6911 = vmatprep.subr.mxu0 %v6654
        %6912 = vmatpush1.msra.mxu0 %v6653
        %6913 = vmatprep.subr.mxu0 %v6662
        %6914 = vmatpush1.msra.mxu0 %v6661
        %6915 = vmatprep.subr.mxu0 %v6670
        %6916 = vmatpush1.msra.mxu0 %v6669
        %6917 = vmatprep.subr.mxu0 %v6678
        %6918 = vmatpush1.msra.mxu0 %v6677
        %6919 = vmatprep.subr.mxu0 %v6686
        %6920 = vmatpush1.msra.mxu0 %v6685
        %6921 = vmatprep.subr.mxu0 %v6694
        %6922 = vmatpush1.msra.mxu0 %v6693
        %6923 = vmatprep.subr.mxu0 %v6702
        %6924 = vmatpush1.msra.mxu0 %v6701
        %6925 = vmatprep.subr.mxu0 %v6710
        %6926 = vmatpush1.msra.mxu0 %v6709
        %6927 = vmatprep.subr.mxu0 %v6718
        %6928 = vmatpush1.msra.mxu0 %v6717
        %6929 = vmatprep.subr.mxu0 %v6726
        %6930 = vmatpush1.msra.mxu0 %v6725
        %6931 = vmatprep.subr.mxu0 %v6734
        %6932 = vmatpush1.msra.mxu0 %v6733
        %6933 = vmatprep.subr.mxu0 %v6742
        %6934 = vmatpush1.msra.mxu0 %v6741
        %6935 = vmatprep.subr.mxu0 %v6750
        %6936 = vmatpush1.msra.mxu0 %v6749
        %6937 = vmatprep.mubr.f32.mxu0 %v6496
        %6938 = vmatmul.mubr.f32.gmra.mrb[0].mxu0 %v6495
        %v6939 = vpop.f32.mrb[0].mxu0
        %v6940 = vadd.f32 %v6767, %v6939
        %v6941 = vpop.f32.mrb[0].mxu0
        %v6942 = vadd.f32 %v6771, %v6941
        %6943 = vmatprep.mubr.f32.mxu0 %v6498
        %6944 = vmatmul.mubr.f32.gmra.mrb[0].mxu0 %v6497
        %v6945 = vpop.f32.mrb[0].mxu0
        %v6946 = vadd.f32 %v6767, %v6945
        %v6947 = vpop.f32.mrb[0].mxu0
        %v6948 = vadd.f32 %v6771, %v6947
        %6949 = vdwg.mxu0
        %6950 = vmatprep.subr.mxu0 %v6504
        %6951 = vmatpush1.msra.mxu0 %v6503
        %6952 = vmatprep.subr.mxu0 %v6512
        %6953 = vmatpush1.msra.mxu0 %v6511
        %6954 = vmatprep.subr.mxu0 %v6520
        %6955 = vmatpush1.msra.mxu0 %v6519
        %6956 = vmatprep.subr.mxu0 %v6528
        %6957 = vmatpush1.msra.mxu0 %v6527
        %6958 = vmatprep.subr.mxu0 %v6536
        %6959 = vmatpush1.msra.mxu0 %v6535
        %6960 = vmatprep.subr.mxu0 %v6544
        %6961 = vmatpush1.msra.mxu0 %v6543
        %6962 = vmatprep.subr.mxu0 %v6552
        %6963 = vmatpush1.msra.mxu0 %v6551
        %6964 = vmatprep.subr.mxu0 %v6560
        %6965 = vmatpush1.msra.mxu0 %v6559
        %6966 = vmatprep.subr.mxu0 %v6568
        %6967 = vmatpush1.msra.mxu0 %v6567
        %6968 = vmatprep.subr.mxu0 %v6576
        %6969 = vmatpush1.msra.mxu0 %v6575
        %6970 = vmatprep.subr.mxu0 %v6584
        %6971 = vmatpush1.msra.mxu0 %v6583
        %6972 = vmatprep.subr.mxu0 %v6592
        %6973 = vmatpush1.msra.mxu0 %v6591
        %6974 = vmatprep.subr.mxu0 %v6600
        %6975 = vmatpush1.msra.mxu0 %v6599
        %6976 = vmatprep.subr.mxu0 %v6608
        %6977 = vmatpush1.msra.mxu0 %v6607
        %6978 = vmatprep.subr.mxu0 %v6616
        %6979 = vmatpush1.msra.mxu0 %v6615
        %6980 = vmatprep.subr.mxu0 %v6624
        %6981 = vmatpush1.msra.mxu0 %v6623
        %6982 = vmatprep.subr.mxu0 %v6632
        %6983 = vmatpush1.msra.mxu0 %v6631
        %6984 = vmatprep.subr.mxu0 %v6640
        %6985 = vmatpush1.msra.mxu0 %v6639
        %6986 = vmatprep.subr.mxu0 %v6648
        %6987 = vmatpush1.msra.mxu0 %v6647
        %6988 = vmatprep.subr.mxu0 %v6656
        %6989 = vmatpush1.msra.mxu0 %v6655
        %6990 = vmatprep.subr.mxu0 %v6664
        %6991 = vmatpush1.msra.mxu0 %v6663
        %6992 = vmatprep.subr.mxu0 %v6672
        %6993 = vmatpush1.msra.mxu0 %v6671
        %6994 = vmatprep.subr.mxu0 %v6680
        %6995 = vmatpush1.msra.mxu0 %v6679
        %6996 = vmatprep.subr.mxu0 %v6688
        %6997 = vmatpush1.msra.mxu0 %v6687
        %6998 = vmatprep.subr.mxu0 %v6696
        %6999 = vmatpush1.msra.mxu0 %v6695
        %7000 = vmatprep.subr.mxu0 %v6704
        %7001 = vmatpush1.msra.mxu0 %v6703
        %7002 = vmatprep.subr.mxu0 %v6712
        %7003 = vmatpush1.msra.mxu0 %v6711
        %7004 = vmatprep.subr.mxu0 %v6720
        %7005 = vmatpush1.msra.mxu0 %v6719
        %7006 = vmatprep.subr.mxu0 %v6728
        %7007 = vmatpush1.msra.mxu0 %v6727
        %7008 = vmatprep.subr.mxu0 %v6736
        %7009 = vmatpush1.msra.mxu0 %v6735
        %7010 = vmatprep.subr.mxu0 %v6744
        %7011 = vmatpush1.msra.mxu0 %v6743
        %7012 = vmatprep.subr.mxu0 %v6752
        %7013 = vmatpush1.msra.mxu0 %v6751
        %7014 = vmatprep.mubr.f32.mxu0 %v6496
        %7015 = vmatmul.mubr.f32.gmra.mrb[0].mxu0 %v6495
        %v7016 = vpop.f32.mrb[0].mxu0
        %v7017 = vadd.f32 %v6775, %v7016
        %v7018 = vpop.f32.mrb[0].mxu0
        %v7019 = vadd.f32 %v6779, %v7018
        %7020 = vmatprep.mubr.f32.mxu0 %v6498
        %7021 = vmatmul.mubr.f32.gmra.mrb[0].mxu0 %v6497
        %v7022 = vpop.f32.mrb[0].mxu0
        %v7023 = vadd.f32 %v6775, %v7022
        %v7024 = vpop.f32.mrb[0].mxu0
        %v7025 = vadd.f32 %v6779, %v7024
        %7026 = vdwg.mxu0
        %7027 = vmatprep.subr.mxu0 %v6506
        %7028 = vmatpush1.msra.mxu0 %v6505
        %7029 = vmatprep.subr.mxu0 %v6514
        %7030 = vmatpush1.msra.mxu0 %v6513
        %7031 = vmatprep.subr.mxu0 %v6522
        %7032 = vmatpush1.msra.mxu0 %v6521
        %7033 = vmatprep.subr.mxu0 %v6530
        %7034 = vmatpush1.msra.mxu0 %v6529
        %7035 = vmatprep.subr.mxu0 %v6538
        %7036 = vmatpush1.msra.mxu0 %v6537
        %7037 = vmatprep.subr.mxu0 %v6546
        %7038 = vmatpush1.msra.mxu0 %v6545
        %7039 = vmatprep.subr.mxu0 %v6554
        %7040 = vmatpush1.msra.mxu0 %v6553
        %7041 = vmatprep.subr.mxu0 %v6562
        %7042 = vmatpush1.msra.mxu0 %v6561
        %7043 = vmatprep.subr.mxu0 %v6570
        %7044 = vmatpush1.msra.mxu0 %v6569
        %7045 = vmatprep.subr.mxu0 %v6578
        %7046 = vmatpush1.msra.mxu0 %v6577
        %7047 = vmatprep.subr.mxu0 %v6586
        %7048 = vmatpush1.msra.mxu0 %v6585
        %7049 = vmatprep.subr.mxu0 %v6594
        %7050 = vmatpush1.msra.mxu0 %v6593
        %7051 = vmatprep.subr.mxu0 %v6602
        %7052 = vmatpush1.msra.mxu0 %v6601
        %7053 = vmatprep.subr.mxu0 %v6610
        %7054 = vmatpush1.msra.mxu0 %v6609
        %7055 = vmatprep.subr.mxu0 %v6618
        %7056 = vmatpush1.msra.mxu0 %v6617
        %7057 = vmatprep.subr.mxu0 %v6626
        %7058 = vmatpush1.msra.mxu0 %v6625
        %7059 = vmatprep.subr.mxu0 %v6634
        %7060 = vmatpush1.msra.mxu0 %v6633
        %7061 = vmatprep.subr.mxu0 %v6642
        %7062 = vmatpush1.msra.mxu0 %v6641
        %7063 = vmatprep.subr.mxu0 %v6650
        %7064 = vmatpush1.msra.mxu0 %v6649
        %7065 = vmatprep.subr.mxu0 %v6658
        %7066 = vmatpush1.msra.mxu0 %v6657
        %7067 = vmatprep.subr.mxu0 %v6666
        %7068 = vmatpush1.msra.mxu0 %v6665
        %7069 = vmatprep.subr.mxu0 %v6674
        %7070 = vmatpush1.msra.mxu0 %v6673
        %7071 = vmatprep.subr.mxu0 %v6682
        %7072 = vmatpush1.msra.mxu0 %v6681
        %7073 = vmatprep.subr.mxu0 %v6690
        %7074 = vmatpush1.msra.mxu0 %v6689
        %7075 = vmatprep.subr.mxu0 %v6698
        %7076 = vmatpush1.msra.mxu0 %v6697
        %7077 = vmatprep.subr.mxu0 %v6706
        %7078 = vmatpush1.msra.mxu0 %v6705
        %7079 = vmatprep.subr.mxu0 %v6714
        %7080 = vmatpush1.msra.mxu0 %v6713
        %7081 = vmatprep.subr.mxu0 %v6722
        %7082 = vmatpush1.msra.mxu0 %v6721
        %7083 = vmatprep.subr.mxu0 %v6730
        %7084 = vmatpush1.msra.mxu0 %v6729
        %7085 = vmatprep.subr.mxu0 %v6738
        %7086 = vmatpush1.msra.mxu0 %v6737
        %7087 = vmatprep.subr.mxu0 %v6746
        %7088 = vmatpush1.msra.mxu0 %v6745
        %7089 = vmatprep.subr.mxu0 %v6754
        %7090 = vmatpush1.msra.mxu0 %v6753
        %7091 = vmatprep.mubr.f32.mxu0 %v6496
        %7092 = vmatmul.mubr.f32.gmra.mrb[0].mxu0 %v6495
        %v7093 = vpop.f32.mrb[0].mxu0
        %v7094 = vadd.f32 %v6783, %v7093
        %v7095 = vpop.f32.mrb[0].mxu0
        %v7096 = vadd.f32 %v6787, %v7095
        %7097 = vmatprep.mubr.f32.mxu0 %v6498
        %7098 = vmatmul.mubr.f32.gmra.mrb[0].mxu0 %v6497
        %v7099 = vpop.f32.mrb[0].mxu0
        %v7100 = vadd.f32 %v6783, %v7099
        %v7101 = vpop.f32.mrb[0].mxu0
        %v7102 = vadd.f32 %v6787, %v7101
        %7103 = vdwg.mxu0
        %v7104 = vmax.f32 %v6863, 0.0
        %v7105 = vmax.f32 %v6865, 0.0
        %v7106 = vmax.f32 %v6940, 0.0
        %v7107 = vmax.f32 %v6942, 0.0
        %v7108 = vmax.f32 %v7017, 0.0
        %v7109 = vmax.f32 %v7019, 0.0
        %v7110 = vmax.f32 %v7094, 0.0
        %v7111 = vmax.f32 %v7096, 0.0
        %v7112 = vmax.f32 %v6869, 0.0
        %v7113 = vmax.f32 %v6871, 0.0
        %v7114 = vmax.f32 %v6946, 0.0
        %v7115 = vmax.f32 %v6948, 0.0
        %v7116 = vmax.f32 %v7023, 0.0
        %v7117 = vmax.f32 %v7025, 0.0
        %v7118 = vmax.f32 %v7100, 0.0
        %v7119 = vmax.f32 %v7102, 0.0
        %v7120 = vld [vmem:[%s574] sm:$0xff]
        %v7121 = vld [vmem:[%s574 + $0x8] sm:$0xff]
        %v7122 = vld [vmem:[%s574 + $0x10] sm:$0xff]
        %v7123 = vld [vmem:[%s574 + $0x18] sm:$0xff]
        %v7124 = vld [vmem:[%s574 + $0x20] sm:$0xff]
        %v7125 = vld [vmem:[%s574 + $0x28] sm:$0xff]
        %v7126 = vld [vmem:[%s574 + $0x30] sm:$0xff]
        %v7127 = vld [vmem:[%s574 + $0x38] sm:$0xff]
        %v7128 = vld [vmem:[%s574 + $0x40] sm:$0xff]
        %v7129 = vld [vmem:[%s574 + $0x48] sm:$0xff]
        %v7130 = vld [vmem:[%s574 + $0x50] sm:$0xff]
        %v7131 = vld [vmem:[%s574 + $0x58] sm:$0xff]
        %v7132 = vld [vmem:[%s574 + $0x60] sm:$0xff]
        %v7133 = vld [vmem:[%s574 + $0x68] sm:$0xff]
        %v7134 = vld [vmem:[%s574 + $0x70] sm:$0xff]
        %v7135 = vld [vmem:[%s574 + $0x78] sm:$0xff]
        %v7136 = vld [vmem:[%s574 + $0x80] sm:$0xff]
        %v7137 = vld [vmem:[%s574 + $0x88] sm:$0xff]
        %v7138 = vld [vmem:[%s574 + $0x90] sm:$0xff]
        %v7139 = vld [vmem:[%s574 + $0x98] sm:$0xff]
        %v7140 = vld [vmem:[%s574 + $0xa0] sm:$0xff]
        %v7141 = vld [vmem:[%s574 + $0xa8] sm:$0xff]
        %v7142 = vld [vmem:[%s574 + $0xb0] sm:$0xff]
        %v7143 = vld [vmem:[%s574 + $0xb8] sm:$0xff]
        %v7144 = vld [vmem:[%s574 + $0xc0] sm:$0xff]
        %v7145 = vld [vmem:[%s574 + $0xc8] sm:$0xff]
        %v7146 = vld [vmem:[%s574 + $0xd0] sm:$0xff]
        %v7147 = vld [vmem:[%s574 + $0xd8] sm:$0xff]
        %v7148 = vld [vmem:[%s574 + $0xe0] sm:$0xff]
        %v7149 = vld [vmem:[%s574 + $0xe8] sm:$0xff]
        %v7150 = vld [vmem:[%s574 + $0xf0] sm:$0xff]
        %v7151 = vld [vmem:[%s574 + $0xf8] sm:$0xff]
        %v7152 = vld [vmem:[%s574 + $0x100] sm:$0xff]
        %v7153 = vld [vmem:[%s574 + $0x108] sm:$0xff]
        %v7154 = vld [vmem:[%s574 + $0x110] sm:$0xff]
        %v7155 = vld [vmem:[%s574 + $0x118] sm:$0xff]
        %v7156 = vld [vmem:[%s574 + $0x120] sm:$0xff]
        %v7157 = vld [vmem:[%s574 + $0x128] sm:$0xff]
        %v7158 = vld [vmem:[%s574 + $0x130] sm:$0xff]
        %v7159 = vld [vmem:[%s574 + $0x138] sm:$0xff]
        %v7160 = vld [vmem:[%s574 + $0x140] sm:$0xff]
        %v7161 = vld [vmem:[%s574 + $0x148] sm:$0xff]
        %v7162 = vld [vmem:[%s574 + $0x150] sm:$0xff]
        %v7163 = vld [vmem:[%s574 + $0x158] sm:$0xff]
        %v7164 = vld [vmem:[%s574 + $0x160] sm:$0xff]
        %v7165 = vld [vmem:[%s574 + $0x168] sm:$0xff]
        %v7166 = vld [vmem:[%s574 + $0x170] sm:$0xff]
        %v7167 = vld [vmem:[%s574 + $0x178] sm:$0xff]
        %v7168 = vld [vmem:[%s574 + $0x180] sm:$0xff]
        %v7169 = vld [vmem:[%s574 + $0x188] sm:$0xff]
        %v7170 = vld [vmem:[%s574 + $0x190] sm:$0xff]
        %v7171 = vld [vmem:[%s574 + $0x198] sm:$0xff]
        %v7172 = vld [vmem:[%s574 + $0x1a0] sm:$0xff]
        %v7173 = vld [vmem:[%s574 + $0x1a8] sm:$0xff]
        %v7174 = vld [vmem:[%s574 + $0x1b0] sm:$0xff]
        %v7175 = vld [vmem:[%s574 + $0x1b8] sm:$0xff]
        %v7176 = vld [vmem:[%s574 + $0x1c0] sm:$0xff]
        %v7177 = vld [vmem:[%s574 + $0x1c8] sm:$0xff]
        %v7178 = vld [vmem:[%s574 + $0x1d0] sm:$0xff]
        %v7179 = vld [vmem:[%s574 + $0x1d8] sm:$0xff]
        %v7180 = vld [vmem:[%s574 + $0x1e0] sm:$0xff]
        %v7181 = vld [vmem:[%s574 + $0x1e8] sm:$0xff]
        %v7182 = vld [vmem:[%s574 + $0x1f0] sm:$0xff]
        %v7183 = vld [vmem:[%s574 + $0x1f8] sm:$0xff]
        %v7184 = vld [vmem:[%s574 + $0x200] sm:$0xff]
        %v7185 = vld [vmem:[%s574 + $0x208] sm:$0xff]
        %v7186 = vld [vmem:[%s574 + $0x210] sm:$0xff]
        %v7187 = vld [vmem:[%s574 + $0x218] sm:$0xff]
        %v7188 = vld [vmem:[%s574 + $0x220] sm:$0xff]
        %v7189 = vld [vmem:[%s574 + $0x228] sm:$0xff]
        %v7190 = vld [vmem:[%s574 + $0x230] sm:$0xff]
        %v7191 = vld [vmem:[%s574 + $0x238] sm:$0xff]
        %v7192 = vld [vmem:[%s574 + $0x240] sm:$0xff]
        %v7193 = vld [vmem:[%s574 + $0x248] sm:$0xff]
        %v7194 = vld [vmem:[%s574 + $0x250] sm:$0xff]
        %v7195 = vld [vmem:[%s574 + $0x258] sm:$0xff]
        %v7196 = vld [vmem:[%s574 + $0x260] sm:$0xff]
        %v7197 = vld [vmem:[%s574 + $0x268] sm:$0xff]
        %v7198 = vld [vmem:[%s574 + $0x270] sm:$0xff]
        %v7199 = vld [vmem:[%s574 + $0x278] sm:$0xff]
        %v7200 = vld [vmem:[%s574 + $0x280] sm:$0xff]
        %v7201 = vld [vmem:[%s574 + $0x288] sm:$0xff]
        %v7202 = vld [vmem:[%s574 + $0x290] sm:$0xff]
        %v7203 = vld [vmem:[%s574 + $0x298] sm:$0xff]
        %v7204 = vld [vmem:[%s574 + $0x2a0] sm:$0xff]
        %v7205 = vld [vmem:[%s574 + $0x2a8] sm:$0xff]
        %v7206 = vld [vmem:[%s574 + $0x2b0] sm:$0xff]
        %v7207 = vld [vmem:[%s574 + $0x2b8] sm:$0xff]
        %v7208 = vld [vmem:[%s574 + $0x2c0] sm:$0xff]
        %v7209 = vld [vmem:[%s574 + $0x2c8] sm:$0xff]
        %v7210 = vld [vmem:[%s574 + $0x2d0] sm:$0xff]
        %v7211 = vld [vmem:[%s574 + $0x2d8] sm:$0xff]
        %v7212 = vld [vmem:[%s574 + $0x2e0] sm:$0xff]
        %v7213 = vld [vmem:[%s574 + $0x2e8] sm:$0xff]
        %v7214 = vld [vmem:[%s574 + $0x2f0] sm:$0xff]
        %v7215 = vld [vmem:[%s574 + $0x2f8] sm:$0xff]
        %v7216 = vld [vmem:[%s574 + $0x300] sm:$0xff]
        %v7217 = vld [vmem:[%s574 + $0x308] sm:$0xff]
        %v7218 = vld [vmem:[%s574 + $0x310] sm:$0xff]
        %v7219 = vld [vmem:[%s574 + $0x318] sm:$0xff]
        %v7220 = vld [vmem:[%s574 + $0x320] sm:$0xff]
        %v7221 = vld [vmem:[%s574 + $0x328] sm:$0xff]
        %v7222 = vld [vmem:[%s574 + $0x330] sm:$0xff]
        %v7223 = vld [vmem:[%s574 + $0x338] sm:$0xff]
        %v7224 = vld [vmem:[%s574 + $0x340] sm:$0xff]
        %v7225 = vld [vmem:[%s574 + $0x348] sm:$0xff]
        %v7226 = vld [vmem:[%s574 + $0x350] sm:$0xff]
        %v7227 = vld [vmem:[%s574 + $0x358] sm:$0xff]
        %v7228 = vld [vmem:[%s574 + $0x360] sm:$0xff]
        %v7229 = vld [vmem:[%s574 + $0x368] sm:$0xff]
        %v7230 = vld [vmem:[%s574 + $0x370] sm:$0xff]
        %v7231 = vld [vmem:[%s574 + $0x378] sm:$0xff]
        %v7232 = vld [vmem:[%s574 + $0x380] sm:$0xff]
        %v7233 = vld [vmem:[%s574 + $0x388] sm:$0xff]
        %v7234 = vld [vmem:[%s574 + $0x390] sm:$0xff]
        %v7235 = vld [vmem:[%s574 + $0x398] sm:$0xff]
        %v7236 = vld [vmem:[%s574 + $0x3a0] sm:$0xff]
        %v7237 = vld [vmem:[%s574 + $0x3a8] sm:$0xff]
        %v7238 = vld [vmem:[%s574 + $0x3b0] sm:$0xff]
        %v7239 = vld [vmem:[%s574 + $0x3b8] sm:$0xff]
        %v7240 = vld [vmem:[%s574 + $0x3c0] sm:$0xff]
        %v7241 = vld [vmem:[%s574 + $0x3c8] sm:$0xff]
        %v7242 = vld [vmem:[%s574 + $0x3d0] sm:$0xff]
        %v7243 = vld [vmem:[%s574 + $0x3d8] sm:$0xff]
        %v7244 = vld [vmem:[%s574 + $0x3e0] sm:$0xff]
        %v7245 = vld [vmem:[%s574 + $0x3e8] sm:$0xff]
        %v7246 = vld [vmem:[%s574 + $0x3f0] sm:$0xff]
        %v7247 = vld [vmem:[%s574 + $0x3f8] sm:$0xff]
        %v7248 = vld [vmem:[%s574 + $0x400] sm:$0xff]
        %v7249 = vld [vmem:[%s574 + $0x408] sm:$0xff]
        %v7250 = vld [vmem:[%s574 + $0x410] sm:$0xff]
        %v7251 = vld [vmem:[%s574 + $0x418] sm:$0xff]
        %v7252 = vld [vmem:[%s574 + $0x420] sm:$0xff]
        %v7253 = vld [vmem:[%s574 + $0x428] sm:$0xff]
        %v7254 = vld [vmem:[%s574 + $0x430] sm:$0xff]
        %v7255 = vld [vmem:[%s574 + $0x438] sm:$0xff]
        %v7256 = vld [vmem:[%s574 + $0x440] sm:$0xff]
        %v7257 = vld [vmem:[%s574 + $0x448] sm:$0xff]
        %v7258 = vld [vmem:[%s574 + $0x450] sm:$0xff]
        %v7259 = vld [vmem:[%s574 + $0x458] sm:$0xff]
        %v7260 = vld [vmem:[%s574 + $0x460] sm:$0xff]
        %v7261 = vld [vmem:[%s574 + $0x468] sm:$0xff]
        %v7262 = vld [vmem:[%s574 + $0x470] sm:$0xff]
        %v7263 = vld [vmem:[%s574 + $0x478] sm:$0xff]
        %v7264 = vld [vmem:[%s574 + $0x480] sm:$0xff]
        %v7265 = vld [vmem:[%s574 + $0x488] sm:$0xff]
        %v7266 = vld [vmem:[%s574 + $0x490] sm:$0xff]
        %v7267 = vld [vmem:[%s574 + $0x498] sm:$0xff]
        %v7268 = vld [vmem:[%s574 + $0x4a0] sm:$0xff]
        %v7269 = vld [vmem:[%s574 + $0x4a8] sm:$0xff]
        %v7270 = vld [vmem:[%s574 + $0x4b0] sm:$0xff]
        %v7271 = vld [vmem:[%s574 + $0x4b8] sm:$0xff]
        %v7272 = vld [vmem:[%s574 + $0x4c0] sm:$0xff]
        %v7273 = vld [vmem:[%s574 + $0x4c8] sm:$0xff]
        %v7274 = vld [vmem:[%s574 + $0x4d0] sm:$0xff]
        %v7275 = vld [vmem:[%s574 + $0x4d8] sm:$0xff]
        %v7276 = vld [vmem:[%s574 + $0x4e0] sm:$0xff]
        %v7277 = vld [vmem:[%s574 + $0x4e8] sm:$0xff]
        %v7278 = vld [vmem:[%s574 + $0x4f0] sm:$0xff]
        %v7279 = vld [vmem:[%s574 + $0x4f8] sm:$0xff]
        %v7280 = vld [vmem:[%s574 + $0x500] sm:$0xff]
        %v7281 = vld [vmem:[%s574 + $0x508] sm:$0xff]
        %v7282 = vld [vmem:[%s574 + $0x510] sm:$0xff]
        %v7283 = vld [vmem:[%s574 + $0x518] sm:$0xff]
        %v7284 = vld [vmem:[%s574 + $0x520] sm:$0xff]
        %v7285 = vld [vmem:[%s574 + $0x528] sm:$0xff]
        %v7286 = vld [vmem:[%s574 + $0x530] sm:$0xff]
        %v7287 = vld [vmem:[%s574 + $0x538] sm:$0xff]
        %v7288 = vld [vmem:[%s574 + $0x540] sm:$0xff]
        %v7289 = vld [vmem:[%s574 + $0x548] sm:$0xff]
        %v7290 = vld [vmem:[%s574 + $0x550] sm:$0xff]
        %v7291 = vld [vmem:[%s574 + $0x558] sm:$0xff]
        %v7292 = vld [vmem:[%s574 + $0x560] sm:$0xff]
        %v7293 = vld [vmem:[%s574 + $0x568] sm:$0xff]
        %v7294 = vld [vmem:[%s574 + $0x570] sm:$0xff]
        %v7295 = vld [vmem:[%s574 + $0x578] sm:$0xff]
        %v7296 = vld [vmem:[%s574 + $0x580] sm:$0xff]
        %v7297 = vld [vmem:[%s574 + $0x588] sm:$0xff]
        %v7298 = vld [vmem:[%s574 + $0x590] sm:$0xff]
        %v7299 = vld [vmem:[%s574 + $0x598] sm:$0xff]
        %v7300 = vld [vmem:[%s574 + $0x5a0] sm:$0xff]
        %v7301 = vld [vmem:[%s574 + $0x5a8] sm:$0xff]
        %v7302 = vld [vmem:[%s574 + $0x5b0] sm:$0xff]
        %v7303 = vld [vmem:[%s574 + $0x5b8] sm:$0xff]
        %v7304 = vld [vmem:[%s574 + $0x5c0] sm:$0xff]
        %v7305 = vld [vmem:[%s574 + $0x5c8] sm:$0xff]
        %v7306 = vld [vmem:[%s574 + $0x5d0] sm:$0xff]
        %v7307 = vld [vmem:[%s574 + $0x5d8] sm:$0xff]
        %v7308 = vld [vmem:[%s574 + $0x5e0] sm:$0xff]
        %v7309 = vld [vmem:[%s574 + $0x5e8] sm:$0xff]
        %v7310 = vld [vmem:[%s574 + $0x5f0] sm:$0xff]
        %v7311 = vld [vmem:[%s574 + $0x5f8] sm:$0xff]
        %v7312 = vld [vmem:[%s574 + $0x600] sm:$0xff]
        %v7313 = vld [vmem:[%s574 + $0x608] sm:$0xff]
        %v7314 = vld [vmem:[%s574 + $0x610] sm:$0xff]
        %v7315 = vld [vmem:[%s574 + $0x618] sm:$0xff]
        %v7316 = vld [vmem:[%s574 + $0x620] sm:$0xff]
        %v7317 = vld [vmem:[%s574 + $0x628] sm:$0xff]
        %v7318 = vld [vmem:[%s574 + $0x630] sm:$0xff]
        %v7319 = vld [vmem:[%s574 + $0x638] sm:$0xff]
        %v7320 = vld [vmem:[%s574 + $0x640] sm:$0xff]
        %v7321 = vld [vmem:[%s574 + $0x648] sm:$0xff]
        %v7322 = vld [vmem:[%s574 + $0x650] sm:$0xff]
        %v7323 = vld [vmem:[%s574 + $0x658] sm:$0xff]
        %v7324 = vld [vmem:[%s574 + $0x660] sm:$0xff]
        %v7325 = vld [vmem:[%s574 + $0x668] sm:$0xff]
        %v7326 = vld [vmem:[%s574 + $0x670] sm:$0xff]
        %v7327 = vld [vmem:[%s574 + $0x678] sm:$0xff]
        %v7328 = vld [vmem:[%s574 + $0x680] sm:$0xff]
        %v7329 = vld [vmem:[%s574 + $0x688] sm:$0xff]
        %v7330 = vld [vmem:[%s574 + $0x690] sm:$0xff]
        %v7331 = vld [vmem:[%s574 + $0x698] sm:$0xff]
        %v7332 = vld [vmem:[%s574 + $0x6a0] sm:$0xff]
        %v7333 = vld [vmem:[%s574 + $0x6a8] sm:$0xff]
        %v7334 = vld [vmem:[%s574 + $0x6b0] sm:$0xff]
        %v7335 = vld [vmem:[%s574 + $0x6b8] sm:$0xff]
        %v7336 = vld [vmem:[%s574 + $0x6c0] sm:$0xff]
        %v7337 = vld [vmem:[%s574 + $0x6c8] sm:$0xff]
        %v7338 = vld [vmem:[%s574 + $0x6d0] sm:$0xff]
        %v7339 = vld [vmem:[%s574 + $0x6d8] sm:$0xff]
        %v7340 = vld [vmem:[%s574 + $0x6e0] sm:$0xff]
        %v7341 = vld [vmem:[%s574 + $0x6e8] sm:$0xff]
        %v7342 = vld [vmem:[%s574 + $0x6f0] sm:$0xff]
        %v7343 = vld [vmem:[%s574 + $0x6f8] sm:$0xff]
        %v7344 = vld [vmem:[%s574 + $0x700] sm:$0xff]
        %v7345 = vld [vmem:[%s574 + $0x708] sm:$0xff]
        %v7346 = vld [vmem:[%s574 + $0x710] sm:$0xff]
        %v7347 = vld [vmem:[%s574 + $0x718] sm:$0xff]
        %v7348 = vld [vmem:[%s574 + $0x720] sm:$0xff]
        %v7349 = vld [vmem:[%s574 + $0x728] sm:$0xff]
        %v7350 = vld [vmem:[%s574 + $0x730] sm:$0xff]
        %v7351 = vld [vmem:[%s574 + $0x738] sm:$0xff]
        %v7352 = vld [vmem:[%s574 + $0x740] sm:$0xff]
        %v7353 = vld [vmem:[%s574 + $0x748] sm:$0xff]
        %v7354 = vld [vmem:[%s574 + $0x750] sm:$0xff]
        %v7355 = vld [vmem:[%s574 + $0x758] sm:$0xff]
        %v7356 = vld [vmem:[%s574 + $0x760] sm:$0xff]
        %v7357 = vld [vmem:[%s574 + $0x768] sm:$0xff]
        %v7358 = vld [vmem:[%s574 + $0x770] sm:$0xff]
        %v7359 = vld [vmem:[%s574 + $0x778] sm:$0xff]
        %v7360 = vld [vmem:[%s574 + $0x780] sm:$0xff]
        %v7361 = vld [vmem:[%s574 + $0x788] sm:$0xff]
        %v7362 = vld [vmem:[%s574 + $0x790] sm:$0xff]
        %v7363 = vld [vmem:[%s574 + $0x798] sm:$0xff]
        %v7364 = vld [vmem:[%s574 + $0x7a0] sm:$0xff]
        %v7365 = vld [vmem:[%s574 + $0x7a8] sm:$0xff]
        %v7366 = vld [vmem:[%s574 + $0x7b0] sm:$0xff]
        %v7367 = vld [vmem:[%s574 + $0x7b8] sm:$0xff]
        %v7368 = vld [vmem:[%s574 + $0x7c0] sm:$0xff]
        %v7369 = vld [vmem:[%s574 + $0x7c8] sm:$0xff]
        %v7370 = vld [vmem:[%s574 + $0x7d0] sm:$0xff]
        %v7371 = vld [vmem:[%s574 + $0x7d8] sm:$0xff]
        %v7372 = vld [vmem:[%s574 + $0x7e0] sm:$0xff]
        %v7373 = vld [vmem:[%s574 + $0x7e8] sm:$0xff]
        %v7374 = vld [vmem:[%s574 + $0x7f0] sm:$0xff]
        %v7375 = vld [vmem:[%s574 + $0x7f8] sm:$0xff]
        %v7376 = vlaneseq
        %v7377 = vshrl.u32 %v7376, 7
        %v7378 = vsub.s32 6, %v7377
        %v7379 = vrot.slane %v661, %v7378
        %v7380 = vlaneseq
        %v7381 = vshrl.u32 %v7380, 7
        %v7382 = vsub.s32 6, %v7381
        %v7383 = vrot.slane %v662, %v7382
        %7384 = vmatprep.subr.mxu0 %v7121
        %7385 = vmatpush1.msra.mxu0 %v7120
        %7386 = vmatprep.subr.mxu0 %v7123
        %7387 = vmatpush1.msra.mxu0 %v7122
        %7388 = vmatprep.subr.mxu0 %v7125
        %7389 = vmatpush1.msra.mxu0 %v7124
        %7390 = vmatprep.subr.mxu0 %v7127
        %7391 = vmatpush1.msra.mxu0 %v7126
        %7392 = vmatprep.subr.mxu0 %v7129
        %7393 = vmatpush1.msra.mxu0 %v7128
        %7394 = vmatprep.subr.mxu0 %v7131
        %7395 = vmatpush1.msra.mxu0 %v7130
        %7396 = vmatprep.subr.mxu0 %v7133
        %7397 = vmatpush1.msra.mxu0 %v7132
        %7398 = vmatprep.subr.mxu0 %v7135
        %7399 = vmatpush1.msra.mxu0 %v7134
        %7400 = vmatprep.subr.mxu0 %v7137
        %7401 = vmatpush1.msra.mxu0 %v7136
        %7402 = vmatprep.subr.mxu0 %v7139
        %7403 = vmatpush1.msra.mxu0 %v7138
        %7404 = vmatprep.subr.mxu0 %v7141
        %7405 = vmatpush1.msra.mxu0 %v7140
        %7406 = vmatprep.subr.mxu0 %v7143
        %7407 = vmatpush1.msra.mxu0 %v7142
        %7408 = vmatprep.subr.mxu0 %v7145
        %7409 = vmatpush1.msra.mxu0 %v7144
        %7410 = vmatprep.subr.mxu0 %v7147
        %7411 = vmatpush1.msra.mxu0 %v7146
        %7412 = vmatprep.subr.mxu0 %v7149
        %7413 = vmatpush1.msra.mxu0 %v7148
        %7414 = vmatprep.subr.mxu0 %v7151
        %7415 = vmatpush1.msra.mxu0 %v7150
        %7416 = vmatprep.subr.mxu0 %v7153
        %7417 = vmatpush1.msra.mxu0 %v7152
        %7418 = vmatprep.subr.mxu0 %v7155
        %7419 = vmatpush1.msra.mxu0 %v7154
        %7420 = vmatprep.subr.mxu0 %v7157
        %7421 = vmatpush1.msra.mxu0 %v7156
        %7422 = vmatprep.subr.mxu0 %v7159
        %7423 = vmatpush1.msra.mxu0 %v7158
        %7424 = vmatprep.subr.mxu0 %v7161
        %7425 = vmatpush1.msra.mxu0 %v7160
        %7426 = vmatprep.subr.mxu0 %v7163
        %7427 = vmatpush1.msra.mxu0 %v7162
        %7428 = vmatprep.subr.mxu0 %v7165
        %7429 = vmatpush1.msra.mxu0 %v7164
        %7430 = vmatprep.subr.mxu0 %v7167
        %7431 = vmatpush1.msra.mxu0 %v7166
        %7432 = vmatprep.subr.mxu0 %v7169
        %7433 = vmatpush1.msra.mxu0 %v7168
        %7434 = vmatprep.subr.mxu0 %v7171
        %7435 = vmatpush1.msra.mxu0 %v7170
        %7436 = vmatprep.subr.mxu0 %v7173
        %7437 = vmatpush1.msra.mxu0 %v7172
        %7438 = vmatprep.subr.mxu0 %v7175
        %7439 = vmatpush1.msra.mxu0 %v7174
        %7440 = vmatprep.subr.mxu0 %v7177
        %7441 = vmatpush1.msra.mxu0 %v7176
        %7442 = vmatprep.subr.mxu0 %v7179
        %7443 = vmatpush1.msra.mxu0 %v7178
        %7444 = vmatprep.subr.mxu0 %v7181
        %7445 = vmatpush1.msra.mxu0 %v7180
        %7446 = vmatprep.subr.mxu0 %v7183
        %7447 = vmatpush1.msra.mxu0 %v7182
        %7448 = vmatprep.mubr.f32.mxu0 %v7105
        %7449 = vmatmul.mubr.f32.gmra.mrb[0].mxu0 %v7104
        %v7450 = vpop.f32.mrb[0].mxu0
        %v7451 = vadd.f32 %v7379, %v7450
        %v7452 = vpop.f32.mrb[0].mxu0
        %v7453 = vadd.f32 %v7383, %v7452
        %7454 = vmatprep.mubr.f32.mxu0 %v7113
        %7455 = vmatmul.mubr.f32.gmra.mrb[0].mxu0 %v7112
        %v7456 = vpop.f32.mrb[0].mxu0
        %v7457 = vadd.f32 %v7379, %v7456
        %v7458 = vpop.f32.mrb[0].mxu0
        %v7459 = vadd.f32 %v7383, %v7458
        %7460 = vdwg.mxu0
        %7461 = vmatprep.subr.mxu0 %v7185
        %7462 = vmatpush1.msra.mxu0 %v7184
        %7463 = vmatprep.subr.mxu0 %v7187
        %7464 = vmatpush1.msra.mxu0 %v7186
        %7465 = vmatprep.subr.mxu0 %v7189
        %7466 = vmatpush1.msra.mxu0 %v7188
        %7467 = vmatprep.subr.mxu0 %v7191
        %7468 = vmatpush1.msra.mxu0 %v7190
        %7469 = vmatprep.subr.mxu0 %v7193
        %7470 = vmatpush1.msra.mxu0 %v7192
        %7471 = vmatprep.subr.mxu0 %v7195
        %7472 = vmatpush1.msra.mxu0 %v7194
        %7473 = vmatprep.subr.mxu0 %v7197
        %7474 = vmatpush1.msra.mxu0 %v7196
        %7475 = vmatprep.subr.mxu0 %v7199
        %7476 = vmatpush1.msra.mxu0 %v7198
        %7477 = vmatprep.subr.mxu0 %v7201
        %7478 = vmatpush1.msra.mxu0 %v7200
        %7479 = vmatprep.subr.mxu0 %v7203
        %7480 = vmatpush1.msra.mxu0 %v7202
        %7481 = vmatprep.subr.mxu0 %v7205
        %7482 = vmatpush1.msra.mxu0 %v7204
        %7483 = vmatprep.subr.mxu0 %v7207
        %7484 = vmatpush1.msra.mxu0 %v7206
        %7485 = vmatprep.subr.mxu0 %v7209
        %7486 = vmatpush1.msra.mxu0 %v7208
        %7487 = vmatprep.subr.mxu0 %v7211
        %7488 = vmatpush1.msra.mxu0 %v7210
        %7489 = vmatprep.subr.mxu0 %v7213
        %7490 = vmatpush1.msra.mxu0 %v7212
        %7491 = vmatprep.subr.mxu0 %v7215
        %7492 = vmatpush1.msra.mxu0 %v7214
        %7493 = vmatprep.subr.mxu0 %v7217
        %7494 = vmatpush1.msra.mxu0 %v7216
        %7495 = vmatprep.subr.mxu0 %v7219
        %7496 = vmatpush1.msra.mxu0 %v7218
        %7497 = vmatprep.subr.mxu0 %v7221
        %7498 = vmatpush1.msra.mxu0 %v7220
        %7499 = vmatprep.subr.mxu0 %v7223
        %7500 = vmatpush1.msra.mxu0 %v7222
        %7501 = vmatprep.subr.mxu0 %v7225
        %7502 = vmatpush1.msra.mxu0 %v7224
        %7503 = vmatprep.subr.mxu0 %v7227
        %7504 = vmatpush1.msra.mxu0 %v7226
        %7505 = vmatprep.subr.mxu0 %v7229
        %7506 = vmatpush1.msra.mxu0 %v7228
        %7507 = vmatprep.subr.mxu0 %v7231
        %7508 = vmatpush1.msra.mxu0 %v7230
        %7509 = vmatprep.subr.mxu0 %v7233
        %7510 = vmatpush1.msra.mxu0 %v7232
        %7511 = vmatprep.subr.mxu0 %v7235
        %7512 = vmatpush1.msra.mxu0 %v7234
        %7513 = vmatprep.subr.mxu0 %v7237
        %7514 = vmatpush1.msra.mxu0 %v7236
        %7515 = vmatprep.subr.mxu0 %v7239
        %7516 = vmatpush1.msra.mxu0 %v7238
        %7517 = vmatprep.subr.mxu0 %v7241
        %7518 = vmatpush1.msra.mxu0 %v7240
        %7519 = vmatprep.subr.mxu0 %v7243
        %7520 = vmatpush1.msra.mxu0 %v7242
        %7521 = vmatprep.subr.mxu0 %v7245
        %7522 = vmatpush1.msra.mxu0 %v7244
        %7523 = vmatprep.subr.mxu0 %v7247
        %7524 = vmatpush1.msra.mxu0 %v7246
        %7525 = vmatprep.mubr.f32.mxu0 %v7107
        %7526 = vmatmul.mubr.f32.gmra.mrb[0].mxu0 %v7106
        %v7527 = vpop.f32.mrb[0].mxu0
        %v7528 = vadd.f32 %v7451, %v7527
        %v7529 = vpop.f32.mrb[0].mxu0
        %v7530 = vadd.f32 %v7453, %v7529
        %7531 = vmatprep.mubr.f32.mxu0 %v7115
        %7532 = vmatmul.mubr.f32.gmra.mrb[0].mxu0 %v7114
        %v7533 = vpop.f32.mrb[0].mxu0
        %v7534 = vadd.f32 %v7457, %v7533
        %v7535 = vpop.f32.mrb[0].mxu0
        %v7536 = vadd.f32 %v7459, %v7535
        %7537 = vdwg.mxu0
        %7538 = vmatprep.subr.mxu0 %v7249
        %7539 = vmatpush1.msra.mxu0 %v7248
        %7540 = vmatprep.subr.mxu0 %v7251
        %7541 = vmatpush1.msra.mxu0 %v7250
        %7542 = vmatprep.subr.mxu0 %v7253
        %7543 = vmatpush1.msra.mxu0 %v7252
        %7544 = vmatprep.subr.mxu0 %v7255
        %7545 = vmatpush1.msra.mxu0 %v7254
        %7546 = vmatprep.subr.mxu0 %v7257
        %7547 = vmatpush1.msra.mxu0 %v7256
        %7548 = vmatprep.subr.mxu0 %v7259
        %7549 = vmatpush1.msra.mxu0 %v7258
        %7550 = vmatprep.subr.mxu0 %v7261
        %7551 = vmatpush1.msra.mxu0 %v7260
        %7552 = vmatprep.subr.mxu0 %v7263
        %7553 = vmatpush1.msra.mxu0 %v7262
        %7554 = vmatprep.subr.mxu0 %v7265
        %7555 = vmatpush1.msra.mxu0 %v7264
        %7556 = vmatprep.subr.mxu0 %v7267
        %7557 = vmatpush1.msra.mxu0 %v7266
        %7558 = vmatprep.subr.mxu0 %v7269
        %7559 = vmatpush1.msra.mxu0 %v7268
        %7560 = vmatprep.subr.mxu0 %v7271
        %7561 = vmatpush1.msra.mxu0 %v7270
        %7562 = vmatprep.subr.mxu0 %v7273
        %7563 = vmatpush1.msra.mxu0 %v7272
        %7564 = vmatprep.subr.mxu0 %v7275
        %7565 = vmatpush1.msra.mxu0 %v7274
        %7566 = vmatprep.subr.mxu0 %v7277
        %7567 = vmatpush1.msra.mxu0 %v7276
        %7568 = vmatprep.subr.mxu0 %v7279
        %7569 = vmatpush1.msra.mxu0 %v7278
        %7570 = vmatprep.subr.mxu0 %v7281
        %7571 = vmatpush1.msra.mxu0 %v7280
        %7572 = vmatprep.subr.mxu0 %v7283
        %7573 = vmatpush1.msra.mxu0 %v7282
        %7574 = vmatprep.subr.mxu0 %v7285
        %7575 = vmatpush1.msra.mxu0 %v7284
        %7576 = vmatprep.subr.mxu0 %v7287
        %7577 = vmatpush1.msra.mxu0 %v7286
        %7578 = vmatprep.subr.mxu0 %v7289
        %7579 = vmatpush1.msra.mxu0 %v7288
        %7580 = vmatprep.subr.mxu0 %v7291
        %7581 = vmatpush1.msra.mxu0 %v7290
        %7582 = vmatprep.subr.mxu0 %v7293
        %7583 = vmatpush1.msra.mxu0 %v7292
        %7584 = vmatprep.subr.mxu0 %v7295
        %7585 = vmatpush1.msra.mxu0 %v7294
        %7586 = vmatprep.subr.mxu0 %v7297
        %7587 = vmatpush1.msra.mxu0 %v7296
        %7588 = vmatprep.subr.mxu0 %v7299
        %7589 = vmatpush1.msra.mxu0 %v7298
        %7590 = vmatprep.subr.mxu0 %v7301
        %7591 = vmatpush1.msra.mxu0 %v7300
        %7592 = vmatprep.subr.mxu0 %v7303
        %7593 = vmatpush1.msra.mxu0 %v7302
        %7594 = vmatprep.subr.mxu0 %v7305
        %7595 = vmatpush1.msra.mxu0 %v7304
        %7596 = vmatprep.subr.mxu0 %v7307
        %7597 = vmatpush1.msra.mxu0 %v7306
        %7598 = vmatprep.subr.mxu0 %v7309
        %7599 = vmatpush1.msra.mxu0 %v7308
        %7600 = vmatprep.subr.mxu0 %v7311
        %7601 = vmatpush1.msra.mxu0 %v7310
        %7602 = vmatprep.mubr.f32.mxu0 %v7109
        %7603 = vmatmul.mubr.f32.gmra.mrb[0].mxu0 %v7108
        %v7604 = vpop.f32.mrb[0].mxu0
        %v7605 = vadd.f32 %v7528, %v7604
        %v7606 = vpop.f32.mrb[0].mxu0
        %v7607 = vadd.f32 %v7530, %v7606
        %7608 = vmatprep.mubr.f32.mxu0 %v7117
        %7609 = vmatmul.mubr.f32.gmra.mrb[0].mxu0 %v7116
        %v7610 = vpop.f32.mrb[0].mxu0
        %v7611 = vadd.f32 %v7534, %v7610
        %v7612 = vpop.f32.mrb[0].mxu0
        %v7613 = vadd.f32 %v7536, %v7612
        %7614 = vdwg.mxu0
        %7615 = vmatprep.subr.mxu0 %v7313
        %7616 = vmatpush1.msra.mxu0 %v7312
        %7617 = vmatprep.subr.mxu0 %v7315
        %7618 = vmatpush1.msra.mxu0 %v7314
        %7619 = vmatprep.subr.mxu0 %v7317
        %7620 = vmatpush1.msra.mxu0 %v7316
        %7621 = vmatprep.subr.mxu0 %v7319
        %7622 = vmatpush1.msra.mxu0 %v7318
        %7623 = vmatprep.subr.mxu0 %v7321
        %7624 = vmatpush1.msra.mxu0 %v7320
        %7625 = vmatprep.subr.mxu0 %v7323
        %7626 = vmatpush1.msra.mxu0 %v7322
        %7627 = vmatprep.subr.mxu0 %v7325
        %7628 = vmatpush1.msra.mxu0 %v7324
        %7629 = vmatprep.subr.mxu0 %v7327
        %7630 = vmatpush1.msra.mxu0 %v7326
        %7631 = vmatprep.subr.mxu0 %v7329
        %7632 = vmatpush1.msra.mxu0 %v7328
        %7633 = vmatprep.subr.mxu0 %v7331
        %7634 = vmatpush1.msra.mxu0 %v7330
        %7635 = vmatprep.subr.mxu0 %v7333
        %7636 = vmatpush1.msra.mxu0 %v7332
        %7637 = vmatprep.subr.mxu0 %v7335
        %7638 = vmatpush1.msra.mxu0 %v7334
        %7639 = vmatprep.subr.mxu0 %v7337
        %7640 = vmatpush1.msra.mxu0 %v7336
        %7641 = vmatprep.subr.mxu0 %v7339
        %7642 = vmatpush1.msra.mxu0 %v7338
        %7643 = vmatprep.subr.mxu0 %v7341
        %7644 = vmatpush1.msra.mxu0 %v7340
        %7645 = vmatprep.subr.mxu0 %v7343
        %7646 = vmatpush1.msra.mxu0 %v7342
        %7647 = vmatprep.subr.mxu0 %v7345
        %7648 = vmatpush1.msra.mxu0 %v7344
        %7649 = vmatprep.subr.mxu0 %v7347
        %7650 = vmatpush1.msra.mxu0 %v7346
        %7651 = vmatprep.subr.mxu0 %v7349
        %7652 = vmatpush1.msra.mxu0 %v7348
        %7653 = vmatprep.subr.mxu0 %v7351
        %7654 = vmatpush1.msra.mxu0 %v7350
        %7655 = vmatprep.subr.mxu0 %v7353
        %7656 = vmatpush1.msra.mxu0 %v7352
        %7657 = vmatprep.subr.mxu0 %v7355
        %7658 = vmatpush1.msra.mxu0 %v7354
        %7659 = vmatprep.subr.mxu0 %v7357
        %7660 = vmatpush1.msra.mxu0 %v7356
        %7661 = vmatprep.subr.mxu0 %v7359
        %7662 = vmatpush1.msra.mxu0 %v7358
        %7663 = vmatprep.subr.mxu0 %v7361
        %7664 = vmatpush1.msra.mxu0 %v7360
        %7665 = vmatprep.subr.mxu0 %v7363
        %7666 = vmatpush1.msra.mxu0 %v7362
        %7667 = vmatprep.subr.mxu0 %v7365
        %7668 = vmatpush1.msra.mxu0 %v7364
        %7669 = vmatprep.subr.mxu0 %v7367
        %7670 = vmatpush1.msra.mxu0 %v7366
        %7671 = vmatprep.subr.mxu0 %v7369
        %7672 = vmatpush1.msra.mxu0 %v7368
        %7673 = vmatprep.subr.mxu0 %v7371
        %7674 = vmatpush1.msra.mxu0 %v7370
        %7675 = vmatprep.subr.mxu0 %v7373
        %7676 = vmatpush1.msra.mxu0 %v7372
        %7677 = vmatprep.subr.mxu0 %v7375
        %7678 = vmatpush1.msra.mxu0 %v7374
        %7679 = vmatprep.mubr.f32.mxu0 %v7111
        %7680 = vmatmul.mubr.f32.gmra.mrb[0].mxu0 %v7110
        %v7681 = vpop.f32.mrb[0].mxu0
        %v7682 = vadd.f32 %v7605, %v7681
        %v7683 = vpop.f32.mrb[0].mxu0
        %v7684 = vadd.f32 %v7607, %v7683
        %7685 = vmatprep.mubr.f32.mxu0 %v7119
        %7686 = vmatmul.mubr.f32.gmra.mrb[0].mxu0 %v7118
        %v7687 = vpop.f32.mrb[0].mxu0
        %v7688 = vadd.f32 %v7611, %v7687
        %v7689 = vpop.f32.mrb[0].mxu0
        %v7690 = vadd.f32 %v7613, %v7689
        %7691 = vdwg.mxu0
        %v7692 = vadd.f32 %v6495, %v7682
        %v7693 = vadd.f32 %v6496, %v7684
        %v7694 = vadd.f32 %v6497, %v7688
        %v7695 = vadd.f32 %v6498, %v7690
        %v7696 = vadd.f32 %v7692, %v7693
        %7697 = vadd.xlane.f32.xlu0 %v7696
        %v7698 = vpop.xlane.xlu0 %7697
        %v7699 = vsel %vm1261, %v7694, 0.0
        %v7700 = vsel %vm1261, %v7695, 0.0
        %v7701 = vadd.f32 %v7699, %v7700
        %7702 = vadd.xlane.f32.xlu0 %v7701
        %v7703 = vpop.xlane.xlu0 %7702
        %v7704 = vmul.f32 %v7698, %v3545
        %v7705 = vmul.f32 %v7703, %v3545
        %v7706 = vsub.f32 %v7692, %v7704
        %v7707 = vsub.f32 %v7693, %v7704
        %v7708 = vsub.f32 %v7694, %v7705
        %v7709 = vsub.f32 %v7695, %v7705
        %v7710 = vmul.f32 %v7706, %v7706
        %v7711 = vmul.f32 %v7707, %v7707
        %v7712 = vmul.f32 %v7708, %v7708
        %v7713 = vmul.f32 %v7709, %v7709
        %v7714 = vadd.f32 %v7710, %v7711
        %7715 = vadd.xlane.f32.xlu0 %v7714
        %v7716 = vpop.xlane.xlu0 %7715
        %v7717 = vsel %vm1261, %v7712, 0.0
        %v7718 = vsel %vm1261, %v7713, 0.0
        %v7719 = vadd.f32 %v7717, %v7718
        %7720 = vadd.xlane.f32.xlu0 %v7719
        %v7721 = vpop.xlane.xlu0 %7720
        %v7722 = vmul.f32 %v7716, %v3545
        %v7723 = vmul.f32 %v7721, %v3545
        %v7724 = vadd.f32 %v7722, 1e-05
        %v7725 = vadd.f32 %v7723, 1e-05
        %v7726 = vrsqrt.pop %v7724
        %v7727 = vrsqrt.pop %v7725
        %v7728 = vmul.f32 %v7706, %v7726
        %v7729 = vmul.f32 %v7707, %v7726
        %v7730 = vmul.f32 %v7708, %v7727
        %v7731 = vmul.f32 %v7709, %v7727
        %v7732 = vlaneseq
        %v7733 = vshrl.u32 %v7732, 7
        %v7734 = vsub.s32 4, %v7733
        %v7735 = vrot.slane %v661, %v7734
        %v7736 = vlaneseq
        %v7737 = vshrl.u32 %v7736, 7
        %v7738 = vsub.s32 4, %v7737
        %v7739 = vrot.slane %v662, %v7738
        %v7740 = vmul.f32 %v7728, %v7735
        %v7741 = vmul.f32 %v7729, %v7739
        %v7742 = vmul.f32 %v7730, %v7735
        %v7743 = vmul.f32 %v7731, %v7739
        %v7744 = vlaneseq
        %v7745 = vshrl.u32 %v7744, 7
        %v7746 = vsub.s32 5, %v7745
        %v7747 = vrot.slane %v661, %v7746
        %v7748 = vlaneseq
        %v7749 = vshrl.u32 %v7748, 7
        %v7750 = vsub.s32 5, %v7749
        %v7751 = vrot.slane %v662, %v7750
        %v7752 = vadd.f32 %v7740, %v7747
        %v7753 = vadd.f32 %v7741, %v7751
        %v7754 = vadd.f32 %v7742, %v7747
        %v7755 = vadd.f32 %v7743, %v7751
        %7756 = vst [vmem:[#allocation17] sm:$0xff] %v7752
        %7757 = vst [vmem:[#allocation17 + $0x8] sm:$0xff] %v7753
        %7758 = vst [vmem:[#allocation17 + $0x10] sm:$0x3] %v7754
        %7759 = vst [vmem:[#allocation17 + $0x18] sm:$0x3] %v7755
        %p7760 = scmp.eq.s32.totalorder %s29, 5
        // Predicated region
        $region113: #{tpu_custom_call.1} parent=63 // pred_check
          %p7761 = pneg %p7760
        $region114: #{tpu_custom_call.1} parent=63 // pred_check_branch
          %7763 = sbr.rel (%p7761) target = $region116
        $region115: #{tpu_custom_call.1} parent=63 // pred_region
          %v7764 = vld [vmem:[#allocation15] sm:$0xff]
          %v7765 = vld [vmem:[#allocation15 + $0x8] sm:$0xff]
          %v7766 = vld [vmem:[#allocation15 + $0x10] sm:$0xff]
          %v7767 = vld [vmem:[#allocation15 + $0x18] sm:$0xff]
          %v7768 = vld [vmem:[#allocation15 + $0x20] sm:$0xff]
          %v7769 = vld [vmem:[#allocation15 + $0x28] sm:$0xff]
          %v7770 = vld [vmem:[#allocation15 + $0x30] sm:$0xff]
          %v7771 = vld [vmem:[#allocation15 + $0x38] sm:$0xff]
          %v7772 = vld [vmem:[#allocation15 + $0x40] sm:$0xff]
          %v7773 = vld [vmem:[#allocation15 + $0x48] sm:$0xff]
          %v7774 = vld [vmem:[#allocation15 + $0x50] sm:$0xff]
          %v7775 = vld [vmem:[#allocation15 + $0x58] sm:$0xff]
          %v7776 = vld [vmem:[#allocation15 + $0x60] sm:$0xff]
          %v7777 = vld [vmem:[#allocation15 + $0x68] sm:$0xff]
          %v7778 = vld [vmem:[#allocation15 + $0x70] sm:$0xff]
          %v7779 = vld [vmem:[#allocation15 + $0x78] sm:$0xff]
          %v7780 = vld [vmem:[#allocation15 + $0x80] sm:$0xff]
          %v7781 = vld [vmem:[#allocation15 + $0x88] sm:$0xff]
          %v7782 = vld [vmem:[#allocation15 + $0x90] sm:$0xff]
          %v7783 = vld [vmem:[#allocation15 + $0x98] sm:$0xff]
          %v7784 = vld [vmem:[#allocation15 + $0xa0] sm:$0xff]
          %v7785 = vld [vmem:[#allocation15 + $0xa8] sm:$0xff]
          %v7786 = vld [vmem:[#allocation15 + $0xb0] sm:$0xff]
          %v7787 = vld [vmem:[#allocation15 + $0xb8] sm:$0xff]
          %v7788 = vld [vmem:[#allocation15 + $0xc0] sm:$0xff]
          %v7789 = vld [vmem:[#allocation15 + $0xc8] sm:$0xff]
          %v7790 = vld [vmem:[#allocation15 + $0xd0] sm:$0xff]
          %v7791 = vld [vmem:[#allocation15 + $0xd8] sm:$0xff]
          %v7792 = vld [vmem:[#allocation15 + $0xe0] sm:$0xff]
          %v7793 = vld [vmem:[#allocation15 + $0xe8] sm:$0xff]
          %v7794 = vld [vmem:[#allocation15 + $0xf0] sm:$0xff]
          %v7795 = vld [vmem:[#allocation15 + $0xf8] sm:$0xff]
          %v7796 = vld [vmem:[#allocation16] sm:$0x1]
          %v7798 = vlaneseq
          %v7799 = vshrl.u32 %v7798, 7
          %v7800 = vsub.s32 0, %v7799
          %v7801 = vrot.slane %v7796, %v7800
          %7803 = vmatprep.subr.mxu0 0.0
          %7804 = vmatpush1.msra.mxu0 %v7764
          %7805 = vmatprep.subr.mxu0 0.0
          %7806 = vmatpush1.msra.mxu0 %v7765
          %7807 = vmatprep.subr.mxu0 0.0
          %7808 = vmatpush1.msra.mxu0 %v7766
          %7809 = vmatprep.subr.mxu0 0.0
          %7810 = vmatpush1.msra.mxu0 %v7767
          %7811 = vmatprep.subr.mxu0 0.0
          %7812 = vmatpush1.msra.mxu0 %v7768
          %7813 = vmatprep.subr.mxu0 0.0
          %7814 = vmatpush1.msra.mxu0 %v7769
          %7815 = vmatprep.subr.mxu0 0.0
          %7816 = vmatpush1.msra.mxu0 %v7770
          %7817 = vmatprep.subr.mxu0 0.0
          %7818 = vmatpush1.msra.mxu0 %v7771
          %7819 = vmatprep.subr.mxu0 0.0
          %7820 = vmatpush1.msra.mxu0 %v7772
          %7821 = vmatprep.subr.mxu0 0.0
          %7822 = vmatpush1.msra.mxu0 %v7773
          %7823 = vmatprep.subr.mxu0 0.0
          %7824 = vmatpush1.msra.mxu0 %v7774
          %7825 = vmatprep.subr.mxu0 0.0
          %7826 = vmatpush1.msra.mxu0 %v7775
          %7827 = vmatprep.subr.mxu0 0.0
          %7828 = vmatpush1.msra.mxu0 %v7776
          %7829 = vmatprep.subr.mxu0 0.0
          %7830 = vmatpush1.msra.mxu0 %v7777
          %7831 = vmatprep.subr.mxu0 0.0
          %7832 = vmatpush1.msra.mxu0 %v7778
          %7833 = vmatprep.subr.mxu0 0.0
          %7834 = vmatpush1.msra.mxu0 %v7779
          %7835 = vmatprep.subr.mxu0 0.0
          %7836 = vmatpush1.msra.mxu0 %v7780
          %7837 = vmatprep.subr.mxu0 0.0
          %7838 = vmatpush1.msra.mxu0 %v7781
          %7839 = vmatprep.subr.mxu0 0.0
          %7840 = vmatpush1.msra.mxu0 %v7782
          %7841 = vmatprep.subr.mxu0 0.0
          %7842 = vmatpush1.msra.mxu0 %v7783
          %7843 = vmatprep.subr.mxu0 0.0
          %7844 = vmatpush1.msra.mxu0 %v7784
          %7845 = vmatprep.subr.mxu0 0.0
          %7846 = vmatpush1.msra.mxu0 %v7785
          %7847 = vmatprep.subr.mxu0 0.0
          %7848 = vmatpush1.msra.mxu0 %v7786
          %7849 = vmatprep.subr.mxu0 0.0
          %7850 = vmatpush1.msra.mxu0 %v7787
          %7851 = vmatprep.subr.mxu0 0.0
          %7852 = vmatpush1.msra.mxu0 %v7788
          %7853 = vmatprep.subr.mxu0 0.0
          %7854 = vmatpush1.msra.mxu0 %v7789
          %7855 = vmatprep.subr.mxu0 0.0
          %7856 = vmatpush1.msra.mxu0 %v7790
          %7857 = vmatprep.subr.mxu0 0.0
          %7858 = vmatpush1.msra.mxu0 %v7791
          %7859 = vmatprep.subr.mxu0 0.0
          %7860 = vmatpush1.msra.mxu0 %v7792
          %7861 = vmatprep.subr.mxu0 0.0
          %7862 = vmatpush1.msra.mxu0 %v7793
          %7863 = vmatprep.subr.mxu0 0.0
          %7864 = vmatpush1.msra.mxu0 %v7794
          %7865 = vmatprep.subr.mxu0 0.0
          %7866 = vmatpush1.msra.mxu0 %v7795
          %7867 = vmatprep.mubr.f32.mxu0 %v7753
          %7868 = vmatmul.mubr.f32.gmra.mrb[0].mxu0 %v7752
          %v7869 = vpop.f32.mrb[0].mxu0
          %v7870 = vadd.f32 %v7801, %v7869
          %v7871 = vpop.f32.mrb[0].mxu0
          %7872 = vmatprep.mubr.f32.mxu0 %v7755
          %7873 = vmatmul.mubr.f32.gmra.mrb[0].mxu0 %v7754
          %v7874 = vpop.f32.mrb[0].mxu0
          %v7875 = vadd.f32 %v7801, %v7874
          %v7876 = vpop.f32.mrb[0].mxu0
          %7877 = vdwg.mxu0
          %7878 = vst [vmem:[#allocation18] sm:$0xff] %v7870
          %7879 = vst [vmem:[#allocation18 + $0x8] sm:$0x3] %v7875
        $region116: #{tpu_custom_call.1} parent=63 // pred_fallthru
          _
        // Predicated region
        $region117: #{tpu_custom_call.1} parent=63 // pred_check
          %p7880 = pneg %p298
        $region118: #{tpu_custom_call.1} parent=63 // pred_check_branch
          %7882 = sbr.rel (%p7880) target = $region120
        $region119: #{tpu_custom_call.1} parent=63 // pred_region
          %s7884 = ssub.s32 512, 512
          %7885 = vsyncadd [#allocation4], %s7884
          %s7886 = sshll.u32 [#allocation17], 4
          %s7887 = int_to_ptr.vmem [resolvable:$true] %s7886
          %7892 = dma.vmem_to_hbm [thread:$0]  %s7887, 512, %s11, [#allocation4], 256, 256, 16
        $region120: #{tpu_custom_call.1} parent=63 // pred_fallthru
          _
        // Predicated region
        $region121: #{tpu_custom_call.1} parent=63 // pred_check
          %p7893 = pneg %p319
        $region122: #{tpu_custom_call.1} parent=63 // pred_check_branch
          %7895 = sbr.rel (%p7893) target = $region124
        $region123: #{tpu_custom_call.1} parent=63 // pred_region
          %s7897 = ssub.s32 256, 256
          %7898 = vsyncadd [#allocation19], %s7897
          %s7899 = sshll.u32 [#allocation18], 4
          %s7900 = int_to_ptr.vmem [resolvable:$true] %s7899
          %7905 = dma.vmem_to_hbm [thread:$0]  %s7900, 256, %s12, [#allocation19], 128, 128, 8
        $region124: #{tpu_custom_call.1} parent=63 // pred_fallthru
          _
        // Predicated region
        $region125: #{tpu_custom_call.1} parent=63 // pred_check
          %p7906 = pneg %p298
        $region126: #{tpu_custom_call.1} parent=63 // pred_check_branch
          %7908 = sbr.rel (%p7906) target = $region128
        $region127: #{tpu_custom_call.1} parent=63 // pred_region
          %7909 = dma.done [#allocation4], 512
        $region128: #{tpu_custom_call.1} parent=63 // pred_fallthru
          _
        // Predicated region
        $region129: #{tpu_custom_call.1} parent=63 // pred_check
          %p7910 = pneg %p319
        $region130: #{tpu_custom_call.1} parent=63 // pred_check_branch
          %7912 = sbr.rel (%p7910) target = $region132
        $region131: #{tpu_custom_call.1} parent=63 // pred_region
          %7913 = dma.done [#allocation19], 256
        $region132: #{tpu_custom_call.1} parent=63 // pred_fallthru
          _
      $region64: #{tpu_custom_call.1} parent=5 // pred_fallthru
        _
      %p7914 = scmp.le.s32.totalorder 2, %s24
      // Predicated region
      $region133: #{tpu_custom_call.1} parent=5 // pred_check
        %p7915 = pneg %p7914
      $region134: #{tpu_custom_call.1} parent=5 // pred_check_branch
        %7917 = sbr.rel (%p7915) target = $region136
      $region135: #{tpu_custom_call.1} parent=5 // pred_region
        %s7918 = ssub.s32 %s24, 2
      $region136: #{tpu_custom_call.1} parent=5 // pred_fallthru
        _
    $region6: #{tpu_custom_call.1} parent=1 // loop_footer
      %s28 = sadd.s32 1, %s24
    $region7: #{tpu_custom_call.1} parent=1 // loop_footer_branch
      %23 = sbr.rel target = $region3
    $region8: #{tpu_custom_call.1} parent=1 // loop_exit
      _
    %7919 = vsyncpa [#allocation3], 1
    %s7920 = scalar_lea.sflag [#allocation3], 1
    %7921 = vsyncpa %s7920, 1
    %7922 = vsyncpa [#allocation6], 1
    %7923 = vsyncpa [#allocation9], 1
    %7924 = vsyncpa [#allocation4], 1
    %s7925 = scalar_lea.sflag [#allocation4], 1
    %7926 = vsyncpa %s7925, 1
    %7927 = vsyncpa [#allocation19], 1

</llo_original>
